<compile_context>
chip_gen: v7x
topology: tpu7x:2x2x1
jax: 0.10.0
libtpu: 0.0.40
codegen_flags: <defaults>
</compile_context>

<pallas_src>
import functools

import jax
import jax.numpy as jnp
from jax.experimental import pallas as pl
from jax.experimental.pallas import tpu as pltpu

_NEG_BIG = -1e30  # used instead of -inf so masked-row arithmetic never yields NaN


def _round_up(x, m):
    return ((x + m - 1) // m) * m


def toad_kernel(h_ref, w1_ref, b1_ref, w2_ref, b2_ref,
                wab_ref, bab_ref, wc_ref, bc_ref, wcls_ref, bcls_ref,
                a_raw_ref, logits_ref, m_out_ref,
                m_sc, l_sc, acc_sc,
                *, n_valid, tile_n, att_dim):
    i = pl.program_id(0)
    n_tiles = pl.num_programs(0)

    @pl.when(i == 0)
    def _init():
        m_sc[...] = jnp.full_like(m_sc, _NEG_BIG)
        l_sc[...] = jnp.zeros_like(l_sc)
        acc_sc[...] = jnp.zeros_like(acc_sc)

    # ---- fc stack: Linear(L,512)+ReLU, Linear(512,512)+ReLU (bf16 MXU, f32 acc) ----
    hb = h_ref[...].astype(jnp.bfloat16)
    h1 = jnp.maximum(
        jnp.dot(hb, w1_ref[...], preferred_element_type=jnp.float32) + b1_ref[...], 0.0)
    h2 = jnp.maximum(
        jnp.dot(h1.astype(jnp.bfloat16), w2_ref[...],
                preferred_element_type=jnp.float32) + b2_ref[...], 0.0)

    # ---- gated attention: tanh / sigmoid branches fused into a single matmul ----
    ab = jnp.dot(h2.astype(jnp.bfloat16), wab_ref[...],
                 preferred_element_type=jnp.float32) + bab_ref[...]
    a = jnp.tanh(ab[:, :att_dim])
    g = jax.nn.sigmoid(ab[:, att_dim:])
    ag = a * g

    # 384 -> 1 projection as a VPU multiply + lane (XLU) reduction; keeps the MXU free.
    s = jnp.sum(ag * wc_ref[...], axis=-1, keepdims=True) + bc_ref[0, 0]   # (tile_n, 1)

    # Mask padded rows (N was rounded up to a multiple of tile_n in the wrapper).
    row = i * tile_n + jax.lax.broadcasted_iota(jnp.int32, (tile_n, 1), 0)
    s = jnp.where(row < n_valid, s, _NEG_BIG)
    a_raw_ref[...] = s                                     # raw (pre-softmax) scores

    # ---- online softmax over N + running weighted sum of h2 (M = A^T @ h2) ----
    t_max = jnp.max(s, axis=0, keepdims=True)              # (1, 1)
    m_new = jnp.maximum(m_sc[...], t_max)
    alpha = jnp.exp(m_sc[...] - m_new)                     # (1, 1); 0 on first tile
    p = jnp.exp(s - m_new)                                 # (tile_n, 1); 0 on padded rows
    l_sc[...] = alpha * l_sc[...] + jnp.sum(p, axis=0, keepdims=True)
    acc_sc[...] = alpha * acc_sc[...] + jnp.sum(p * h2, axis=0, keepdims=True)
    m_sc[...] = m_new

    @pl.when(i == n_tiles - 1)
    def _finalize():
        M = acc_sc[...] / l_sc[...]                        # (1, 512)
        m_out_ref[...] = M
        logits_ref[...] = (jnp.dot(M, wcls_ref[...],
                                   preferred_element_type=jnp.float32) + bcls_ref[...])


def toad_forward(h, kparams, *, tile_n=512, return_features=False, attention_only=False):
    (w1, b1, w2, b2, wab, bab, wc_row, bc, wcls, bcls) = kparams
    N, L = h.shape
    S1 = w1.shape[1]
    D2 = wab.shape[1]
    D = D2 // 2
    C = wcls.shape[1]

    # Tile the instance axis; pad N up to a multiple of the tile (masked in-kernel).
    tile_n = _round_up(min(tile_n, N), 8)
    n_pad = _round_up(N, tile_n)
    if n_pad != N:
        h = jnp.pad(h, ((0, n_pad - N), (0, 0)))
    n_tiles = n_pad // tile_n

    const = lambda i: (0, 0)
    kernel = functools.partial(toad_kernel, n_valid=N, tile_n=tile_n, att_dim=D)

    cost = pl.CostEstimate(
        flops=int(2 * n_pad * (L * S1 + S1 * S1 + S1 * D2 + D) + 2 * S1 * C),
        transcendentals=int(n_pad * (2 * D + 2)),
        bytes_accessed=int(h.size * h.dtype.itemsize
                           + sum(int(x.size) * x.dtype.itemsize for x in kparams)
                           + n_pad * 4 + (S1 + C) * 4),
    )

    a_raw_col, logits, M = pl.pallas_call(
        kernel,
        grid=(n_tiles,),
        in_specs=[
            pl.BlockSpec((tile_n, L), lambda i: (i, 0)),        # h tile (streamed)
            pl.BlockSpec((L, S1), const),                       # W1  (resident, bf16)
            pl.BlockSpec((1, S1), const),                       # b1
            pl.BlockSpec((S1, S1), const),                      # W2  (resident, bf16)
            pl.BlockSpec((1, S1), const),                       # b2
            pl.BlockSpec((S1, D2), const),                      # [Wa|Wb] (resident, bf16)
            pl.BlockSpec((1, D2), const),                       # [ba|bb]
            pl.BlockSpec((1, D), const),                        # Wc as a (1, D) row
            pl.BlockSpec(memory_space=pltpu.MemorySpace.SMEM),  # bc scalar
            pl.BlockSpec((S1, C), const),                       # Wcls (f32, tiny)
            pl.BlockSpec((1, C), const),                        # bcls
        ],
        out_specs=(
            pl.BlockSpec((tile_n, 1), lambda i: (i, 0)),        # raw attention scores
            pl.BlockSpec((1, C), const),                        # logits
            pl.BlockSpec((1, S1), const),                       # M (bag features)
        ),
        out_shape=(
            jax.ShapeDtypeStruct((n_pad, 1), jnp.float32),
            jax.ShapeDtypeStruct((1, C), jnp.float32),
            jax.ShapeDtypeStruct((1, S1), jnp.float32),
        ),
        scratch_shapes=[
            pltpu.VMEM((1, 1), jnp.float32),    # running max
            pltpu.VMEM((1, 1), jnp.float32),    # running denominator
            pltpu.VMEM((1, S1), jnp.float32),   # running weighted sum of h2
        ],
        compiler_params=pltpu.CompilerParams(
            dimension_semantics=("arbitrary",),
            vmem_limit_bytes=32 * 1024 * 1024),
        cost_estimate=cost,
    )(h, w1, b1, w2, b2, wab, bab, wc_row, bc, wcls, bcls)

    # ---- plain-JAX glue on tiny (1, N) / (1, C) tensors ----
    A_raw = a_raw_col[:N, 0][None, :]                       # (1, N) raw scores
    if attention_only:
        return A_raw[0]                                     # torch returns pre-softmax A[0]
    A = jax.nn.softmax(A_raw, axis=1)
    Y_prob = jax.nn.softmax(logits, axis=1)
    Y_hat = jnp.argmax(logits, axis=1)[:, None]             # torch.topk(logits, 1, dim=1)[1]

    results = {}
    if return_features:
        results['features'] = M
    results.update({'logits': logits, 'Y_prob': Y_prob, 'Y_hat': Y_hat, 'A': A})
    return results


def init_params(key, L=1024, S1=512, D=384, n_classes=2):
    """Deterministic synthetic weights, layout (in_features, out_features), f32."""
    ks = jax.random.split(key, 12)

    def lin(kw, kb, fin, fout):
        scale = 1.0 / jnp.sqrt(jnp.float32(fin))
        w = jax.random.normal(kw, (fin, fout), jnp.float32) * scale
        b = jax.random.normal(kb, (1, fout), jnp.float32) * scale
        return w, b

    w1, b1 = lin(ks[0], ks[1], L, S1)
    w2, b2 = lin(ks[2], ks[3], S1, S1)
    wa, ba = lin(ks[4], ks[5], S1, D)
    wb, bb = lin(ks[6], ks[7], S1, D)
    wc, bc = lin(ks[8], ks[9], D, 1)
    wcls, bcls = lin(ks[10], ks[11], S1, n_classes)
    return (w1, b1, w2, b2, wa, ba, wb, bb, wc, bc, wcls, bcls)


def prepare_params(params):
    """Kernel-ready params: bf16 matmul weights, fused gate projection,
    Wc as a (1, D) row, bc as a (1, 1) SMEM scalar; biases / classifier stay f32."""
    (w1, b1, w2, b2, wa, ba, wb, bb, wc, bc, wcls, bcls) = params
    wab = jnp.concatenate([wa, wb], axis=1).astype(jnp.bfloat16)   # (S1, 2D)
    bab = jnp.concatenate([ba, bb], axis=1)                        # (1, 2D) f32
    return (w1.astype(jnp.bfloat16), b1,
            w2.astype(jnp.bfloat16), b2,
            wab, bab,
            wc.T.astype(jnp.float32),     # (1, D)
            bc.reshape(1, 1).astype(jnp.float32),
            wcls, bcls)


if __name__ == "__main__":
    key = jax.random.PRNGKey(0)
    k_h, k_p = jax.random.split(key)

    N, L = 600, 1024            # small bag; exercises multi-tile grid + row masking
    h = jax.random.normal(k_h, (N, L), jnp.float32).astype(jnp.bfloat16)
    params = init_params(k_p)
    kparams = prepare_params(params)

    out = toad_forward(h, kparams, tile_n=256, return_features=True)
    jax.block_until_ready(out)

    att = toad_forward(h, kparams, tile_n=256, attention_only=True)
    jax.block_until_ready(att)

    assert out['logits'].shape == (1, 2)
    assert out['Y_prob'].shape == (1, 2)
    assert out['Y_hat'].shape == (1, 1)
    assert out['A'].shape == (1, N)
    assert out['features'].shape == (1, 512)
    assert att.shape == (N,)
    assert bool(jnp.isfinite(out['logits']).all())
    assert abs(float(out['A'].sum()) - 1.0) < 1e-3   # attention softmax normalizes

    print("KERNEL_OK")
</pallas_src>

<mosaic_0001>
module attributes {stable_mosaic.version = 11 : i64} {
  func.func @toad_kernel(%arg0: i32, %arg1: memref<256x1024xbf16, #tpu.memory_space<vmem>>, %arg2: memref<1024x512xbf16, #tpu.memory_space<vmem>>, %arg3: memref<1x512xf32, #tpu.memory_space<vmem>>, %arg4: memref<512x512xbf16, #tpu.memory_space<vmem>>, %arg5: memref<1x512xf32, #tpu.memory_space<vmem>>, %arg6: memref<512x768xbf16, #tpu.memory_space<vmem>>, %arg7: memref<1x768xf32, #tpu.memory_space<vmem>>, %arg8: memref<1x384xf32, #tpu.memory_space<vmem>>, %arg9: memref<1x1xf32, #tpu.memory_space<smem>>, %arg10: memref<512x2xf32, #tpu.memory_space<vmem>>, %arg11: memref<1x2xf32, #tpu.memory_space<vmem>>, %arg12: memref<256x1xf32, #tpu.memory_space<vmem>>, %arg13: memref<1x2xf32, #tpu.memory_space<vmem>>, %arg14: memref<1x512xf32, #tpu.memory_space<vmem>>, %arg15: memref<1x1xf32, #tpu.memory_space<vmem>>, %arg16: memref<1x1xf32, #tpu.memory_space<vmem>>, %arg17: memref<1x512xf32, #tpu.memory_space<vmem>>) attributes {dimension_semantics = [#tpu.dimension_semantics<arbitrary>], iteration_bounds = array<i64: 3>, scalar_prefetch = 0 : i64, scratch_operands = 3 : i64, tpu.core_type = #tpu.core_type<tc>, window_params = [{transform_indices = @transform_0, window_bounds = array<i64: 256, 1024>}, {pipeline_mode = #tpu.pipeline_mode<synchronous>, transform_indices = @transform_1, window_bounds = array<i64: 1024, 512>}, {pipeline_mode = #tpu.pipeline_mode<synchronous>, transform_indices = @transform_2, window_bounds = array<i64: 1, 512>}, {pipeline_mode = #tpu.pipeline_mode<synchronous>, transform_indices = @transform_3, window_bounds = array<i64: 512, 512>}, {pipeline_mode = #tpu.pipeline_mode<synchronous>, transform_indices = @transform_4, window_bounds = array<i64: 1, 512>}, {pipeline_mode = #tpu.pipeline_mode<synchronous>, transform_indices = @transform_5, window_bounds = array<i64: 512, 768>}, {pipeline_mode = #tpu.pipeline_mode<synchronous>, transform_indices = @transform_6, window_bounds = array<i64: 1, 768>}, {pipeline_mode = #tpu.pipeline_mode<synchronous>, transform_indices = @transform_7, window_bounds = array<i64: 1, 384>}, {transform_indices = @transform_8, window_bounds = array<i64: 1, 1>}, {pipeline_mode = #tpu.pipeline_mode<synchronous>, transform_indices = @transform_9, window_bounds = array<i64: 512, 2>}, {pipeline_mode = #tpu.pipeline_mode<synchronous>, transform_indices = @transform_10, window_bounds = array<i64: 1, 2>}, {transform_indices = @transform_11, window_bounds = array<i64: 256, 1>}, {pipeline_mode = #tpu.pipeline_mode<synchronous>, transform_indices = @transform_12, window_bounds = array<i64: 1, 2>}, {pipeline_mode = #tpu.pipeline_mode<synchronous>, transform_indices = @transform_13, window_bounds = array<i64: 1, 512>}]} {
    %c0_i32 = arith.constant 0 : i32
    %0 = arith.cmpi eq, %arg0, %c0_i32 : i32
    %1 = arith.extui %0 : i1 to i32
    %c0_i32_0 = arith.constant 0 : i32
    %2 = arith.cmpi ne, %1, %c0_i32_0 : i32
    scf.if %2 {
      %cst_45 = arith.constant -1.000000e+30 : f32
      %80 = vector.broadcast %cst_45 : f32 to vector<1x1xf32>
      %c0_46 = arith.constant 0 : index
      %c0_47 = arith.constant 0 : index
      %81 = vector.load %arg15[%c0_46, %c0_47] : memref<1x1xf32, #tpu.memory_space<vmem>>, vector<1x1xf32>
      tpu.vector_store %arg15[%c0_46, %c0_47], %80 {strides = array<i32>} : memref<1x1xf32, #tpu.memory_space<vmem>>, vector<1x1xf32>,
      %cst_48 = arith.constant 0.000000e+00 : f32
      %82 = vector.broadcast %cst_48 : f32 to vector<1x1xf32>
      %c0_49 = arith.constant 0 : index
      %c0_50 = arith.constant 0 : index
      %83 = vector.load %arg16[%c0_49, %c0_50] : memref<1x1xf32, #tpu.memory_space<vmem>>, vector<1x1xf32>
      tpu.vector_store %arg16[%c0_49, %c0_50], %82 {strides = array<i32>} : memref<1x1xf32, #tpu.memory_space<vmem>>, vector<1x1xf32>,
      %cst_51 = arith.constant 0.000000e+00 : f32
      %84 = vector.broadcast %cst_51 : f32 to vector<1x512xf32>
      %c0_52 = arith.constant 0 : index
      %c0_53 = arith.constant 0 : index
      %85 = vector.load %arg17[%c0_52, %c0_53] : memref<1x512xf32, #tpu.memory_space<vmem>>, vector<1x512xf32>
      tpu.vector_store %arg17[%c0_52, %c0_53], %84 {strides = array<i32>} : memref<1x512xf32, #tpu.memory_space<vmem>>, vector<1x512xf32>,
    } else {
    }
    %c0 = arith.constant 0 : index
    %c0_1 = arith.constant 0 : index
    %3 = vector.load %arg1[%c0, %c0_1] : memref<256x1024xbf16, #tpu.memory_space<vmem>>, vector<256x1024xbf16>
    %c0_2 = arith.constant 0 : index
    %c0_3 = arith.constant 0 : index
    %4 = vector.load %arg2[%c0_2, %c0_3] : memref<1024x512xbf16, #tpu.memory_space<vmem>>, vector<1024x512xbf16>
    %cst = arith.constant dense<0.000000e+00> : vector<256x512xf32>
    %5 = tpu.matmul %3, %4, %cst {dimension_numbers = #tpu.dot_dimension_numbers<[1], [0], [0], [1], [0, 0, 1, 1], [], []>} : vector<256x1024xbf16>, vector<1024x512xbf16>, vector<256x512xf32> -> vector<256x512xf32>
    %c0_4 = arith.constant 0 : index
    %c0_5 = arith.constant 0 : index
    %6 = vector.load %arg3[%c0_4, %c0_5] : memref<1x512xf32, #tpu.memory_space<vmem>>, vector<1x512xf32>
    %7 = vector.broadcast %6 : vector<1x512xf32> to vector<256x512xf32>
    %8 = arith.addf %5, %7 : vector<256x512xf32>
    %cst_6 = arith.constant 0.000000e+00 : f32
    %9 = vector.broadcast %cst_6 : f32 to vector<256x512xf32>
    %10 = arith.maximumf %8, %9 : vector<256x512xf32>
    %11 = arith.truncf %10 : vector<256x512xf32> to vector<256x512xbf16>
    %c0_7 = arith.constant 0 : index
    %c0_8 = arith.constant 0 : index
    %12 = vector.load %arg4[%c0_7, %c0_8] : memref<512x512xbf16, #tpu.memory_space<vmem>>, vector<512x512xbf16>
    %cst_9 = arith.constant dense<0.000000e+00> : vector<256x512xf32>
    %13 = tpu.matmul %11, %12, %cst_9 {dimension_numbers = #tpu.dot_dimension_numbers<[1], [0], [0], [1], [0, 0, 1, 1], [], []>} : vector<256x512xbf16>, vector<512x512xbf16>, vector<256x512xf32> -> vector<256x512xf32>
    %c0_10 = arith.constant 0 : index
    %c0_11 = arith.constant 0 : index
    %14 = vector.load %arg5[%c0_10, %c0_11] : memref<1x512xf32, #tpu.memory_space<vmem>>, vector<1x512xf32>
    %15 = vector.broadcast %14 : vector<1x512xf32> to vector<256x512xf32>
    %16 = arith.addf %13, %15 : vector<256x512xf32>
    %cst_12 = arith.constant 0.000000e+00 : f32
    %17 = vector.broadcast %cst_12 : f32 to vector<256x512xf32>
    %18 = arith.maximumf %16, %17 : vector<256x512xf32>
    %19 = arith.truncf %18 : vector<256x512xf32> to vector<256x512xbf16>
    %c0_13 = arith.constant 0 : index
    %c0_14 = arith.constant 0 : index
    %20 = vector.load %arg6[%c0_13, %c0_14] : memref<512x768xbf16, #tpu.memory_space<vmem>>, vector<512x768xbf16>
    %cst_15 = arith.constant dense<0.000000e+00> : vector<256x768xf32>
    %21 = tpu.matmul %19, %20, %cst_15 {dimension_numbers = #tpu.dot_dimension_numbers<[1], [0], [0], [1], [0, 0, 1, 1], [], []>} : vector<256x512xbf16>, vector<512x768xbf16>, vector<256x768xf32> -> vector<256x768xf32>
    %c0_16 = arith.constant 0 : index
    %c0_17 = arith.constant 0 : index
    %22 = vector.load %arg7[%c0_16, %c0_17] : memref<1x768xf32, #tpu.memory_space<vmem>>, vector<1x768xf32>
    %23 = vector.broadcast %22 : vector<1x768xf32> to vector<256x768xf32>
    %24 = arith.addf %21, %23 : vector<256x768xf32>
    %25 = vector.extract_strided_slice %24 {offsets = [0, 0], sizes = [256, 384], strides = [1, 1]} : vector<256x768xf32> to vector<256x384xf32>
    %26 = math.tanh %25 : vector<256x384xf32>
    %27 = vector.extract_strided_slice %24 {offsets = [0, 384], sizes = [256, 384], strides = [1, 1]} : vector<256x768xf32> to vector<256x384xf32>
    %28 = arith.negf %27 : vector<256x384xf32>
    %29 = math.exp %28 : vector<256x384xf32>
    %cst_18 = arith.constant 1.000000e+00 : f32
    %30 = vector.broadcast %cst_18 : f32 to vector<256x384xf32>
    %31 = arith.addf %30, %29 : vector<256x384xf32>
    %32 = arith.divf %30, %31 : vector<256x384xf32>
    %33 = arith.mulf %26, %32 : vector<256x384xf32>
    %c0_19 = arith.constant 0 : index
    %c0_20 = arith.constant 0 : index
    %34 = vector.load %arg8[%c0_19, %c0_20] : memref<1x384xf32, #tpu.memory_space<vmem>>, vector<1x384xf32>
    %35 = vector.broadcast %34 : vector<1x384xf32> to vector<256x384xf32>
    %36 = arith.mulf %33, %35 : vector<256x384xf32>
    %cst_21 = arith.constant dense<0.000000e+00> : vector<256xf32>
    %37 = vector.multi_reduction <add>, %36, %cst_21 [1] : vector<256x384xf32> to vector<256xf32>
    %38 = vector.shape_cast %37 : vector<256xf32> to vector<256x1xf32>
    %c0_22 = arith.constant 0 : index
    %c0_23 = arith.constant 0 : index
    %39 = memref.load %arg9[%c0_22, %c0_23] : memref<1x1xf32, #tpu.memory_space<smem>>
    %40 = vector.broadcast %39 : f32 to vector<256x1xf32>
    %41 = arith.addf %38, %40 : vector<256x1xf32>
    %c256_i32 = arith.constant 256 : i32
    %42 = arith.muli %arg0, %c256_i32 : i32
    %43 = tpu.iota {dimensions = array<i32: 0>} : vector<256x1xi32>
    %44 = vector.broadcast %42 : i32 to vector<256x1xi32>
    %45 = arith.addi %44, %43 : vector<256x1xi32>
    %c600_i32 = arith.constant 600 : i32
    %46 = vector.broadcast %c600_i32 : i32 to vector<256x1xi32>
    %47 = arith.cmpi slt, %45, %46 : vector<256x1xi32>
    %cst_24 = arith.constant -1.000000e+30 : f32
    %48 = vector.broadcast %cst_24 : f32 to vector<256x1xf32>
    %49 = arith.select %47, %41, %48 : vector<256x1xi1>, vector<256x1xf32>
    %c0_25 = arith.constant 0 : index
    %c0_26 = arith.constant 0 : index
    %50 = vector.load %arg12[%c0_25, %c0_26] : memref<256x1xf32, #tpu.memory_space<vmem>>, vector<256x1xf32>
    tpu.vector_store %arg12[%c0_25, %c0_26], %49 {strides = array<i32>} : memref<256x1xf32, #tpu.memory_space<vmem>>, vector<256x1xf32>,
    %cst_27 = arith.constant dense<0xFF800000> : vector<1xf32>
    %51 = vector.multi_reduction <maximumf>, %49, %cst_27 [0] : vector<256x1xf32> to vector<1xf32>
    %52 = vector.shape_cast %51 : vector<1xf32> to vector<1x1xf32>
    %c0_28 = arith.constant 0 : index
    %c0_29 = arith.constant 0 : index
    %53 = vector.load %arg15[%c0_28, %c0_29] : memref<1x1xf32, #tpu.memory_space<vmem>>, vector<1x1xf32>
    %54 = arith.maximumf %53, %52 : vector<1x1xf32>
    %c0_30 = arith.constant 0 : index
    %c0_31 = arith.constant 0 : index
    %55 = vector.load %arg15[%c0_30, %c0_31] : memref<1x1xf32, #tpu.memory_space<vmem>>, vector<1x1xf32>
    %56 = arith.subf %55, %54 : vector<1x1xf32>
    %57 = math.exp %56 : vector<1x1xf32>
    %58 = vector.broadcast %54 : vector<1x1xf32> to vector<256x1xf32>
    %59 = arith.subf %49, %58 : vector<256x1xf32>
    %60 = math.exp %59 : vector<256x1xf32>
    %c0_32 = arith.constant 0 : index
    %c0_33 = arith.constant 0 : index
    %61 = vector.load %arg16[%c0_32, %c0_33] : memref<1x1xf32, #tpu.memory_space<vmem>>, vector<1x1xf32>
    %62 = arith.mulf %57, %61 : vector<1x1xf32>
    %cst_34 = arith.constant dense<0.000000e+00> : vector<1xf32>
    %63 = vector.multi_reduction <add>, %60, %cst_34 [0] : vector<256x1xf32> to vector<1xf32>
    %64 = vector.shape_cast %63 : vector<1xf32> to vector<1x1xf32>
    %65 = arith.addf %62, %64 : vector<1x1xf32>
    %c0_35 = arith.constant 0 : index
    %c0_36 = arith.constant 0 : index
    %66 = vector.load %arg16[%c0_35, %c0_36] : memref<1x1xf32, #tpu.memory_space<vmem>>, vector<1x1xf32>
    tpu.vector_store %arg16[%c0_35, %c0_36], %65 {strides = array<i32>} : memref<1x1xf32, #tpu.memory_space<vmem>>, vector<1x1xf32>,
    %c0_37 = arith.constant 0 : index
    %c0_38 = arith.constant 0 : index
    %67 = vector.load %arg17[%c0_37, %c0_38] : memref<1x512xf32, #tpu.memory_space<vmem>>, vector<1x512xf32>
    %68 = vector.broadcast %57 : vector<1x1xf32> to vector<1x512xf32>
    %69 = arith.mulf %68, %67 : vector<1x512xf32>
    %70 = vector.broadcast %60 : vector<256x1xf32> to vector<256x512xf32>
    %71 = arith.mulf %70, %18 : vector<256x512xf32>
    %cst_39 = arith.constant dense<0.000000e+00> : vector<512xf32>
    %72 = vector.multi_reduction <add>, %71, %cst_39 [0] : vector<256x512xf32> to vector<512xf32>
    %73 = vector.shape_cast %72 : vector<512xf32> to vector<1x512xf32>
    %74 = arith.addf %69, %73 : vector<1x512xf32>
    %c0_40 = arith.constant 0 : index
    %c0_41 = arith.constant 0 : index
    %75 = vector.load %arg17[%c0_40, %c0_41] : memref<1x512xf32, #tpu.memory_space<vmem>>, vector<1x512xf32>
    tpu.vector_store %arg17[%c0_40, %c0_41], %74 {strides = array<i32>} : memref<1x512xf32, #tpu.memory_space<vmem>>, vector<1x512xf32>,
    %c0_42 = arith.constant 0 : index
    %c0_43 = arith.constant 0 : index
    %76 = vector.load %arg15[%c0_42, %c0_43] : memref<1x1xf32, #tpu.memory_space<vmem>>, vector<1x1xf32>
    tpu.vector_store %arg15[%c0_42, %c0_43], %54 {strides = array<i32>} : memref<1x1xf32, #tpu.memory_space<vmem>>, vector<1x1xf32>,
    %c2_i32 = arith.constant 2 : i32
    %77 = arith.cmpi eq, %arg0, %c2_i32 : i32
    %78 = arith.extui %77 : i1 to i32
    %c0_i32_44 = arith.constant 0 : i32
    %79 = arith.cmpi ne, %78, %c0_i32_44 : i32
    scf.if %79 {
      %c0_45 = arith.constant 0 : index
      %c0_46 = arith.constant 0 : index
      %80 = vector.load %arg17[%c0_45, %c0_46] : memref<1x512xf32, #tpu.memory_space<vmem>>, vector<1x512xf32>
      %c0_47 = arith.constant 0 : index
      %c0_48 = arith.constant 0 : index
      %81 = vector.load %arg16[%c0_47, %c0_48] : memref<1x1xf32, #tpu.memory_space<vmem>>, vector<1x1xf32>
      %82 = vector.broadcast %81 : vector<1x1xf32> to vector<1x512xf32>
      %83 = arith.divf %80, %82 : vector<1x512xf32>
      %c0_49 = arith.constant 0 : index
      %c0_50 = arith.constant 0 : index
      %84 = vector.load %arg14[%c0_49, %c0_50] : memref<1x512xf32, #tpu.memory_space<vmem>>, vector<1x512xf32>
      tpu.vector_store %arg14[%c0_49, %c0_50], %83 {strides = array<i32>} : memref<1x512xf32, #tpu.memory_space<vmem>>, vector<1x512xf32>,
      %c0_51 = arith.constant 0 : index
      %c0_52 = arith.constant 0 : index
      %85 = vector.load %arg10[%c0_51, %c0_52] : memref<512x2xf32, #tpu.memory_space<vmem>>, vector<512x2xf32>
      %cst_53 = arith.constant dense<0.000000e+00> : vector<1x2xf32>
      %86 = tpu.matmul %83, %85, %cst_53 {dimension_numbers = #tpu.dot_dimension_numbers<[1], [0], [0], [1], [0, 0, 1, 1], [], []>} : vector<1x512xf32>, vector<512x2xf32>, vector<1x2xf32> -> vector<1x2xf32>
      %c0_54 = arith.constant 0 : index
      %c0_55 = arith.constant 0 : index
      %87 = vector.load %arg11[%c0_54, %c0_55] : memref<1x2xf32, #tpu.memory_space<vmem>>, vector<1x2xf32>
      %88 = arith.addf %86, %87 : vector<1x2xf32>
      %c0_56 = arith.constant 0 : index
      %c0_57 = arith.constant 0 : index
      %89 = vector.load %arg13[%c0_56, %c0_57] : memref<1x2xf32, #tpu.memory_space<vmem>>, vector<1x2xf32>
      tpu.vector_store %arg13[%c0_56, %c0_57], %88 {strides = array<i32>} : memref<1x2xf32, #tpu.memory_space<vmem>>, vector<1x2xf32>,
    } else {
    }
    return
  }
  func.func @transform_0(%arg0: i32) -> (i32, i32) {
    %c0_i32 = arith.constant 0 : i32
    %c0_i32_0 = arith.constant 0 : i32
    return %arg0, %c0_i32 : i32, i32
  }
  func.func @transform_1(%arg0: i32) -> (i32, i32) {
    %c0_i32 = arith.constant 0 : i32
    %c0_i32_0 = arith.constant 0 : i32
    %c0_i32_1 = arith.constant 0 : i32
    return %c0_i32, %c0_i32_0 : i32, i32
  }
  func.func @transform_2(%arg0: i32) -> (i32, i32) {
    %c0_i32 = arith.constant 0 : i32
    %c0_i32_0 = arith.constant 0 : i32
    %c0_i32_1 = arith.constant 0 : i32
    return %c0_i32, %c0_i32_0 : i32, i32
  }
  func.func @transform_3(%arg0: i32) -> (i32, i32) {
    %c0_i32 = arith.constant 0 : i32
    %c0_i32_0 = arith.constant 0 : i32
    %c0_i32_1 = arith.constant 0 : i32
    return %c0_i32, %c0_i32_0 : i32, i32
  }
  func.func @transform_4(%arg0: i32) -> (i32, i32) {
    %c0_i32 = arith.constant 0 : i32
    %c0_i32_0 = arith.constant 0 : i32
    %c0_i32_1 = arith.constant 0 : i32
    return %c0_i32, %c0_i32_0 : i32, i32
  }
  func.func @transform_5(%arg0: i32) -> (i32, i32) {
    %c0_i32 = arith.constant 0 : i32
    %c0_i32_0 = arith.constant 0 : i32
    %c0_i32_1 = arith.constant 0 : i32
    return %c0_i32, %c0_i32_0 : i32, i32
  }
  func.func @transform_6(%arg0: i32) -> (i32, i32) {
    %c0_i32 = arith.constant 0 : i32
    %c0_i32_0 = arith.constant 0 : i32
    %c0_i32_1 = arith.constant 0 : i32
    return %c0_i32, %c0_i32_0 : i32, i32
  }
  func.func @transform_7(%arg0: i32) -> (i32, i32) {
    %c0_i32 = arith.constant 0 : i32
    %c0_i32_0 = arith.constant 0 : i32
    %c0_i32_1 = arith.constant 0 : i32
    return %c0_i32, %c0_i32_0 : i32, i32
  }
  func.func @transform_8(%arg0: i32) -> (i32, i32) {
    %c0_i32 = arith.constant 0 : i32
    %c0_i32_0 = arith.constant 0 : i32
    %c0_i32_1 = arith.constant 0 : i32
    return %c0_i32, %c0_i32_0 : i32, i32
  }
  func.func @transform_9(%arg0: i32) -> (i32, i32) {
    %c0_i32 = arith.constant 0 : i32
    %c0_i32_0 = arith.constant 0 : i32
    %c0_i32_1 = arith.constant 0 : i32
    return %c0_i32, %c0_i32_0 : i32, i32
  }
  func.func @transform_10(%arg0: i32) -> (i32, i32) {
    %c0_i32 = arith.constant 0 : i32
    %c0_i32_0 = arith.constant 0 : i32
    %c0_i32_1 = arith.constant 0 : i32
    return %c0_i32, %c0_i32_0 : i32, i32
  }
  func.func @transform_11(%arg0: i32) -> (i32, i32) {
    %c0_i32 = arith.constant 0 : i32
    %c0_i32_0 = arith.constant 0 : i32
    return %arg0, %c0_i32 : i32, i32
  }
  func.func @transform_12(%arg0: i32) -> (i32, i32) {
    %c0_i32 = arith.constant 0 : i32
    %c0_i32_0 = arith.constant 0 : i32
    %c0_i32_1 = arith.constant 0 : i32
    return %c0_i32, %c0_i32_0 : i32, i32
  }
  func.func @transform_13(%arg0: i32) -> (i32, i32) {
    %c0_i32 = arith.constant 0 : i32
    %c0_i32_0 = arith.constant 0 : i32
    %c0_i32_1 = arith.constant 0 : i32
    return %c0_i32, %c0_i32_0 : i32, i32
  }
}

</mosaic_0001>

<llo_original>
// kernel: tpu_custom_call.1
$region0: #{tpu_custom_call.1}
  #allocation0 [shape = 'u32[]', space=smem, size = 0x4, offset = 0x4, fixed_abs, tag = 'smem constant byte address 0x4 - core index']
  #allocation1 [shape = 'u32[144,128]{1,0:T(1,128)}', space=vmem, size = 0x12000, scoped, tag = 'internal scratch']
  #allocation2 [shape = 'f32[1,1]{1,0:T(1,128)}', space=vmem, size = 0x200, scoped, tag = 'scratch operand']
  #allocation3 [shape = 'f32[1,1]{1,0:T(1,128)}', space=vmem, size = 0x200, scoped, tag = 'scratch operand']
  #allocation4 [shape = 'f32[1,512]{1,0:T(1,128)}', space=vmem, size = 0x800, scoped, tag = 'scratch operand']
  #allocation5 [shape = 'f32[1,1]{1,0:T(1,128)S(6)}', space=smem, size = 0x200, scoped, tag = 'scoped memory for tpu_custom_call.1']
  %s0 = inlined_call_operand.hbm [shape: bf16[768,1024], index: 0, kind: input, shape index: {}]
  %s1 = inlined_call_operand.hbm [shape: bf16[1024,512], index: 1, kind: input, shape index: {}]
  %s2 = inlined_call_operand.hbm [shape: f32[1,512], index: 2, kind: input, shape index: {}]
  %s3 = inlined_call_operand.hbm [shape: bf16[512,512], index: 3, kind: input, shape index: {}]
  %s4 = inlined_call_operand.hbm [shape: f32[1,512], index: 4, kind: input, shape index: {}]
  %s5 = inlined_call_operand.hbm [shape: bf16[512,768], index: 5, kind: input, shape index: {}]
  %s6 = inlined_call_operand.hbm [shape: f32[1,768], index: 6, kind: input, shape index: {}]
  %s7 = inlined_call_operand.hbm [shape: f32[1,384], index: 7, kind: input, shape index: {}]
  %s8 = inlined_call_operand.<no memory space> [shape: f32[1,1], index: 8, kind: input, shape index: {}]
  %s9 = inlined_call_operand.vmem [shape: f32[512,2], index: 9, kind: input, shape index: {}]
  %s10 = inlined_call_operand.hbm [shape: f32[1,2], index: 10, kind: input, shape index: {}]
  %s11 = inlined_call_operand.vmem [shape: f32[768,1], index: 11, kind: output, shape index: {0}]
  %s12 = inlined_call_operand.hbm [shape: f32[1,2], index: 12, kind: output, shape index: {1}]
  %s13 = inlined_call_operand.hbm [shape: f32[1,512], index: 13, kind: output, shape index: {2}]
  %14 = xla_tuple %s11, %s12, %s13
  %s15 = sld [smem:[#allocation0]]
  $region137: #{tpu_custom_call.1} parent=0
    _
  %s17 = ssub.s32 1, %s15
  %s18 = scalar_select 0, %s17, %s15
  %19 = sst [smem:[#allocation5]] %s8
  $region1: #{tpu_custom_call.1} parent=0
    #allocation6 [shape = 'u8[1048576]{0}', space=vmem, size = 0x100000, scoped, tag = 'input window, operand 0']
    #allocation7 [shape = 's32[2]{0}', space=sflag, size = 0x8, scoped, tag = 'scoped memory for tpu_custom_call.1']
    #allocation8 [shape = 's32[2]{0}', space=sflag, size = 0x8, scoped, tag = 'scoped memory for tpu_custom_call.1']
    #allocation9 [shape = 'u8[1048576]{0}', space=vmem, size = 0x100000, scoped, tag = 'input window, operand 1, single buffered']
    #allocation10 [shape = 's32[1]{0}', space=sflag, size = 0x4, scoped, tag = 'scoped memory for tpu_custom_call.1']
    #allocation11 [shape = 'u8[2048]{0}', space=vmem, size = 0x800, scoped, tag = 'input window, operand 2, single buffered']
    #allocation12 [shape = 'u8[524288]{0}', space=vmem, size = 0x80000, scoped, tag = 'input window, operand 3, single buffered']
    #allocation13 [shape = 's32[1]{0}', space=sflag, size = 0x4, scoped, tag = 'scoped memory for tpu_custom_call.1']
    #allocation14 [shape = 'u8[2048]{0}', space=vmem, size = 0x800, scoped, tag = 'input window, operand 4, single buffered']
    #allocation15 [shape = 'u8[786432]{0}', space=vmem, size = 0xc0000, scoped, tag = 'input window, operand 5, single buffered']
    #allocation16 [shape = 's32[1]{0}', space=sflag, size = 0x4, scoped, tag = 'scoped memory for tpu_custom_call.1']
    #allocation17 [shape = 'u8[3072]{0}', space=vmem, size = 0xc00, scoped, tag = 'input window, operand 6, single buffered']
    #allocation18 [shape = 'u8[1536]{0}', space=vmem, size = 0x800, scoped, tag = 'input window, operand 7, single buffered']
    #allocation19 [shape = 's32[1]{0}', space=sflag, size = 0x4, scoped, tag = 'scoped memory for tpu_custom_call.1']
    #allocation20 [shape = 'u8[512]{0}', space=vmem, size = 0x400, scoped, tag = 'input window, operand 10, single buffered']
    #allocation21 [shape = 'u8[512]{0}', space=vmem, size = 0x400, scoped, tag = 'output window, operand 1, single buffered']
    #allocation22 [shape = 'u8[2048]{0}', space=vmem, size = 0x800, scoped, tag = 'output window, operand 2, single buffered']
    #allocation23 [shape = 's32[1]{0}', space=sflag, size = 0x4, scoped, tag = 'scoped memory for tpu_custom_call.1']
    %20 = vsyncpa [#allocation7], 0
    %s21 = scalar_lea.sflag [#allocation7], 1
    %22 = vsyncpa %s21, 0
    %23 = vsyncpa [#allocation10], 0
    %24 = vsyncpa [#allocation13], 0
    %25 = vsyncpa [#allocation16], 0
    %26 = vsyncpa [#allocation19], 0
    %27 = vsyncpa [#allocation8], 0
    %28 = vsyncpa [#allocation23], 0
    loop: start=0, step=1, limit=5
    $region2: #{tpu_custom_call.1} parent=1 // loop_pre_header
      _
    $region3: #{tpu_custom_call.1} parent=1 // loop_header
      %s30 = sphi 0, %s34
      %p31 = scmp.ge.s32.totalorder %s30, 5
      %s40 = sphi 0, %s42
      %s43 = sphi 0, %s40
      %s44 = sphi 0, %s43
      %s60 = sphi 0, %s44
      %s64 = sphi 0, %s64
      %s66 = sphi 0, %s64
      %s67 = sphi 0, %s66
      %s81 = sphi 0, %s67
      %s85 = sphi 0, %s85
      %s87 = sphi 0, %s85
      %s88 = sphi 0, %s87
      %s102 = sphi 0, %s88
      %s106 = sphi 0, %s106
      %s108 = sphi 0, %s106
      %s109 = sphi 0, %s108
      %s123 = sphi 0, %s109
      %s127 = sphi 0, %s127
      %s129 = sphi 0, %s127
      %s130 = sphi 0, %s129
      %s144 = sphi 0, %s130
      %s148 = sphi 0, %s148
      %s150 = sphi 0, %s148
      %s151 = sphi 0, %s150
      %s165 = sphi 0, %s151
      %s169 = sphi 0, %s169
      %s171 = sphi 0, %s169
      %s172 = sphi 0, %s171
      %s186 = sphi 0, %s172
      %s190 = sphi 0, %s190
      %s192 = sphi 0, %s190
      %s193 = sphi 0, %s192
      %s207 = sphi 0, %s193
      %s211 = sphi 0, %s211
      %s213 = sphi 0, %s211
      %s214 = sphi 0, %s213
      %s228 = sphi 0, %s214
      %s232 = sphi 0, %s232
      %s234 = sphi 0, %s232
      %s235 = sphi 0, %s234
      %s249 = sphi 0, %s235
      %s253 = sphi 0, %s253
      %s255 = sphi 0, %s253
      %s256 = sphi 0, %s255
      %s270 = sphi 0, %s256
      %s276 = sphi 0, %s278
      %s279 = sphi 0, %s276
      %s280 = sphi 0, %s279
      %s296 = sphi 0, %s280
      %s300 = sphi 0, %s300
      %s302 = sphi 0, %s300
      %s303 = sphi 0, %s302
      %s317 = sphi 0, %s303
      %s321 = sphi 0, %s321
      %s323 = sphi 0, %s321
      %s324 = sphi 0, %s323
      %s338 = sphi 0, %s324
    $region4: #{tpu_custom_call.1} parent=1 // loop_header_branch
      %33 = sbr.rel (%p31) target = $region8
    $region5: #{tpu_custom_call.1} parent=1 // loop_body
      %s35 = ssub.s32 %s30, 1
      %s36 = ssub.s32 %s30, 2
      %s37 = sadd.s32 %s30, 1
      %s38 = ssub.s32 %s30, %s37
      %p39 = scmp.eq.s32.totalorder %s38, 0
      %s41 = sadd.s32 %s40, 1
      %s42 = scalar_select %p39, %s40, %s41
      %p45 = pneg %p39
      %p46 = scmp.eq.s32.totalorder %s30, 2
      %p47 = por %p45, %p46
      %p48 = scmp.ne.s32.totalorder %s40, %s43
      %p49 = scmp.eq.s32.totalorder %s30, 0
      %p50 = por %p48, %p49
      %p51 = scmp.ne.s32.totalorder %s40, %s43
      %p52 = scmp.eq.s32.totalorder %s35, 2
      %p53 = por %p51, %p52
      %p54 = scmp.ne.s32.totalorder %s43, %s44
      %p55 = scmp.eq.s32.totalorder %s35, 0
      %p56 = por %p54, %p55
      %p57 = scmp.ne.s32.totalorder %s43, %s44
      %p58 = scmp.eq.s32.totalorder %s36, 2
      %p59 = por %p57, %p58
      %p61 = scmp.ne.s32.totalorder %s44, %s60
      %p62 = scmp.eq.s32.totalorder %s36, 0
      %p63 = por %p61, %p62
      %s65 = sadd.s32 %s64, 1
      %p68 = scmp.eq.s32.totalorder %s30, 2
      %p69 = scmp.ne.s32.totalorder %s64, %s66
      %p70 = scmp.eq.s32.totalorder %s30, 0
      %p71 = por %p69, %p70
      %p72 = scmp.ne.s32.totalorder %s64, %s66
      %p73 = scmp.eq.s32.totalorder %s35, 2
      %p74 = por %p72, %p73
      %p75 = scmp.ne.s32.totalorder %s66, %s67
      %p76 = scmp.eq.s32.totalorder %s35, 0
      %p77 = por %p75, %p76
      %p78 = scmp.ne.s32.totalorder %s66, %s67
      %p79 = scmp.eq.s32.totalorder %s36, 2
      %p80 = por %p78, %p79
      %p82 = scmp.ne.s32.totalorder %s67, %s81
      %p83 = scmp.eq.s32.totalorder %s36, 0
      %p84 = por %p82, %p83
      %s86 = sadd.s32 %s85, 1
      %p89 = scmp.eq.s32.totalorder %s30, 2
      %p90 = scmp.ne.s32.totalorder %s85, %s87
      %p91 = scmp.eq.s32.totalorder %s30, 0
      %p92 = por %p90, %p91
      %p93 = scmp.ne.s32.totalorder %s85, %s87
      %p94 = scmp.eq.s32.totalorder %s35, 2
      %p95 = por %p93, %p94
      %p96 = scmp.ne.s32.totalorder %s87, %s88
      %p97 = scmp.eq.s32.totalorder %s35, 0
      %p98 = por %p96, %p97
      %p99 = scmp.ne.s32.totalorder %s87, %s88
      %p100 = scmp.eq.s32.totalorder %s36, 2
      %p101 = por %p99, %p100
      %p103 = scmp.ne.s32.totalorder %s88, %s102
      %p104 = scmp.eq.s32.totalorder %s36, 0
      %p105 = por %p103, %p104
      %s107 = sadd.s32 %s106, 1
      %p110 = scmp.eq.s32.totalorder %s30, 2
      %p111 = scmp.ne.s32.totalorder %s106, %s108
      %p112 = scmp.eq.s32.totalorder %s30, 0
      %p113 = por %p111, %p112
      %p114 = scmp.ne.s32.totalorder %s106, %s108
      %p115 = scmp.eq.s32.totalorder %s35, 2
      %p116 = por %p114, %p115
      %p117 = scmp.ne.s32.totalorder %s108, %s109
      %p118 = scmp.eq.s32.totalorder %s35, 0
      %p119 = por %p117, %p118
      %p120 = scmp.ne.s32.totalorder %s108, %s109
      %p121 = scmp.eq.s32.totalorder %s36, 2
      %p122 = por %p120, %p121
      %p124 = scmp.ne.s32.totalorder %s109, %s123
      %p125 = scmp.eq.s32.totalorder %s36, 0
      %p126 = por %p124, %p125
      %s128 = sadd.s32 %s127, 1
      %p131 = scmp.eq.s32.totalorder %s30, 2
      %p132 = scmp.ne.s32.totalorder %s127, %s129
      %p133 = scmp.eq.s32.totalorder %s30, 0
      %p134 = por %p132, %p133
      %p135 = scmp.ne.s32.totalorder %s127, %s129
      %p136 = scmp.eq.s32.totalorder %s35, 2
      %p137 = por %p135, %p136
      %p138 = scmp.ne.s32.totalorder %s129, %s130
      %p139 = scmp.eq.s32.totalorder %s35, 0
      %p140 = por %p138, %p139
      %p141 = scmp.ne.s32.totalorder %s129, %s130
      %p142 = scmp.eq.s32.totalorder %s36, 2
      %p143 = por %p141, %p142
      %p145 = scmp.ne.s32.totalorder %s130, %s144
      %p146 = scmp.eq.s32.totalorder %s36, 0
      %p147 = por %p145, %p146
      %s149 = sadd.s32 %s148, 1
      %p152 = scmp.eq.s32.totalorder %s30, 2
      %p153 = scmp.ne.s32.totalorder %s148, %s150
      %p154 = scmp.eq.s32.totalorder %s30, 0
      %p155 = por %p153, %p154
      %p156 = scmp.ne.s32.totalorder %s148, %s150
      %p157 = scmp.eq.s32.totalorder %s35, 2
      %p158 = por %p156, %p157
      %p159 = scmp.ne.s32.totalorder %s150, %s151
      %p160 = scmp.eq.s32.totalorder %s35, 0
      %p161 = por %p159, %p160
      %p162 = scmp.ne.s32.totalorder %s150, %s151
      %p163 = scmp.eq.s32.totalorder %s36, 2
      %p164 = por %p162, %p163
      %p166 = scmp.ne.s32.totalorder %s151, %s165
      %p167 = scmp.eq.s32.totalorder %s36, 0
      %p168 = por %p166, %p167
      %s170 = sadd.s32 %s169, 1
      %p173 = scmp.eq.s32.totalorder %s30, 2
      %p174 = scmp.ne.s32.totalorder %s169, %s171
      %p175 = scmp.eq.s32.totalorder %s30, 0
      %p176 = por %p174, %p175
      %p177 = scmp.ne.s32.totalorder %s169, %s171
      %p178 = scmp.eq.s32.totalorder %s35, 2
      %p179 = por %p177, %p178
      %p180 = scmp.ne.s32.totalorder %s171, %s172
      %p181 = scmp.eq.s32.totalorder %s35, 0
      %p182 = por %p180, %p181
      %p183 = scmp.ne.s32.totalorder %s171, %s172
      %p184 = scmp.eq.s32.totalorder %s36, 2
      %p185 = por %p183, %p184
      %p187 = scmp.ne.s32.totalorder %s172, %s186
      %p188 = scmp.eq.s32.totalorder %s36, 0
      %p189 = por %p187, %p188
      %s191 = sadd.s32 %s190, 1
      %p194 = scmp.eq.s32.totalorder %s30, 2
      %p195 = scmp.ne.s32.totalorder %s190, %s192
      %p196 = scmp.eq.s32.totalorder %s30, 0
      %p197 = por %p195, %p196
      %p198 = scmp.ne.s32.totalorder %s190, %s192
      %p199 = scmp.eq.s32.totalorder %s35, 2
      %p200 = por %p198, %p199
      %p201 = scmp.ne.s32.totalorder %s192, %s193
      %p202 = scmp.eq.s32.totalorder %s35, 0
      %p203 = por %p201, %p202
      %p204 = scmp.ne.s32.totalorder %s192, %s193
      %p205 = scmp.eq.s32.totalorder %s36, 2
      %p206 = por %p204, %p205
      %p208 = scmp.ne.s32.totalorder %s193, %s207
      %p209 = scmp.eq.s32.totalorder %s36, 0
      %p210 = por %p208, %p209
      %s212 = sadd.s32 %s211, 1
      %p215 = scmp.eq.s32.totalorder %s30, 2
      %p216 = scmp.ne.s32.totalorder %s211, %s213
      %p217 = scmp.eq.s32.totalorder %s30, 0
      %p218 = por %p216, %p217
      %p219 = scmp.ne.s32.totalorder %s211, %s213
      %p220 = scmp.eq.s32.totalorder %s35, 2
      %p221 = por %p219, %p220
      %p222 = scmp.ne.s32.totalorder %s213, %s214
      %p223 = scmp.eq.s32.totalorder %s35, 0
      %p224 = por %p222, %p223
      %p225 = scmp.ne.s32.totalorder %s213, %s214
      %p226 = scmp.eq.s32.totalorder %s36, 2
      %p227 = por %p225, %p226
      %p229 = scmp.ne.s32.totalorder %s214, %s228
      %p230 = scmp.eq.s32.totalorder %s36, 0
      %p231 = por %p229, %p230
      %s233 = sadd.s32 %s232, 1
      %p236 = scmp.eq.s32.totalorder %s30, 2
      %p237 = scmp.ne.s32.totalorder %s232, %s234
      %p238 = scmp.eq.s32.totalorder %s30, 0
      %p239 = por %p237, %p238
      %p240 = scmp.ne.s32.totalorder %s232, %s234
      %p241 = scmp.eq.s32.totalorder %s35, 2
      %p242 = por %p240, %p241
      %p243 = scmp.ne.s32.totalorder %s234, %s235
      %p244 = scmp.eq.s32.totalorder %s35, 0
      %p245 = por %p243, %p244
      %p246 = scmp.ne.s32.totalorder %s234, %s235
      %p247 = scmp.eq.s32.totalorder %s36, 2
      %p248 = por %p246, %p247
      %p250 = scmp.ne.s32.totalorder %s235, %s249
      %p251 = scmp.eq.s32.totalorder %s36, 0
      %p252 = por %p250, %p251
      %s254 = sadd.s32 %s253, 1
      %p257 = scmp.eq.s32.totalorder %s30, 2
      %p258 = scmp.ne.s32.totalorder %s253, %s255
      %p259 = scmp.eq.s32.totalorder %s30, 0
      %p260 = por %p258, %p259
      %p261 = scmp.ne.s32.totalorder %s253, %s255
      %p262 = scmp.eq.s32.totalorder %s35, 2
      %p263 = por %p261, %p262
      %p264 = scmp.ne.s32.totalorder %s255, %s256
      %p265 = scmp.eq.s32.totalorder %s35, 0
      %p266 = por %p264, %p265
      %p267 = scmp.ne.s32.totalorder %s255, %s256
      %p268 = scmp.eq.s32.totalorder %s36, 2
      %p269 = por %p267, %p268
      %p271 = scmp.ne.s32.totalorder %s256, %s270
      %p272 = scmp.eq.s32.totalorder %s36, 0
      %p273 = por %p271, %p272
      %s274 = ssub.s32 %s30, %s37
      %p275 = scmp.eq.s32.totalorder %s274, 0
      %s277 = sadd.s32 %s276, 1
      %s278 = scalar_select %p275, %s276, %s277
      %p281 = pneg %p275
      %p282 = scmp.eq.s32.totalorder %s30, 2
      %p283 = por %p281, %p282
      %p284 = scmp.ne.s32.totalorder %s276, %s279
      %p285 = scmp.eq.s32.totalorder %s30, 0
      %p286 = por %p284, %p285
      %p287 = scmp.ne.s32.totalorder %s276, %s279
      %p288 = scmp.eq.s32.totalorder %s35, 2
      %p289 = por %p287, %p288
      %p290 = scmp.ne.s32.totalorder %s279, %s280
      %p291 = scmp.eq.s32.totalorder %s35, 0
      %p292 = por %p290, %p291
      %p293 = scmp.ne.s32.totalorder %s279, %s280
      %p294 = scmp.eq.s32.totalorder %s36, 2
      %p295 = por %p293, %p294
      %p297 = scmp.ne.s32.totalorder %s280, %s296
      %p298 = scmp.eq.s32.totalorder %s36, 0
      %p299 = por %p297, %p298
      %s301 = sadd.s32 %s300, 1
      %p304 = scmp.eq.s32.totalorder %s30, 2
      %p305 = scmp.ne.s32.totalorder %s300, %s302
      %p306 = scmp.eq.s32.totalorder %s30, 0
      %p307 = por %p305, %p306
      %p308 = scmp.ne.s32.totalorder %s300, %s302
      %p309 = scmp.eq.s32.totalorder %s35, 2
      %p310 = por %p308, %p309
      %p311 = scmp.ne.s32.totalorder %s302, %s303
      %p312 = scmp.eq.s32.totalorder %s35, 0
      %p313 = por %p311, %p312
      %p314 = scmp.ne.s32.totalorder %s302, %s303
      %p315 = scmp.eq.s32.totalorder %s36, 2
      %p316 = por %p314, %p315
      %p318 = scmp.ne.s32.totalorder %s303, %s317
      %p319 = scmp.eq.s32.totalorder %s36, 0
      %p320 = por %p318, %p319
      %s322 = sadd.s32 %s321, 1
      %p325 = scmp.eq.s32.totalorder %s30, 2
      %p326 = scmp.ne.s32.totalorder %s321, %s323
      %p327 = scmp.eq.s32.totalorder %s30, 0
      %p328 = por %p326, %p327
      %p329 = scmp.ne.s32.totalorder %s321, %s323
      %p330 = scmp.eq.s32.totalorder %s35, 2
      %p331 = por %p329, %p330
      %p332 = scmp.ne.s32.totalorder %s323, %s324
      %p333 = scmp.eq.s32.totalorder %s35, 0
      %p334 = por %p332, %p333
      %p335 = scmp.ne.s32.totalorder %s323, %s324
      %p336 = scmp.eq.s32.totalorder %s36, 2
      %p337 = por %p335, %p336
      %p339 = scmp.ne.s32.totalorder %s324, %s338
      %p340 = scmp.eq.s32.totalorder %s36, 0
      %p341 = por %p339, %p340
      %p342 = scmp.le.s32.totalorder 1, %s30
      %p343 = scmp.lt.s32.totalorder %s30, 4
      %p344 = pnand %p342, %p343
      %p345 = pneg %p344
      // Predicated region
      $region9: #{tpu_custom_call.1} parent=5 // pred_check
        _
      $region10: #{tpu_custom_call.1} parent=5 // pred_check_branch
        %347 = sbr.rel (%p344) target = $region12
      $region11: #{tpu_custom_call.1} parent=5 // pred_region
        %s348 = ssub.s32 %s30, 1
        // Predicated region
        $region13: #{tpu_custom_call.1} parent=11 // pred_check
          %p349 = pneg %p77
        $region14: #{tpu_custom_call.1} parent=11 // pred_check_branch
          %351 = sbr.rel (%p349) target = $region16
        $region15: #{tpu_custom_call.1} parent=11 // pred_region
          %s353 = ssub.s32 32768, 32768
          %354 = vsyncadd [#allocation10], %s353
          %s355 = sshll.u32 [#allocation9], 4
          %s356 = int_to_ptr.vmem [resolvable:$true] %s355
          %361 = dma.hbm_to_vmem [thread:$0]  %s1, 32768, %s356, [#allocation10], 256, 256, 16
        $region16: #{tpu_custom_call.1} parent=11 // pred_fallthru
          _
        // Predicated region
        $region17: #{tpu_custom_call.1} parent=11 // pred_check
          %p362 = pneg %p98
        $region18: #{tpu_custom_call.1} parent=11 // pred_check_branch
          %364 = sbr.rel (%p362) target = $region20
        $region19: #{tpu_custom_call.1} parent=11 // pred_region
          %s366 = ssub.s32 64, 64
          %367 = vsyncadd [#allocation10], %s366
          %s369 = sshll.u32 [#allocation11], 4
          %s370 = int_to_ptr.vmem [resolvable:$true] %s369
          %372 = dma.hbm_to_vmem [thread:$0]  %s2, 64, %s370, [#allocation10]
        $region20: #{tpu_custom_call.1} parent=11 // pred_fallthru
          _
        // Predicated region
        $region21: #{tpu_custom_call.1} parent=11 // pred_check
          %p373 = pneg %p119
        $region22: #{tpu_custom_call.1} parent=11 // pred_check_branch
          %375 = sbr.rel (%p373) target = $region24
        $region23: #{tpu_custom_call.1} parent=11 // pred_region
          %s377 = ssub.s32 16384, 16384
          %378 = vsyncadd [#allocation13], %s377
          %s379 = sshll.u32 [#allocation12], 4
          %s380 = int_to_ptr.vmem [resolvable:$true] %s379
          %385 = dma.hbm_to_vmem [thread:$0]  %s3, 16384, %s380, [#allocation13], 256, 256, 16
        $region24: #{tpu_custom_call.1} parent=11 // pred_fallthru
          _
        // Predicated region
        $region25: #{tpu_custom_call.1} parent=11 // pred_check
          %p386 = pneg %p140
        $region26: #{tpu_custom_call.1} parent=11 // pred_check_branch
          %388 = sbr.rel (%p386) target = $region28
        $region27: #{tpu_custom_call.1} parent=11 // pred_region
          %s390 = ssub.s32 64, 64
          %391 = vsyncadd [#allocation13], %s390
          %s393 = sshll.u32 [#allocation14], 4
          %s394 = int_to_ptr.vmem [resolvable:$true] %s393
          %396 = dma.hbm_to_vmem [thread:$0]  %s4, 64, %s394, [#allocation13]
        $region28: #{tpu_custom_call.1} parent=11 // pred_fallthru
          _
        // Predicated region
        $region29: #{tpu_custom_call.1} parent=11 // pred_check
          %p397 = pneg %p161
        $region30: #{tpu_custom_call.1} parent=11 // pred_check_branch
          %399 = sbr.rel (%p397) target = $region32
        $region31: #{tpu_custom_call.1} parent=11 // pred_region
          %s401 = ssub.s32 24576, 24576
          %402 = vsyncadd [#allocation16], %s401
          %s403 = sshll.u32 [#allocation15], 4
          %s404 = int_to_ptr.vmem [resolvable:$true] %s403
          %409 = dma.hbm_to_vmem [thread:$0]  %s5, 24576, %s404, [#allocation16], 384, 384, 24
        $region32: #{tpu_custom_call.1} parent=11 // pred_fallthru
          _
        // Predicated region
        $region33: #{tpu_custom_call.1} parent=11 // pred_check
          %p410 = pneg %p182
        $region34: #{tpu_custom_call.1} parent=11 // pred_check_branch
          %412 = sbr.rel (%p410) target = $region36
        $region35: #{tpu_custom_call.1} parent=11 // pred_region
          %s414 = ssub.s32 96, 96
          %415 = vsyncadd [#allocation16], %s414
          %s417 = sshll.u32 [#allocation17], 4
          %s418 = int_to_ptr.vmem [resolvable:$true] %s417
          %420 = dma.hbm_to_vmem [thread:$0]  %s6, 96, %s418, [#allocation16]
        $region36: #{tpu_custom_call.1} parent=11 // pred_fallthru
          _
        // Predicated region
        $region37: #{tpu_custom_call.1} parent=11 // pred_check
          %p421 = pneg %p203
        $region38: #{tpu_custom_call.1} parent=11 // pred_check_branch
          %423 = sbr.rel (%p421) target = $region40
        $region39: #{tpu_custom_call.1} parent=11 // pred_region
          %s425 = ssub.s32 48, 48
          %426 = vsyncadd [#allocation19], %s425
          %s428 = sshll.u32 [#allocation18], 4
          %s429 = int_to_ptr.vmem [resolvable:$true] %s428
          %431 = dma.hbm_to_vmem [thread:$0]  %s7, 48, %s429, [#allocation19]
        $region40: #{tpu_custom_call.1} parent=11 // pred_fallthru
          _
        // Predicated region
        $region41: #{tpu_custom_call.1} parent=11 // pred_check
          %p432 = pneg %p224
        $region42: #{tpu_custom_call.1} parent=11 // pred_check_branch
          %434 = sbr.rel (%p432) target = $region44
        $region43: #{tpu_custom_call.1} parent=11 // pred_region
          _
        $region44: #{tpu_custom_call.1} parent=11 // pred_fallthru
          _
        // Predicated region
        $region45: #{tpu_custom_call.1} parent=11 // pred_check
          %p435 = pneg %p245
        $region46: #{tpu_custom_call.1} parent=11 // pred_check_branch
          %437 = sbr.rel (%p435) target = $region48
        $region47: #{tpu_custom_call.1} parent=11 // pred_region
          _
        $region48: #{tpu_custom_call.1} parent=11 // pred_fallthru
          _
        // Predicated region
        $region49: #{tpu_custom_call.1} parent=11 // pred_check
          %p438 = pneg %p266
        $region50: #{tpu_custom_call.1} parent=11 // pred_check_branch
          %440 = sbr.rel (%p438) target = $region52
        $region51: #{tpu_custom_call.1} parent=11 // pred_region
          %s442 = ssub.s32 16, 16
          %443 = vsyncadd [#allocation19], %s442
          %s445 = sshll.u32 [#allocation20], 4
          %s446 = int_to_ptr.vmem [resolvable:$true] %s445
          %448 = dma.hbm_to_vmem [thread:$0]  %s10, 16, %s446, [#allocation19]
        $region52: #{tpu_custom_call.1} parent=11 // pred_fallthru
          _
      $region12: #{tpu_custom_call.1} parent=5 // pred_fallthru
        _
      %p449 = scmp.lt.s32.totalorder %s30, 3
      // Predicated region
      $region53: #{tpu_custom_call.1} parent=5 // pred_check
        %p450 = pneg %p449
      $region54: #{tpu_custom_call.1} parent=5 // pred_check_branch
        %452 = sbr.rel (%p450) target = $region56
      $region55: #{tpu_custom_call.1} parent=5 // pred_region
        // Predicated region
        $region57: #{tpu_custom_call.1} parent=55 // pred_check
          %p453 = pneg %p50
        $region58: #{tpu_custom_call.1} parent=55 // pred_check_branch
          %455 = sbr.rel (%p453) target = $region60
        $region59: #{tpu_custom_call.1} parent=55 // pred_region
          %s456 = sand.u32 %s40, 1
          %s457 = scalar_lea.sflag [#allocation7], %s456
          %s458 = sand.u32 %s40, 1
          %s459 = smul.addr %s458, 1024
          %s460 = scalar_lea.vmem [#allocation6], %s459
          %s461 = smul.u32 32, %s30
          %s463 = ssub.s32 16384, 16384
          %464 = vsyncadd %s457, %s463
          %s465 = smul.addr %s461, 8
          %s466 = smul.addr %s465, 64
          %s467 = scalar_lea.hbm %s0, %s466
          %s468 = sshll.u32 %s460, 4
          %s469 = int_to_ptr.vmem [resolvable:$true] %s468
          %474 = dma.hbm_to_vmem [thread:$0]  %s467, 16384, %s469, %s457, 512, 512, 32
        $region60: #{tpu_custom_call.1} parent=55 // pred_fallthru
          _
      $region56: #{tpu_custom_call.1} parent=5 // pred_fallthru
        _
      %p475 = scmp.le.s32.totalorder 1, %s30
      %p476 = scmp.lt.s32.totalorder %s30, 4
      %p477 = pnand %p475, %p476
      %p478 = pneg %p477
      // Predicated region
      $region61: #{tpu_custom_call.1} parent=5 // pred_check
        _
      $region62: #{tpu_custom_call.1} parent=5 // pred_check_branch
        %480 = sbr.rel (%p477) target = $region64
      $region63: #{tpu_custom_call.1} parent=5 // pred_region
        %s481 = ssub.s32 %s30, 1
        %s482 = sand.u32 %s43, 1
        %s483 = scalar_lea.sflag [#allocation7], %s482
        %s484 = sand.u32 %s43, 1
        %s485 = smul.addr %s484, 1024
        %s486 = scalar_lea.vmem [#allocation6], %s485
        // Predicated region
        $region65: #{tpu_custom_call.1} parent=63 // pred_check
          %p487 = pneg %p56
        $region66: #{tpu_custom_call.1} parent=63 // pred_check_branch
          %489 = sbr.rel (%p487) target = $region68
        $region67: #{tpu_custom_call.1} parent=63 // pred_region
          %490 = dma.done %s483, 16384
        $region68: #{tpu_custom_call.1} parent=63 // pred_fallthru
          _
        // Predicated region
        $region69: #{tpu_custom_call.1} parent=63 // pred_check
          %p491 = pneg %p77
        $region70: #{tpu_custom_call.1} parent=63 // pred_check_branch
          %493 = sbr.rel (%p491) target = $region72
        $region71: #{tpu_custom_call.1} parent=63 // pred_region
          %494 = dma.done [#allocation10], 32768
        $region72: #{tpu_custom_call.1} parent=63 // pred_fallthru
          _
        // Predicated region
        $region73: #{tpu_custom_call.1} parent=63 // pred_check
          %p495 = pneg %p98
        $region74: #{tpu_custom_call.1} parent=63 // pred_check_branch
          %497 = sbr.rel (%p495) target = $region76
        $region75: #{tpu_custom_call.1} parent=63 // pred_region
          %498 = dma.done [#allocation10], 64
        $region76: #{tpu_custom_call.1} parent=63 // pred_fallthru
          _
        // Predicated region
        $region77: #{tpu_custom_call.1} parent=63 // pred_check
          %p499 = pneg %p119
        $region78: #{tpu_custom_call.1} parent=63 // pred_check_branch
          %501 = sbr.rel (%p499) target = $region80
        $region79: #{tpu_custom_call.1} parent=63 // pred_region
          %502 = dma.done [#allocation13], 16384
        $region80: #{tpu_custom_call.1} parent=63 // pred_fallthru
          _
        // Predicated region
        $region81: #{tpu_custom_call.1} parent=63 // pred_check
          %p503 = pneg %p140
        $region82: #{tpu_custom_call.1} parent=63 // pred_check_branch
          %505 = sbr.rel (%p503) target = $region84
        $region83: #{tpu_custom_call.1} parent=63 // pred_region
          %506 = dma.done [#allocation13], 64
        $region84: #{tpu_custom_call.1} parent=63 // pred_fallthru
          _
        // Predicated region
        $region85: #{tpu_custom_call.1} parent=63 // pred_check
          %p507 = pneg %p161
        $region86: #{tpu_custom_call.1} parent=63 // pred_check_branch
          %509 = sbr.rel (%p507) target = $region88
        $region87: #{tpu_custom_call.1} parent=63 // pred_region
          %510 = dma.done [#allocation16], 24576
        $region88: #{tpu_custom_call.1} parent=63 // pred_fallthru
          _
        // Predicated region
        $region89: #{tpu_custom_call.1} parent=63 // pred_check
          %p511 = pneg %p182
        $region90: #{tpu_custom_call.1} parent=63 // pred_check_branch
          %513 = sbr.rel (%p511) target = $region92
        $region91: #{tpu_custom_call.1} parent=63 // pred_region
          %514 = dma.done [#allocation16], 96
        $region92: #{tpu_custom_call.1} parent=63 // pred_fallthru
          _
        // Predicated region
        $region93: #{tpu_custom_call.1} parent=63 // pred_check
          %p515 = pneg %p203
        $region94: #{tpu_custom_call.1} parent=63 // pred_check_branch
          %517 = sbr.rel (%p515) target = $region96
        $region95: #{tpu_custom_call.1} parent=63 // pred_region
          %518 = dma.done [#allocation19], 48
        $region96: #{tpu_custom_call.1} parent=63 // pred_fallthru
          _
        // Predicated region
        $region97: #{tpu_custom_call.1} parent=63 // pred_check
          %p519 = pneg %p266
        $region98: #{tpu_custom_call.1} parent=63 // pred_check_branch
          %521 = sbr.rel (%p519) target = $region100
        $region99: #{tpu_custom_call.1} parent=63 // pred_region
          %522 = dma.done [#allocation19], 16
        $region100: #{tpu_custom_call.1} parent=63 // pred_fallthru
          _
        %s523 = sand.u32 %s43, 1
        %s524 = scalar_lea.sflag [#allocation7], %s523
        %s525 = sand.u32 %s43, 1
        %s526 = smul.addr %s525, 1024
        %s527 = scalar_lea.vmem [#allocation6], %s526
        %p528 = pneg %p56
        %p529 = pneg %p53
        %p530 = pneg %p77
        %p531 = pneg %p74
        %p532 = pneg %p98
        %p533 = pneg %p95
        %p534 = pneg %p119
        %p535 = pneg %p116
        %p536 = pneg %p140
        %p537 = pneg %p137
        %p538 = pneg %p161
        %p539 = pneg %p158
        %p540 = pneg %p182
        %p541 = pneg %p179
        %p542 = pneg %p203
        %p543 = pneg %p200
        %p544 = pneg %p224
        %p545 = pneg %p221
        %p546 = pneg %p245
        %p547 = pneg %p242
        %p548 = pneg %p266
        %p549 = pneg %p263
        %p550 = pneg %p292
        %p551 = pneg %p289
        %s552 = smul.u32 32, %s35
        %p553 = scmp.lt.s32.totalorder %s552, 95
        %s554 = scalar_select %p553, %s552, 95
        %s555 = smul.addr %s554, 8
        %s556 = scalar_lea.vmem %s11, %s555
        %p557 = pneg %p313
        %p558 = pneg %p310
        %p559 = pneg %p334
        %p560 = pneg %p331
        %s561 = smul.u32 32, %s35
        %s562 = smul.u32 32, %s35
        %p563 = scmp.lt.s32.totalorder %s562, 95
        %s564 = scalar_select %p563, %s562, 95
        %s565 = smul.addr %s564, 8
        %s566 = scalar_lea.vmem %s11, %s565
        %s567 = smul.u32 32, %s35
        %p568 = scmp.eq.s32.totalorder %s35, 0
        // Predicated region
        $region101: #{tpu_custom_call.1} parent=63 // pred_check
          %p569 = pneg %p568
        $region102: #{tpu_custom_call.1} parent=63 // pred_check_branch
          %571 = sbr.rel (%p569) target = $region104
        $region103: #{tpu_custom_call.1} parent=63 // pred_region
          %vm572 = vcmask 0
          %573 = vst.msk [vmem:[#allocation2] sm:$0x1] %vm572, -1e+30
          %574 = vst.msk [vmem:[#allocation3] sm:$0x1] %vm572, 0.0
          %v575 = vlaneseq
          %vm576 = vcmp.ge.s32.totalorder %v575, 0
          %vm577 = vcmp.lt.s32.totalorder %v575, 512
          %vm578 = vmand %vm576, %vm577
          %579 = vst.msk [vmem:[#allocation4] sm:$0xf] %vm578, 0.0
        $region104: #{tpu_custom_call.1} parent=63 // pred_fallthru
          _
        %v580 = vld [vmem:[%s486] sm:$0xff]
        %v581 = vld [vmem:[%s486 + $0x8] sm:$0xff]
        %v582 = vld [vmem:[%s486 + $0x10] sm:$0xff]
        %v583 = vld [vmem:[%s486 + $0x18] sm:$0xff]
        %v584 = vld [vmem:[%s486 + $0x20] sm:$0xff]
        %v585 = vld [vmem:[%s486 + $0x28] sm:$0xff]
        %v586 = vld [vmem:[%s486 + $0x30] sm:$0xff]
        %v587 = vld [vmem:[%s486 + $0x38] sm:$0xff]
        %v588 = vld [vmem:[%s486 + $0x40] sm:$0xff]
        %v589 = vld [vmem:[%s486 + $0x48] sm:$0xff]
        %v590 = vld [vmem:[%s486 + $0x50] sm:$0xff]
        %v591 = vld [vmem:[%s486 + $0x58] sm:$0xff]
        %v592 = vld [vmem:[%s486 + $0x60] sm:$0xff]
        %v593 = vld [vmem:[%s486 + $0x68] sm:$0xff]
        %v594 = vld [vmem:[%s486 + $0x70] sm:$0xff]
        %v595 = vld [vmem:[%s486 + $0x78] sm:$0xff]
        %v596 = vld [vmem:[%s486 + $0x80] sm:$0xff]
        %v597 = vld [vmem:[%s486 + $0x88] sm:$0xff]
        %v598 = vld [vmem:[%s486 + $0x90] sm:$0xff]
        %v599 = vld [vmem:[%s486 + $0x98] sm:$0xff]
        %v600 = vld [vmem:[%s486 + $0xa0] sm:$0xff]
        %v601 = vld [vmem:[%s486 + $0xa8] sm:$0xff]
        %v602 = vld [vmem:[%s486 + $0xb0] sm:$0xff]
        %v603 = vld [vmem:[%s486 + $0xb8] sm:$0xff]
        %v604 = vld [vmem:[%s486 + $0xc0] sm:$0xff]
        %v605 = vld [vmem:[%s486 + $0xc8] sm:$0xff]
        %v606 = vld [vmem:[%s486 + $0xd0] sm:$0xff]
        %v607 = vld [vmem:[%s486 + $0xd8] sm:$0xff]
        %v608 = vld [vmem:[%s486 + $0xe0] sm:$0xff]
        %v609 = vld [vmem:[%s486 + $0xe8] sm:$0xff]
        %v610 = vld [vmem:[%s486 + $0xf0] sm:$0xff]
        %v611 = vld [vmem:[%s486 + $0xf8] sm:$0xff]
        %v612 = vld [vmem:[%s486 + $0x100] sm:$0xff]
        %v613 = vld [vmem:[%s486 + $0x108] sm:$0xff]
        %v614 = vld [vmem:[%s486 + $0x110] sm:$0xff]
        %v615 = vld [vmem:[%s486 + $0x118] sm:$0xff]
        %v616 = vld [vmem:[%s486 + $0x120] sm:$0xff]
        %v617 = vld [vmem:[%s486 + $0x128] sm:$0xff]
        %v618 = vld [vmem:[%s486 + $0x130] sm:$0xff]
        %v619 = vld [vmem:[%s486 + $0x138] sm:$0xff]
        %v620 = vld [vmem:[%s486 + $0x140] sm:$0xff]
        %v621 = vld [vmem:[%s486 + $0x148] sm:$0xff]
        %v622 = vld [vmem:[%s486 + $0x150] sm:$0xff]
        %v623 = vld [vmem:[%s486 + $0x158] sm:$0xff]
        %v624 = vld [vmem:[%s486 + $0x160] sm:$0xff]
        %v625 = vld [vmem:[%s486 + $0x168] sm:$0xff]
        %v626 = vld [vmem:[%s486 + $0x170] sm:$0xff]
        %v627 = vld [vmem:[%s486 + $0x178] sm:$0xff]
        %v628 = vld [vmem:[%s486 + $0x180] sm:$0xff]
        %v629 = vld [vmem:[%s486 + $0x188] sm:$0xff]
        %v630 = vld [vmem:[%s486 + $0x190] sm:$0xff]
        %v631 = vld [vmem:[%s486 + $0x198] sm:$0xff]
        %v632 = vld [vmem:[%s486 + $0x1a0] sm:$0xff]
        %v633 = vld [vmem:[%s486 + $0x1a8] sm:$0xff]
        %v634 = vld [vmem:[%s486 + $0x1b0] sm:$0xff]
        %v635 = vld [vmem:[%s486 + $0x1b8] sm:$0xff]
        %v636 = vld [vmem:[%s486 + $0x1c0] sm:$0xff]
        %v637 = vld [vmem:[%s486 + $0x1c8] sm:$0xff]
        %v638 = vld [vmem:[%s486 + $0x1d0] sm:$0xff]
        %v639 = vld [vmem:[%s486 + $0x1d8] sm:$0xff]
        %v640 = vld [vmem:[%s486 + $0x1e0] sm:$0xff]
        %v641 = vld [vmem:[%s486 + $0x1e8] sm:$0xff]
        %v642 = vld [vmem:[%s486 + $0x1f0] sm:$0xff]
        %v643 = vld [vmem:[%s486 + $0x1f8] sm:$0xff]
        %v644 = vld [vmem:[%s486 + $0x200] sm:$0xff]
        %v645 = vld [vmem:[%s486 + $0x208] sm:$0xff]
        %v646 = vld [vmem:[%s486 + $0x210] sm:$0xff]
        %v647 = vld [vmem:[%s486 + $0x218] sm:$0xff]
        %v648 = vld [vmem:[%s486 + $0x220] sm:$0xff]
        %v649 = vld [vmem:[%s486 + $0x228] sm:$0xff]
        %v650 = vld [vmem:[%s486 + $0x230] sm:$0xff]
        %v651 = vld [vmem:[%s486 + $0x238] sm:$0xff]
        %v652 = vld [vmem:[%s486 + $0x240] sm:$0xff]
        %v653 = vld [vmem:[%s486 + $0x248] sm:$0xff]
        %v654 = vld [vmem:[%s486 + $0x250] sm:$0xff]
        %v655 = vld [vmem:[%s486 + $0x258] sm:$0xff]
        %v656 = vld [vmem:[%s486 + $0x260] sm:$0xff]
        %v657 = vld [vmem:[%s486 + $0x268] sm:$0xff]
        %v658 = vld [vmem:[%s486 + $0x270] sm:$0xff]
        %v659 = vld [vmem:[%s486 + $0x278] sm:$0xff]
        %v660 = vld [vmem:[%s486 + $0x280] sm:$0xff]
        %v661 = vld [vmem:[%s486 + $0x288] sm:$0xff]
        %v662 = vld [vmem:[%s486 + $0x290] sm:$0xff]
        %v663 = vld [vmem:[%s486 + $0x298] sm:$0xff]
        %v664 = vld [vmem:[%s486 + $0x2a0] sm:$0xff]
        %v665 = vld [vmem:[%s486 + $0x2a8] sm:$0xff]
        %v666 = vld [vmem:[%s486 + $0x2b0] sm:$0xff]
        %v667 = vld [vmem:[%s486 + $0x2b8] sm:$0xff]
        %v668 = vld [vmem:[%s486 + $0x2c0] sm:$0xff]
        %v669 = vld [vmem:[%s486 + $0x2c8] sm:$0xff]
        %v670 = vld [vmem:[%s486 + $0x2d0] sm:$0xff]
        %v671 = vld [vmem:[%s486 + $0x2d8] sm:$0xff]
        %v672 = vld [vmem:[%s486 + $0x2e0] sm:$0xff]
        %v673 = vld [vmem:[%s486 + $0x2e8] sm:$0xff]
        %v674 = vld [vmem:[%s486 + $0x2f0] sm:$0xff]
        %v675 = vld [vmem:[%s486 + $0x2f8] sm:$0xff]
        %v676 = vld [vmem:[%s486 + $0x300] sm:$0xff]
        %v677 = vld [vmem:[%s486 + $0x308] sm:$0xff]
        %v678 = vld [vmem:[%s486 + $0x310] sm:$0xff]
        %v679 = vld [vmem:[%s486 + $0x318] sm:$0xff]
        %v680 = vld [vmem:[%s486 + $0x320] sm:$0xff]
        %v681 = vld [vmem:[%s486 + $0x328] sm:$0xff]
        %v682 = vld [vmem:[%s486 + $0x330] sm:$0xff]
        %v683 = vld [vmem:[%s486 + $0x338] sm:$0xff]
        %v684 = vld [vmem:[%s486 + $0x340] sm:$0xff]
        %v685 = vld [vmem:[%s486 + $0x348] sm:$0xff]
        %v686 = vld [vmem:[%s486 + $0x350] sm:$0xff]
        %v687 = vld [vmem:[%s486 + $0x358] sm:$0xff]
        %v688 = vld [vmem:[%s486 + $0x360] sm:$0xff]
        %v689 = vld [vmem:[%s486 + $0x368] sm:$0xff]
        %v690 = vld [vmem:[%s486 + $0x370] sm:$0xff]
        %v691 = vld [vmem:[%s486 + $0x378] sm:$0xff]
        %v692 = vld [vmem:[%s486 + $0x380] sm:$0xff]
        %v693 = vld [vmem:[%s486 + $0x388] sm:$0xff]
        %v694 = vld [vmem:[%s486 + $0x390] sm:$0xff]
        %v695 = vld [vmem:[%s486 + $0x398] sm:$0xff]
        %v696 = vld [vmem:[%s486 + $0x3a0] sm:$0xff]
        %v697 = vld [vmem:[%s486 + $0x3a8] sm:$0xff]
        %v698 = vld [vmem:[%s486 + $0x3b0] sm:$0xff]
        %v699 = vld [vmem:[%s486 + $0x3b8] sm:$0xff]
        %v700 = vld [vmem:[%s486 + $0x3c0] sm:$0xff]
        %v701 = vld [vmem:[%s486 + $0x3c8] sm:$0xff]
        %v702 = vld [vmem:[%s486 + $0x3d0] sm:$0xff]
        %v703 = vld [vmem:[%s486 + $0x3d8] sm:$0xff]
        %v704 = vld [vmem:[%s486 + $0x3e0] sm:$0xff]
        %v705 = vld [vmem:[%s486 + $0x3e8] sm:$0xff]
        %v706 = vld [vmem:[%s486 + $0x3f0] sm:$0xff]
        %v707 = vld [vmem:[%s486 + $0x3f8] sm:$0xff]
        %v708 = vld [vmem:[#allocation9] sm:$0xff]
        %v709 = vld [vmem:[#allocation9 + $0x8] sm:$0xff]
        %v710 = vld [vmem:[#allocation9 + $0x10] sm:$0xff]
        %v711 = vld [vmem:[#allocation9 + $0x18] sm:$0xff]
        %v712 = vld [vmem:[#allocation9 + $0x20] sm:$0xff]
        %v713 = vld [vmem:[#allocation9 + $0x28] sm:$0xff]
        %v714 = vld [vmem:[#allocation9 + $0x30] sm:$0xff]
        %v715 = vld [vmem:[#allocation9 + $0x38] sm:$0xff]
        %v716 = vld [vmem:[#allocation9 + $0x40] sm:$0xff]
        %v717 = vld [vmem:[#allocation9 + $0x48] sm:$0xff]
        %v718 = vld [vmem:[#allocation9 + $0x50] sm:$0xff]
        %v719 = vld [vmem:[#allocation9 + $0x58] sm:$0xff]
        %v720 = vld [vmem:[#allocation9 + $0x60] sm:$0xff]
        %v721 = vld [vmem:[#allocation9 + $0x68] sm:$0xff]
        %v722 = vld [vmem:[#allocation9 + $0x70] sm:$0xff]
        %v723 = vld [vmem:[#allocation9 + $0x78] sm:$0xff]
        %v724 = vld [vmem:[#allocation9 + $0x80] sm:$0xff]
        %v725 = vld [vmem:[#allocation9 + $0x88] sm:$0xff]
        %v726 = vld [vmem:[#allocation9 + $0x90] sm:$0xff]
        %v727 = vld [vmem:[#allocation9 + $0x98] sm:$0xff]
        %v728 = vld [vmem:[#allocation9 + $0xa0] sm:$0xff]
        %v729 = vld [vmem:[#allocation9 + $0xa8] sm:$0xff]
        %v730 = vld [vmem:[#allocation9 + $0xb0] sm:$0xff]
        %v731 = vld [vmem:[#allocation9 + $0xb8] sm:$0xff]
        %v732 = vld [vmem:[#allocation9 + $0xc0] sm:$0xff]
        %v733 = vld [vmem:[#allocation9 + $0xc8] sm:$0xff]
        %v734 = vld [vmem:[#allocation9 + $0xd0] sm:$0xff]
        %v735 = vld [vmem:[#allocation9 + $0xd8] sm:$0xff]
        %v736 = vld [vmem:[#allocation9 + $0xe0] sm:$0xff]
        %v737 = vld [vmem:[#allocation9 + $0xe8] sm:$0xff]
        %v738 = vld [vmem:[#allocation9 + $0xf0] sm:$0xff]
        %v739 = vld [vmem:[#allocation9 + $0xf8] sm:$0xff]
        %v740 = vld [vmem:[#allocation9 + $0x100] sm:$0xff]
        %v741 = vld [vmem:[#allocation9 + $0x108] sm:$0xff]
        %v742 = vld [vmem:[#allocation9 + $0x110] sm:$0xff]
        %v743 = vld [vmem:[#allocation9 + $0x118] sm:$0xff]
        %v744 = vld [vmem:[#allocation9 + $0x120] sm:$0xff]
        %v745 = vld [vmem:[#allocation9 + $0x128] sm:$0xff]
        %v746 = vld [vmem:[#allocation9 + $0x130] sm:$0xff]
        %v747 = vld [vmem:[#allocation9 + $0x138] sm:$0xff]
        %v748 = vld [vmem:[#allocation9 + $0x140] sm:$0xff]
        %v749 = vld [vmem:[#allocation9 + $0x148] sm:$0xff]
        %v750 = vld [vmem:[#allocation9 + $0x150] sm:$0xff]
        %v751 = vld [vmem:[#allocation9 + $0x158] sm:$0xff]
        %v752 = vld [vmem:[#allocation9 + $0x160] sm:$0xff]
        %v753 = vld [vmem:[#allocation9 + $0x168] sm:$0xff]
        %v754 = vld [vmem:[#allocation9 + $0x170] sm:$0xff]
        %v755 = vld [vmem:[#allocation9 + $0x178] sm:$0xff]
        %v756 = vld [vmem:[#allocation9 + $0x180] sm:$0xff]
        %v757 = vld [vmem:[#allocation9 + $0x188] sm:$0xff]
        %v758 = vld [vmem:[#allocation9 + $0x190] sm:$0xff]
        %v759 = vld [vmem:[#allocation9 + $0x198] sm:$0xff]
        %v760 = vld [vmem:[#allocation9 + $0x1a0] sm:$0xff]
        %v761 = vld [vmem:[#allocation9 + $0x1a8] sm:$0xff]
        %v762 = vld [vmem:[#allocation9 + $0x1b0] sm:$0xff]
        %v763 = vld [vmem:[#allocation9 + $0x1b8] sm:$0xff]
        %v764 = vld [vmem:[#allocation9 + $0x1c0] sm:$0xff]
        %v765 = vld [vmem:[#allocation9 + $0x1c8] sm:$0xff]
        %v766 = vld [vmem:[#allocation9 + $0x1d0] sm:$0xff]
        %v767 = vld [vmem:[#allocation9 + $0x1d8] sm:$0xff]
        %v768 = vld [vmem:[#allocation9 + $0x1e0] sm:$0xff]
        %v769 = vld [vmem:[#allocation9 + $0x1e8] sm:$0xff]
        %v770 = vld [vmem:[#allocation9 + $0x1f0] sm:$0xff]
        %v771 = vld [vmem:[#allocation9 + $0x1f8] sm:$0xff]
        %v772 = vld [vmem:[#allocation9 + $0x200] sm:$0xff]
        %v773 = vld [vmem:[#allocation9 + $0x208] sm:$0xff]
        %v774 = vld [vmem:[#allocation9 + $0x210] sm:$0xff]
        %v775 = vld [vmem:[#allocation9 + $0x218] sm:$0xff]
        %v776 = vld [vmem:[#allocation9 + $0x220] sm:$0xff]
        %v777 = vld [vmem:[#allocation9 + $0x228] sm:$0xff]
        %v778 = vld [vmem:[#allocation9 + $0x230] sm:$0xff]
        %v779 = vld [vmem:[#allocation9 + $0x238] sm:$0xff]
        %v780 = vld [vmem:[#allocation9 + $0x240] sm:$0xff]
        %v781 = vld [vmem:[#allocation9 + $0x248] sm:$0xff]
        %v782 = vld [vmem:[#allocation9 + $0x250] sm:$0xff]
        %v783 = vld [vmem:[#allocation9 + $0x258] sm:$0xff]
        %v784 = vld [vmem:[#allocation9 + $0x260] sm:$0xff]
        %v785 = vld [vmem:[#allocation9 + $0x268] sm:$0xff]
        %v786 = vld [vmem:[#allocation9 + $0x270] sm:$0xff]
        %v787 = vld [vmem:[#allocation9 + $0x278] sm:$0xff]
        %v788 = vld [vmem:[#allocation9 + $0x280] sm:$0xff]
        %v789 = vld [vmem:[#allocation9 + $0x288] sm:$0xff]
        %v790 = vld [vmem:[#allocation9 + $0x290] sm:$0xff]
        %v791 = vld [vmem:[#allocation9 + $0x298] sm:$0xff]
        %v792 = vld [vmem:[#allocation9 + $0x2a0] sm:$0xff]
        %v793 = vld [vmem:[#allocation9 + $0x2a8] sm:$0xff]
        %v794 = vld [vmem:[#allocation9 + $0x2b0] sm:$0xff]
        %v795 = vld [vmem:[#allocation9 + $0x2b8] sm:$0xff]
        %v796 = vld [vmem:[#allocation9 + $0x2c0] sm:$0xff]
        %v797 = vld [vmem:[#allocation9 + $0x2c8] sm:$0xff]
        %v798 = vld [vmem:[#allocation9 + $0x2d0] sm:$0xff]
        %v799 = vld [vmem:[#allocation9 + $0x2d8] sm:$0xff]
        %v800 = vld [vmem:[#allocation9 + $0x2e0] sm:$0xff]
        %v801 = vld [vmem:[#allocation9 + $0x2e8] sm:$0xff]
        %v802 = vld [vmem:[#allocation9 + $0x2f0] sm:$0xff]
        %v803 = vld [vmem:[#allocation9 + $0x2f8] sm:$0xff]
        %v804 = vld [vmem:[#allocation9 + $0x300] sm:$0xff]
        %v805 = vld [vmem:[#allocation9 + $0x308] sm:$0xff]
        %v806 = vld [vmem:[#allocation9 + $0x310] sm:$0xff]
        %v807 = vld [vmem:[#allocation9 + $0x318] sm:$0xff]
        %v808 = vld [vmem:[#allocation9 + $0x320] sm:$0xff]
        %v809 = vld [vmem:[#allocation9 + $0x328] sm:$0xff]
        %v810 = vld [vmem:[#allocation9 + $0x330] sm:$0xff]
        %v811 = vld [vmem:[#allocation9 + $0x338] sm:$0xff]
        %v812 = vld [vmem:[#allocation9 + $0x340] sm:$0xff]
        %v813 = vld [vmem:[#allocation9 + $0x348] sm:$0xff]
        %v814 = vld [vmem:[#allocation9 + $0x350] sm:$0xff]
        %v815 = vld [vmem:[#allocation9 + $0x358] sm:$0xff]
        %v816 = vld [vmem:[#allocation9 + $0x360] sm:$0xff]
        %v817 = vld [vmem:[#allocation9 + $0x368] sm:$0xff]
        %v818 = vld [vmem:[#allocation9 + $0x370] sm:$0xff]
        %v819 = vld [vmem:[#allocation9 + $0x378] sm:$0xff]
        %v820 = vld [vmem:[#allocation9 + $0x380] sm:$0xff]
        %v821 = vld [vmem:[#allocation9 + $0x388] sm:$0xff]
        %v822 = vld [vmem:[#allocation9 + $0x390] sm:$0xff]
        %v823 = vld [vmem:[#allocation9 + $0x398] sm:$0xff]
        %v824 = vld [vmem:[#allocation9 + $0x3a0] sm:$0xff]
        %v825 = vld [vmem:[#allocation9 + $0x3a8] sm:$0xff]
        %v826 = vld [vmem:[#allocation9 + $0x3b0] sm:$0xff]
        %v827 = vld [vmem:[#allocation9 + $0x3b8] sm:$0xff]
        %v828 = vld [vmem:[#allocation9 + $0x3c0] sm:$0xff]
        %v829 = vld [vmem:[#allocation9 + $0x3c8] sm:$0xff]
        %v830 = vld [vmem:[#allocation9 + $0x3d0] sm:$0xff]
        %v831 = vld [vmem:[#allocation9 + $0x3d8] sm:$0xff]
        %v832 = vld [vmem:[#allocation9 + $0x3e0] sm:$0xff]
        %v833 = vld [vmem:[#allocation9 + $0x3e8] sm:$0xff]
        %v834 = vld [vmem:[#allocation9 + $0x3f0] sm:$0xff]
        %v835 = vld [vmem:[#allocation9 + $0x3f8] sm:$0xff]
        %v836 = vld [vmem:[#allocation9 + $0x400] sm:$0xff]
        %v837 = vld [vmem:[#allocation9 + $0x408] sm:$0xff]
        %v838 = vld [vmem:[#allocation9 + $0x410] sm:$0xff]
        %v839 = vld [vmem:[#allocation9 + $0x418] sm:$0xff]
        %v840 = vld [vmem:[#allocation9 + $0x420] sm:$0xff]
        %v841 = vld [vmem:[#allocation9 + $0x428] sm:$0xff]
        %v842 = vld [vmem:[#allocation9 + $0x430] sm:$0xff]
        %v843 = vld [vmem:[#allocation9 + $0x438] sm:$0xff]
        %v844 = vld [vmem:[#allocation9 + $0x440] sm:$0xff]
        %v845 = vld [vmem:[#allocation9 + $0x448] sm:$0xff]
        %v846 = vld [vmem:[#allocation9 + $0x450] sm:$0xff]
        %v847 = vld [vmem:[#allocation9 + $0x458] sm:$0xff]
        %v848 = vld [vmem:[#allocation9 + $0x460] sm:$0xff]
        %v849 = vld [vmem:[#allocation9 + $0x468] sm:$0xff]
        %v850 = vld [vmem:[#allocation9 + $0x470] sm:$0xff]
        %v851 = vld [vmem:[#allocation9 + $0x478] sm:$0xff]
        %v852 = vld [vmem:[#allocation9 + $0x480] sm:$0xff]
        %v853 = vld [vmem:[#allocation9 + $0x488] sm:$0xff]
        %v854 = vld [vmem:[#allocation9 + $0x490] sm:$0xff]
        %v855 = vld [vmem:[#allocation9 + $0x498] sm:$0xff]
        %v856 = vld [vmem:[#allocation9 + $0x4a0] sm:$0xff]
        %v857 = vld [vmem:[#allocation9 + $0x4a8] sm:$0xff]
        %v858 = vld [vmem:[#allocation9 + $0x4b0] sm:$0xff]
        %v859 = vld [vmem:[#allocation9 + $0x4b8] sm:$0xff]
        %v860 = vld [vmem:[#allocation9 + $0x4c0] sm:$0xff]
        %v861 = vld [vmem:[#allocation9 + $0x4c8] sm:$0xff]
        %v862 = vld [vmem:[#allocation9 + $0x4d0] sm:$0xff]
        %v863 = vld [vmem:[#allocation9 + $0x4d8] sm:$0xff]
        %v864 = vld [vmem:[#allocation9 + $0x4e0] sm:$0xff]
        %v865 = vld [vmem:[#allocation9 + $0x4e8] sm:$0xff]
        %v866 = vld [vmem:[#allocation9 + $0x4f0] sm:$0xff]
        %v867 = vld [vmem:[#allocation9 + $0x4f8] sm:$0xff]
        %v868 = vld [vmem:[#allocation9 + $0x500] sm:$0xff]
        %v869 = vld [vmem:[#allocation9 + $0x508] sm:$0xff]
        %v870 = vld [vmem:[#allocation9 + $0x510] sm:$0xff]
        %v871 = vld [vmem:[#allocation9 + $0x518] sm:$0xff]
        %v872 = vld [vmem:[#allocation9 + $0x520] sm:$0xff]
        %v873 = vld [vmem:[#allocation9 + $0x528] sm:$0xff]
        %v874 = vld [vmem:[#allocation9 + $0x530] sm:$0xff]
        %v875 = vld [vmem:[#allocation9 + $0x538] sm:$0xff]
        %v876 = vld [vmem:[#allocation9 + $0x540] sm:$0xff]
        %v877 = vld [vmem:[#allocation9 + $0x548] sm:$0xff]
        %v878 = vld [vmem:[#allocation9 + $0x550] sm:$0xff]
        %v879 = vld [vmem:[#allocation9 + $0x558] sm:$0xff]
        %v880 = vld [vmem:[#allocation9 + $0x560] sm:$0xff]
        %v881 = vld [vmem:[#allocation9 + $0x568] sm:$0xff]
        %v882 = vld [vmem:[#allocation9 + $0x570] sm:$0xff]
        %v883 = vld [vmem:[#allocation9 + $0x578] sm:$0xff]
        %v884 = vld [vmem:[#allocation9 + $0x580] sm:$0xff]
        %v885 = vld [vmem:[#allocation9 + $0x588] sm:$0xff]
        %v886 = vld [vmem:[#allocation9 + $0x590] sm:$0xff]
        %v887 = vld [vmem:[#allocation9 + $0x598] sm:$0xff]
        %v888 = vld [vmem:[#allocation9 + $0x5a0] sm:$0xff]
        %v889 = vld [vmem:[#allocation9 + $0x5a8] sm:$0xff]
        %v890 = vld [vmem:[#allocation9 + $0x5b0] sm:$0xff]
        %v891 = vld [vmem:[#allocation9 + $0x5b8] sm:$0xff]
        %v892 = vld [vmem:[#allocation9 + $0x5c0] sm:$0xff]
        %v893 = vld [vmem:[#allocation9 + $0x5c8] sm:$0xff]
        %v894 = vld [vmem:[#allocation9 + $0x5d0] sm:$0xff]
        %v895 = vld [vmem:[#allocation9 + $0x5d8] sm:$0xff]
        %v896 = vld [vmem:[#allocation9 + $0x5e0] sm:$0xff]
        %v897 = vld [vmem:[#allocation9 + $0x5e8] sm:$0xff]
        %v898 = vld [vmem:[#allocation9 + $0x5f0] sm:$0xff]
        %v899 = vld [vmem:[#allocation9 + $0x5f8] sm:$0xff]
        %v900 = vld [vmem:[#allocation9 + $0x600] sm:$0xff]
        %v901 = vld [vmem:[#allocation9 + $0x608] sm:$0xff]
        %v902 = vld [vmem:[#allocation9 + $0x610] sm:$0xff]
        %v903 = vld [vmem:[#allocation9 + $0x618] sm:$0xff]
        %v904 = vld [vmem:[#allocation9 + $0x620] sm:$0xff]
        %v905 = vld [vmem:[#allocation9 + $0x628] sm:$0xff]
        %v906 = vld [vmem:[#allocation9 + $0x630] sm:$0xff]
        %v907 = vld [vmem:[#allocation9 + $0x638] sm:$0xff]
        %v908 = vld [vmem:[#allocation9 + $0x640] sm:$0xff]
        %v909 = vld [vmem:[#allocation9 + $0x648] sm:$0xff]
        %v910 = vld [vmem:[#allocation9 + $0x650] sm:$0xff]
        %v911 = vld [vmem:[#allocation9 + $0x658] sm:$0xff]
        %v912 = vld [vmem:[#allocation9 + $0x660] sm:$0xff]
        %v913 = vld [vmem:[#allocation9 + $0x668] sm:$0xff]
        %v914 = vld [vmem:[#allocation9 + $0x670] sm:$0xff]
        %v915 = vld [vmem:[#allocation9 + $0x678] sm:$0xff]
        %v916 = vld [vmem:[#allocation9 + $0x680] sm:$0xff]
        %v917 = vld [vmem:[#allocation9 + $0x688] sm:$0xff]
        %v918 = vld [vmem:[#allocation9 + $0x690] sm:$0xff]
        %v919 = vld [vmem:[#allocation9 + $0x698] sm:$0xff]
        %v920 = vld [vmem:[#allocation9 + $0x6a0] sm:$0xff]
        %v921 = vld [vmem:[#allocation9 + $0x6a8] sm:$0xff]
        %v922 = vld [vmem:[#allocation9 + $0x6b0] sm:$0xff]
        %v923 = vld [vmem:[#allocation9 + $0x6b8] sm:$0xff]
        %v924 = vld [vmem:[#allocation9 + $0x6c0] sm:$0xff]
        %v925 = vld [vmem:[#allocation9 + $0x6c8] sm:$0xff]
        %v926 = vld [vmem:[#allocation9 + $0x6d0] sm:$0xff]
        %v927 = vld [vmem:[#allocation9 + $0x6d8] sm:$0xff]
        %v928 = vld [vmem:[#allocation9 + $0x6e0] sm:$0xff]
        %v929 = vld [vmem:[#allocation9 + $0x6e8] sm:$0xff]
        %v930 = vld [vmem:[#allocation9 + $0x6f0] sm:$0xff]
        %v931 = vld [vmem:[#allocation9 + $0x6f8] sm:$0xff]
        %v932 = vld [vmem:[#allocation9 + $0x700] sm:$0xff]
        %v933 = vld [vmem:[#allocation9 + $0x708] sm:$0xff]
        %v934 = vld [vmem:[#allocation9 + $0x710] sm:$0xff]
        %v935 = vld [vmem:[#allocation9 + $0x718] sm:$0xff]
        %v936 = vld [vmem:[#allocation9 + $0x720] sm:$0xff]
        %v937 = vld [vmem:[#allocation9 + $0x728] sm:$0xff]
        %v938 = vld [vmem:[#allocation9 + $0x730] sm:$0xff]
        %v939 = vld [vmem:[#allocation9 + $0x738] sm:$0xff]
        %v940 = vld [vmem:[#allocation9 + $0x740] sm:$0xff]
        %v941 = vld [vmem:[#allocation9 + $0x748] sm:$0xff]
        %v942 = vld [vmem:[#allocation9 + $0x750] sm:$0xff]
        %v943 = vld [vmem:[#allocation9 + $0x758] sm:$0xff]
        %v944 = vld [vmem:[#allocation9 + $0x760] sm:$0xff]
        %v945 = vld [vmem:[#allocation9 + $0x768] sm:$0xff]
        %v946 = vld [vmem:[#allocation9 + $0x770] sm:$0xff]
        %v947 = vld [vmem:[#allocation9 + $0x778] sm:$0xff]
        %v948 = vld [vmem:[#allocation9 + $0x780] sm:$0xff]
        %v949 = vld [vmem:[#allocation9 + $0x788] sm:$0xff]
        %v950 = vld [vmem:[#allocation9 + $0x790] sm:$0xff]
        %v951 = vld [vmem:[#allocation9 + $0x798] sm:$0xff]
        %v952 = vld [vmem:[#allocation9 + $0x7a0] sm:$0xff]
        %v953 = vld [vmem:[#allocation9 + $0x7a8] sm:$0xff]
        %v954 = vld [vmem:[#allocation9 + $0x7b0] sm:$0xff]
        %v955 = vld [vmem:[#allocation9 + $0x7b8] sm:$0xff]
        %v956 = vld [vmem:[#allocation9 + $0x7c0] sm:$0xff]
        %v957 = vld [vmem:[#allocation9 + $0x7c8] sm:$0xff]
        %v958 = vld [vmem:[#allocation9 + $0x7d0] sm:$0xff]
        %v959 = vld [vmem:[#allocation9 + $0x7d8] sm:$0xff]
        %v960 = vld [vmem:[#allocation9 + $0x7e0] sm:$0xff]
        %v961 = vld [vmem:[#allocation9 + $0x7e8] sm:$0xff]
        %v962 = vld [vmem:[#allocation9 + $0x7f0] sm:$0xff]
        %v963 = vld [vmem:[#allocation9 + $0x7f8] sm:$0xff]
        %v964 = vld [vmem:[#allocation11] sm:$0xf]
        %v966 = vlaneseq
        %v967 = vshrl.u32 %v966, 7
        %v968 = vsub.s32 0, %v967
        %v969 = vrot.slane %v964, %v968
        %v970 = vlaneseq
        %v971 = vshrl.u32 %v970, 7
        %v972 = vsub.s32 1, %v971
        %v973 = vrot.slane %v964, %v972
        %v974 = vlaneseq
        %v975 = vshrl.u32 %v974, 7
        %v976 = vsub.s32 2, %v975
        %v977 = vrot.slane %v964, %v976
        %v978 = vlaneseq
        %v979 = vshrl.u32 %v978, 7
        %v980 = vsub.s32 3, %v979
        %v981 = vrot.slane %v964, %v980
        %v1114 = vunpack.c.l.b16 %v580
        %v1115 = vunpack.c.h.b16 %v580
        %v1116 = vunpack.c.l.b16 %v581
        %v1117 = vunpack.c.h.b16 %v581
        %v1118 = vunpack.c.l.b16 %v582
        %v1119 = vunpack.c.h.b16 %v582
        %v1120 = vunpack.c.l.b16 %v583
        %v1121 = vunpack.c.h.b16 %v583
        %v1122 = vunpack.c.l.b16 %v584
        %v1123 = vunpack.c.h.b16 %v584
        %v1124 = vunpack.c.l.b16 %v585
        %v1125 = vunpack.c.h.b16 %v585
        %v1126 = vunpack.c.l.b16 %v586
        %v1127 = vunpack.c.h.b16 %v586
        %v1128 = vunpack.c.l.b16 %v587
        %v1129 = vunpack.c.h.b16 %v587
        %v1130 = vunpack.c.l.b16 %v588
        %v1131 = vunpack.c.h.b16 %v588
        %v1132 = vunpack.c.l.b16 %v589
        %v1133 = vunpack.c.h.b16 %v589
        %v1134 = vunpack.c.l.b16 %v590
        %v1135 = vunpack.c.h.b16 %v590
        %v1136 = vunpack.c.l.b16 %v591
        %v1137 = vunpack.c.h.b16 %v591
        %v1138 = vunpack.c.l.b16 %v592
        %v1139 = vunpack.c.h.b16 %v592
        %v1140 = vunpack.c.l.b16 %v593
        %v1141 = vunpack.c.h.b16 %v593
        %v1142 = vunpack.c.l.b16 %v594
        %v1143 = vunpack.c.h.b16 %v594
        %v1144 = vunpack.c.l.b16 %v595
        %v1145 = vunpack.c.h.b16 %v595
        %v1146 = vunpack.c.l.b16 %v596
        %v1147 = vunpack.c.h.b16 %v596
        %v1148 = vunpack.c.l.b16 %v597
        %v1149 = vunpack.c.h.b16 %v597
        %v1150 = vunpack.c.l.b16 %v598
        %v1151 = vunpack.c.h.b16 %v598
        %v1152 = vunpack.c.l.b16 %v599
        %v1153 = vunpack.c.h.b16 %v599
        %v1154 = vunpack.c.l.b16 %v600
        %v1155 = vunpack.c.h.b16 %v600
        %v1156 = vunpack.c.l.b16 %v601
        %v1157 = vunpack.c.h.b16 %v601
        %v1158 = vunpack.c.l.b16 %v602
        %v1159 = vunpack.c.h.b16 %v602
        %v1160 = vunpack.c.l.b16 %v603
        %v1161 = vunpack.c.h.b16 %v603
        %v1162 = vunpack.c.l.b16 %v604
        %v1163 = vunpack.c.h.b16 %v604
        %v1164 = vunpack.c.l.b16 %v605
        %v1165 = vunpack.c.h.b16 %v605
        %v1166 = vunpack.c.l.b16 %v606
        %v1167 = vunpack.c.h.b16 %v606
        %v1168 = vunpack.c.l.b16 %v607
        %v1169 = vunpack.c.h.b16 %v607
        %v1170 = vunpack.c.l.b16 %v608
        %v1171 = vunpack.c.h.b16 %v608
        %v1172 = vunpack.c.l.b16 %v609
        %v1173 = vunpack.c.h.b16 %v609
        %v1174 = vunpack.c.l.b16 %v610
        %v1175 = vunpack.c.h.b16 %v610
        %v1176 = vunpack.c.l.b16 %v611
        %v1177 = vunpack.c.h.b16 %v611
        %v1178 = vunpack.c.l.b16 %v612
        %v1179 = vunpack.c.h.b16 %v612
        %v1180 = vunpack.c.l.b16 %v613
        %v1181 = vunpack.c.h.b16 %v613
        %v1182 = vunpack.c.l.b16 %v614
        %v1183 = vunpack.c.h.b16 %v614
        %v1184 = vunpack.c.l.b16 %v615
        %v1185 = vunpack.c.h.b16 %v615
        %v1186 = vunpack.c.l.b16 %v616
        %v1187 = vunpack.c.h.b16 %v616
        %v1188 = vunpack.c.l.b16 %v617
        %v1189 = vunpack.c.h.b16 %v617
        %v1190 = vunpack.c.l.b16 %v618
        %v1191 = vunpack.c.h.b16 %v618
        %v1192 = vunpack.c.l.b16 %v619
        %v1193 = vunpack.c.h.b16 %v619
        %v1194 = vunpack.c.l.b16 %v620
        %v1195 = vunpack.c.h.b16 %v620
        %v1196 = vunpack.c.l.b16 %v621
        %v1197 = vunpack.c.h.b16 %v621
        %v1198 = vunpack.c.l.b16 %v622
        %v1199 = vunpack.c.h.b16 %v622
        %v1200 = vunpack.c.l.b16 %v623
        %v1201 = vunpack.c.h.b16 %v623
        %v1202 = vunpack.c.l.b16 %v624
        %v1203 = vunpack.c.h.b16 %v624
        %v1204 = vunpack.c.l.b16 %v625
        %v1205 = vunpack.c.h.b16 %v625
        %v1206 = vunpack.c.l.b16 %v626
        %v1207 = vunpack.c.h.b16 %v626
        %v1208 = vunpack.c.l.b16 %v627
        %v1209 = vunpack.c.h.b16 %v627
        %v1210 = vunpack.c.l.b16 %v628
        %v1211 = vunpack.c.h.b16 %v628
        %v1212 = vunpack.c.l.b16 %v629
        %v1213 = vunpack.c.h.b16 %v629
        %v1214 = vunpack.c.l.b16 %v630
        %v1215 = vunpack.c.h.b16 %v630
        %v1216 = vunpack.c.l.b16 %v631
        %v1217 = vunpack.c.h.b16 %v631
        %v1218 = vunpack.c.l.b16 %v632
        %v1219 = vunpack.c.h.b16 %v632
        %v1220 = vunpack.c.l.b16 %v633
        %v1221 = vunpack.c.h.b16 %v633
        %v1222 = vunpack.c.l.b16 %v634
        %v1223 = vunpack.c.h.b16 %v634
        %v1224 = vunpack.c.l.b16 %v635
        %v1225 = vunpack.c.h.b16 %v635
        %v1226 = vunpack.c.l.b16 %v636
        %v1227 = vunpack.c.h.b16 %v636
        %v1228 = vunpack.c.l.b16 %v637
        %v1229 = vunpack.c.h.b16 %v637
        %v1230 = vunpack.c.l.b16 %v638
        %v1231 = vunpack.c.h.b16 %v638
        %v1232 = vunpack.c.l.b16 %v639
        %v1233 = vunpack.c.h.b16 %v639
        %v1234 = vunpack.c.l.b16 %v640
        %v1235 = vunpack.c.h.b16 %v640
        %v1236 = vunpack.c.l.b16 %v641
        %v1237 = vunpack.c.h.b16 %v641
        %v1238 = vunpack.c.l.b16 %v642
        %v1239 = vunpack.c.h.b16 %v642
        %v1240 = vunpack.c.l.b16 %v643
        %v1241 = vunpack.c.h.b16 %v643
        %v1242 = vunpack.c.l.b16 %v644
        %v1243 = vunpack.c.h.b16 %v644
        %v1244 = vunpack.c.l.b16 %v645
        %v1245 = vunpack.c.h.b16 %v645
        %v1246 = vunpack.c.l.b16 %v646
        %v1247 = vunpack.c.h.b16 %v646
        %v1248 = vunpack.c.l.b16 %v647
        %v1249 = vunpack.c.h.b16 %v647
        %v1250 = vunpack.c.l.b16 %v648
        %v1251 = vunpack.c.h.b16 %v648
        %v1252 = vunpack.c.l.b16 %v649
        %v1253 = vunpack.c.h.b16 %v649
        %v1254 = vunpack.c.l.b16 %v650
        %v1255 = vunpack.c.h.b16 %v650
        %v1256 = vunpack.c.l.b16 %v651
        %v1257 = vunpack.c.h.b16 %v651
        %v1258 = vunpack.c.l.b16 %v652
        %v1259 = vunpack.c.h.b16 %v652
        %v1260 = vunpack.c.l.b16 %v653
        %v1261 = vunpack.c.h.b16 %v653
        %v1262 = vunpack.c.l.b16 %v654
        %v1263 = vunpack.c.h.b16 %v654
        %v1264 = vunpack.c.l.b16 %v655
        %v1265 = vunpack.c.h.b16 %v655
        %v1266 = vunpack.c.l.b16 %v656
        %v1267 = vunpack.c.h.b16 %v656
        %v1268 = vunpack.c.l.b16 %v657
        %v1269 = vunpack.c.h.b16 %v657
        %v1270 = vunpack.c.l.b16 %v658
        %v1271 = vunpack.c.h.b16 %v658
        %v1272 = vunpack.c.l.b16 %v659
        %v1273 = vunpack.c.h.b16 %v659
        %v1274 = vunpack.c.l.b16 %v660
        %v1275 = vunpack.c.h.b16 %v660
        %v1276 = vunpack.c.l.b16 %v661
        %v1277 = vunpack.c.h.b16 %v661
        %v1278 = vunpack.c.l.b16 %v662
        %v1279 = vunpack.c.h.b16 %v662
        %v1280 = vunpack.c.l.b16 %v663
        %v1281 = vunpack.c.h.b16 %v663
        %v1282 = vunpack.c.l.b16 %v664
        %v1283 = vunpack.c.h.b16 %v664
        %v1284 = vunpack.c.l.b16 %v665
        %v1285 = vunpack.c.h.b16 %v665
        %v1286 = vunpack.c.l.b16 %v666
        %v1287 = vunpack.c.h.b16 %v666
        %v1288 = vunpack.c.l.b16 %v667
        %v1289 = vunpack.c.h.b16 %v667
        %v1290 = vunpack.c.l.b16 %v668
        %v1291 = vunpack.c.h.b16 %v668
        %v1292 = vunpack.c.l.b16 %v669
        %v1293 = vunpack.c.h.b16 %v669
        %v1294 = vunpack.c.l.b16 %v670
        %v1295 = vunpack.c.h.b16 %v670
        %v1296 = vunpack.c.l.b16 %v671
        %v1297 = vunpack.c.h.b16 %v671
        %v1298 = vunpack.c.l.b16 %v672
        %v1299 = vunpack.c.h.b16 %v672
        %v1300 = vunpack.c.l.b16 %v673
        %v1301 = vunpack.c.h.b16 %v673
        %v1302 = vunpack.c.l.b16 %v674
        %v1303 = vunpack.c.h.b16 %v674
        %v1304 = vunpack.c.l.b16 %v675
        %v1305 = vunpack.c.h.b16 %v675
        %v1306 = vunpack.c.l.b16 %v676
        %v1307 = vunpack.c.h.b16 %v676
        %v1308 = vunpack.c.l.b16 %v677
        %v1309 = vunpack.c.h.b16 %v677
        %v1310 = vunpack.c.l.b16 %v678
        %v1311 = vunpack.c.h.b16 %v678
        %v1312 = vunpack.c.l.b16 %v679
        %v1313 = vunpack.c.h.b16 %v679
        %v1314 = vunpack.c.l.b16 %v680
        %v1315 = vunpack.c.h.b16 %v680
        %v1316 = vunpack.c.l.b16 %v681
        %v1317 = vunpack.c.h.b16 %v681
        %v1318 = vunpack.c.l.b16 %v682
        %v1319 = vunpack.c.h.b16 %v682
        %v1320 = vunpack.c.l.b16 %v683
        %v1321 = vunpack.c.h.b16 %v683
        %v1322 = vunpack.c.l.b16 %v684
        %v1323 = vunpack.c.h.b16 %v684
        %v1324 = vunpack.c.l.b16 %v685
        %v1325 = vunpack.c.h.b16 %v685
        %v1326 = vunpack.c.l.b16 %v686
        %v1327 = vunpack.c.h.b16 %v686
        %v1328 = vunpack.c.l.b16 %v687
        %v1329 = vunpack.c.h.b16 %v687
        %v1330 = vunpack.c.l.b16 %v688
        %v1331 = vunpack.c.h.b16 %v688
        %v1332 = vunpack.c.l.b16 %v689
        %v1333 = vunpack.c.h.b16 %v689
        %v1334 = vunpack.c.l.b16 %v690
        %v1335 = vunpack.c.h.b16 %v690
        %v1336 = vunpack.c.l.b16 %v691
        %v1337 = vunpack.c.h.b16 %v691
        %v1338 = vunpack.c.l.b16 %v692
        %v1339 = vunpack.c.h.b16 %v692
        %v1340 = vunpack.c.l.b16 %v693
        %v1341 = vunpack.c.h.b16 %v693
        %v1342 = vunpack.c.l.b16 %v694
        %v1343 = vunpack.c.h.b16 %v694
        %v1344 = vunpack.c.l.b16 %v695
        %v1345 = vunpack.c.h.b16 %v695
        %v1346 = vunpack.c.l.b16 %v696
        %v1347 = vunpack.c.h.b16 %v696
        %v1348 = vunpack.c.l.b16 %v697
        %v1349 = vunpack.c.h.b16 %v697
        %v1350 = vunpack.c.l.b16 %v698
        %v1351 = vunpack.c.h.b16 %v698
        %v1352 = vunpack.c.l.b16 %v699
        %v1353 = vunpack.c.h.b16 %v699
        %v1354 = vunpack.c.l.b16 %v700
        %v1355 = vunpack.c.h.b16 %v700
        %v1356 = vunpack.c.l.b16 %v701
        %v1357 = vunpack.c.h.b16 %v701
        %v1358 = vunpack.c.l.b16 %v702
        %v1359 = vunpack.c.h.b16 %v702
        %v1360 = vunpack.c.l.b16 %v703
        %v1361 = vunpack.c.h.b16 %v703
        %v1362 = vunpack.c.l.b16 %v704
        %v1363 = vunpack.c.h.b16 %v704
        %v1364 = vunpack.c.l.b16 %v705
        %v1365 = vunpack.c.h.b16 %v705
        %v1366 = vunpack.c.l.b16 %v706
        %v1367 = vunpack.c.h.b16 %v706
        %v1368 = vunpack.c.l.b16 %v707
        %v1369 = vunpack.c.h.b16 %v707
        %v1370 = vpack.c.b16 %v1122, %v1114
        %v1371 = vpack.c.b16 %v1123, %v1115
        %v1372 = vpack.c.b16 %v1124, %v1116
        %v1373 = vpack.c.b16 %v1125, %v1117
        %v1374 = vpack.c.b16 %v1126, %v1118
        %v1375 = vpack.c.b16 %v1127, %v1119
        %v1376 = vpack.c.b16 %v1128, %v1120
        %v1377 = vpack.c.b16 %v1129, %v1121
        %v1378 = vpack.c.b16 %v1138, %v1130
        %v1379 = vpack.c.b16 %v1139, %v1131
        %v1380 = vpack.c.b16 %v1140, %v1132
        %v1381 = vpack.c.b16 %v1141, %v1133
        %v1382 = vpack.c.b16 %v1142, %v1134
        %v1383 = vpack.c.b16 %v1143, %v1135
        %v1384 = vpack.c.b16 %v1144, %v1136
        %v1385 = vpack.c.b16 %v1145, %v1137
        %v1386 = vpack.c.b16 %v1154, %v1146
        %v1387 = vpack.c.b16 %v1155, %v1147
        %v1388 = vpack.c.b16 %v1156, %v1148
        %v1389 = vpack.c.b16 %v1157, %v1149
        %v1390 = vpack.c.b16 %v1158, %v1150
        %v1391 = vpack.c.b16 %v1159, %v1151
        %v1392 = vpack.c.b16 %v1160, %v1152
        %v1393 = vpack.c.b16 %v1161, %v1153
        %v1394 = vpack.c.b16 %v1170, %v1162
        %v1395 = vpack.c.b16 %v1171, %v1163
        %v1396 = vpack.c.b16 %v1172, %v1164
        %v1397 = vpack.c.b16 %v1173, %v1165
        %v1398 = vpack.c.b16 %v1174, %v1166
        %v1399 = vpack.c.b16 %v1175, %v1167
        %v1400 = vpack.c.b16 %v1176, %v1168
        %v1401 = vpack.c.b16 %v1177, %v1169
        %v1402 = vpack.c.b16 %v1186, %v1178
        %v1403 = vpack.c.b16 %v1187, %v1179
        %v1404 = vpack.c.b16 %v1188, %v1180
        %v1405 = vpack.c.b16 %v1189, %v1181
        %v1406 = vpack.c.b16 %v1190, %v1182
        %v1407 = vpack.c.b16 %v1191, %v1183
        %v1408 = vpack.c.b16 %v1192, %v1184
        %v1409 = vpack.c.b16 %v1193, %v1185
        %v1410 = vpack.c.b16 %v1202, %v1194
        %v1411 = vpack.c.b16 %v1203, %v1195
        %v1412 = vpack.c.b16 %v1204, %v1196
        %v1413 = vpack.c.b16 %v1205, %v1197
        %v1414 = vpack.c.b16 %v1206, %v1198
        %v1415 = vpack.c.b16 %v1207, %v1199
        %v1416 = vpack.c.b16 %v1208, %v1200
        %v1417 = vpack.c.b16 %v1209, %v1201
        %v1418 = vpack.c.b16 %v1218, %v1210
        %v1419 = vpack.c.b16 %v1219, %v1211
        %v1420 = vpack.c.b16 %v1220, %v1212
        %v1421 = vpack.c.b16 %v1221, %v1213
        %v1422 = vpack.c.b16 %v1222, %v1214
        %v1423 = vpack.c.b16 %v1223, %v1215
        %v1424 = vpack.c.b16 %v1224, %v1216
        %v1425 = vpack.c.b16 %v1225, %v1217
        %v1426 = vpack.c.b16 %v1234, %v1226
        %v1427 = vpack.c.b16 %v1235, %v1227
        %v1428 = vpack.c.b16 %v1236, %v1228
        %v1429 = vpack.c.b16 %v1237, %v1229
        %v1430 = vpack.c.b16 %v1238, %v1230
        %v1431 = vpack.c.b16 %v1239, %v1231
        %v1432 = vpack.c.b16 %v1240, %v1232
        %v1433 = vpack.c.b16 %v1241, %v1233
        %v1434 = vpack.c.b16 %v1250, %v1242
        %v1435 = vpack.c.b16 %v1251, %v1243
        %v1436 = vpack.c.b16 %v1252, %v1244
        %v1437 = vpack.c.b16 %v1253, %v1245
        %v1438 = vpack.c.b16 %v1254, %v1246
        %v1439 = vpack.c.b16 %v1255, %v1247
        %v1440 = vpack.c.b16 %v1256, %v1248
        %v1441 = vpack.c.b16 %v1257, %v1249
        %v1442 = vpack.c.b16 %v1266, %v1258
        %v1443 = vpack.c.b16 %v1267, %v1259
        %v1444 = vpack.c.b16 %v1268, %v1260
        %v1445 = vpack.c.b16 %v1269, %v1261
        %v1446 = vpack.c.b16 %v1270, %v1262
        %v1447 = vpack.c.b16 %v1271, %v1263
        %v1448 = vpack.c.b16 %v1272, %v1264
        %v1449 = vpack.c.b16 %v1273, %v1265
        %v1450 = vpack.c.b16 %v1282, %v1274
        %v1451 = vpack.c.b16 %v1283, %v1275
        %v1452 = vpack.c.b16 %v1284, %v1276
        %v1453 = vpack.c.b16 %v1285, %v1277
        %v1454 = vpack.c.b16 %v1286, %v1278
        %v1455 = vpack.c.b16 %v1287, %v1279
        %v1456 = vpack.c.b16 %v1288, %v1280
        %v1457 = vpack.c.b16 %v1289, %v1281
        %v1458 = vpack.c.b16 %v1298, %v1290
        %v1459 = vpack.c.b16 %v1299, %v1291
        %v1460 = vpack.c.b16 %v1300, %v1292
        %v1461 = vpack.c.b16 %v1301, %v1293
        %v1462 = vpack.c.b16 %v1302, %v1294
        %v1463 = vpack.c.b16 %v1303, %v1295
        %v1464 = vpack.c.b16 %v1304, %v1296
        %v1465 = vpack.c.b16 %v1305, %v1297
        %v1466 = vpack.c.b16 %v1314, %v1306
        %v1467 = vpack.c.b16 %v1315, %v1307
        %v1468 = vpack.c.b16 %v1316, %v1308
        %v1469 = vpack.c.b16 %v1317, %v1309
        %v1470 = vpack.c.b16 %v1318, %v1310
        %v1471 = vpack.c.b16 %v1319, %v1311
        %v1472 = vpack.c.b16 %v1320, %v1312
        %v1473 = vpack.c.b16 %v1321, %v1313
        %v1474 = vpack.c.b16 %v1330, %v1322
        %v1475 = vpack.c.b16 %v1331, %v1323
        %v1476 = vpack.c.b16 %v1332, %v1324
        %v1477 = vpack.c.b16 %v1333, %v1325
        %v1478 = vpack.c.b16 %v1334, %v1326
        %v1479 = vpack.c.b16 %v1335, %v1327
        %v1480 = vpack.c.b16 %v1336, %v1328
        %v1481 = vpack.c.b16 %v1337, %v1329
        %v1482 = vpack.c.b16 %v1346, %v1338
        %v1483 = vpack.c.b16 %v1347, %v1339
        %v1484 = vpack.c.b16 %v1348, %v1340
        %v1485 = vpack.c.b16 %v1349, %v1341
        %v1486 = vpack.c.b16 %v1350, %v1342
        %v1487 = vpack.c.b16 %v1351, %v1343
        %v1488 = vpack.c.b16 %v1352, %v1344
        %v1489 = vpack.c.b16 %v1353, %v1345
        %v1490 = vpack.c.b16 %v1362, %v1354
        %v1491 = vpack.c.b16 %v1363, %v1355
        %v1492 = vpack.c.b16 %v1364, %v1356
        %v1493 = vpack.c.b16 %v1365, %v1357
        %v1494 = vpack.c.b16 %v1366, %v1358
        %v1495 = vpack.c.b16 %v1367, %v1359
        %v1496 = vpack.c.b16 %v1368, %v1360
        %v1497 = vpack.c.b16 %v1369, %v1361
        %v1882 = vunpack.c.l.b16 %v708
        %v1883 = vunpack.c.h.b16 %v708
        %v1884 = vunpack.c.l.b16 %v709
        %v1885 = vunpack.c.h.b16 %v709
        %v1886 = vunpack.c.l.b16 %v710
        %v1887 = vunpack.c.h.b16 %v710
        %v1888 = vunpack.c.l.b16 %v711
        %v1889 = vunpack.c.h.b16 %v711
        %v1890 = vunpack.c.l.b16 %v712
        %v1891 = vunpack.c.h.b16 %v712
        %v1892 = vunpack.c.l.b16 %v713
        %v1893 = vunpack.c.h.b16 %v713
        %v1894 = vunpack.c.l.b16 %v714
        %v1895 = vunpack.c.h.b16 %v714
        %v1896 = vunpack.c.l.b16 %v715
        %v1897 = vunpack.c.h.b16 %v715
        %v1898 = vunpack.c.l.b16 %v716
        %v1899 = vunpack.c.h.b16 %v716
        %v1900 = vunpack.c.l.b16 %v717
        %v1901 = vunpack.c.h.b16 %v717
        %v1902 = vunpack.c.l.b16 %v718
        %v1903 = vunpack.c.h.b16 %v718
        %v1904 = vunpack.c.l.b16 %v719
        %v1905 = vunpack.c.h.b16 %v719
        %v1906 = vunpack.c.l.b16 %v720
        %v1907 = vunpack.c.h.b16 %v720
        %v1908 = vunpack.c.l.b16 %v721
        %v1909 = vunpack.c.h.b16 %v721
        %v1910 = vunpack.c.l.b16 %v722
        %v1911 = vunpack.c.h.b16 %v722
        %v1912 = vunpack.c.l.b16 %v723
        %v1913 = vunpack.c.h.b16 %v723
        %v1914 = vunpack.c.l.b16 %v724
        %v1915 = vunpack.c.h.b16 %v724
        %v1916 = vunpack.c.l.b16 %v725
        %v1917 = vunpack.c.h.b16 %v725
        %v1918 = vunpack.c.l.b16 %v726
        %v1919 = vunpack.c.h.b16 %v726
        %v1920 = vunpack.c.l.b16 %v727
        %v1921 = vunpack.c.h.b16 %v727
        %v1922 = vunpack.c.l.b16 %v728
        %v1923 = vunpack.c.h.b16 %v728
        %v1924 = vunpack.c.l.b16 %v729
        %v1925 = vunpack.c.h.b16 %v729
        %v1926 = vunpack.c.l.b16 %v730
        %v1927 = vunpack.c.h.b16 %v730
        %v1928 = vunpack.c.l.b16 %v731
        %v1929 = vunpack.c.h.b16 %v731
        %v1930 = vunpack.c.l.b16 %v732
        %v1931 = vunpack.c.h.b16 %v732
        %v1932 = vunpack.c.l.b16 %v733
        %v1933 = vunpack.c.h.b16 %v733
        %v1934 = vunpack.c.l.b16 %v734
        %v1935 = vunpack.c.h.b16 %v734
        %v1936 = vunpack.c.l.b16 %v735
        %v1937 = vunpack.c.h.b16 %v735
        %v1938 = vunpack.c.l.b16 %v736
        %v1939 = vunpack.c.h.b16 %v736
        %v1940 = vunpack.c.l.b16 %v737
        %v1941 = vunpack.c.h.b16 %v737
        %v1942 = vunpack.c.l.b16 %v738
        %v1943 = vunpack.c.h.b16 %v738
        %v1944 = vunpack.c.l.b16 %v739
        %v1945 = vunpack.c.h.b16 %v739
        %v1946 = vunpack.c.l.b16 %v740
        %v1947 = vunpack.c.h.b16 %v740
        %v1948 = vunpack.c.l.b16 %v741
        %v1949 = vunpack.c.h.b16 %v741
        %v1950 = vunpack.c.l.b16 %v742
        %v1951 = vunpack.c.h.b16 %v742
        %v1952 = vunpack.c.l.b16 %v743
        %v1953 = vunpack.c.h.b16 %v743
        %v1954 = vunpack.c.l.b16 %v744
        %v1955 = vunpack.c.h.b16 %v744
        %v1956 = vunpack.c.l.b16 %v745
        %v1957 = vunpack.c.h.b16 %v745
        %v1958 = vunpack.c.l.b16 %v746
        %v1959 = vunpack.c.h.b16 %v746
        %v1960 = vunpack.c.l.b16 %v747
        %v1961 = vunpack.c.h.b16 %v747
        %v1962 = vunpack.c.l.b16 %v748
        %v1963 = vunpack.c.h.b16 %v748
        %v1964 = vunpack.c.l.b16 %v749
        %v1965 = vunpack.c.h.b16 %v749
        %v1966 = vunpack.c.l.b16 %v750
        %v1967 = vunpack.c.h.b16 %v750
        %v1968 = vunpack.c.l.b16 %v751
        %v1969 = vunpack.c.h.b16 %v751
        %v1970 = vunpack.c.l.b16 %v752
        %v1971 = vunpack.c.h.b16 %v752
        %v1972 = vunpack.c.l.b16 %v753
        %v1973 = vunpack.c.h.b16 %v753
        %v1974 = vunpack.c.l.b16 %v754
        %v1975 = vunpack.c.h.b16 %v754
        %v1976 = vunpack.c.l.b16 %v755
        %v1977 = vunpack.c.h.b16 %v755
        %v1978 = vunpack.c.l.b16 %v756
        %v1979 = vunpack.c.h.b16 %v756
        %v1980 = vunpack.c.l.b16 %v757
        %v1981 = vunpack.c.h.b16 %v757
        %v1982 = vunpack.c.l.b16 %v758
        %v1983 = vunpack.c.h.b16 %v758
        %v1984 = vunpack.c.l.b16 %v759
        %v1985 = vunpack.c.h.b16 %v759
        %v1986 = vunpack.c.l.b16 %v760
        %v1987 = vunpack.c.h.b16 %v760
        %v1988 = vunpack.c.l.b16 %v761
        %v1989 = vunpack.c.h.b16 %v761
        %v1990 = vunpack.c.l.b16 %v762
        %v1991 = vunpack.c.h.b16 %v762
        %v1992 = vunpack.c.l.b16 %v763
        %v1993 = vunpack.c.h.b16 %v763
        %v1994 = vunpack.c.l.b16 %v764
        %v1995 = vunpack.c.h.b16 %v764
        %v1996 = vunpack.c.l.b16 %v765
        %v1997 = vunpack.c.h.b16 %v765
        %v1998 = vunpack.c.l.b16 %v766
        %v1999 = vunpack.c.h.b16 %v766
        %v2000 = vunpack.c.l.b16 %v767
        %v2001 = vunpack.c.h.b16 %v767
        %v2002 = vunpack.c.l.b16 %v768
        %v2003 = vunpack.c.h.b16 %v768
        %v2004 = vunpack.c.l.b16 %v769
        %v2005 = vunpack.c.h.b16 %v769
        %v2006 = vunpack.c.l.b16 %v770
        %v2007 = vunpack.c.h.b16 %v770
        %v2008 = vunpack.c.l.b16 %v771
        %v2009 = vunpack.c.h.b16 %v771
        %v2010 = vunpack.c.l.b16 %v772
        %v2011 = vunpack.c.h.b16 %v772
        %v2012 = vunpack.c.l.b16 %v773
        %v2013 = vunpack.c.h.b16 %v773
        %v2014 = vunpack.c.l.b16 %v774
        %v2015 = vunpack.c.h.b16 %v774
        %v2016 = vunpack.c.l.b16 %v775
        %v2017 = vunpack.c.h.b16 %v775
        %v2018 = vunpack.c.l.b16 %v776
        %v2019 = vunpack.c.h.b16 %v776
        %v2020 = vunpack.c.l.b16 %v777
        %v2021 = vunpack.c.h.b16 %v777
        %v2022 = vunpack.c.l.b16 %v778
        %v2023 = vunpack.c.h.b16 %v778
        %v2024 = vunpack.c.l.b16 %v779
        %v2025 = vunpack.c.h.b16 %v779
        %v2026 = vunpack.c.l.b16 %v780
        %v2027 = vunpack.c.h.b16 %v780
        %v2028 = vunpack.c.l.b16 %v781
        %v2029 = vunpack.c.h.b16 %v781
        %v2030 = vunpack.c.l.b16 %v782
        %v2031 = vunpack.c.h.b16 %v782
        %v2032 = vunpack.c.l.b16 %v783
        %v2033 = vunpack.c.h.b16 %v783
        %v2034 = vunpack.c.l.b16 %v784
        %v2035 = vunpack.c.h.b16 %v784
        %v2036 = vunpack.c.l.b16 %v785
        %v2037 = vunpack.c.h.b16 %v785
        %v2038 = vunpack.c.l.b16 %v786
        %v2039 = vunpack.c.h.b16 %v786
        %v2040 = vunpack.c.l.b16 %v787
        %v2041 = vunpack.c.h.b16 %v787
        %v2042 = vunpack.c.l.b16 %v788
        %v2043 = vunpack.c.h.b16 %v788
        %v2044 = vunpack.c.l.b16 %v789
        %v2045 = vunpack.c.h.b16 %v789
        %v2046 = vunpack.c.l.b16 %v790
        %v2047 = vunpack.c.h.b16 %v790
        %v2048 = vunpack.c.l.b16 %v791
        %v2049 = vunpack.c.h.b16 %v791
        %v2050 = vunpack.c.l.b16 %v792
        %v2051 = vunpack.c.h.b16 %v792
        %v2052 = vunpack.c.l.b16 %v793
        %v2053 = vunpack.c.h.b16 %v793
        %v2054 = vunpack.c.l.b16 %v794
        %v2055 = vunpack.c.h.b16 %v794
        %v2056 = vunpack.c.l.b16 %v795
        %v2057 = vunpack.c.h.b16 %v795
        %v2058 = vunpack.c.l.b16 %v796
        %v2059 = vunpack.c.h.b16 %v796
        %v2060 = vunpack.c.l.b16 %v797
        %v2061 = vunpack.c.h.b16 %v797
        %v2062 = vunpack.c.l.b16 %v798
        %v2063 = vunpack.c.h.b16 %v798
        %v2064 = vunpack.c.l.b16 %v799
        %v2065 = vunpack.c.h.b16 %v799
        %v2066 = vunpack.c.l.b16 %v800
        %v2067 = vunpack.c.h.b16 %v800
        %v2068 = vunpack.c.l.b16 %v801
        %v2069 = vunpack.c.h.b16 %v801
        %v2070 = vunpack.c.l.b16 %v802
        %v2071 = vunpack.c.h.b16 %v802
        %v2072 = vunpack.c.l.b16 %v803
        %v2073 = vunpack.c.h.b16 %v803
        %v2074 = vunpack.c.l.b16 %v804
        %v2075 = vunpack.c.h.b16 %v804
        %v2076 = vunpack.c.l.b16 %v805
        %v2077 = vunpack.c.h.b16 %v805
        %v2078 = vunpack.c.l.b16 %v806
        %v2079 = vunpack.c.h.b16 %v806
        %v2080 = vunpack.c.l.b16 %v807
        %v2081 = vunpack.c.h.b16 %v807
        %v2082 = vunpack.c.l.b16 %v808
        %v2083 = vunpack.c.h.b16 %v808
        %v2084 = vunpack.c.l.b16 %v809
        %v2085 = vunpack.c.h.b16 %v809
        %v2086 = vunpack.c.l.b16 %v810
        %v2087 = vunpack.c.h.b16 %v810
        %v2088 = vunpack.c.l.b16 %v811
        %v2089 = vunpack.c.h.b16 %v811
        %v2090 = vunpack.c.l.b16 %v812
        %v2091 = vunpack.c.h.b16 %v812
        %v2092 = vunpack.c.l.b16 %v813
        %v2093 = vunpack.c.h.b16 %v813
        %v2094 = vunpack.c.l.b16 %v814
        %v2095 = vunpack.c.h.b16 %v814
        %v2096 = vunpack.c.l.b16 %v815
        %v2097 = vunpack.c.h.b16 %v815
        %v2098 = vunpack.c.l.b16 %v816
        %v2099 = vunpack.c.h.b16 %v816
        %v2100 = vunpack.c.l.b16 %v817
        %v2101 = vunpack.c.h.b16 %v817
        %v2102 = vunpack.c.l.b16 %v818
        %v2103 = vunpack.c.h.b16 %v818
        %v2104 = vunpack.c.l.b16 %v819
        %v2105 = vunpack.c.h.b16 %v819
        %v2106 = vunpack.c.l.b16 %v820
        %v2107 = vunpack.c.h.b16 %v820
        %v2108 = vunpack.c.l.b16 %v821
        %v2109 = vunpack.c.h.b16 %v821
        %v2110 = vunpack.c.l.b16 %v822
        %v2111 = vunpack.c.h.b16 %v822
        %v2112 = vunpack.c.l.b16 %v823
        %v2113 = vunpack.c.h.b16 %v823
        %v2114 = vunpack.c.l.b16 %v824
        %v2115 = vunpack.c.h.b16 %v824
        %v2116 = vunpack.c.l.b16 %v825
        %v2117 = vunpack.c.h.b16 %v825
        %v2118 = vunpack.c.l.b16 %v826
        %v2119 = vunpack.c.h.b16 %v826
        %v2120 = vunpack.c.l.b16 %v827
        %v2121 = vunpack.c.h.b16 %v827
        %v2122 = vunpack.c.l.b16 %v828
        %v2123 = vunpack.c.h.b16 %v828
        %v2124 = vunpack.c.l.b16 %v829
        %v2125 = vunpack.c.h.b16 %v829
        %v2126 = vunpack.c.l.b16 %v830
        %v2127 = vunpack.c.h.b16 %v830
        %v2128 = vunpack.c.l.b16 %v831
        %v2129 = vunpack.c.h.b16 %v831
        %v2130 = vunpack.c.l.b16 %v832
        %v2131 = vunpack.c.h.b16 %v832
        %v2132 = vunpack.c.l.b16 %v833
        %v2133 = vunpack.c.h.b16 %v833
        %v2134 = vunpack.c.l.b16 %v834
        %v2135 = vunpack.c.h.b16 %v834
        %v2136 = vunpack.c.l.b16 %v835
        %v2137 = vunpack.c.h.b16 %v835
        %v2138 = vunpack.c.l.b16 %v836
        %v2139 = vunpack.c.h.b16 %v836
        %v2140 = vunpack.c.l.b16 %v837
        %v2141 = vunpack.c.h.b16 %v837
        %v2142 = vunpack.c.l.b16 %v838
        %v2143 = vunpack.c.h.b16 %v838
        %v2144 = vunpack.c.l.b16 %v839
        %v2145 = vunpack.c.h.b16 %v839
        %v2146 = vunpack.c.l.b16 %v840
        %v2147 = vunpack.c.h.b16 %v840
        %v2148 = vunpack.c.l.b16 %v841
        %v2149 = vunpack.c.h.b16 %v841
        %v2150 = vunpack.c.l.b16 %v842
        %v2151 = vunpack.c.h.b16 %v842
        %v2152 = vunpack.c.l.b16 %v843
        %v2153 = vunpack.c.h.b16 %v843
        %v2154 = vunpack.c.l.b16 %v844
        %v2155 = vunpack.c.h.b16 %v844
        %v2156 = vunpack.c.l.b16 %v845
        %v2157 = vunpack.c.h.b16 %v845
        %v2158 = vunpack.c.l.b16 %v846
        %v2159 = vunpack.c.h.b16 %v846
        %v2160 = vunpack.c.l.b16 %v847
        %v2161 = vunpack.c.h.b16 %v847
        %v2162 = vunpack.c.l.b16 %v848
        %v2163 = vunpack.c.h.b16 %v848
        %v2164 = vunpack.c.l.b16 %v849
        %v2165 = vunpack.c.h.b16 %v849
        %v2166 = vunpack.c.l.b16 %v850
        %v2167 = vunpack.c.h.b16 %v850
        %v2168 = vunpack.c.l.b16 %v851
        %v2169 = vunpack.c.h.b16 %v851
        %v2170 = vunpack.c.l.b16 %v852
        %v2171 = vunpack.c.h.b16 %v852
        %v2172 = vunpack.c.l.b16 %v853
        %v2173 = vunpack.c.h.b16 %v853
        %v2174 = vunpack.c.l.b16 %v854
        %v2175 = vunpack.c.h.b16 %v854
        %v2176 = vunpack.c.l.b16 %v855
        %v2177 = vunpack.c.h.b16 %v855
        %v2178 = vunpack.c.l.b16 %v856
        %v2179 = vunpack.c.h.b16 %v856
        %v2180 = vunpack.c.l.b16 %v857
        %v2181 = vunpack.c.h.b16 %v857
        %v2182 = vunpack.c.l.b16 %v858
        %v2183 = vunpack.c.h.b16 %v858
        %v2184 = vunpack.c.l.b16 %v859
        %v2185 = vunpack.c.h.b16 %v859
        %v2186 = vunpack.c.l.b16 %v860
        %v2187 = vunpack.c.h.b16 %v860
        %v2188 = vunpack.c.l.b16 %v861
        %v2189 = vunpack.c.h.b16 %v861
        %v2190 = vunpack.c.l.b16 %v862
        %v2191 = vunpack.c.h.b16 %v862
        %v2192 = vunpack.c.l.b16 %v863
        %v2193 = vunpack.c.h.b16 %v863
        %v2194 = vunpack.c.l.b16 %v864
        %v2195 = vunpack.c.h.b16 %v864
        %v2196 = vunpack.c.l.b16 %v865
        %v2197 = vunpack.c.h.b16 %v865
        %v2198 = vunpack.c.l.b16 %v866
        %v2199 = vunpack.c.h.b16 %v866
        %v2200 = vunpack.c.l.b16 %v867
        %v2201 = vunpack.c.h.b16 %v867
        %v2202 = vunpack.c.l.b16 %v868
        %v2203 = vunpack.c.h.b16 %v868
        %v2204 = vunpack.c.l.b16 %v869
        %v2205 = vunpack.c.h.b16 %v869
        %v2206 = vunpack.c.l.b16 %v870
        %v2207 = vunpack.c.h.b16 %v870
        %v2208 = vunpack.c.l.b16 %v871
        %v2209 = vunpack.c.h.b16 %v871
        %v2210 = vunpack.c.l.b16 %v872
        %v2211 = vunpack.c.h.b16 %v872
        %v2212 = vunpack.c.l.b16 %v873
        %v2213 = vunpack.c.h.b16 %v873
        %v2214 = vunpack.c.l.b16 %v874
        %v2215 = vunpack.c.h.b16 %v874
        %v2216 = vunpack.c.l.b16 %v875
        %v2217 = vunpack.c.h.b16 %v875
        %v2218 = vunpack.c.l.b16 %v876
        %v2219 = vunpack.c.h.b16 %v876
        %v2220 = vunpack.c.l.b16 %v877
        %v2221 = vunpack.c.h.b16 %v877
        %v2222 = vunpack.c.l.b16 %v878
        %v2223 = vunpack.c.h.b16 %v878
        %v2224 = vunpack.c.l.b16 %v879
        %v2225 = vunpack.c.h.b16 %v879
        %v2226 = vunpack.c.l.b16 %v880
        %v2227 = vunpack.c.h.b16 %v880
        %v2228 = vunpack.c.l.b16 %v881
        %v2229 = vunpack.c.h.b16 %v881
        %v2230 = vunpack.c.l.b16 %v882
        %v2231 = vunpack.c.h.b16 %v882
        %v2232 = vunpack.c.l.b16 %v883
        %v2233 = vunpack.c.h.b16 %v883
        %v2234 = vunpack.c.l.b16 %v884
        %v2235 = vunpack.c.h.b16 %v884
        %v2236 = vunpack.c.l.b16 %v885
        %v2237 = vunpack.c.h.b16 %v885
        %v2238 = vunpack.c.l.b16 %v886
        %v2239 = vunpack.c.h.b16 %v886
        %v2240 = vunpack.c.l.b16 %v887
        %v2241 = vunpack.c.h.b16 %v887
        %v2242 = vunpack.c.l.b16 %v888
        %v2243 = vunpack.c.h.b16 %v888
        %v2244 = vunpack.c.l.b16 %v889
        %v2245 = vunpack.c.h.b16 %v889
        %v2246 = vunpack.c.l.b16 %v890
        %v2247 = vunpack.c.h.b16 %v890
        %v2248 = vunpack.c.l.b16 %v891
        %v2249 = vunpack.c.h.b16 %v891
        %v2250 = vunpack.c.l.b16 %v892
        %v2251 = vunpack.c.h.b16 %v892
        %v2252 = vunpack.c.l.b16 %v893
        %v2253 = vunpack.c.h.b16 %v893
        %v2254 = vunpack.c.l.b16 %v894
        %v2255 = vunpack.c.h.b16 %v894
        %v2256 = vunpack.c.l.b16 %v895
        %v2257 = vunpack.c.h.b16 %v895
        %v2258 = vunpack.c.l.b16 %v896
        %v2259 = vunpack.c.h.b16 %v896
        %v2260 = vunpack.c.l.b16 %v897
        %v2261 = vunpack.c.h.b16 %v897
        %v2262 = vunpack.c.l.b16 %v898
        %v2263 = vunpack.c.h.b16 %v898
        %v2264 = vunpack.c.l.b16 %v899
        %v2265 = vunpack.c.h.b16 %v899
        %v2266 = vunpack.c.l.b16 %v900
        %v2267 = vunpack.c.h.b16 %v900
        %v2268 = vunpack.c.l.b16 %v901
        %v2269 = vunpack.c.h.b16 %v901
        %v2270 = vunpack.c.l.b16 %v902
        %v2271 = vunpack.c.h.b16 %v902
        %v2272 = vunpack.c.l.b16 %v903
        %v2273 = vunpack.c.h.b16 %v903
        %v2274 = vunpack.c.l.b16 %v904
        %v2275 = vunpack.c.h.b16 %v904
        %v2276 = vunpack.c.l.b16 %v905
        %v2277 = vunpack.c.h.b16 %v905
        %v2278 = vunpack.c.l.b16 %v906
        %v2279 = vunpack.c.h.b16 %v906
        %v2280 = vunpack.c.l.b16 %v907
        %v2281 = vunpack.c.h.b16 %v907
        %v2282 = vunpack.c.l.b16 %v908
        %v2283 = vunpack.c.h.b16 %v908
        %v2284 = vunpack.c.l.b16 %v909
        %v2285 = vunpack.c.h.b16 %v909
        %v2286 = vunpack.c.l.b16 %v910
        %v2287 = vunpack.c.h.b16 %v910
        %v2288 = vunpack.c.l.b16 %v911
        %v2289 = vunpack.c.h.b16 %v911
        %v2290 = vunpack.c.l.b16 %v912
        %v2291 = vunpack.c.h.b16 %v912
        %v2292 = vunpack.c.l.b16 %v913
        %v2293 = vunpack.c.h.b16 %v913
        %v2294 = vunpack.c.l.b16 %v914
        %v2295 = vunpack.c.h.b16 %v914
        %v2296 = vunpack.c.l.b16 %v915
        %v2297 = vunpack.c.h.b16 %v915
        %v2298 = vunpack.c.l.b16 %v916
        %v2299 = vunpack.c.h.b16 %v916
        %v2300 = vunpack.c.l.b16 %v917
        %v2301 = vunpack.c.h.b16 %v917
        %v2302 = vunpack.c.l.b16 %v918
        %v2303 = vunpack.c.h.b16 %v918
        %v2304 = vunpack.c.l.b16 %v919
        %v2305 = vunpack.c.h.b16 %v919
        %v2306 = vunpack.c.l.b16 %v920
        %v2307 = vunpack.c.h.b16 %v920
        %v2308 = vunpack.c.l.b16 %v921
        %v2309 = vunpack.c.h.b16 %v921
        %v2310 = vunpack.c.l.b16 %v922
        %v2311 = vunpack.c.h.b16 %v922
        %v2312 = vunpack.c.l.b16 %v923
        %v2313 = vunpack.c.h.b16 %v923
        %v2314 = vunpack.c.l.b16 %v924
        %v2315 = vunpack.c.h.b16 %v924
        %v2316 = vunpack.c.l.b16 %v925
        %v2317 = vunpack.c.h.b16 %v925
        %v2318 = vunpack.c.l.b16 %v926
        %v2319 = vunpack.c.h.b16 %v926
        %v2320 = vunpack.c.l.b16 %v927
        %v2321 = vunpack.c.h.b16 %v927
        %v2322 = vunpack.c.l.b16 %v928
        %v2323 = vunpack.c.h.b16 %v928
        %v2324 = vunpack.c.l.b16 %v929
        %v2325 = vunpack.c.h.b16 %v929
        %v2326 = vunpack.c.l.b16 %v930
        %v2327 = vunpack.c.h.b16 %v930
        %v2328 = vunpack.c.l.b16 %v931
        %v2329 = vunpack.c.h.b16 %v931
        %v2330 = vunpack.c.l.b16 %v932
        %v2331 = vunpack.c.h.b16 %v932
        %v2332 = vunpack.c.l.b16 %v933
        %v2333 = vunpack.c.h.b16 %v933
        %v2334 = vunpack.c.l.b16 %v934
        %v2335 = vunpack.c.h.b16 %v934
        %v2336 = vunpack.c.l.b16 %v935
        %v2337 = vunpack.c.h.b16 %v935
        %v2338 = vunpack.c.l.b16 %v936
        %v2339 = vunpack.c.h.b16 %v936
        %v2340 = vunpack.c.l.b16 %v937
        %v2341 = vunpack.c.h.b16 %v937
        %v2342 = vunpack.c.l.b16 %v938
        %v2343 = vunpack.c.h.b16 %v938
        %v2344 = vunpack.c.l.b16 %v939
        %v2345 = vunpack.c.h.b16 %v939
        %v2346 = vunpack.c.l.b16 %v940
        %v2347 = vunpack.c.h.b16 %v940
        %v2348 = vunpack.c.l.b16 %v941
        %v2349 = vunpack.c.h.b16 %v941
        %v2350 = vunpack.c.l.b16 %v942
        %v2351 = vunpack.c.h.b16 %v942
        %v2352 = vunpack.c.l.b16 %v943
        %v2353 = vunpack.c.h.b16 %v943
        %v2354 = vunpack.c.l.b16 %v944
        %v2355 = vunpack.c.h.b16 %v944
        %v2356 = vunpack.c.l.b16 %v945
        %v2357 = vunpack.c.h.b16 %v945
        %v2358 = vunpack.c.l.b16 %v946
        %v2359 = vunpack.c.h.b16 %v946
        %v2360 = vunpack.c.l.b16 %v947
        %v2361 = vunpack.c.h.b16 %v947
        %v2362 = vunpack.c.l.b16 %v948
        %v2363 = vunpack.c.h.b16 %v948
        %v2364 = vunpack.c.l.b16 %v949
        %v2365 = vunpack.c.h.b16 %v949
        %v2366 = vunpack.c.l.b16 %v950
        %v2367 = vunpack.c.h.b16 %v950
        %v2368 = vunpack.c.l.b16 %v951
        %v2369 = vunpack.c.h.b16 %v951
        %v2370 = vunpack.c.l.b16 %v952
        %v2371 = vunpack.c.h.b16 %v952
        %v2372 = vunpack.c.l.b16 %v953
        %v2373 = vunpack.c.h.b16 %v953
        %v2374 = vunpack.c.l.b16 %v954
        %v2375 = vunpack.c.h.b16 %v954
        %v2376 = vunpack.c.l.b16 %v955
        %v2377 = vunpack.c.h.b16 %v955
        %v2378 = vunpack.c.l.b16 %v956
        %v2379 = vunpack.c.h.b16 %v956
        %v2380 = vunpack.c.l.b16 %v957
        %v2381 = vunpack.c.h.b16 %v957
        %v2382 = vunpack.c.l.b16 %v958
        %v2383 = vunpack.c.h.b16 %v958
        %v2384 = vunpack.c.l.b16 %v959
        %v2385 = vunpack.c.h.b16 %v959
        %v2386 = vunpack.c.l.b16 %v960
        %v2387 = vunpack.c.h.b16 %v960
        %v2388 = vunpack.c.l.b16 %v961
        %v2389 = vunpack.c.h.b16 %v961
        %v2390 = vunpack.c.l.b16 %v962
        %v2391 = vunpack.c.h.b16 %v962
        %v2392 = vunpack.c.l.b16 %v963
        %v2393 = vunpack.c.h.b16 %v963
        %v2394 = vpack.c.b16 %v1886, %v1882
        %v2395 = vpack.c.b16 %v1887, %v1883
        %v2396 = vpack.c.b16 %v1888, %v1884
        %v2397 = vpack.c.b16 %v1889, %v1885
        %v2398 = vpack.c.b16 %v1894, %v1890
        %v2399 = vpack.c.b16 %v1895, %v1891
        %v2400 = vpack.c.b16 %v1896, %v1892
        %v2401 = vpack.c.b16 %v1897, %v1893
        %v2402 = vpack.c.b16 %v1902, %v1898
        %v2403 = vpack.c.b16 %v1903, %v1899
        %v2404 = vpack.c.b16 %v1904, %v1900
        %v2405 = vpack.c.b16 %v1905, %v1901
        %v2406 = vpack.c.b16 %v1910, %v1906
        %v2407 = vpack.c.b16 %v1911, %v1907
        %v2408 = vpack.c.b16 %v1912, %v1908
        %v2409 = vpack.c.b16 %v1913, %v1909
        %v2410 = vpack.c.b16 %v1918, %v1914
        %v2411 = vpack.c.b16 %v1919, %v1915
        %v2412 = vpack.c.b16 %v1920, %v1916
        %v2413 = vpack.c.b16 %v1921, %v1917
        %v2414 = vpack.c.b16 %v1926, %v1922
        %v2415 = vpack.c.b16 %v1927, %v1923
        %v2416 = vpack.c.b16 %v1928, %v1924
        %v2417 = vpack.c.b16 %v1929, %v1925
        %v2418 = vpack.c.b16 %v1934, %v1930
        %v2419 = vpack.c.b16 %v1935, %v1931
        %v2420 = vpack.c.b16 %v1936, %v1932
        %v2421 = vpack.c.b16 %v1937, %v1933
        %v2422 = vpack.c.b16 %v1942, %v1938
        %v2423 = vpack.c.b16 %v1943, %v1939
        %v2424 = vpack.c.b16 %v1944, %v1940
        %v2425 = vpack.c.b16 %v1945, %v1941
        %v2426 = vpack.c.b16 %v1950, %v1946
        %v2427 = vpack.c.b16 %v1951, %v1947
        %v2428 = vpack.c.b16 %v1952, %v1948
        %v2429 = vpack.c.b16 %v1953, %v1949
        %v2430 = vpack.c.b16 %v1958, %v1954
        %v2431 = vpack.c.b16 %v1959, %v1955
        %v2432 = vpack.c.b16 %v1960, %v1956
        %v2433 = vpack.c.b16 %v1961, %v1957
        %v2434 = vpack.c.b16 %v1966, %v1962
        %v2435 = vpack.c.b16 %v1967, %v1963
        %v2436 = vpack.c.b16 %v1968, %v1964
        %v2437 = vpack.c.b16 %v1969, %v1965
        %v2438 = vpack.c.b16 %v1974, %v1970
        %v2439 = vpack.c.b16 %v1975, %v1971
        %v2440 = vpack.c.b16 %v1976, %v1972
        %v2441 = vpack.c.b16 %v1977, %v1973
        %v2442 = vpack.c.b16 %v1982, %v1978
        %v2443 = vpack.c.b16 %v1983, %v1979
        %v2444 = vpack.c.b16 %v1984, %v1980
        %v2445 = vpack.c.b16 %v1985, %v1981
        %v2446 = vpack.c.b16 %v1990, %v1986
        %v2447 = vpack.c.b16 %v1991, %v1987
        %v2448 = vpack.c.b16 %v1992, %v1988
        %v2449 = vpack.c.b16 %v1993, %v1989
        %v2450 = vpack.c.b16 %v1998, %v1994
        %v2451 = vpack.c.b16 %v1999, %v1995
        %v2452 = vpack.c.b16 %v2000, %v1996
        %v2453 = vpack.c.b16 %v2001, %v1997
        %v2454 = vpack.c.b16 %v2006, %v2002
        %v2455 = vpack.c.b16 %v2007, %v2003
        %v2456 = vpack.c.b16 %v2008, %v2004
        %v2457 = vpack.c.b16 %v2009, %v2005
        %v2458 = vpack.c.b16 %v2014, %v2010
        %v2459 = vpack.c.b16 %v2015, %v2011
        %v2460 = vpack.c.b16 %v2016, %v2012
        %v2461 = vpack.c.b16 %v2017, %v2013
        %v2462 = vpack.c.b16 %v2022, %v2018
        %v2463 = vpack.c.b16 %v2023, %v2019
        %v2464 = vpack.c.b16 %v2024, %v2020
        %v2465 = vpack.c.b16 %v2025, %v2021
        %v2466 = vpack.c.b16 %v2030, %v2026
        %v2467 = vpack.c.b16 %v2031, %v2027
        %v2468 = vpack.c.b16 %v2032, %v2028
        %v2469 = vpack.c.b16 %v2033, %v2029
        %v2470 = vpack.c.b16 %v2038, %v2034
        %v2471 = vpack.c.b16 %v2039, %v2035
        %v2472 = vpack.c.b16 %v2040, %v2036
        %v2473 = vpack.c.b16 %v2041, %v2037
        %v2474 = vpack.c.b16 %v2046, %v2042
        %v2475 = vpack.c.b16 %v2047, %v2043
        %v2476 = vpack.c.b16 %v2048, %v2044
        %v2477 = vpack.c.b16 %v2049, %v2045
        %v2478 = vpack.c.b16 %v2054, %v2050
        %v2479 = vpack.c.b16 %v2055, %v2051
        %v2480 = vpack.c.b16 %v2056, %v2052
        %v2481 = vpack.c.b16 %v2057, %v2053
        %v2482 = vpack.c.b16 %v2062, %v2058
        %v2483 = vpack.c.b16 %v2063, %v2059
        %v2484 = vpack.c.b16 %v2064, %v2060
        %v2485 = vpack.c.b16 %v2065, %v2061
        %v2486 = vpack.c.b16 %v2070, %v2066
        %v2487 = vpack.c.b16 %v2071, %v2067
        %v2488 = vpack.c.b16 %v2072, %v2068
        %v2489 = vpack.c.b16 %v2073, %v2069
        %v2490 = vpack.c.b16 %v2078, %v2074
        %v2491 = vpack.c.b16 %v2079, %v2075
        %v2492 = vpack.c.b16 %v2080, %v2076
        %v2493 = vpack.c.b16 %v2081, %v2077
        %v2494 = vpack.c.b16 %v2086, %v2082
        %v2495 = vpack.c.b16 %v2087, %v2083
        %v2496 = vpack.c.b16 %v2088, %v2084
        %v2497 = vpack.c.b16 %v2089, %v2085
        %v2498 = vpack.c.b16 %v2094, %v2090
        %v2499 = vpack.c.b16 %v2095, %v2091
        %v2500 = vpack.c.b16 %v2096, %v2092
        %v2501 = vpack.c.b16 %v2097, %v2093
        %v2502 = vpack.c.b16 %v2102, %v2098
        %v2503 = vpack.c.b16 %v2103, %v2099
        %v2504 = vpack.c.b16 %v2104, %v2100
        %v2505 = vpack.c.b16 %v2105, %v2101
        %v2506 = vpack.c.b16 %v2110, %v2106
        %v2507 = vpack.c.b16 %v2111, %v2107
        %v2508 = vpack.c.b16 %v2112, %v2108
        %v2509 = vpack.c.b16 %v2113, %v2109
        %v2510 = vpack.c.b16 %v2118, %v2114
        %v2511 = vpack.c.b16 %v2119, %v2115
        %v2512 = vpack.c.b16 %v2120, %v2116
        %v2513 = vpack.c.b16 %v2121, %v2117
        %v2514 = vpack.c.b16 %v2126, %v2122
        %v2515 = vpack.c.b16 %v2127, %v2123
        %v2516 = vpack.c.b16 %v2128, %v2124
        %v2517 = vpack.c.b16 %v2129, %v2125
        %v2518 = vpack.c.b16 %v2134, %v2130
        %v2519 = vpack.c.b16 %v2135, %v2131
        %v2520 = vpack.c.b16 %v2136, %v2132
        %v2521 = vpack.c.b16 %v2137, %v2133
        %v2522 = vpack.c.b16 %v2142, %v2138
        %v2523 = vpack.c.b16 %v2143, %v2139
        %v2524 = vpack.c.b16 %v2144, %v2140
        %v2525 = vpack.c.b16 %v2145, %v2141
        %v2526 = vpack.c.b16 %v2150, %v2146
        %v2527 = vpack.c.b16 %v2151, %v2147
        %v2528 = vpack.c.b16 %v2152, %v2148
        %v2529 = vpack.c.b16 %v2153, %v2149
        %v2530 = vpack.c.b16 %v2158, %v2154
        %v2531 = vpack.c.b16 %v2159, %v2155
        %v2532 = vpack.c.b16 %v2160, %v2156
        %v2533 = vpack.c.b16 %v2161, %v2157
        %v2534 = vpack.c.b16 %v2166, %v2162
        %v2535 = vpack.c.b16 %v2167, %v2163
        %v2536 = vpack.c.b16 %v2168, %v2164
        %v2537 = vpack.c.b16 %v2169, %v2165
        %v2538 = vpack.c.b16 %v2174, %v2170
        %v2539 = vpack.c.b16 %v2175, %v2171
        %v2540 = vpack.c.b16 %v2176, %v2172
        %v2541 = vpack.c.b16 %v2177, %v2173
        %v2542 = vpack.c.b16 %v2182, %v2178
        %v2543 = vpack.c.b16 %v2183, %v2179
        %v2544 = vpack.c.b16 %v2184, %v2180
        %v2545 = vpack.c.b16 %v2185, %v2181
        %v2546 = vpack.c.b16 %v2190, %v2186
        %v2547 = vpack.c.b16 %v2191, %v2187
        %v2548 = vpack.c.b16 %v2192, %v2188
        %v2549 = vpack.c.b16 %v2193, %v2189
        %v2550 = vpack.c.b16 %v2198, %v2194
        %v2551 = vpack.c.b16 %v2199, %v2195
        %v2552 = vpack.c.b16 %v2200, %v2196
        %v2553 = vpack.c.b16 %v2201, %v2197
        %v2554 = vpack.c.b16 %v2206, %v2202
        %v2555 = vpack.c.b16 %v2207, %v2203
        %v2556 = vpack.c.b16 %v2208, %v2204
        %v2557 = vpack.c.b16 %v2209, %v2205
        %v2558 = vpack.c.b16 %v2214, %v2210
        %v2559 = vpack.c.b16 %v2215, %v2211
        %v2560 = vpack.c.b16 %v2216, %v2212
        %v2561 = vpack.c.b16 %v2217, %v2213
        %v2562 = vpack.c.b16 %v2222, %v2218
        %v2563 = vpack.c.b16 %v2223, %v2219
        %v2564 = vpack.c.b16 %v2224, %v2220
        %v2565 = vpack.c.b16 %v2225, %v2221
        %v2566 = vpack.c.b16 %v2230, %v2226
        %v2567 = vpack.c.b16 %v2231, %v2227
        %v2568 = vpack.c.b16 %v2232, %v2228
        %v2569 = vpack.c.b16 %v2233, %v2229
        %v2570 = vpack.c.b16 %v2238, %v2234
        %v2571 = vpack.c.b16 %v2239, %v2235
        %v2572 = vpack.c.b16 %v2240, %v2236
        %v2573 = vpack.c.b16 %v2241, %v2237
        %v2574 = vpack.c.b16 %v2246, %v2242
        %v2575 = vpack.c.b16 %v2247, %v2243
        %v2576 = vpack.c.b16 %v2248, %v2244
        %v2577 = vpack.c.b16 %v2249, %v2245
        %v2578 = vpack.c.b16 %v2254, %v2250
        %v2579 = vpack.c.b16 %v2255, %v2251
        %v2580 = vpack.c.b16 %v2256, %v2252
        %v2581 = vpack.c.b16 %v2257, %v2253
        %v2582 = vpack.c.b16 %v2262, %v2258
        %v2583 = vpack.c.b16 %v2263, %v2259
        %v2584 = vpack.c.b16 %v2264, %v2260
        %v2585 = vpack.c.b16 %v2265, %v2261
        %v2586 = vpack.c.b16 %v2270, %v2266
        %v2587 = vpack.c.b16 %v2271, %v2267
        %v2588 = vpack.c.b16 %v2272, %v2268
        %v2589 = vpack.c.b16 %v2273, %v2269
        %v2590 = vpack.c.b16 %v2278, %v2274
        %v2591 = vpack.c.b16 %v2279, %v2275
        %v2592 = vpack.c.b16 %v2280, %v2276
        %v2593 = vpack.c.b16 %v2281, %v2277
        %v2594 = vpack.c.b16 %v2286, %v2282
        %v2595 = vpack.c.b16 %v2287, %v2283
        %v2596 = vpack.c.b16 %v2288, %v2284
        %v2597 = vpack.c.b16 %v2289, %v2285
        %v2598 = vpack.c.b16 %v2294, %v2290
        %v2599 = vpack.c.b16 %v2295, %v2291
        %v2600 = vpack.c.b16 %v2296, %v2292
        %v2601 = vpack.c.b16 %v2297, %v2293
        %v2602 = vpack.c.b16 %v2302, %v2298
        %v2603 = vpack.c.b16 %v2303, %v2299
        %v2604 = vpack.c.b16 %v2304, %v2300
        %v2605 = vpack.c.b16 %v2305, %v2301
        %v2606 = vpack.c.b16 %v2310, %v2306
        %v2607 = vpack.c.b16 %v2311, %v2307
        %v2608 = vpack.c.b16 %v2312, %v2308
        %v2609 = vpack.c.b16 %v2313, %v2309
        %v2610 = vpack.c.b16 %v2318, %v2314
        %v2611 = vpack.c.b16 %v2319, %v2315
        %v2612 = vpack.c.b16 %v2320, %v2316
        %v2613 = vpack.c.b16 %v2321, %v2317
        %v2614 = vpack.c.b16 %v2326, %v2322
        %v2615 = vpack.c.b16 %v2327, %v2323
        %v2616 = vpack.c.b16 %v2328, %v2324
        %v2617 = vpack.c.b16 %v2329, %v2325
        %v2618 = vpack.c.b16 %v2334, %v2330
        %v2619 = vpack.c.b16 %v2335, %v2331
        %v2620 = vpack.c.b16 %v2336, %v2332
        %v2621 = vpack.c.b16 %v2337, %v2333
        %v2622 = vpack.c.b16 %v2342, %v2338
        %v2623 = vpack.c.b16 %v2343, %v2339
        %v2624 = vpack.c.b16 %v2344, %v2340
        %v2625 = vpack.c.b16 %v2345, %v2341
        %v2626 = vpack.c.b16 %v2350, %v2346
        %v2627 = vpack.c.b16 %v2351, %v2347
        %v2628 = vpack.c.b16 %v2352, %v2348
        %v2629 = vpack.c.b16 %v2353, %v2349
        %v2630 = vpack.c.b16 %v2358, %v2354
        %v2631 = vpack.c.b16 %v2359, %v2355
        %v2632 = vpack.c.b16 %v2360, %v2356
        %v2633 = vpack.c.b16 %v2361, %v2357
        %v2634 = vpack.c.b16 %v2366, %v2362
        %v2635 = vpack.c.b16 %v2367, %v2363
        %v2636 = vpack.c.b16 %v2368, %v2364
        %v2637 = vpack.c.b16 %v2369, %v2365
        %v2638 = vpack.c.b16 %v2374, %v2370
        %v2639 = vpack.c.b16 %v2375, %v2371
        %v2640 = vpack.c.b16 %v2376, %v2372
        %v2641 = vpack.c.b16 %v2377, %v2373
        %v2642 = vpack.c.b16 %v2382, %v2378
        %v2643 = vpack.c.b16 %v2383, %v2379
        %v2644 = vpack.c.b16 %v2384, %v2380
        %v2645 = vpack.c.b16 %v2385, %v2381
        %v2646 = vpack.c.b16 %v2390, %v2386
        %v2647 = vpack.c.b16 %v2391, %v2387
        %v2648 = vpack.c.b16 %v2392, %v2388
        %v2649 = vpack.c.b16 %v2393, %v2389
        %2906 = vmatprep.subr.bf16.mxu0 %v2395
        %2907 = vmatpush1.bf16.msra.mxu0 %v2394
        %2908 = vmatprep.subr.bf16.mxu0 %v2399
        %2909 = vmatpush1.bf16.msra.mxu0 %v2398
        %2910 = vmatprep.subr.bf16.mxu0 %v2403
        %2911 = vmatpush1.bf16.msra.mxu0 %v2402
        %2912 = vmatprep.subr.bf16.mxu0 %v2407
        %2913 = vmatpush1.bf16.msra.mxu0 %v2406
        %2914 = vmatprep.subr.bf16.mxu0 %v2411
        %2915 = vmatpush1.bf16.msra.mxu0 %v2410
        %2916 = vmatprep.subr.bf16.mxu0 %v2415
        %2917 = vmatpush1.bf16.msra.mxu0 %v2414
        %2918 = vmatprep.subr.bf16.mxu0 %v2419
        %2919 = vmatpush1.bf16.msra.mxu0 %v2418
        %2920 = vmatprep.subr.bf16.mxu0 %v2423
        %2921 = vmatpush1.bf16.msra.mxu0 %v2422
        %2922 = vmatprep.subr.bf16.mxu0 %v2427
        %2923 = vmatpush1.bf16.msra.mxu0 %v2426
        %2924 = vmatprep.subr.bf16.mxu0 %v2431
        %2925 = vmatpush1.bf16.msra.mxu0 %v2430
        %2926 = vmatprep.subr.bf16.mxu0 %v2435
        %2927 = vmatpush1.bf16.msra.mxu0 %v2434
        %2928 = vmatprep.subr.bf16.mxu0 %v2439
        %2929 = vmatpush1.bf16.msra.mxu0 %v2438
        %2930 = vmatprep.subr.bf16.mxu0 %v2443
        %2931 = vmatpush1.bf16.msra.mxu0 %v2442
        %2932 = vmatprep.subr.bf16.mxu0 %v2447
        %2933 = vmatpush1.bf16.msra.mxu0 %v2446
        %2934 = vmatprep.subr.bf16.mxu0 %v2451
        %2935 = vmatpush1.bf16.msra.mxu0 %v2450
        %2936 = vmatprep.subr.bf16.mxu0 %v2455
        %2937 = vmatpush1.bf16.msra.mxu0 %v2454
        %2938 = vmatprep.mubr.bf16.mxu0 %v1371
        %2939 = vmatmul.mubr.bf16.gmra.mrb[0].mxu0 %v1370
        %v2940 = vpop.f32.mrb[0].mxu0
        %v2941 = vadd.f32 %v969, %v2940
        %v2942 = vpop.f32.mrb[0].mxu0
        %v2943 = vadd.f32 %v973, %v2942
        %v2944 = vpop.f32.mrb[0].mxu0
        %v2945 = vadd.f32 %v969, %v2944
        %v2946 = vpop.f32.mrb[0].mxu0
        %v2947 = vadd.f32 %v973, %v2946
        %2948 = vmatprep.mubr.bf16.mxu0 %v1379
        %2949 = vmatmul.mubr.bf16.gmra.mrb[0].mxu0 %v1378
        %v2950 = vpop.f32.mrb[0].mxu0
        %v2951 = vadd.f32 %v969, %v2950
        %v2952 = vpop.f32.mrb[0].mxu0
        %v2953 = vadd.f32 %v973, %v2952
        %v2954 = vpop.f32.mrb[0].mxu0
        %v2955 = vadd.f32 %v969, %v2954
        %v2956 = vpop.f32.mrb[0].mxu0
        %v2957 = vadd.f32 %v973, %v2956
        %2958 = vmatprep.mubr.bf16.mxu0 %v1387
        %2959 = vmatmul.mubr.bf16.gmra.mrb[0].mxu0 %v1386
        %v2960 = vpop.f32.mrb[0].mxu0
        %v2961 = vadd.f32 %v969, %v2960
        %v2962 = vpop.f32.mrb[0].mxu0
        %v2963 = vadd.f32 %v973, %v2962
        %v2964 = vpop.f32.mrb[0].mxu0
        %v2965 = vadd.f32 %v969, %v2964
        %v2966 = vpop.f32.mrb[0].mxu0
        %v2967 = vadd.f32 %v973, %v2966
        %2968 = vmatprep.mubr.bf16.mxu0 %v1395
        %2969 = vmatmul.mubr.bf16.gmra.mrb[0].mxu0 %v1394
        %v2970 = vpop.f32.mrb[0].mxu0
        %v2971 = vadd.f32 %v969, %v2970
        %v2972 = vpop.f32.mrb[0].mxu0
        %v2973 = vadd.f32 %v973, %v2972
        %v2974 = vpop.f32.mrb[0].mxu0
        %v2975 = vadd.f32 %v969, %v2974
        %v2976 = vpop.f32.mrb[0].mxu0
        %v2977 = vadd.f32 %v973, %v2976
        %2978 = vmatprep.mubr.bf16.mxu0 %v1403
        %2979 = vmatmul.mubr.bf16.gmra.mrb[0].mxu0 %v1402
        %v2980 = vpop.f32.mrb[0].mxu0
        %v2981 = vadd.f32 %v969, %v2980
        %v2982 = vpop.f32.mrb[0].mxu0
        %v2983 = vadd.f32 %v973, %v2982
        %v2984 = vpop.f32.mrb[0].mxu0
        %v2985 = vadd.f32 %v969, %v2984
        %v2986 = vpop.f32.mrb[0].mxu0
        %v2987 = vadd.f32 %v973, %v2986
        %2988 = vmatprep.mubr.bf16.mxu0 %v1411
        %2989 = vmatmul.mubr.bf16.gmra.mrb[0].mxu0 %v1410
        %v2990 = vpop.f32.mrb[0].mxu0
        %v2991 = vadd.f32 %v969, %v2990
        %v2992 = vpop.f32.mrb[0].mxu0
        %v2993 = vadd.f32 %v973, %v2992
        %v2994 = vpop.f32.mrb[0].mxu0
        %v2995 = vadd.f32 %v969, %v2994
        %v2996 = vpop.f32.mrb[0].mxu0
        %v2997 = vadd.f32 %v973, %v2996
        %2998 = vmatprep.mubr.bf16.mxu0 %v1419
        %2999 = vmatmul.mubr.bf16.gmra.mrb[0].mxu0 %v1418
        %v3000 = vpop.f32.mrb[0].mxu0
        %v3001 = vadd.f32 %v969, %v3000
        %v3002 = vpop.f32.mrb[0].mxu0
        %v3003 = vadd.f32 %v973, %v3002
        %v3004 = vpop.f32.mrb[0].mxu0
        %v3005 = vadd.f32 %v969, %v3004
        %v3006 = vpop.f32.mrb[0].mxu0
        %v3007 = vadd.f32 %v973, %v3006
        %3008 = vmatprep.mubr.bf16.mxu0 %v1427
        %3009 = vmatmul.mubr.bf16.gmra.mrb[0].mxu0 %v1426
        %v3010 = vpop.f32.mrb[0].mxu0
        %v3011 = vadd.f32 %v969, %v3010
        %v3012 = vpop.f32.mrb[0].mxu0
        %v3013 = vadd.f32 %v973, %v3012
        %v3014 = vpop.f32.mrb[0].mxu0
        %v3015 = vadd.f32 %v969, %v3014
        %v3016 = vpop.f32.mrb[0].mxu0
        %v3017 = vadd.f32 %v973, %v3016
        %3018 = vmatprep.mubr.bf16.mxu0 %v1435
        %3019 = vmatmul.mubr.bf16.gmra.mrb[0].mxu0 %v1434
        %v3020 = vpop.f32.mrb[0].mxu0
        %v3021 = vadd.f32 %v969, %v3020
        %v3022 = vpop.f32.mrb[0].mxu0
        %v3023 = vadd.f32 %v973, %v3022
        %v3024 = vpop.f32.mrb[0].mxu0
        %v3025 = vadd.f32 %v969, %v3024
        %v3026 = vpop.f32.mrb[0].mxu0
        %v3027 = vadd.f32 %v973, %v3026
        %3028 = vmatprep.mubr.bf16.mxu0 %v1443
        %3029 = vmatmul.mubr.bf16.gmra.mrb[0].mxu0 %v1442
        %v3030 = vpop.f32.mrb[0].mxu0
        %v3031 = vadd.f32 %v969, %v3030
        %v3032 = vpop.f32.mrb[0].mxu0
        %v3033 = vadd.f32 %v973, %v3032
        %v3034 = vpop.f32.mrb[0].mxu0
        %v3035 = vadd.f32 %v969, %v3034
        %v3036 = vpop.f32.mrb[0].mxu0
        %v3037 = vadd.f32 %v973, %v3036
        %3038 = vmatprep.mubr.bf16.mxu0 %v1451
        %3039 = vmatmul.mubr.bf16.gmra.mrb[0].mxu0 %v1450
        %v3040 = vpop.f32.mrb[0].mxu0
        %v3041 = vadd.f32 %v969, %v3040
        %v3042 = vpop.f32.mrb[0].mxu0
        %v3043 = vadd.f32 %v973, %v3042
        %v3044 = vpop.f32.mrb[0].mxu0
        %v3045 = vadd.f32 %v969, %v3044
        %v3046 = vpop.f32.mrb[0].mxu0
        %v3047 = vadd.f32 %v973, %v3046
        %3048 = vmatprep.mubr.bf16.mxu0 %v1459
        %3049 = vmatmul.mubr.bf16.gmra.mrb[0].mxu0 %v1458
        %v3050 = vpop.f32.mrb[0].mxu0
        %v3051 = vadd.f32 %v969, %v3050
        %v3052 = vpop.f32.mrb[0].mxu0
        %v3053 = vadd.f32 %v973, %v3052
        %v3054 = vpop.f32.mrb[0].mxu0
        %v3055 = vadd.f32 %v969, %v3054
        %v3056 = vpop.f32.mrb[0].mxu0
        %v3057 = vadd.f32 %v973, %v3056
        %3058 = vmatprep.mubr.bf16.mxu0 %v1467
        %3059 = vmatmul.mubr.bf16.gmra.mrb[0].mxu0 %v1466
        %v3060 = vpop.f32.mrb[0].mxu0
        %v3061 = vadd.f32 %v969, %v3060
        %v3062 = vpop.f32.mrb[0].mxu0
        %v3063 = vadd.f32 %v973, %v3062
        %v3064 = vpop.f32.mrb[0].mxu0
        %v3065 = vadd.f32 %v969, %v3064
        %v3066 = vpop.f32.mrb[0].mxu0
        %v3067 = vadd.f32 %v973, %v3066
        %3068 = vmatprep.mubr.bf16.mxu0 %v1475
        %3069 = vmatmul.mubr.bf16.gmra.mrb[0].mxu0 %v1474
        %v3070 = vpop.f32.mrb[0].mxu0
        %v3071 = vadd.f32 %v969, %v3070
        %v3072 = vpop.f32.mrb[0].mxu0
        %v3073 = vadd.f32 %v973, %v3072
        %v3074 = vpop.f32.mrb[0].mxu0
        %v3075 = vadd.f32 %v969, %v3074
        %v3076 = vpop.f32.mrb[0].mxu0
        %v3077 = vadd.f32 %v973, %v3076
        %3078 = vmatprep.mubr.bf16.mxu0 %v1483
        %3079 = vmatmul.mubr.bf16.gmra.mrb[0].mxu0 %v1482
        %v3080 = vpop.f32.mrb[0].mxu0
        %v3081 = vadd.f32 %v969, %v3080
        %v3082 = vpop.f32.mrb[0].mxu0
        %v3083 = vadd.f32 %v973, %v3082
        %v3084 = vpop.f32.mrb[0].mxu0
        %v3085 = vadd.f32 %v969, %v3084
        %v3086 = vpop.f32.mrb[0].mxu0
        %v3087 = vadd.f32 %v973, %v3086
        %3088 = vmatprep.mubr.bf16.mxu0 %v1491
        %3089 = vmatmul.mubr.bf16.gmra.mrb[0].mxu0 %v1490
        %v3090 = vpop.f32.mrb[0].mxu0
        %v3091 = vadd.f32 %v969, %v3090
        %v3092 = vpop.f32.mrb[0].mxu0
        %v3093 = vadd.f32 %v973, %v3092
        %v3094 = vpop.f32.mrb[0].mxu0
        %v3095 = vadd.f32 %v969, %v3094
        %v3096 = vpop.f32.mrb[0].mxu0
        %v3097 = vadd.f32 %v973, %v3096
        %3098 = vdwg.mxu0
        %3099 = vmatprep.subr.bf16.mxu0 %v2459
        %3100 = vmatpush1.bf16.msra.mxu0 %v2458
        %3101 = vmatprep.subr.bf16.mxu0 %v2463
        %3102 = vmatpush1.bf16.msra.mxu0 %v2462
        %3103 = vmatprep.subr.bf16.mxu0 %v2467
        %3104 = vmatpush1.bf16.msra.mxu0 %v2466
        %3105 = vmatprep.subr.bf16.mxu0 %v2471
        %3106 = vmatpush1.bf16.msra.mxu0 %v2470
        %3107 = vmatprep.subr.bf16.mxu0 %v2475
        %3108 = vmatpush1.bf16.msra.mxu0 %v2474
        %3109 = vmatprep.subr.bf16.mxu0 %v2479
        %3110 = vmatpush1.bf16.msra.mxu0 %v2478
        %3111 = vmatprep.subr.bf16.mxu0 %v2483
        %3112 = vmatpush1.bf16.msra.mxu0 %v2482
        %3113 = vmatprep.subr.bf16.mxu0 %v2487
        %3114 = vmatpush1.bf16.msra.mxu0 %v2486
        %3115 = vmatprep.subr.bf16.mxu0 %v2491
        %3116 = vmatpush1.bf16.msra.mxu0 %v2490
        %3117 = vmatprep.subr.bf16.mxu0 %v2495
        %3118 = vmatpush1.bf16.msra.mxu0 %v2494
        %3119 = vmatprep.subr.bf16.mxu0 %v2499
        %3120 = vmatpush1.bf16.msra.mxu0 %v2498
        %3121 = vmatprep.subr.bf16.mxu0 %v2503
        %3122 = vmatpush1.bf16.msra.mxu0 %v2502
        %3123 = vmatprep.subr.bf16.mxu0 %v2507
        %3124 = vmatpush1.bf16.msra.mxu0 %v2506
        %3125 = vmatprep.subr.bf16.mxu0 %v2511
        %3126 = vmatpush1.bf16.msra.mxu0 %v2510
        %3127 = vmatprep.subr.bf16.mxu0 %v2515
        %3128 = vmatpush1.bf16.msra.mxu0 %v2514
        %3129 = vmatprep.subr.bf16.mxu0 %v2519
        %3130 = vmatpush1.bf16.msra.mxu0 %v2518
        %3131 = vmatprep.mubr.bf16.mxu0 %v1373
        %3132 = vmatmul.mubr.bf16.gmra.mrb[0].mxu0 %v1372
        %v3133 = vpop.f32.mrb[0].mxu0
        %v3134 = vadd.f32 %v2941, %v3133
        %v3135 = vpop.f32.mrb[0].mxu0
        %v3136 = vadd.f32 %v2943, %v3135
        %v3137 = vpop.f32.mrb[0].mxu0
        %v3138 = vadd.f32 %v2945, %v3137
        %v3139 = vpop.f32.mrb[0].mxu0
        %v3140 = vadd.f32 %v2947, %v3139
        %3141 = vmatprep.mubr.bf16.mxu0 %v1381
        %3142 = vmatmul.mubr.bf16.gmra.mrb[0].mxu0 %v1380
        %v3143 = vpop.f32.mrb[0].mxu0
        %v3144 = vadd.f32 %v2951, %v3143
        %v3145 = vpop.f32.mrb[0].mxu0
        %v3146 = vadd.f32 %v2953, %v3145
        %v3147 = vpop.f32.mrb[0].mxu0
        %v3148 = vadd.f32 %v2955, %v3147
        %v3149 = vpop.f32.mrb[0].mxu0
        %v3150 = vadd.f32 %v2957, %v3149
        %3151 = vmatprep.mubr.bf16.mxu0 %v1389
        %3152 = vmatmul.mubr.bf16.gmra.mrb[0].mxu0 %v1388
        %v3153 = vpop.f32.mrb[0].mxu0
        %v3154 = vadd.f32 %v2961, %v3153
        %v3155 = vpop.f32.mrb[0].mxu0
        %v3156 = vadd.f32 %v2963, %v3155
        %v3157 = vpop.f32.mrb[0].mxu0
        %v3158 = vadd.f32 %v2965, %v3157
        %v3159 = vpop.f32.mrb[0].mxu0
        %v3160 = vadd.f32 %v2967, %v3159
        %3161 = vmatprep.mubr.bf16.mxu0 %v1397
        %3162 = vmatmul.mubr.bf16.gmra.mrb[0].mxu0 %v1396
        %v3163 = vpop.f32.mrb[0].mxu0
        %v3164 = vadd.f32 %v2971, %v3163
        %v3165 = vpop.f32.mrb[0].mxu0
        %v3166 = vadd.f32 %v2973, %v3165
        %v3167 = vpop.f32.mrb[0].mxu0
        %v3168 = vadd.f32 %v2975, %v3167
        %v3169 = vpop.f32.mrb[0].mxu0
        %v3170 = vadd.f32 %v2977, %v3169
        %3171 = vmatprep.mubr.bf16.mxu0 %v1405
        %3172 = vmatmul.mubr.bf16.gmra.mrb[0].mxu0 %v1404
        %v3173 = vpop.f32.mrb[0].mxu0
        %v3174 = vadd.f32 %v2981, %v3173
        %v3175 = vpop.f32.mrb[0].mxu0
        %v3176 = vadd.f32 %v2983, %v3175
        %v3177 = vpop.f32.mrb[0].mxu0
        %v3178 = vadd.f32 %v2985, %v3177
        %v3179 = vpop.f32.mrb[0].mxu0
        %v3180 = vadd.f32 %v2987, %v3179
        %3181 = vmatprep.mubr.bf16.mxu0 %v1413
        %3182 = vmatmul.mubr.bf16.gmra.mrb[0].mxu0 %v1412
        %v3183 = vpop.f32.mrb[0].mxu0
        %v3184 = vadd.f32 %v2991, %v3183
        %v3185 = vpop.f32.mrb[0].mxu0
        %v3186 = vadd.f32 %v2993, %v3185
        %v3187 = vpop.f32.mrb[0].mxu0
        %v3188 = vadd.f32 %v2995, %v3187
        %v3189 = vpop.f32.mrb[0].mxu0
        %v3190 = vadd.f32 %v2997, %v3189
        %3191 = vmatprep.mubr.bf16.mxu0 %v1421
        %3192 = vmatmul.mubr.bf16.gmra.mrb[0].mxu0 %v1420
        %v3193 = vpop.f32.mrb[0].mxu0
        %v3194 = vadd.f32 %v3001, %v3193
        %v3195 = vpop.f32.mrb[0].mxu0
        %v3196 = vadd.f32 %v3003, %v3195
        %v3197 = vpop.f32.mrb[0].mxu0
        %v3198 = vadd.f32 %v3005, %v3197
        %v3199 = vpop.f32.mrb[0].mxu0
        %v3200 = vadd.f32 %v3007, %v3199
        %3201 = vmatprep.mubr.bf16.mxu0 %v1429
        %3202 = vmatmul.mubr.bf16.gmra.mrb[0].mxu0 %v1428
        %v3203 = vpop.f32.mrb[0].mxu0
        %v3204 = vadd.f32 %v3011, %v3203
        %v3205 = vpop.f32.mrb[0].mxu0
        %v3206 = vadd.f32 %v3013, %v3205
        %v3207 = vpop.f32.mrb[0].mxu0
        %v3208 = vadd.f32 %v3015, %v3207
        %v3209 = vpop.f32.mrb[0].mxu0
        %v3210 = vadd.f32 %v3017, %v3209
        %3211 = vmatprep.mubr.bf16.mxu0 %v1437
        %3212 = vmatmul.mubr.bf16.gmra.mrb[0].mxu0 %v1436
        %v3213 = vpop.f32.mrb[0].mxu0
        %v3214 = vadd.f32 %v3021, %v3213
        %v3215 = vpop.f32.mrb[0].mxu0
        %v3216 = vadd.f32 %v3023, %v3215
        %v3217 = vpop.f32.mrb[0].mxu0
        %v3218 = vadd.f32 %v3025, %v3217
        %v3219 = vpop.f32.mrb[0].mxu0
        %v3220 = vadd.f32 %v3027, %v3219
        %3221 = vmatprep.mubr.bf16.mxu0 %v1445
        %3222 = vmatmul.mubr.bf16.gmra.mrb[0].mxu0 %v1444
        %v3223 = vpop.f32.mrb[0].mxu0
        %v3224 = vadd.f32 %v3031, %v3223
        %v3225 = vpop.f32.mrb[0].mxu0
        %v3226 = vadd.f32 %v3033, %v3225
        %v3227 = vpop.f32.mrb[0].mxu0
        %v3228 = vadd.f32 %v3035, %v3227
        %v3229 = vpop.f32.mrb[0].mxu0
        %v3230 = vadd.f32 %v3037, %v3229
        %3231 = vmatprep.mubr.bf16.mxu0 %v1453
        %3232 = vmatmul.mubr.bf16.gmra.mrb[0].mxu0 %v1452
        %v3233 = vpop.f32.mrb[0].mxu0
        %v3234 = vadd.f32 %v3041, %v3233
        %v3235 = vpop.f32.mrb[0].mxu0
        %v3236 = vadd.f32 %v3043, %v3235
        %v3237 = vpop.f32.mrb[0].mxu0
        %v3238 = vadd.f32 %v3045, %v3237
        %v3239 = vpop.f32.mrb[0].mxu0
        %v3240 = vadd.f32 %v3047, %v3239
        %3241 = vmatprep.mubr.bf16.mxu0 %v1461
        %3242 = vmatmul.mubr.bf16.gmra.mrb[0].mxu0 %v1460
        %v3243 = vpop.f32.mrb[0].mxu0
        %v3244 = vadd.f32 %v3051, %v3243
        %v3245 = vpop.f32.mrb[0].mxu0
        %v3246 = vadd.f32 %v3053, %v3245
        %v3247 = vpop.f32.mrb[0].mxu0
        %v3248 = vadd.f32 %v3055, %v3247
        %v3249 = vpop.f32.mrb[0].mxu0
        %v3250 = vadd.f32 %v3057, %v3249
        %3251 = vmatprep.mubr.bf16.mxu0 %v1469
        %3252 = vmatmul.mubr.bf16.gmra.mrb[0].mxu0 %v1468
        %v3253 = vpop.f32.mrb[0].mxu0
        %v3254 = vadd.f32 %v3061, %v3253
        %v3255 = vpop.f32.mrb[0].mxu0
        %v3256 = vadd.f32 %v3063, %v3255
        %v3257 = vpop.f32.mrb[0].mxu0
        %v3258 = vadd.f32 %v3065, %v3257
        %v3259 = vpop.f32.mrb[0].mxu0
        %v3260 = vadd.f32 %v3067, %v3259
        %3261 = vmatprep.mubr.bf16.mxu0 %v1477
        %3262 = vmatmul.mubr.bf16.gmra.mrb[0].mxu0 %v1476
        %v3263 = vpop.f32.mrb[0].mxu0
        %v3264 = vadd.f32 %v3071, %v3263
        %v3265 = vpop.f32.mrb[0].mxu0
        %v3266 = vadd.f32 %v3073, %v3265
        %v3267 = vpop.f32.mrb[0].mxu0
        %v3268 = vadd.f32 %v3075, %v3267
        %v3269 = vpop.f32.mrb[0].mxu0
        %v3270 = vadd.f32 %v3077, %v3269
        %3271 = vmatprep.mubr.bf16.mxu0 %v1485
        %3272 = vmatmul.mubr.bf16.gmra.mrb[0].mxu0 %v1484
        %v3273 = vpop.f32.mrb[0].mxu0
        %v3274 = vadd.f32 %v3081, %v3273
        %v3275 = vpop.f32.mrb[0].mxu0
        %v3276 = vadd.f32 %v3083, %v3275
        %v3277 = vpop.f32.mrb[0].mxu0
        %v3278 = vadd.f32 %v3085, %v3277
        %v3279 = vpop.f32.mrb[0].mxu0
        %v3280 = vadd.f32 %v3087, %v3279
        %3281 = vmatprep.mubr.bf16.mxu0 %v1493
        %3282 = vmatmul.mubr.bf16.gmra.mrb[0].mxu0 %v1492
        %v3283 = vpop.f32.mrb[0].mxu0
        %v3284 = vadd.f32 %v3091, %v3283
        %v3285 = vpop.f32.mrb[0].mxu0
        %v3286 = vadd.f32 %v3093, %v3285
        %v3287 = vpop.f32.mrb[0].mxu0
        %v3288 = vadd.f32 %v3095, %v3287
        %v3289 = vpop.f32.mrb[0].mxu0
        %v3290 = vadd.f32 %v3097, %v3289
        %3291 = vdwg.mxu0
        %3292 = vmatprep.subr.bf16.mxu0 %v2523
        %3293 = vmatpush1.bf16.msra.mxu0 %v2522
        %3294 = vmatprep.subr.bf16.mxu0 %v2527
        %3295 = vmatpush1.bf16.msra.mxu0 %v2526
        %3296 = vmatprep.subr.bf16.mxu0 %v2531
        %3297 = vmatpush1.bf16.msra.mxu0 %v2530
        %3298 = vmatprep.subr.bf16.mxu0 %v2535
        %3299 = vmatpush1.bf16.msra.mxu0 %v2534
        %3300 = vmatprep.subr.bf16.mxu0 %v2539
        %3301 = vmatpush1.bf16.msra.mxu0 %v2538
        %3302 = vmatprep.subr.bf16.mxu0 %v2543
        %3303 = vmatpush1.bf16.msra.mxu0 %v2542
        %3304 = vmatprep.subr.bf16.mxu0 %v2547
        %3305 = vmatpush1.bf16.msra.mxu0 %v2546
        %3306 = vmatprep.subr.bf16.mxu0 %v2551
        %3307 = vmatpush1.bf16.msra.mxu0 %v2550
        %3308 = vmatprep.subr.bf16.mxu0 %v2555
        %3309 = vmatpush1.bf16.msra.mxu0 %v2554
        %3310 = vmatprep.subr.bf16.mxu0 %v2559
        %3311 = vmatpush1.bf16.msra.mxu0 %v2558
        %3312 = vmatprep.subr.bf16.mxu0 %v2563
        %3313 = vmatpush1.bf16.msra.mxu0 %v2562
        %3314 = vmatprep.subr.bf16.mxu0 %v2567
        %3315 = vmatpush1.bf16.msra.mxu0 %v2566
        %3316 = vmatprep.subr.bf16.mxu0 %v2571
        %3317 = vmatpush1.bf16.msra.mxu0 %v2570
        %3318 = vmatprep.subr.bf16.mxu0 %v2575
        %3319 = vmatpush1.bf16.msra.mxu0 %v2574
        %3320 = vmatprep.subr.bf16.mxu0 %v2579
        %3321 = vmatpush1.bf16.msra.mxu0 %v2578
        %3322 = vmatprep.subr.bf16.mxu0 %v2583
        %3323 = vmatpush1.bf16.msra.mxu0 %v2582
        %3324 = vmatprep.mubr.bf16.mxu0 %v1375
        %3325 = vmatmul.mubr.bf16.gmra.mrb[0].mxu0 %v1374
        %v3326 = vpop.f32.mrb[0].mxu0
        %v3327 = vadd.f32 %v3134, %v3326
        %v3328 = vpop.f32.mrb[0].mxu0
        %v3329 = vadd.f32 %v3136, %v3328
        %v3330 = vpop.f32.mrb[0].mxu0
        %v3331 = vadd.f32 %v3138, %v3330
        %v3332 = vpop.f32.mrb[0].mxu0
        %v3333 = vadd.f32 %v3140, %v3332
        %3334 = vmatprep.mubr.bf16.mxu0 %v1383
        %3335 = vmatmul.mubr.bf16.gmra.mrb[0].mxu0 %v1382
        %v3336 = vpop.f32.mrb[0].mxu0
        %v3337 = vadd.f32 %v3144, %v3336
        %v3338 = vpop.f32.mrb[0].mxu0
        %v3339 = vadd.f32 %v3146, %v3338
        %v3340 = vpop.f32.mrb[0].mxu0
        %v3341 = vadd.f32 %v3148, %v3340
        %v3342 = vpop.f32.mrb[0].mxu0
        %v3343 = vadd.f32 %v3150, %v3342
        %3344 = vmatprep.mubr.bf16.mxu0 %v1391
        %3345 = vmatmul.mubr.bf16.gmra.mrb[0].mxu0 %v1390
        %v3346 = vpop.f32.mrb[0].mxu0
        %v3347 = vadd.f32 %v3154, %v3346
        %v3348 = vpop.f32.mrb[0].mxu0
        %v3349 = vadd.f32 %v3156, %v3348
        %v3350 = vpop.f32.mrb[0].mxu0
        %v3351 = vadd.f32 %v3158, %v3350
        %v3352 = vpop.f32.mrb[0].mxu0
        %v3353 = vadd.f32 %v3160, %v3352
        %3354 = vmatprep.mubr.bf16.mxu0 %v1399
        %3355 = vmatmul.mubr.bf16.gmra.mrb[0].mxu0 %v1398
        %v3356 = vpop.f32.mrb[0].mxu0
        %v3357 = vadd.f32 %v3164, %v3356
        %v3358 = vpop.f32.mrb[0].mxu0
        %v3359 = vadd.f32 %v3166, %v3358
        %v3360 = vpop.f32.mrb[0].mxu0
        %v3361 = vadd.f32 %v3168, %v3360
        %v3362 = vpop.f32.mrb[0].mxu0
        %v3363 = vadd.f32 %v3170, %v3362
        %3364 = vmatprep.mubr.bf16.mxu0 %v1407
        %3365 = vmatmul.mubr.bf16.gmra.mrb[0].mxu0 %v1406
        %v3366 = vpop.f32.mrb[0].mxu0
        %v3367 = vadd.f32 %v3174, %v3366
        %v3368 = vpop.f32.mrb[0].mxu0
        %v3369 = vadd.f32 %v3176, %v3368
        %v3370 = vpop.f32.mrb[0].mxu0
        %v3371 = vadd.f32 %v3178, %v3370
        %v3372 = vpop.f32.mrb[0].mxu0
        %v3373 = vadd.f32 %v3180, %v3372
        %3374 = vmatprep.mubr.bf16.mxu0 %v1415
        %3375 = vmatmul.mubr.bf16.gmra.mrb[0].mxu0 %v1414
        %v3376 = vpop.f32.mrb[0].mxu0
        %v3377 = vadd.f32 %v3184, %v3376
        %v3378 = vpop.f32.mrb[0].mxu0
        %v3379 = vadd.f32 %v3186, %v3378
        %v3380 = vpop.f32.mrb[0].mxu0
        %v3381 = vadd.f32 %v3188, %v3380
        %v3382 = vpop.f32.mrb[0].mxu0
        %v3383 = vadd.f32 %v3190, %v3382
        %3384 = vmatprep.mubr.bf16.mxu0 %v1423
        %3385 = vmatmul.mubr.bf16.gmra.mrb[0].mxu0 %v1422
        %v3386 = vpop.f32.mrb[0].mxu0
        %v3387 = vadd.f32 %v3194, %v3386
        %v3388 = vpop.f32.mrb[0].mxu0
        %v3389 = vadd.f32 %v3196, %v3388
        %v3390 = vpop.f32.mrb[0].mxu0
        %v3391 = vadd.f32 %v3198, %v3390
        %v3392 = vpop.f32.mrb[0].mxu0
        %v3393 = vadd.f32 %v3200, %v3392
        %3394 = vmatprep.mubr.bf16.mxu0 %v1431
        %3395 = vmatmul.mubr.bf16.gmra.mrb[0].mxu0 %v1430
        %v3396 = vpop.f32.mrb[0].mxu0
        %v3397 = vadd.f32 %v3204, %v3396
        %v3398 = vpop.f32.mrb[0].mxu0
        %v3399 = vadd.f32 %v3206, %v3398
        %v3400 = vpop.f32.mrb[0].mxu0
        %v3401 = vadd.f32 %v3208, %v3400
        %v3402 = vpop.f32.mrb[0].mxu0
        %v3403 = vadd.f32 %v3210, %v3402
        %3404 = vmatprep.mubr.bf16.mxu0 %v1439
        %3405 = vmatmul.mubr.bf16.gmra.mrb[0].mxu0 %v1438
        %v3406 = vpop.f32.mrb[0].mxu0
        %v3407 = vadd.f32 %v3214, %v3406
        %v3408 = vpop.f32.mrb[0].mxu0
        %v3409 = vadd.f32 %v3216, %v3408
        %v3410 = vpop.f32.mrb[0].mxu0
        %v3411 = vadd.f32 %v3218, %v3410
        %v3412 = vpop.f32.mrb[0].mxu0
        %v3413 = vadd.f32 %v3220, %v3412
        %3414 = vmatprep.mubr.bf16.mxu0 %v1447
        %3415 = vmatmul.mubr.bf16.gmra.mrb[0].mxu0 %v1446
        %v3416 = vpop.f32.mrb[0].mxu0
        %v3417 = vadd.f32 %v3224, %v3416
        %v3418 = vpop.f32.mrb[0].mxu0
        %v3419 = vadd.f32 %v3226, %v3418
        %v3420 = vpop.f32.mrb[0].mxu0
        %v3421 = vadd.f32 %v3228, %v3420
        %v3422 = vpop.f32.mrb[0].mxu0
        %v3423 = vadd.f32 %v3230, %v3422
        %3424 = vmatprep.mubr.bf16.mxu0 %v1455
        %3425 = vmatmul.mubr.bf16.gmra.mrb[0].mxu0 %v1454
        %v3426 = vpop.f32.mrb[0].mxu0
        %v3427 = vadd.f32 %v3234, %v3426
        %v3428 = vpop.f32.mrb[0].mxu0
        %v3429 = vadd.f32 %v3236, %v3428
        %v3430 = vpop.f32.mrb[0].mxu0
        %v3431 = vadd.f32 %v3238, %v3430
        %v3432 = vpop.f32.mrb[0].mxu0
        %v3433 = vadd.f32 %v3240, %v3432
        %3434 = vmatprep.mubr.bf16.mxu0 %v1463
        %3435 = vmatmul.mubr.bf16.gmra.mrb[0].mxu0 %v1462
        %v3436 = vpop.f32.mrb[0].mxu0
        %v3437 = vadd.f32 %v3244, %v3436
        %v3438 = vpop.f32.mrb[0].mxu0
        %v3439 = vadd.f32 %v3246, %v3438
        %v3440 = vpop.f32.mrb[0].mxu0
        %v3441 = vadd.f32 %v3248, %v3440
        %v3442 = vpop.f32.mrb[0].mxu0
        %v3443 = vadd.f32 %v3250, %v3442
        %3444 = vmatprep.mubr.bf16.mxu0 %v1471
        %3445 = vmatmul.mubr.bf16.gmra.mrb[0].mxu0 %v1470
        %v3446 = vpop.f32.mrb[0].mxu0
        %v3447 = vadd.f32 %v3254, %v3446
        %v3448 = vpop.f32.mrb[0].mxu0
        %v3449 = vadd.f32 %v3256, %v3448
        %v3450 = vpop.f32.mrb[0].mxu0
        %v3451 = vadd.f32 %v3258, %v3450
        %v3452 = vpop.f32.mrb[0].mxu0
        %v3453 = vadd.f32 %v3260, %v3452
        %3454 = vmatprep.mubr.bf16.mxu0 %v1479
        %3455 = vmatmul.mubr.bf16.gmra.mrb[0].mxu0 %v1478
        %v3456 = vpop.f32.mrb[0].mxu0
        %v3457 = vadd.f32 %v3264, %v3456
        %v3458 = vpop.f32.mrb[0].mxu0
        %v3459 = vadd.f32 %v3266, %v3458
        %v3460 = vpop.f32.mrb[0].mxu0
        %v3461 = vadd.f32 %v3268, %v3460
        %v3462 = vpop.f32.mrb[0].mxu0
        %v3463 = vadd.f32 %v3270, %v3462
        %3464 = vmatprep.mubr.bf16.mxu0 %v1487
        %3465 = vmatmul.mubr.bf16.gmra.mrb[0].mxu0 %v1486
        %v3466 = vpop.f32.mrb[0].mxu0
        %v3467 = vadd.f32 %v3274, %v3466
        %v3468 = vpop.f32.mrb[0].mxu0
        %v3469 = vadd.f32 %v3276, %v3468
        %v3470 = vpop.f32.mrb[0].mxu0
        %v3471 = vadd.f32 %v3278, %v3470
        %v3472 = vpop.f32.mrb[0].mxu0
        %v3473 = vadd.f32 %v3280, %v3472
        %3474 = vmatprep.mubr.bf16.mxu0 %v1495
        %3475 = vmatmul.mubr.bf16.gmra.mrb[0].mxu0 %v1494
        %v3476 = vpop.f32.mrb[0].mxu0
        %v3477 = vadd.f32 %v3284, %v3476
        %v3478 = vpop.f32.mrb[0].mxu0
        %v3479 = vadd.f32 %v3286, %v3478
        %v3480 = vpop.f32.mrb[0].mxu0
        %v3481 = vadd.f32 %v3288, %v3480
        %v3482 = vpop.f32.mrb[0].mxu0
        %v3483 = vadd.f32 %v3290, %v3482
        %3484 = vdwg.mxu0
        %3485 = vmatprep.subr.bf16.mxu0 %v2587
        %3486 = vmatpush1.bf16.msra.mxu0 %v2586
        %3487 = vmatprep.subr.bf16.mxu0 %v2591
        %3488 = vmatpush1.bf16.msra.mxu0 %v2590
        %3489 = vmatprep.subr.bf16.mxu0 %v2595
        %3490 = vmatpush1.bf16.msra.mxu0 %v2594
        %3491 = vmatprep.subr.bf16.mxu0 %v2599
        %3492 = vmatpush1.bf16.msra.mxu0 %v2598
        %3493 = vmatprep.subr.bf16.mxu0 %v2603
        %3494 = vmatpush1.bf16.msra.mxu0 %v2602
        %3495 = vmatprep.subr.bf16.mxu0 %v2607
        %3496 = vmatpush1.bf16.msra.mxu0 %v2606
        %3497 = vmatprep.subr.bf16.mxu0 %v2611
        %3498 = vmatpush1.bf16.msra.mxu0 %v2610
        %3499 = vmatprep.subr.bf16.mxu0 %v2615
        %3500 = vmatpush1.bf16.msra.mxu0 %v2614
        %3501 = vmatprep.subr.bf16.mxu0 %v2619
        %3502 = vmatpush1.bf16.msra.mxu0 %v2618
        %3503 = vmatprep.subr.bf16.mxu0 %v2623
        %3504 = vmatpush1.bf16.msra.mxu0 %v2622
        %3505 = vmatprep.subr.bf16.mxu0 %v2627
        %3506 = vmatpush1.bf16.msra.mxu0 %v2626
        %3507 = vmatprep.subr.bf16.mxu0 %v2631
        %3508 = vmatpush1.bf16.msra.mxu0 %v2630
        %3509 = vmatprep.subr.bf16.mxu0 %v2635
        %3510 = vmatpush1.bf16.msra.mxu0 %v2634
        %3511 = vmatprep.subr.bf16.mxu0 %v2639
        %3512 = vmatpush1.bf16.msra.mxu0 %v2638
        %3513 = vmatprep.subr.bf16.mxu0 %v2643
        %3514 = vmatpush1.bf16.msra.mxu0 %v2642
        %3515 = vmatprep.subr.bf16.mxu0 %v2647
        %3516 = vmatpush1.bf16.msra.mxu0 %v2646
        %3517 = vmatprep.mubr.bf16.mxu0 %v1377
        %3518 = vmatmul.mubr.bf16.gmra.mrb[0].mxu0 %v1376
        %v3519 = vpop.f32.mrb[0].mxu0
        %v3520 = vadd.f32 %v3327, %v3519
        %v3521 = vpop.f32.mrb[0].mxu0
        %v3522 = vadd.f32 %v3329, %v3521
        %v3523 = vpop.f32.mrb[0].mxu0
        %v3524 = vadd.f32 %v3331, %v3523
        %v3525 = vpop.f32.mrb[0].mxu0
        %v3526 = vadd.f32 %v3333, %v3525
        %3527 = vmatprep.mubr.bf16.mxu0 %v1385
        %3528 = vmatmul.mubr.bf16.gmra.mrb[0].mxu0 %v1384
        %v3529 = vpop.f32.mrb[0].mxu0
        %v3530 = vadd.f32 %v3337, %v3529
        %v3531 = vpop.f32.mrb[0].mxu0
        %v3532 = vadd.f32 %v3339, %v3531
        %v3533 = vpop.f32.mrb[0].mxu0
        %v3534 = vadd.f32 %v3341, %v3533
        %v3535 = vpop.f32.mrb[0].mxu0
        %v3536 = vadd.f32 %v3343, %v3535
        %3537 = vmatprep.mubr.bf16.mxu0 %v1393
        %3538 = vmatmul.mubr.bf16.gmra.mrb[0].mxu0 %v1392
        %v3539 = vpop.f32.mrb[0].mxu0
        %v3540 = vadd.f32 %v3347, %v3539
        %v3541 = vpop.f32.mrb[0].mxu0
        %v3542 = vadd.f32 %v3349, %v3541
        %v3543 = vpop.f32.mrb[0].mxu0
        %v3544 = vadd.f32 %v3351, %v3543
        %v3545 = vpop.f32.mrb[0].mxu0
        %v3546 = vadd.f32 %v3353, %v3545
        %3547 = vmatprep.mubr.bf16.mxu0 %v1401
        %3548 = vmatmul.mubr.bf16.gmra.mrb[0].mxu0 %v1400
        %v3549 = vpop.f32.mrb[0].mxu0
        %v3550 = vadd.f32 %v3357, %v3549
        %v3551 = vpop.f32.mrb[0].mxu0
        %v3552 = vadd.f32 %v3359, %v3551
        %v3553 = vpop.f32.mrb[0].mxu0
        %v3554 = vadd.f32 %v3361, %v3553
        %v3555 = vpop.f32.mrb[0].mxu0
        %v3556 = vadd.f32 %v3363, %v3555
        %3557 = vmatprep.mubr.bf16.mxu0 %v1409
        %3558 = vmatmul.mubr.bf16.gmra.mrb[0].mxu0 %v1408
        %v3559 = vpop.f32.mrb[0].mxu0
        %v3560 = vadd.f32 %v3367, %v3559
        %v3561 = vpop.f32.mrb[0].mxu0
        %v3562 = vadd.f32 %v3369, %v3561
        %v3563 = vpop.f32.mrb[0].mxu0
        %v3564 = vadd.f32 %v3371, %v3563
        %v3565 = vpop.f32.mrb[0].mxu0
        %v3566 = vadd.f32 %v3373, %v3565
        %3567 = vmatprep.mubr.bf16.mxu0 %v1417
        %3568 = vmatmul.mubr.bf16.gmra.mrb[0].mxu0 %v1416
        %v3569 = vpop.f32.mrb[0].mxu0
        %v3570 = vadd.f32 %v3377, %v3569
        %v3571 = vpop.f32.mrb[0].mxu0
        %v3572 = vadd.f32 %v3379, %v3571
        %v3573 = vpop.f32.mrb[0].mxu0
        %v3574 = vadd.f32 %v3381, %v3573
        %v3575 = vpop.f32.mrb[0].mxu0
        %v3576 = vadd.f32 %v3383, %v3575
        %3577 = vmatprep.mubr.bf16.mxu0 %v1425
        %3578 = vmatmul.mubr.bf16.gmra.mrb[0].mxu0 %v1424
        %v3579 = vpop.f32.mrb[0].mxu0
        %v3580 = vadd.f32 %v3387, %v3579
        %v3581 = vpop.f32.mrb[0].mxu0
        %v3582 = vadd.f32 %v3389, %v3581
        %v3583 = vpop.f32.mrb[0].mxu0
        %v3584 = vadd.f32 %v3391, %v3583
        %v3585 = vpop.f32.mrb[0].mxu0
        %v3586 = vadd.f32 %v3393, %v3585
        %3587 = vmatprep.mubr.bf16.mxu0 %v1433
        %3588 = vmatmul.mubr.bf16.gmra.mrb[0].mxu0 %v1432
        %v3589 = vpop.f32.mrb[0].mxu0
        %v3590 = vadd.f32 %v3397, %v3589
        %v3591 = vpop.f32.mrb[0].mxu0
        %v3592 = vadd.f32 %v3399, %v3591
        %v3593 = vpop.f32.mrb[0].mxu0
        %v3594 = vadd.f32 %v3401, %v3593
        %v3595 = vpop.f32.mrb[0].mxu0
        %v3596 = vadd.f32 %v3403, %v3595
        %3597 = vmatprep.mubr.bf16.mxu0 %v1441
        %3598 = vmatmul.mubr.bf16.gmra.mrb[0].mxu0 %v1440
        %v3599 = vpop.f32.mrb[0].mxu0
        %v3600 = vadd.f32 %v3407, %v3599
        %v3601 = vpop.f32.mrb[0].mxu0
        %v3602 = vadd.f32 %v3409, %v3601
        %v3603 = vpop.f32.mrb[0].mxu0
        %v3604 = vadd.f32 %v3411, %v3603
        %v3605 = vpop.f32.mrb[0].mxu0
        %v3606 = vadd.f32 %v3413, %v3605
        %3607 = vmatprep.mubr.bf16.mxu0 %v1449
        %3608 = vmatmul.mubr.bf16.gmra.mrb[0].mxu0 %v1448
        %v3609 = vpop.f32.mrb[0].mxu0
        %v3610 = vadd.f32 %v3417, %v3609
        %v3611 = vpop.f32.mrb[0].mxu0
        %v3612 = vadd.f32 %v3419, %v3611
        %v3613 = vpop.f32.mrb[0].mxu0
        %v3614 = vadd.f32 %v3421, %v3613
        %v3615 = vpop.f32.mrb[0].mxu0
        %v3616 = vadd.f32 %v3423, %v3615
        %3617 = vmatprep.mubr.bf16.mxu0 %v1457
        %3618 = vmatmul.mubr.bf16.gmra.mrb[0].mxu0 %v1456
        %v3619 = vpop.f32.mrb[0].mxu0
        %v3620 = vadd.f32 %v3427, %v3619
        %v3621 = vpop.f32.mrb[0].mxu0
        %v3622 = vadd.f32 %v3429, %v3621
        %v3623 = vpop.f32.mrb[0].mxu0
        %v3624 = vadd.f32 %v3431, %v3623
        %v3625 = vpop.f32.mrb[0].mxu0
        %v3626 = vadd.f32 %v3433, %v3625
        %3627 = vmatprep.mubr.bf16.mxu0 %v1465
        %3628 = vmatmul.mubr.bf16.gmra.mrb[0].mxu0 %v1464
        %v3629 = vpop.f32.mrb[0].mxu0
        %v3630 = vadd.f32 %v3437, %v3629
        %v3631 = vpop.f32.mrb[0].mxu0
        %v3632 = vadd.f32 %v3439, %v3631
        %v3633 = vpop.f32.mrb[0].mxu0
        %v3634 = vadd.f32 %v3441, %v3633
        %v3635 = vpop.f32.mrb[0].mxu0
        %v3636 = vadd.f32 %v3443, %v3635
        %3637 = vmatprep.mubr.bf16.mxu0 %v1473
        %3638 = vmatmul.mubr.bf16.gmra.mrb[0].mxu0 %v1472
        %v3639 = vpop.f32.mrb[0].mxu0
        %v3640 = vadd.f32 %v3447, %v3639
        %v3641 = vpop.f32.mrb[0].mxu0
        %v3642 = vadd.f32 %v3449, %v3641
        %v3643 = vpop.f32.mrb[0].mxu0
        %v3644 = vadd.f32 %v3451, %v3643
        %v3645 = vpop.f32.mrb[0].mxu0
        %v3646 = vadd.f32 %v3453, %v3645
        %3647 = vmatprep.mubr.bf16.mxu0 %v1481
        %3648 = vmatmul.mubr.bf16.gmra.mrb[0].mxu0 %v1480
        %v3649 = vpop.f32.mrb[0].mxu0
        %v3650 = vadd.f32 %v3457, %v3649
        %v3651 = vpop.f32.mrb[0].mxu0
        %v3652 = vadd.f32 %v3459, %v3651
        %v3653 = vpop.f32.mrb[0].mxu0
        %v3654 = vadd.f32 %v3461, %v3653
        %v3655 = vpop.f32.mrb[0].mxu0
        %v3656 = vadd.f32 %v3463, %v3655
        %3657 = vmatprep.mubr.bf16.mxu0 %v1489
        %3658 = vmatmul.mubr.bf16.gmra.mrb[0].mxu0 %v1488
        %v3659 = vpop.f32.mrb[0].mxu0
        %v3660 = vadd.f32 %v3467, %v3659
        %v3661 = vpop.f32.mrb[0].mxu0
        %v3662 = vadd.f32 %v3469, %v3661
        %v3663 = vpop.f32.mrb[0].mxu0
        %v3664 = vadd.f32 %v3471, %v3663
        %v3665 = vpop.f32.mrb[0].mxu0
        %v3666 = vadd.f32 %v3473, %v3665
        %3667 = vmatprep.mubr.bf16.mxu0 %v1497
        %3668 = vmatmul.mubr.bf16.gmra.mrb[0].mxu0 %v1496
        %v3669 = vpop.f32.mrb[0].mxu0
        %v3670 = vadd.f32 %v3477, %v3669
        %v3671 = vpop.f32.mrb[0].mxu0
        %v3672 = vadd.f32 %v3479, %v3671
        %v3673 = vpop.f32.mrb[0].mxu0
        %v3674 = vadd.f32 %v3481, %v3673
        %v3675 = vpop.f32.mrb[0].mxu0
        %v3676 = vadd.f32 %v3483, %v3675
        %3677 = vdwg.mxu0
        %3678 = vmatprep.subr.bf16.mxu0 %v2397
        %3679 = vmatpush1.bf16.msra.mxu0 %v2396
        %3680 = vmatprep.subr.bf16.mxu0 %v2401
        %3681 = vmatpush1.bf16.msra.mxu0 %v2400
        %3682 = vmatprep.subr.bf16.mxu0 %v2405
        %3683 = vmatpush1.bf16.msra.mxu0 %v2404
        %3684 = vmatprep.subr.bf16.mxu0 %v2409
        %3685 = vmatpush1.bf16.msra.mxu0 %v2408
        %3686 = vmatprep.subr.bf16.mxu0 %v2413
        %3687 = vmatpush1.bf16.msra.mxu0 %v2412
        %3688 = vmatprep.subr.bf16.mxu0 %v2417
        %3689 = vmatpush1.bf16.msra.mxu0 %v2416
        %3690 = vmatprep.subr.bf16.mxu0 %v2421
        %3691 = vmatpush1.bf16.msra.mxu0 %v2420
        %3692 = vmatprep.subr.bf16.mxu0 %v2425
        %3693 = vmatpush1.bf16.msra.mxu0 %v2424
        %3694 = vmatprep.subr.bf16.mxu0 %v2429
        %3695 = vmatpush1.bf16.msra.mxu0 %v2428
        %3696 = vmatprep.subr.bf16.mxu0 %v2433
        %3697 = vmatpush1.bf16.msra.mxu0 %v2432
        %3698 = vmatprep.subr.bf16.mxu0 %v2437
        %3699 = vmatpush1.bf16.msra.mxu0 %v2436
        %3700 = vmatprep.subr.bf16.mxu0 %v2441
        %3701 = vmatpush1.bf16.msra.mxu0 %v2440
        %3702 = vmatprep.subr.bf16.mxu0 %v2445
        %3703 = vmatpush1.bf16.msra.mxu0 %v2444
        %3704 = vmatprep.subr.bf16.mxu0 %v2449
        %3705 = vmatpush1.bf16.msra.mxu0 %v2448
        %3706 = vmatprep.subr.bf16.mxu0 %v2453
        %3707 = vmatpush1.bf16.msra.mxu0 %v2452
        %3708 = vmatprep.subr.bf16.mxu0 %v2457
        %3709 = vmatpush1.bf16.msra.mxu0 %v2456
        %3710 = vmatprep.mubr.bf16.mxu0 %v1371
        %3711 = vmatmul.mubr.bf16.gmra.mrb[0].mxu0 %v1370
        %v3712 = vpop.f32.mrb[0].mxu0
        %v3713 = vadd.f32 %v977, %v3712
        %v3714 = vpop.f32.mrb[0].mxu0
        %v3715 = vadd.f32 %v981, %v3714
        %v3716 = vpop.f32.mrb[0].mxu0
        %v3717 = vadd.f32 %v977, %v3716
        %v3718 = vpop.f32.mrb[0].mxu0
        %v3719 = vadd.f32 %v981, %v3718
        %3720 = vmatprep.mubr.bf16.mxu0 %v1379
        %3721 = vmatmul.mubr.bf16.gmra.mrb[0].mxu0 %v1378
        %v3722 = vpop.f32.mrb[0].mxu0
        %v3723 = vadd.f32 %v977, %v3722
        %v3724 = vpop.f32.mrb[0].mxu0
        %v3725 = vadd.f32 %v981, %v3724
        %v3726 = vpop.f32.mrb[0].mxu0
        %v3727 = vadd.f32 %v977, %v3726
        %v3728 = vpop.f32.mrb[0].mxu0
        %v3729 = vadd.f32 %v981, %v3728
        %3730 = vmatprep.mubr.bf16.mxu0 %v1387
        %3731 = vmatmul.mubr.bf16.gmra.mrb[0].mxu0 %v1386
        %v3732 = vpop.f32.mrb[0].mxu0
        %v3733 = vadd.f32 %v977, %v3732
        %v3734 = vpop.f32.mrb[0].mxu0
        %v3735 = vadd.f32 %v981, %v3734
        %v3736 = vpop.f32.mrb[0].mxu0
        %v3737 = vadd.f32 %v977, %v3736
        %v3738 = vpop.f32.mrb[0].mxu0
        %v3739 = vadd.f32 %v981, %v3738
        %3740 = vmatprep.mubr.bf16.mxu0 %v1395
        %3741 = vmatmul.mubr.bf16.gmra.mrb[0].mxu0 %v1394
        %v3742 = vpop.f32.mrb[0].mxu0
        %v3743 = vadd.f32 %v977, %v3742
        %v3744 = vpop.f32.mrb[0].mxu0
        %v3745 = vadd.f32 %v981, %v3744
        %v3746 = vpop.f32.mrb[0].mxu0
        %v3747 = vadd.f32 %v977, %v3746
        %v3748 = vpop.f32.mrb[0].mxu0
        %v3749 = vadd.f32 %v981, %v3748
        %3750 = vmatprep.mubr.bf16.mxu0 %v1403
        %3751 = vmatmul.mubr.bf16.gmra.mrb[0].mxu0 %v1402
        %v3752 = vpop.f32.mrb[0].mxu0
        %v3753 = vadd.f32 %v977, %v3752
        %v3754 = vpop.f32.mrb[0].mxu0
        %v3755 = vadd.f32 %v981, %v3754
        %v3756 = vpop.f32.mrb[0].mxu0
        %v3757 = vadd.f32 %v977, %v3756
        %v3758 = vpop.f32.mrb[0].mxu0
        %v3759 = vadd.f32 %v981, %v3758
        %3760 = vmatprep.mubr.bf16.mxu0 %v1411
        %3761 = vmatmul.mubr.bf16.gmra.mrb[0].mxu0 %v1410
        %v3762 = vpop.f32.mrb[0].mxu0
        %v3763 = vadd.f32 %v977, %v3762
        %v3764 = vpop.f32.mrb[0].mxu0
        %v3765 = vadd.f32 %v981, %v3764
        %v3766 = vpop.f32.mrb[0].mxu0
        %v3767 = vadd.f32 %v977, %v3766
        %v3768 = vpop.f32.mrb[0].mxu0
        %v3769 = vadd.f32 %v981, %v3768
        %3770 = vmatprep.mubr.bf16.mxu0 %v1419
        %3771 = vmatmul.mubr.bf16.gmra.mrb[0].mxu0 %v1418
        %v3772 = vpop.f32.mrb[0].mxu0
        %v3773 = vadd.f32 %v977, %v3772
        %v3774 = vpop.f32.mrb[0].mxu0
        %v3775 = vadd.f32 %v981, %v3774
        %v3776 = vpop.f32.mrb[0].mxu0
        %v3777 = vadd.f32 %v977, %v3776
        %v3778 = vpop.f32.mrb[0].mxu0
        %v3779 = vadd.f32 %v981, %v3778
        %3780 = vmatprep.mubr.bf16.mxu0 %v1427
        %3781 = vmatmul.mubr.bf16.gmra.mrb[0].mxu0 %v1426
        %v3782 = vpop.f32.mrb[0].mxu0
        %v3783 = vadd.f32 %v977, %v3782
        %v3784 = vpop.f32.mrb[0].mxu0
        %v3785 = vadd.f32 %v981, %v3784
        %v3786 = vpop.f32.mrb[0].mxu0
        %v3787 = vadd.f32 %v977, %v3786
        %v3788 = vpop.f32.mrb[0].mxu0
        %v3789 = vadd.f32 %v981, %v3788
        %3790 = vmatprep.mubr.bf16.mxu0 %v1435
        %3791 = vmatmul.mubr.bf16.gmra.mrb[0].mxu0 %v1434
        %v3792 = vpop.f32.mrb[0].mxu0
        %v3793 = vadd.f32 %v977, %v3792
        %v3794 = vpop.f32.mrb[0].mxu0
        %v3795 = vadd.f32 %v981, %v3794
        %v3796 = vpop.f32.mrb[0].mxu0
        %v3797 = vadd.f32 %v977, %v3796
        %v3798 = vpop.f32.mrb[0].mxu0
        %v3799 = vadd.f32 %v981, %v3798
        %3800 = vmatprep.mubr.bf16.mxu0 %v1443
        %3801 = vmatmul.mubr.bf16.gmra.mrb[0].mxu0 %v1442
        %v3802 = vpop.f32.mrb[0].mxu0
        %v3803 = vadd.f32 %v977, %v3802
        %v3804 = vpop.f32.mrb[0].mxu0
        %v3805 = vadd.f32 %v981, %v3804
        %v3806 = vpop.f32.mrb[0].mxu0
        %v3807 = vadd.f32 %v977, %v3806
        %v3808 = vpop.f32.mrb[0].mxu0
        %v3809 = vadd.f32 %v981, %v3808
        %3810 = vmatprep.mubr.bf16.mxu0 %v1451
        %3811 = vmatmul.mubr.bf16.gmra.mrb[0].mxu0 %v1450
        %v3812 = vpop.f32.mrb[0].mxu0
        %v3813 = vadd.f32 %v977, %v3812
        %v3814 = vpop.f32.mrb[0].mxu0
        %v3815 = vadd.f32 %v981, %v3814
        %v3816 = vpop.f32.mrb[0].mxu0
        %v3817 = vadd.f32 %v977, %v3816
        %v3818 = vpop.f32.mrb[0].mxu0
        %v3819 = vadd.f32 %v981, %v3818
        %3820 = vmatprep.mubr.bf16.mxu0 %v1459
        %3821 = vmatmul.mubr.bf16.gmra.mrb[0].mxu0 %v1458
        %v3822 = vpop.f32.mrb[0].mxu0
        %v3823 = vadd.f32 %v977, %v3822
        %v3824 = vpop.f32.mrb[0].mxu0
        %v3825 = vadd.f32 %v981, %v3824
        %v3826 = vpop.f32.mrb[0].mxu0
        %v3827 = vadd.f32 %v977, %v3826
        %v3828 = vpop.f32.mrb[0].mxu0
        %v3829 = vadd.f32 %v981, %v3828
        %3830 = vmatprep.mubr.bf16.mxu0 %v1467
        %3831 = vmatmul.mubr.bf16.gmra.mrb[0].mxu0 %v1466
        %v3832 = vpop.f32.mrb[0].mxu0
        %v3833 = vadd.f32 %v977, %v3832
        %v3834 = vpop.f32.mrb[0].mxu0
        %v3835 = vadd.f32 %v981, %v3834
        %v3836 = vpop.f32.mrb[0].mxu0
        %v3837 = vadd.f32 %v977, %v3836
        %v3838 = vpop.f32.mrb[0].mxu0
        %v3839 = vadd.f32 %v981, %v3838
        %3840 = vmatprep.mubr.bf16.mxu0 %v1475
        %3841 = vmatmul.mubr.bf16.gmra.mrb[0].mxu0 %v1474
        %v3842 = vpop.f32.mrb[0].mxu0
        %v3843 = vadd.f32 %v977, %v3842
        %v3844 = vpop.f32.mrb[0].mxu0
        %v3845 = vadd.f32 %v981, %v3844
        %v3846 = vpop.f32.mrb[0].mxu0
        %v3847 = vadd.f32 %v977, %v3846
        %v3848 = vpop.f32.mrb[0].mxu0
        %v3849 = vadd.f32 %v981, %v3848
        %3850 = vmatprep.mubr.bf16.mxu0 %v1483
        %3851 = vmatmul.mubr.bf16.gmra.mrb[0].mxu0 %v1482
        %v3852 = vpop.f32.mrb[0].mxu0
        %v3853 = vadd.f32 %v977, %v3852
        %v3854 = vpop.f32.mrb[0].mxu0
        %v3855 = vadd.f32 %v981, %v3854
        %v3856 = vpop.f32.mrb[0].mxu0
        %v3857 = vadd.f32 %v977, %v3856
        %v3858 = vpop.f32.mrb[0].mxu0
        %v3859 = vadd.f32 %v981, %v3858
        %3860 = vmatprep.mubr.bf16.mxu0 %v1491
        %3861 = vmatmul.mubr.bf16.gmra.mrb[0].mxu0 %v1490
        %v3862 = vpop.f32.mrb[0].mxu0
        %v3863 = vadd.f32 %v977, %v3862
        %v3864 = vpop.f32.mrb[0].mxu0
        %v3865 = vadd.f32 %v981, %v3864
        %v3866 = vpop.f32.mrb[0].mxu0
        %v3867 = vadd.f32 %v977, %v3866
        %v3868 = vpop.f32.mrb[0].mxu0
        %v3869 = vadd.f32 %v981, %v3868
        %3870 = vdwg.mxu0
        %3871 = vmatprep.subr.bf16.mxu0 %v2461
        %3872 = vmatpush1.bf16.msra.mxu0 %v2460
        %3873 = vmatprep.subr.bf16.mxu0 %v2465
        %3874 = vmatpush1.bf16.msra.mxu0 %v2464
        %3875 = vmatprep.subr.bf16.mxu0 %v2469
        %3876 = vmatpush1.bf16.msra.mxu0 %v2468
        %3877 = vmatprep.subr.bf16.mxu0 %v2473
        %3878 = vmatpush1.bf16.msra.mxu0 %v2472
        %3879 = vmatprep.subr.bf16.mxu0 %v2477
        %3880 = vmatpush1.bf16.msra.mxu0 %v2476
        %3881 = vmatprep.subr.bf16.mxu0 %v2481
        %3882 = vmatpush1.bf16.msra.mxu0 %v2480
        %3883 = vmatprep.subr.bf16.mxu0 %v2485
        %3884 = vmatpush1.bf16.msra.mxu0 %v2484
        %3885 = vmatprep.subr.bf16.mxu0 %v2489
        %3886 = vmatpush1.bf16.msra.mxu0 %v2488
        %3887 = vmatprep.subr.bf16.mxu0 %v2493
        %3888 = vmatpush1.bf16.msra.mxu0 %v2492
        %3889 = vmatprep.subr.bf16.mxu0 %v2497
        %3890 = vmatpush1.bf16.msra.mxu0 %v2496
        %3891 = vmatprep.subr.bf16.mxu0 %v2501
        %3892 = vmatpush1.bf16.msra.mxu0 %v2500
        %3893 = vmatprep.subr.bf16.mxu0 %v2505
        %3894 = vmatpush1.bf16.msra.mxu0 %v2504
        %3895 = vmatprep.subr.bf16.mxu0 %v2509
        %3896 = vmatpush1.bf16.msra.mxu0 %v2508
        %3897 = vmatprep.subr.bf16.mxu0 %v2513
        %3898 = vmatpush1.bf16.msra.mxu0 %v2512
        %3899 = vmatprep.subr.bf16.mxu0 %v2517
        %3900 = vmatpush1.bf16.msra.mxu0 %v2516
        %3901 = vmatprep.subr.bf16.mxu0 %v2521
        %3902 = vmatpush1.bf16.msra.mxu0 %v2520
        %3903 = vmatprep.mubr.bf16.mxu0 %v1373
        %3904 = vmatmul.mubr.bf16.gmra.mrb[0].mxu0 %v1372
        %v3905 = vpop.f32.mrb[0].mxu0
        %v3906 = vadd.f32 %v3713, %v3905
        %v3907 = vpop.f32.mrb[0].mxu0
        %v3908 = vadd.f32 %v3715, %v3907
        %v3909 = vpop.f32.mrb[0].mxu0
        %v3910 = vadd.f32 %v3717, %v3909
        %v3911 = vpop.f32.mrb[0].mxu0
        %v3912 = vadd.f32 %v3719, %v3911
        %3913 = vmatprep.mubr.bf16.mxu0 %v1381
        %3914 = vmatmul.mubr.bf16.gmra.mrb[0].mxu0 %v1380
        %v3915 = vpop.f32.mrb[0].mxu0
        %v3916 = vadd.f32 %v3723, %v3915
        %v3917 = vpop.f32.mrb[0].mxu0
        %v3918 = vadd.f32 %v3725, %v3917
        %v3919 = vpop.f32.mrb[0].mxu0
        %v3920 = vadd.f32 %v3727, %v3919
        %v3921 = vpop.f32.mrb[0].mxu0
        %v3922 = vadd.f32 %v3729, %v3921
        %3923 = vmatprep.mubr.bf16.mxu0 %v1389
        %3924 = vmatmul.mubr.bf16.gmra.mrb[0].mxu0 %v1388
        %v3925 = vpop.f32.mrb[0].mxu0
        %v3926 = vadd.f32 %v3733, %v3925
        %v3927 = vpop.f32.mrb[0].mxu0
        %v3928 = vadd.f32 %v3735, %v3927
        %v3929 = vpop.f32.mrb[0].mxu0
        %v3930 = vadd.f32 %v3737, %v3929
        %v3931 = vpop.f32.mrb[0].mxu0
        %v3932 = vadd.f32 %v3739, %v3931
        %3933 = vmatprep.mubr.bf16.mxu0 %v1397
        %3934 = vmatmul.mubr.bf16.gmra.mrb[0].mxu0 %v1396
        %v3935 = vpop.f32.mrb[0].mxu0
        %v3936 = vadd.f32 %v3743, %v3935
        %v3937 = vpop.f32.mrb[0].mxu0
        %v3938 = vadd.f32 %v3745, %v3937
        %v3939 = vpop.f32.mrb[0].mxu0
        %v3940 = vadd.f32 %v3747, %v3939
        %v3941 = vpop.f32.mrb[0].mxu0
        %v3942 = vadd.f32 %v3749, %v3941
        %3943 = vmatprep.mubr.bf16.mxu0 %v1405
        %3944 = vmatmul.mubr.bf16.gmra.mrb[0].mxu0 %v1404
        %v3945 = vpop.f32.mrb[0].mxu0
        %v3946 = vadd.f32 %v3753, %v3945
        %v3947 = vpop.f32.mrb[0].mxu0
        %v3948 = vadd.f32 %v3755, %v3947
        %v3949 = vpop.f32.mrb[0].mxu0
        %v3950 = vadd.f32 %v3757, %v3949
        %v3951 = vpop.f32.mrb[0].mxu0
        %v3952 = vadd.f32 %v3759, %v3951
        %3953 = vmatprep.mubr.bf16.mxu0 %v1413
        %3954 = vmatmul.mubr.bf16.gmra.mrb[0].mxu0 %v1412
        %v3955 = vpop.f32.mrb[0].mxu0
        %v3956 = vadd.f32 %v3763, %v3955
        %v3957 = vpop.f32.mrb[0].mxu0
        %v3958 = vadd.f32 %v3765, %v3957
        %v3959 = vpop.f32.mrb[0].mxu0
        %v3960 = vadd.f32 %v3767, %v3959
        %v3961 = vpop.f32.mrb[0].mxu0
        %v3962 = vadd.f32 %v3769, %v3961
        %3963 = vmatprep.mubr.bf16.mxu0 %v1421
        %3964 = vmatmul.mubr.bf16.gmra.mrb[0].mxu0 %v1420
        %v3965 = vpop.f32.mrb[0].mxu0
        %v3966 = vadd.f32 %v3773, %v3965
        %v3967 = vpop.f32.mrb[0].mxu0
        %v3968 = vadd.f32 %v3775, %v3967
        %v3969 = vpop.f32.mrb[0].mxu0
        %v3970 = vadd.f32 %v3777, %v3969
        %v3971 = vpop.f32.mrb[0].mxu0
        %v3972 = vadd.f32 %v3779, %v3971
        %3973 = vmatprep.mubr.bf16.mxu0 %v1429
        %3974 = vmatmul.mubr.bf16.gmra.mrb[0].mxu0 %v1428
        %v3975 = vpop.f32.mrb[0].mxu0
        %v3976 = vadd.f32 %v3783, %v3975
        %v3977 = vpop.f32.mrb[0].mxu0
        %v3978 = vadd.f32 %v3785, %v3977
        %v3979 = vpop.f32.mrb[0].mxu0
        %v3980 = vadd.f32 %v3787, %v3979
        %v3981 = vpop.f32.mrb[0].mxu0
        %v3982 = vadd.f32 %v3789, %v3981
        %3983 = vmatprep.mubr.bf16.mxu0 %v1437
        %3984 = vmatmul.mubr.bf16.gmra.mrb[0].mxu0 %v1436
        %v3985 = vpop.f32.mrb[0].mxu0
        %v3986 = vadd.f32 %v3793, %v3985
        %v3987 = vpop.f32.mrb[0].mxu0
        %v3988 = vadd.f32 %v3795, %v3987
        %v3989 = vpop.f32.mrb[0].mxu0
        %v3990 = vadd.f32 %v3797, %v3989
        %v3991 = vpop.f32.mrb[0].mxu0
        %v3992 = vadd.f32 %v3799, %v3991
        %3993 = vmatprep.mubr.bf16.mxu0 %v1445
        %3994 = vmatmul.mubr.bf16.gmra.mrb[0].mxu0 %v1444
        %v3995 = vpop.f32.mrb[0].mxu0
        %v3996 = vadd.f32 %v3803, %v3995
        %v3997 = vpop.f32.mrb[0].mxu0
        %v3998 = vadd.f32 %v3805, %v3997
        %v3999 = vpop.f32.mrb[0].mxu0
        %v4000 = vadd.f32 %v3807, %v3999
        %v4001 = vpop.f32.mrb[0].mxu0
        %v4002 = vadd.f32 %v3809, %v4001
        %4003 = vmatprep.mubr.bf16.mxu0 %v1453
        %4004 = vmatmul.mubr.bf16.gmra.mrb[0].mxu0 %v1452
        %v4005 = vpop.f32.mrb[0].mxu0
        %v4006 = vadd.f32 %v3813, %v4005
        %v4007 = vpop.f32.mrb[0].mxu0
        %v4008 = vadd.f32 %v3815, %v4007
        %v4009 = vpop.f32.mrb[0].mxu0
        %v4010 = vadd.f32 %v3817, %v4009
        %v4011 = vpop.f32.mrb[0].mxu0
        %v4012 = vadd.f32 %v3819, %v4011
        %4013 = vmatprep.mubr.bf16.mxu0 %v1461
        %4014 = vmatmul.mubr.bf16.gmra.mrb[0].mxu0 %v1460
        %v4015 = vpop.f32.mrb[0].mxu0
        %v4016 = vadd.f32 %v3823, %v4015
        %v4017 = vpop.f32.mrb[0].mxu0
        %v4018 = vadd.f32 %v3825, %v4017
        %v4019 = vpop.f32.mrb[0].mxu0
        %v4020 = vadd.f32 %v3827, %v4019
        %v4021 = vpop.f32.mrb[0].mxu0
        %v4022 = vadd.f32 %v3829, %v4021
        %4023 = vmatprep.mubr.bf16.mxu0 %v1469
        %4024 = vmatmul.mubr.bf16.gmra.mrb[0].mxu0 %v1468
        %v4025 = vpop.f32.mrb[0].mxu0
        %v4026 = vadd.f32 %v3833, %v4025
        %v4027 = vpop.f32.mrb[0].mxu0
        %v4028 = vadd.f32 %v3835, %v4027
        %v4029 = vpop.f32.mrb[0].mxu0
        %v4030 = vadd.f32 %v3837, %v4029
        %v4031 = vpop.f32.mrb[0].mxu0
        %v4032 = vadd.f32 %v3839, %v4031
        %4033 = vmatprep.mubr.bf16.mxu0 %v1477
        %4034 = vmatmul.mubr.bf16.gmra.mrb[0].mxu0 %v1476
        %v4035 = vpop.f32.mrb[0].mxu0
        %v4036 = vadd.f32 %v3843, %v4035
        %v4037 = vpop.f32.mrb[0].mxu0
        %v4038 = vadd.f32 %v3845, %v4037
        %v4039 = vpop.f32.mrb[0].mxu0
        %v4040 = vadd.f32 %v3847, %v4039
        %v4041 = vpop.f32.mrb[0].mxu0
        %v4042 = vadd.f32 %v3849, %v4041
        %4043 = vmatprep.mubr.bf16.mxu0 %v1485
        %4044 = vmatmul.mubr.bf16.gmra.mrb[0].mxu0 %v1484
        %v4045 = vpop.f32.mrb[0].mxu0
        %v4046 = vadd.f32 %v3853, %v4045
        %v4047 = vpop.f32.mrb[0].mxu0
        %v4048 = vadd.f32 %v3855, %v4047
        %v4049 = vpop.f32.mrb[0].mxu0
        %v4050 = vadd.f32 %v3857, %v4049
        %v4051 = vpop.f32.mrb[0].mxu0
        %v4052 = vadd.f32 %v3859, %v4051
        %4053 = vmatprep.mubr.bf16.mxu0 %v1493
        %4054 = vmatmul.mubr.bf16.gmra.mrb[0].mxu0 %v1492
        %v4055 = vpop.f32.mrb[0].mxu0
        %v4056 = vadd.f32 %v3863, %v4055
        %v4057 = vpop.f32.mrb[0].mxu0
        %v4058 = vadd.f32 %v3865, %v4057
        %v4059 = vpop.f32.mrb[0].mxu0
        %v4060 = vadd.f32 %v3867, %v4059
        %v4061 = vpop.f32.mrb[0].mxu0
        %v4062 = vadd.f32 %v3869, %v4061
        %4063 = vdwg.mxu0
        %4064 = vmatprep.subr.bf16.mxu0 %v2525
        %4065 = vmatpush1.bf16.msra.mxu0 %v2524
        %4066 = vmatprep.subr.bf16.mxu0 %v2529
        %4067 = vmatpush1.bf16.msra.mxu0 %v2528
        %4068 = vmatprep.subr.bf16.mxu0 %v2533
        %4069 = vmatpush1.bf16.msra.mxu0 %v2532
        %4070 = vmatprep.subr.bf16.mxu0 %v2537
        %4071 = vmatpush1.bf16.msra.mxu0 %v2536
        %4072 = vmatprep.subr.bf16.mxu0 %v2541
        %4073 = vmatpush1.bf16.msra.mxu0 %v2540
        %4074 = vmatprep.subr.bf16.mxu0 %v2545
        %4075 = vmatpush1.bf16.msra.mxu0 %v2544
        %4076 = vmatprep.subr.bf16.mxu0 %v2549
        %4077 = vmatpush1.bf16.msra.mxu0 %v2548
        %4078 = vmatprep.subr.bf16.mxu0 %v2553
        %4079 = vmatpush1.bf16.msra.mxu0 %v2552
        %4080 = vmatprep.subr.bf16.mxu0 %v2557
        %4081 = vmatpush1.bf16.msra.mxu0 %v2556
        %4082 = vmatprep.subr.bf16.mxu0 %v2561
        %4083 = vmatpush1.bf16.msra.mxu0 %v2560
        %4084 = vmatprep.subr.bf16.mxu0 %v2565
        %4085 = vmatpush1.bf16.msra.mxu0 %v2564
        %4086 = vmatprep.subr.bf16.mxu0 %v2569
        %4087 = vmatpush1.bf16.msra.mxu0 %v2568
        %4088 = vmatprep.subr.bf16.mxu0 %v2573
        %4089 = vmatpush1.bf16.msra.mxu0 %v2572
        %4090 = vmatprep.subr.bf16.mxu0 %v2577
        %4091 = vmatpush1.bf16.msra.mxu0 %v2576
        %4092 = vmatprep.subr.bf16.mxu0 %v2581
        %4093 = vmatpush1.bf16.msra.mxu0 %v2580
        %4094 = vmatprep.subr.bf16.mxu0 %v2585
        %4095 = vmatpush1.bf16.msra.mxu0 %v2584
        %4096 = vmatprep.mubr.bf16.mxu0 %v1375
        %4097 = vmatmul.mubr.bf16.gmra.mrb[0].mxu0 %v1374
        %v4098 = vpop.f32.mrb[0].mxu0
        %v4099 = vadd.f32 %v3906, %v4098
        %v4100 = vpop.f32.mrb[0].mxu0
        %v4101 = vadd.f32 %v3908, %v4100
        %v4102 = vpop.f32.mrb[0].mxu0
        %v4103 = vadd.f32 %v3910, %v4102
        %v4104 = vpop.f32.mrb[0].mxu0
        %v4105 = vadd.f32 %v3912, %v4104
        %4106 = vmatprep.mubr.bf16.mxu0 %v1383
        %4107 = vmatmul.mubr.bf16.gmra.mrb[0].mxu0 %v1382
        %v4108 = vpop.f32.mrb[0].mxu0
        %v4109 = vadd.f32 %v3916, %v4108
        %v4110 = vpop.f32.mrb[0].mxu0
        %v4111 = vadd.f32 %v3918, %v4110
        %v4112 = vpop.f32.mrb[0].mxu0
        %v4113 = vadd.f32 %v3920, %v4112
        %v4114 = vpop.f32.mrb[0].mxu0
        %v4115 = vadd.f32 %v3922, %v4114
        %4116 = vmatprep.mubr.bf16.mxu0 %v1391
        %4117 = vmatmul.mubr.bf16.gmra.mrb[0].mxu0 %v1390
        %v4118 = vpop.f32.mrb[0].mxu0
        %v4119 = vadd.f32 %v3926, %v4118
        %v4120 = vpop.f32.mrb[0].mxu0
        %v4121 = vadd.f32 %v3928, %v4120
        %v4122 = vpop.f32.mrb[0].mxu0
        %v4123 = vadd.f32 %v3930, %v4122
        %v4124 = vpop.f32.mrb[0].mxu0
        %v4125 = vadd.f32 %v3932, %v4124
        %4126 = vmatprep.mubr.bf16.mxu0 %v1399
        %4127 = vmatmul.mubr.bf16.gmra.mrb[0].mxu0 %v1398
        %v4128 = vpop.f32.mrb[0].mxu0
        %v4129 = vadd.f32 %v3936, %v4128
        %v4130 = vpop.f32.mrb[0].mxu0
        %v4131 = vadd.f32 %v3938, %v4130
        %v4132 = vpop.f32.mrb[0].mxu0
        %v4133 = vadd.f32 %v3940, %v4132
        %v4134 = vpop.f32.mrb[0].mxu0
        %v4135 = vadd.f32 %v3942, %v4134
        %4136 = vmatprep.mubr.bf16.mxu0 %v1407
        %4137 = vmatmul.mubr.bf16.gmra.mrb[0].mxu0 %v1406
        %v4138 = vpop.f32.mrb[0].mxu0
        %v4139 = vadd.f32 %v3946, %v4138
        %v4140 = vpop.f32.mrb[0].mxu0
        %v4141 = vadd.f32 %v3948, %v4140
        %v4142 = vpop.f32.mrb[0].mxu0
        %v4143 = vadd.f32 %v3950, %v4142
        %v4144 = vpop.f32.mrb[0].mxu0
        %v4145 = vadd.f32 %v3952, %v4144
        %4146 = vmatprep.mubr.bf16.mxu0 %v1415
        %4147 = vmatmul.mubr.bf16.gmra.mrb[0].mxu0 %v1414
        %v4148 = vpop.f32.mrb[0].mxu0
        %v4149 = vadd.f32 %v3956, %v4148
        %v4150 = vpop.f32.mrb[0].mxu0
        %v4151 = vadd.f32 %v3958, %v4150
        %v4152 = vpop.f32.mrb[0].mxu0
        %v4153 = vadd.f32 %v3960, %v4152
        %v4154 = vpop.f32.mrb[0].mxu0
        %v4155 = vadd.f32 %v3962, %v4154
        %4156 = vmatprep.mubr.bf16.mxu0 %v1423
        %4157 = vmatmul.mubr.bf16.gmra.mrb[0].mxu0 %v1422
        %v4158 = vpop.f32.mrb[0].mxu0
        %v4159 = vadd.f32 %v3966, %v4158
        %v4160 = vpop.f32.mrb[0].mxu0
        %v4161 = vadd.f32 %v3968, %v4160
        %v4162 = vpop.f32.mrb[0].mxu0
        %v4163 = vadd.f32 %v3970, %v4162
        %v4164 = vpop.f32.mrb[0].mxu0
        %v4165 = vadd.f32 %v3972, %v4164
        %4166 = vmatprep.mubr.bf16.mxu0 %v1431
        %4167 = vmatmul.mubr.bf16.gmra.mrb[0].mxu0 %v1430
        %v4168 = vpop.f32.mrb[0].mxu0
        %v4169 = vadd.f32 %v3976, %v4168
        %v4170 = vpop.f32.mrb[0].mxu0
        %v4171 = vadd.f32 %v3978, %v4170
        %v4172 = vpop.f32.mrb[0].mxu0
        %v4173 = vadd.f32 %v3980, %v4172
        %v4174 = vpop.f32.mrb[0].mxu0
        %v4175 = vadd.f32 %v3982, %v4174
        %4176 = vmatprep.mubr.bf16.mxu0 %v1439
        %4177 = vmatmul.mubr.bf16.gmra.mrb[0].mxu0 %v1438
        %v4178 = vpop.f32.mrb[0].mxu0
        %v4179 = vadd.f32 %v3986, %v4178
        %v4180 = vpop.f32.mrb[0].mxu0
        %v4181 = vadd.f32 %v3988, %v4180
        %v4182 = vpop.f32.mrb[0].mxu0
        %v4183 = vadd.f32 %v3990, %v4182
        %v4184 = vpop.f32.mrb[0].mxu0
        %v4185 = vadd.f32 %v3992, %v4184
        %4186 = vmatprep.mubr.bf16.mxu0 %v1447
        %4187 = vmatmul.mubr.bf16.gmra.mrb[0].mxu0 %v1446
        %v4188 = vpop.f32.mrb[0].mxu0
        %v4189 = vadd.f32 %v3996, %v4188
        %v4190 = vpop.f32.mrb[0].mxu0
        %v4191 = vadd.f32 %v3998, %v4190
        %v4192 = vpop.f32.mrb[0].mxu0
        %v4193 = vadd.f32 %v4000, %v4192
        %v4194 = vpop.f32.mrb[0].mxu0
        %v4195 = vadd.f32 %v4002, %v4194
        %4196 = vmatprep.mubr.bf16.mxu0 %v1455
        %4197 = vmatmul.mubr.bf16.gmra.mrb[0].mxu0 %v1454
        %v4198 = vpop.f32.mrb[0].mxu0
        %v4199 = vadd.f32 %v4006, %v4198
        %v4200 = vpop.f32.mrb[0].mxu0
        %v4201 = vadd.f32 %v4008, %v4200
        %v4202 = vpop.f32.mrb[0].mxu0
        %v4203 = vadd.f32 %v4010, %v4202
        %v4204 = vpop.f32.mrb[0].mxu0
        %v4205 = vadd.f32 %v4012, %v4204
        %4206 = vmatprep.mubr.bf16.mxu0 %v1463
        %4207 = vmatmul.mubr.bf16.gmra.mrb[0].mxu0 %v1462
        %v4208 = vpop.f32.mrb[0].mxu0
        %v4209 = vadd.f32 %v4016, %v4208
        %v4210 = vpop.f32.mrb[0].mxu0
        %v4211 = vadd.f32 %v4018, %v4210
        %v4212 = vpop.f32.mrb[0].mxu0
        %v4213 = vadd.f32 %v4020, %v4212
        %v4214 = vpop.f32.mrb[0].mxu0
        %v4215 = vadd.f32 %v4022, %v4214
        %4216 = vmatprep.mubr.bf16.mxu0 %v1471
        %4217 = vmatmul.mubr.bf16.gmra.mrb[0].mxu0 %v1470
        %v4218 = vpop.f32.mrb[0].mxu0
        %v4219 = vadd.f32 %v4026, %v4218
        %v4220 = vpop.f32.mrb[0].mxu0
        %v4221 = vadd.f32 %v4028, %v4220
        %v4222 = vpop.f32.mrb[0].mxu0
        %v4223 = vadd.f32 %v4030, %v4222
        %v4224 = vpop.f32.mrb[0].mxu0
        %v4225 = vadd.f32 %v4032, %v4224
        %4226 = vmatprep.mubr.bf16.mxu0 %v1479
        %4227 = vmatmul.mubr.bf16.gmra.mrb[0].mxu0 %v1478
        %v4228 = vpop.f32.mrb[0].mxu0
        %v4229 = vadd.f32 %v4036, %v4228
        %v4230 = vpop.f32.mrb[0].mxu0
        %v4231 = vadd.f32 %v4038, %v4230
        %v4232 = vpop.f32.mrb[0].mxu0
        %v4233 = vadd.f32 %v4040, %v4232
        %v4234 = vpop.f32.mrb[0].mxu0
        %v4235 = vadd.f32 %v4042, %v4234
        %4236 = vmatprep.mubr.bf16.mxu0 %v1487
        %4237 = vmatmul.mubr.bf16.gmra.mrb[0].mxu0 %v1486
        %v4238 = vpop.f32.mrb[0].mxu0
        %v4239 = vadd.f32 %v4046, %v4238
        %v4240 = vpop.f32.mrb[0].mxu0
        %v4241 = vadd.f32 %v4048, %v4240
        %v4242 = vpop.f32.mrb[0].mxu0
        %v4243 = vadd.f32 %v4050, %v4242
        %v4244 = vpop.f32.mrb[0].mxu0
        %v4245 = vadd.f32 %v4052, %v4244
        %4246 = vmatprep.mubr.bf16.mxu0 %v1495
        %4247 = vmatmul.mubr.bf16.gmra.mrb[0].mxu0 %v1494
        %v4248 = vpop.f32.mrb[0].mxu0
        %v4249 = vadd.f32 %v4056, %v4248
        %v4250 = vpop.f32.mrb[0].mxu0
        %v4251 = vadd.f32 %v4058, %v4250
        %v4252 = vpop.f32.mrb[0].mxu0
        %v4253 = vadd.f32 %v4060, %v4252
        %v4254 = vpop.f32.mrb[0].mxu0
        %v4255 = vadd.f32 %v4062, %v4254
        %4256 = vdwg.mxu0
        %4257 = vmatprep.subr.bf16.mxu0 %v2589
        %4258 = vmatpush1.bf16.msra.mxu0 %v2588
        %4259 = vmatprep.subr.bf16.mxu0 %v2593
        %4260 = vmatpush1.bf16.msra.mxu0 %v2592
        %4261 = vmatprep.subr.bf16.mxu0 %v2597
        %4262 = vmatpush1.bf16.msra.mxu0 %v2596
        %4263 = vmatprep.subr.bf16.mxu0 %v2601
        %4264 = vmatpush1.bf16.msra.mxu0 %v2600
        %4265 = vmatprep.subr.bf16.mxu0 %v2605
        %4266 = vmatpush1.bf16.msra.mxu0 %v2604
        %4267 = vmatprep.subr.bf16.mxu0 %v2609
        %4268 = vmatpush1.bf16.msra.mxu0 %v2608
        %4269 = vmatprep.subr.bf16.mxu0 %v2613
        %4270 = vmatpush1.bf16.msra.mxu0 %v2612
        %4271 = vmatprep.subr.bf16.mxu0 %v2617
        %4272 = vmatpush1.bf16.msra.mxu0 %v2616
        %4273 = vmatprep.subr.bf16.mxu0 %v2621
        %4274 = vmatpush1.bf16.msra.mxu0 %v2620
        %4275 = vmatprep.subr.bf16.mxu0 %v2625
        %4276 = vmatpush1.bf16.msra.mxu0 %v2624
        %4277 = vmatprep.subr.bf16.mxu0 %v2629
        %4278 = vmatpush1.bf16.msra.mxu0 %v2628
        %4279 = vmatprep.subr.bf16.mxu0 %v2633
        %4280 = vmatpush1.bf16.msra.mxu0 %v2632
        %4281 = vmatprep.subr.bf16.mxu0 %v2637
        %4282 = vmatpush1.bf16.msra.mxu0 %v2636
        %4283 = vmatprep.subr.bf16.mxu0 %v2641
        %4284 = vmatpush1.bf16.msra.mxu0 %v2640
        %4285 = vmatprep.subr.bf16.mxu0 %v2645
        %4286 = vmatpush1.bf16.msra.mxu0 %v2644
        %4287 = vmatprep.subr.bf16.mxu0 %v2649
        %4288 = vmatpush1.bf16.msra.mxu0 %v2648
        %4289 = vmatprep.mubr.bf16.mxu0 %v1377
        %4290 = vmatmul.mubr.bf16.gmra.mrb[0].mxu0 %v1376
        %v4291 = vpop.f32.mrb[0].mxu0
        %v4292 = vadd.f32 %v4099, %v4291
        %v4293 = vpop.f32.mrb[0].mxu0
        %v4294 = vadd.f32 %v4101, %v4293
        %v4295 = vpop.f32.mrb[0].mxu0
        %v4296 = vadd.f32 %v4103, %v4295
        %v4297 = vpop.f32.mrb[0].mxu0
        %v4298 = vadd.f32 %v4105, %v4297
        %4299 = vmatprep.mubr.bf16.mxu0 %v1385
        %4300 = vmatmul.mubr.bf16.gmra.mrb[0].mxu0 %v1384
        %v4301 = vpop.f32.mrb[0].mxu0
        %v4302 = vadd.f32 %v4109, %v4301
        %v4303 = vpop.f32.mrb[0].mxu0
        %v4304 = vadd.f32 %v4111, %v4303
        %v4305 = vpop.f32.mrb[0].mxu0
        %v4306 = vadd.f32 %v4113, %v4305
        %v4307 = vpop.f32.mrb[0].mxu0
        %v4308 = vadd.f32 %v4115, %v4307
        %4309 = vmatprep.mubr.bf16.mxu0 %v1393
        %4310 = vmatmul.mubr.bf16.gmra.mrb[0].mxu0 %v1392
        %v4311 = vpop.f32.mrb[0].mxu0
        %v4312 = vadd.f32 %v4119, %v4311
        %v4313 = vpop.f32.mrb[0].mxu0
        %v4314 = vadd.f32 %v4121, %v4313
        %v4315 = vpop.f32.mrb[0].mxu0
        %v4316 = vadd.f32 %v4123, %v4315
        %v4317 = vpop.f32.mrb[0].mxu0
        %v4318 = vadd.f32 %v4125, %v4317
        %4319 = vmatprep.mubr.bf16.mxu0 %v1401
        %4320 = vmatmul.mubr.bf16.gmra.mrb[0].mxu0 %v1400
        %v4321 = vpop.f32.mrb[0].mxu0
        %v4322 = vadd.f32 %v4129, %v4321
        %v4323 = vpop.f32.mrb[0].mxu0
        %v4324 = vadd.f32 %v4131, %v4323
        %v4325 = vpop.f32.mrb[0].mxu0
        %v4326 = vadd.f32 %v4133, %v4325
        %v4327 = vpop.f32.mrb[0].mxu0
        %v4328 = vadd.f32 %v4135, %v4327
        %4329 = vmatprep.mubr.bf16.mxu0 %v1409
        %4330 = vmatmul.mubr.bf16.gmra.mrb[0].mxu0 %v1408
        %v4331 = vpop.f32.mrb[0].mxu0
        %v4332 = vadd.f32 %v4139, %v4331
        %v4333 = vpop.f32.mrb[0].mxu0
        %v4334 = vadd.f32 %v4141, %v4333
        %v4335 = vpop.f32.mrb[0].mxu0
        %v4336 = vadd.f32 %v4143, %v4335
        %v4337 = vpop.f32.mrb[0].mxu0
        %v4338 = vadd.f32 %v4145, %v4337
        %4339 = vmatprep.mubr.bf16.mxu0 %v1417
        %4340 = vmatmul.mubr.bf16.gmra.mrb[0].mxu0 %v1416
        %v4341 = vpop.f32.mrb[0].mxu0
        %v4342 = vadd.f32 %v4149, %v4341
        %v4343 = vpop.f32.mrb[0].mxu0
        %v4344 = vadd.f32 %v4151, %v4343
        %v4345 = vpop.f32.mrb[0].mxu0
        %v4346 = vadd.f32 %v4153, %v4345
        %v4347 = vpop.f32.mrb[0].mxu0
        %v4348 = vadd.f32 %v4155, %v4347
        %4349 = vmatprep.mubr.bf16.mxu0 %v1425
        %4350 = vmatmul.mubr.bf16.gmra.mrb[0].mxu0 %v1424
        %v4351 = vpop.f32.mrb[0].mxu0
        %v4352 = vadd.f32 %v4159, %v4351
        %v4353 = vpop.f32.mrb[0].mxu0
        %v4354 = vadd.f32 %v4161, %v4353
        %v4355 = vpop.f32.mrb[0].mxu0
        %v4356 = vadd.f32 %v4163, %v4355
        %v4357 = vpop.f32.mrb[0].mxu0
        %v4358 = vadd.f32 %v4165, %v4357
        %4359 = vmatprep.mubr.bf16.mxu0 %v1433
        %4360 = vmatmul.mubr.bf16.gmra.mrb[0].mxu0 %v1432
        %v4361 = vpop.f32.mrb[0].mxu0
        %v4362 = vadd.f32 %v4169, %v4361
        %v4363 = vpop.f32.mrb[0].mxu0
        %v4364 = vadd.f32 %v4171, %v4363
        %v4365 = vpop.f32.mrb[0].mxu0
        %v4366 = vadd.f32 %v4173, %v4365
        %v4367 = vpop.f32.mrb[0].mxu0
        %v4368 = vadd.f32 %v4175, %v4367
        %4369 = vmatprep.mubr.bf16.mxu0 %v1441
        %4370 = vmatmul.mubr.bf16.gmra.mrb[0].mxu0 %v1440
        %v4371 = vpop.f32.mrb[0].mxu0
        %v4372 = vadd.f32 %v4179, %v4371
        %v4373 = vpop.f32.mrb[0].mxu0
        %v4374 = vadd.f32 %v4181, %v4373
        %v4375 = vpop.f32.mrb[0].mxu0
        %v4376 = vadd.f32 %v4183, %v4375
        %v4377 = vpop.f32.mrb[0].mxu0
        %v4378 = vadd.f32 %v4185, %v4377
        %4379 = vmatprep.mubr.bf16.mxu0 %v1449
        %4380 = vmatmul.mubr.bf16.gmra.mrb[0].mxu0 %v1448
        %v4381 = vpop.f32.mrb[0].mxu0
        %v4382 = vadd.f32 %v4189, %v4381
        %v4383 = vpop.f32.mrb[0].mxu0
        %v4384 = vadd.f32 %v4191, %v4383
        %v4385 = vpop.f32.mrb[0].mxu0
        %v4386 = vadd.f32 %v4193, %v4385
        %v4387 = vpop.f32.mrb[0].mxu0
        %v4388 = vadd.f32 %v4195, %v4387
        %4389 = vmatprep.mubr.bf16.mxu0 %v1457
        %4390 = vmatmul.mubr.bf16.gmra.mrb[0].mxu0 %v1456
        %v4391 = vpop.f32.mrb[0].mxu0
        %v4392 = vadd.f32 %v4199, %v4391
        %v4393 = vpop.f32.mrb[0].mxu0
        %v4394 = vadd.f32 %v4201, %v4393
        %v4395 = vpop.f32.mrb[0].mxu0
        %v4396 = vadd.f32 %v4203, %v4395
        %v4397 = vpop.f32.mrb[0].mxu0
        %v4398 = vadd.f32 %v4205, %v4397
        %4399 = vmatprep.mubr.bf16.mxu0 %v1465
        %4400 = vmatmul.mubr.bf16.gmra.mrb[0].mxu0 %v1464
        %v4401 = vpop.f32.mrb[0].mxu0
        %v4402 = vadd.f32 %v4209, %v4401
        %v4403 = vpop.f32.mrb[0].mxu0
        %v4404 = vadd.f32 %v4211, %v4403
        %v4405 = vpop.f32.mrb[0].mxu0
        %v4406 = vadd.f32 %v4213, %v4405
        %v4407 = vpop.f32.mrb[0].mxu0
        %v4408 = vadd.f32 %v4215, %v4407
        %4409 = vmatprep.mubr.bf16.mxu0 %v1473
        %4410 = vmatmul.mubr.bf16.gmra.mrb[0].mxu0 %v1472
        %v4411 = vpop.f32.mrb[0].mxu0
        %v4412 = vadd.f32 %v4219, %v4411
        %v4413 = vpop.f32.mrb[0].mxu0
        %v4414 = vadd.f32 %v4221, %v4413
        %v4415 = vpop.f32.mrb[0].mxu0
        %v4416 = vadd.f32 %v4223, %v4415
        %v4417 = vpop.f32.mrb[0].mxu0
        %v4418 = vadd.f32 %v4225, %v4417
        %4419 = vmatprep.mubr.bf16.mxu0 %v1481
        %4420 = vmatmul.mubr.bf16.gmra.mrb[0].mxu0 %v1480
        %v4421 = vpop.f32.mrb[0].mxu0
        %v4422 = vadd.f32 %v4229, %v4421
        %v4423 = vpop.f32.mrb[0].mxu0
        %v4424 = vadd.f32 %v4231, %v4423
        %v4425 = vpop.f32.mrb[0].mxu0
        %v4426 = vadd.f32 %v4233, %v4425
        %v4427 = vpop.f32.mrb[0].mxu0
        %v4428 = vadd.f32 %v4235, %v4427
        %4429 = vmatprep.mubr.bf16.mxu0 %v1489
        %4430 = vmatmul.mubr.bf16.gmra.mrb[0].mxu0 %v1488
        %v4431 = vpop.f32.mrb[0].mxu0
        %v4432 = vadd.f32 %v4239, %v4431
        %v4433 = vpop.f32.mrb[0].mxu0
        %v4434 = vadd.f32 %v4241, %v4433
        %v4435 = vpop.f32.mrb[0].mxu0
        %v4436 = vadd.f32 %v4243, %v4435
        %v4437 = vpop.f32.mrb[0].mxu0
        %v4438 = vadd.f32 %v4245, %v4437
        %4439 = vmatprep.mubr.bf16.mxu0 %v1497
        %4440 = vmatmul.mubr.bf16.gmra.mrb[0].mxu0 %v1496
        %v4441 = vpop.f32.mrb[0].mxu0
        %v4442 = vadd.f32 %v4249, %v4441
        %v4443 = vpop.f32.mrb[0].mxu0
        %v4444 = vadd.f32 %v4251, %v4443
        %v4445 = vpop.f32.mrb[0].mxu0
        %v4446 = vadd.f32 %v4253, %v4445
        %v4447 = vpop.f32.mrb[0].mxu0
        %v4448 = vadd.f32 %v4255, %v4447
        %4449 = vdwg.mxu0
        %v4450 = vmax.f32 %v3520, 0.0
        %v4451 = vmax.f32 %v3522, 0.0
        %v4452 = vmax.f32 %v4292, 0.0
        %v4453 = vmax.f32 %v4294, 0.0
        %v4454 = vmax.f32 %v3524, 0.0
        %v4455 = vmax.f32 %v3526, 0.0
        %v4456 = vmax.f32 %v4296, 0.0
        %v4457 = vmax.f32 %v4298, 0.0
        %v4458 = vmax.f32 %v3530, 0.0
        %v4459 = vmax.f32 %v3532, 0.0
        %v4460 = vmax.f32 %v4302, 0.0
        %v4461 = vmax.f32 %v4304, 0.0
        %v4462 = vmax.f32 %v3534, 0.0
        %v4463 = vmax.f32 %v3536, 0.0
        %v4464 = vmax.f32 %v4306, 0.0
        %v4465 = vmax.f32 %v4308, 0.0
        %v4466 = vmax.f32 %v3540, 0.0
        %v4467 = vmax.f32 %v3542, 0.0
        %v4468 = vmax.f32 %v4312, 0.0
        %v4469 = vmax.f32 %v4314, 0.0
        %v4470 = vmax.f32 %v3544, 0.0
        %v4471 = vmax.f32 %v3546, 0.0
        %v4472 = vmax.f32 %v4316, 0.0
        %v4473 = vmax.f32 %v4318, 0.0
        %v4474 = vmax.f32 %v3550, 0.0
        %v4475 = vmax.f32 %v3552, 0.0
        %v4476 = vmax.f32 %v4322, 0.0
        %v4477 = vmax.f32 %v4324, 0.0
        %v4478 = vmax.f32 %v3554, 0.0
        %v4479 = vmax.f32 %v3556, 0.0
        %v4480 = vmax.f32 %v4326, 0.0
        %v4481 = vmax.f32 %v4328, 0.0
        %v4482 = vmax.f32 %v3560, 0.0
        %v4483 = vmax.f32 %v3562, 0.0
        %v4484 = vmax.f32 %v4332, 0.0
        %v4485 = vmax.f32 %v4334, 0.0
        %v4486 = vmax.f32 %v3564, 0.0
        %v4487 = vmax.f32 %v3566, 0.0
        %v4488 = vmax.f32 %v4336, 0.0
        %v4489 = vmax.f32 %v4338, 0.0
        %v4490 = vmax.f32 %v3570, 0.0
        %v4491 = vmax.f32 %v3572, 0.0
        %v4492 = vmax.f32 %v4342, 0.0
        %v4493 = vmax.f32 %v4344, 0.0
        %v4494 = vmax.f32 %v3574, 0.0
        %v4495 = vmax.f32 %v3576, 0.0
        %v4496 = vmax.f32 %v4346, 0.0
        %v4497 = vmax.f32 %v4348, 0.0
        %v4498 = vmax.f32 %v3580, 0.0
        %v4499 = vmax.f32 %v3582, 0.0
        %v4500 = vmax.f32 %v4352, 0.0
        %v4501 = vmax.f32 %v4354, 0.0
        %v4502 = vmax.f32 %v3584, 0.0
        %v4503 = vmax.f32 %v3586, 0.0
        %v4504 = vmax.f32 %v4356, 0.0
        %v4505 = vmax.f32 %v4358, 0.0
        %v4506 = vmax.f32 %v3590, 0.0
        %v4507 = vmax.f32 %v3592, 0.0
        %v4508 = vmax.f32 %v4362, 0.0
        %v4509 = vmax.f32 %v4364, 0.0
        %v4510 = vmax.f32 %v3594, 0.0
        %v4511 = vmax.f32 %v3596, 0.0
        %v4512 = vmax.f32 %v4366, 0.0
        %v4513 = vmax.f32 %v4368, 0.0
        %v4514 = vmax.f32 %v3600, 0.0
        %v4515 = vmax.f32 %v3602, 0.0
        %v4516 = vmax.f32 %v4372, 0.0
        %v4517 = vmax.f32 %v4374, 0.0
        %v4518 = vmax.f32 %v3604, 0.0
        %v4519 = vmax.f32 %v3606, 0.0
        %v4520 = vmax.f32 %v4376, 0.0
        %v4521 = vmax.f32 %v4378, 0.0
        %v4522 = vmax.f32 %v3610, 0.0
        %v4523 = vmax.f32 %v3612, 0.0
        %v4524 = vmax.f32 %v4382, 0.0
        %v4525 = vmax.f32 %v4384, 0.0
        %v4526 = vmax.f32 %v3614, 0.0
        %v4527 = vmax.f32 %v3616, 0.0
        %v4528 = vmax.f32 %v4386, 0.0
        %v4529 = vmax.f32 %v4388, 0.0
        %v4530 = vmax.f32 %v3620, 0.0
        %v4531 = vmax.f32 %v3622, 0.0
        %v4532 = vmax.f32 %v4392, 0.0
        %v4533 = vmax.f32 %v4394, 0.0
        %v4534 = vmax.f32 %v3624, 0.0
        %v4535 = vmax.f32 %v3626, 0.0
        %v4536 = vmax.f32 %v4396, 0.0
        %v4537 = vmax.f32 %v4398, 0.0
        %v4538 = vmax.f32 %v3630, 0.0
        %v4539 = vmax.f32 %v3632, 0.0
        %v4540 = vmax.f32 %v4402, 0.0
        %v4541 = vmax.f32 %v4404, 0.0
        %v4542 = vmax.f32 %v3634, 0.0
        %v4543 = vmax.f32 %v3636, 0.0
        %v4544 = vmax.f32 %v4406, 0.0
        %v4545 = vmax.f32 %v4408, 0.0
        %v4546 = vmax.f32 %v3640, 0.0
        %v4547 = vmax.f32 %v3642, 0.0
        %v4548 = vmax.f32 %v4412, 0.0
        %v4549 = vmax.f32 %v4414, 0.0
        %v4550 = vmax.f32 %v3644, 0.0
        %v4551 = vmax.f32 %v3646, 0.0
        %v4552 = vmax.f32 %v4416, 0.0
        %v4553 = vmax.f32 %v4418, 0.0
        %v4554 = vmax.f32 %v3650, 0.0
        %v4555 = vmax.f32 %v3652, 0.0
        %v4556 = vmax.f32 %v4422, 0.0
        %v4557 = vmax.f32 %v4424, 0.0
        %v4558 = vmax.f32 %v3654, 0.0
        %v4559 = vmax.f32 %v3656, 0.0
        %v4560 = vmax.f32 %v4426, 0.0
        %v4561 = vmax.f32 %v4428, 0.0
        %v4562 = vmax.f32 %v3660, 0.0
        %v4563 = vmax.f32 %v3662, 0.0
        %v4564 = vmax.f32 %v4432, 0.0
        %v4565 = vmax.f32 %v4434, 0.0
        %v4566 = vmax.f32 %v3664, 0.0
        %v4567 = vmax.f32 %v3666, 0.0
        %v4568 = vmax.f32 %v4436, 0.0
        %v4569 = vmax.f32 %v4438, 0.0
        %v4570 = vmax.f32 %v3670, 0.0
        %v4571 = vmax.f32 %v3672, 0.0
        %v4572 = vmax.f32 %v4442, 0.0
        %v4573 = vmax.f32 %v4444, 0.0
        %v4574 = vmax.f32 %v3674, 0.0
        %v4575 = vmax.f32 %v3676, 0.0
        %v4576 = vmax.f32 %v4446, 0.0
        %v4577 = vmax.f32 %v4448, 0.0
        %v4578 = vpack.c.bf16 %v4454, %v4450
        %v4579 = vpack.c.bf16 %v4455, %v4451
        %v4580 = vpack.c.bf16 %v4456, %v4452
        %v4581 = vpack.c.bf16 %v4457, %v4453
        %v4582 = vpack.c.bf16 %v4462, %v4458
        %v4583 = vpack.c.bf16 %v4463, %v4459
        %v4584 = vpack.c.bf16 %v4464, %v4460
        %v4585 = vpack.c.bf16 %v4465, %v4461
        %v4586 = vpack.c.bf16 %v4470, %v4466
        %v4587 = vpack.c.bf16 %v4471, %v4467
        %v4588 = vpack.c.bf16 %v4472, %v4468
        %v4589 = vpack.c.bf16 %v4473, %v4469
        %v4590 = vpack.c.bf16 %v4478, %v4474
        %v4591 = vpack.c.bf16 %v4479, %v4475
        %v4592 = vpack.c.bf16 %v4480, %v4476
        %v4593 = vpack.c.bf16 %v4481, %v4477
        %v4594 = vpack.c.bf16 %v4486, %v4482
        %v4595 = vpack.c.bf16 %v4487, %v4483
        %v4596 = vpack.c.bf16 %v4488, %v4484
        %v4597 = vpack.c.bf16 %v4489, %v4485
        %v4598 = vpack.c.bf16 %v4494, %v4490
        %v4599 = vpack.c.bf16 %v4495, %v4491
        %v4600 = vpack.c.bf16 %v4496, %v4492
        %v4601 = vpack.c.bf16 %v4497, %v4493
        %v4602 = vpack.c.bf16 %v4502, %v4498
        %v4603 = vpack.c.bf16 %v4503, %v4499
        %v4604 = vpack.c.bf16 %v4504, %v4500
        %v4605 = vpack.c.bf16 %v4505, %v4501
        %v4606 = vpack.c.bf16 %v4510, %v4506
        %v4607 = vpack.c.bf16 %v4511, %v4507
        %v4608 = vpack.c.bf16 %v4512, %v4508
        %v4609 = vpack.c.bf16 %v4513, %v4509
        %v4610 = vpack.c.bf16 %v4518, %v4514
        %v4611 = vpack.c.bf16 %v4519, %v4515
        %v4612 = vpack.c.bf16 %v4520, %v4516
        %v4613 = vpack.c.bf16 %v4521, %v4517
        %v4614 = vpack.c.bf16 %v4526, %v4522
        %v4615 = vpack.c.bf16 %v4527, %v4523
        %v4616 = vpack.c.bf16 %v4528, %v4524
        %v4617 = vpack.c.bf16 %v4529, %v4525
        %v4618 = vpack.c.bf16 %v4534, %v4530
        %v4619 = vpack.c.bf16 %v4535, %v4531
        %v4620 = vpack.c.bf16 %v4536, %v4532
        %v4621 = vpack.c.bf16 %v4537, %v4533
        %v4622 = vpack.c.bf16 %v4542, %v4538
        %v4623 = vpack.c.bf16 %v4543, %v4539
        %v4624 = vpack.c.bf16 %v4544, %v4540
        %v4625 = vpack.c.bf16 %v4545, %v4541
        %v4626 = vpack.c.bf16 %v4550, %v4546
        %v4627 = vpack.c.bf16 %v4551, %v4547
        %v4628 = vpack.c.bf16 %v4552, %v4548
        %v4629 = vpack.c.bf16 %v4553, %v4549
        %v4630 = vpack.c.bf16 %v4558, %v4554
        %v4631 = vpack.c.bf16 %v4559, %v4555
        %v4632 = vpack.c.bf16 %v4560, %v4556
        %v4633 = vpack.c.bf16 %v4561, %v4557
        %v4634 = vpack.c.bf16 %v4566, %v4562
        %v4635 = vpack.c.bf16 %v4567, %v4563
        %v4636 = vpack.c.bf16 %v4568, %v4564
        %v4637 = vpack.c.bf16 %v4569, %v4565
        %v4638 = vpack.c.bf16 %v4574, %v4570
        %v4639 = vpack.c.bf16 %v4575, %v4571
        %v4640 = vpack.c.bf16 %v4576, %v4572
        %v4641 = vpack.c.bf16 %v4577, %v4573
        %v4642 = vld [vmem:[#allocation12] sm:$0xff]
        %v4643 = vld [vmem:[#allocation12 + $0x8] sm:$0xff]
        %v4644 = vld [vmem:[#allocation12 + $0x10] sm:$0xff]
        %v4645 = vld [vmem:[#allocation12 + $0x18] sm:$0xff]
        %v4646 = vld [vmem:[#allocation12 + $0x20] sm:$0xff]
        %v4647 = vld [vmem:[#allocation12 + $0x28] sm:$0xff]
        %v4648 = vld [vmem:[#allocation12 + $0x30] sm:$0xff]
        %v4649 = vld [vmem:[#allocation12 + $0x38] sm:$0xff]
        %v4650 = vld [vmem:[#allocation12 + $0x40] sm:$0xff]
        %v4651 = vld [vmem:[#allocation12 + $0x48] sm:$0xff]
        %v4652 = vld [vmem:[#allocation12 + $0x50] sm:$0xff]
        %v4653 = vld [vmem:[#allocation12 + $0x58] sm:$0xff]
        %v4654 = vld [vmem:[#allocation12 + $0x60] sm:$0xff]
        %v4655 = vld [vmem:[#allocation12 + $0x68] sm:$0xff]
        %v4656 = vld [vmem:[#allocation12 + $0x70] sm:$0xff]
        %v4657 = vld [vmem:[#allocation12 + $0x78] sm:$0xff]
        %v4658 = vld [vmem:[#allocation12 + $0x80] sm:$0xff]
        %v4659 = vld [vmem:[#allocation12 + $0x88] sm:$0xff]
        %v4660 = vld [vmem:[#allocation12 + $0x90] sm:$0xff]
        %v4661 = vld [vmem:[#allocation12 + $0x98] sm:$0xff]
        %v4662 = vld [vmem:[#allocation12 + $0xa0] sm:$0xff]
        %v4663 = vld [vmem:[#allocation12 + $0xa8] sm:$0xff]
        %v4664 = vld [vmem:[#allocation12 + $0xb0] sm:$0xff]
        %v4665 = vld [vmem:[#allocation12 + $0xb8] sm:$0xff]
        %v4666 = vld [vmem:[#allocation12 + $0xc0] sm:$0xff]
        %v4667 = vld [vmem:[#allocation12 + $0xc8] sm:$0xff]
        %v4668 = vld [vmem:[#allocation12 + $0xd0] sm:$0xff]
        %v4669 = vld [vmem:[#allocation12 + $0xd8] sm:$0xff]
        %v4670 = vld [vmem:[#allocation12 + $0xe0] sm:$0xff]
        %v4671 = vld [vmem:[#allocation12 + $0xe8] sm:$0xff]
        %v4672 = vld [vmem:[#allocation12 + $0xf0] sm:$0xff]
        %v4673 = vld [vmem:[#allocation12 + $0xf8] sm:$0xff]
        %v4674 = vld [vmem:[#allocation12 + $0x100] sm:$0xff]
        %v4675 = vld [vmem:[#allocation12 + $0x108] sm:$0xff]
        %v4676 = vld [vmem:[#allocation12 + $0x110] sm:$0xff]
        %v4677 = vld [vmem:[#allocation12 + $0x118] sm:$0xff]
        %v4678 = vld [vmem:[#allocation12 + $0x120] sm:$0xff]
        %v4679 = vld [vmem:[#allocation12 + $0x128] sm:$0xff]
        %v4680 = vld [vmem:[#allocation12 + $0x130] sm:$0xff]
        %v4681 = vld [vmem:[#allocation12 + $0x138] sm:$0xff]
        %v4682 = vld [vmem:[#allocation12 + $0x140] sm:$0xff]
        %v4683 = vld [vmem:[#allocation12 + $0x148] sm:$0xff]
        %v4684 = vld [vmem:[#allocation12 + $0x150] sm:$0xff]
        %v4685 = vld [vmem:[#allocation12 + $0x158] sm:$0xff]
        %v4686 = vld [vmem:[#allocation12 + $0x160] sm:$0xff]
        %v4687 = vld [vmem:[#allocation12 + $0x168] sm:$0xff]
        %v4688 = vld [vmem:[#allocation12 + $0x170] sm:$0xff]
        %v4689 = vld [vmem:[#allocation12 + $0x178] sm:$0xff]
        %v4690 = vld [vmem:[#allocation12 + $0x180] sm:$0xff]
        %v4691 = vld [vmem:[#allocation12 + $0x188] sm:$0xff]
        %v4692 = vld [vmem:[#allocation12 + $0x190] sm:$0xff]
        %v4693 = vld [vmem:[#allocation12 + $0x198] sm:$0xff]
        %v4694 = vld [vmem:[#allocation12 + $0x1a0] sm:$0xff]
        %v4695 = vld [vmem:[#allocation12 + $0x1a8] sm:$0xff]
        %v4696 = vld [vmem:[#allocation12 + $0x1b0] sm:$0xff]
        %v4697 = vld [vmem:[#allocation12 + $0x1b8] sm:$0xff]
        %v4698 = vld [vmem:[#allocation12 + $0x1c0] sm:$0xff]
        %v4699 = vld [vmem:[#allocation12 + $0x1c8] sm:$0xff]
        %v4700 = vld [vmem:[#allocation12 + $0x1d0] sm:$0xff]
        %v4701 = vld [vmem:[#allocation12 + $0x1d8] sm:$0xff]
        %v4702 = vld [vmem:[#allocation12 + $0x1e0] sm:$0xff]
        %v4703 = vld [vmem:[#allocation12 + $0x1e8] sm:$0xff]
        %v4704 = vld [vmem:[#allocation12 + $0x1f0] sm:$0xff]
        %v4705 = vld [vmem:[#allocation12 + $0x1f8] sm:$0xff]
        %v4706 = vld [vmem:[#allocation12 + $0x200] sm:$0xff]
        %v4707 = vld [vmem:[#allocation12 + $0x208] sm:$0xff]
        %v4708 = vld [vmem:[#allocation12 + $0x210] sm:$0xff]
        %v4709 = vld [vmem:[#allocation12 + $0x218] sm:$0xff]
        %v4710 = vld [vmem:[#allocation12 + $0x220] sm:$0xff]
        %v4711 = vld [vmem:[#allocation12 + $0x228] sm:$0xff]
        %v4712 = vld [vmem:[#allocation12 + $0x230] sm:$0xff]
        %v4713 = vld [vmem:[#allocation12 + $0x238] sm:$0xff]
        %v4714 = vld [vmem:[#allocation12 + $0x240] sm:$0xff]
        %v4715 = vld [vmem:[#allocation12 + $0x248] sm:$0xff]
        %v4716 = vld [vmem:[#allocation12 + $0x250] sm:$0xff]
        %v4717 = vld [vmem:[#allocation12 + $0x258] sm:$0xff]
        %v4718 = vld [vmem:[#allocation12 + $0x260] sm:$0xff]
        %v4719 = vld [vmem:[#allocation12 + $0x268] sm:$0xff]
        %v4720 = vld [vmem:[#allocation12 + $0x270] sm:$0xff]
        %v4721 = vld [vmem:[#allocation12 + $0x278] sm:$0xff]
        %v4722 = vld [vmem:[#allocation12 + $0x280] sm:$0xff]
        %v4723 = vld [vmem:[#allocation12 + $0x288] sm:$0xff]
        %v4724 = vld [vmem:[#allocation12 + $0x290] sm:$0xff]
        %v4725 = vld [vmem:[#allocation12 + $0x298] sm:$0xff]
        %v4726 = vld [vmem:[#allocation12 + $0x2a0] sm:$0xff]
        %v4727 = vld [vmem:[#allocation12 + $0x2a8] sm:$0xff]
        %v4728 = vld [vmem:[#allocation12 + $0x2b0] sm:$0xff]
        %v4729 = vld [vmem:[#allocation12 + $0x2b8] sm:$0xff]
        %v4730 = vld [vmem:[#allocation12 + $0x2c0] sm:$0xff]
        %v4731 = vld [vmem:[#allocation12 + $0x2c8] sm:$0xff]
        %v4732 = vld [vmem:[#allocation12 + $0x2d0] sm:$0xff]
        %v4733 = vld [vmem:[#allocation12 + $0x2d8] sm:$0xff]
        %v4734 = vld [vmem:[#allocation12 + $0x2e0] sm:$0xff]
        %v4735 = vld [vmem:[#allocation12 + $0x2e8] sm:$0xff]
        %v4736 = vld [vmem:[#allocation12 + $0x2f0] sm:$0xff]
        %v4737 = vld [vmem:[#allocation12 + $0x2f8] sm:$0xff]
        %v4738 = vld [vmem:[#allocation12 + $0x300] sm:$0xff]
        %v4739 = vld [vmem:[#allocation12 + $0x308] sm:$0xff]
        %v4740 = vld [vmem:[#allocation12 + $0x310] sm:$0xff]
        %v4741 = vld [vmem:[#allocation12 + $0x318] sm:$0xff]
        %v4742 = vld [vmem:[#allocation12 + $0x320] sm:$0xff]
        %v4743 = vld [vmem:[#allocation12 + $0x328] sm:$0xff]
        %v4744 = vld [vmem:[#allocation12 + $0x330] sm:$0xff]
        %v4745 = vld [vmem:[#allocation12 + $0x338] sm:$0xff]
        %v4746 = vld [vmem:[#allocation12 + $0x340] sm:$0xff]
        %v4747 = vld [vmem:[#allocation12 + $0x348] sm:$0xff]
        %v4748 = vld [vmem:[#allocation12 + $0x350] sm:$0xff]
        %v4749 = vld [vmem:[#allocation12 + $0x358] sm:$0xff]
        %v4750 = vld [vmem:[#allocation12 + $0x360] sm:$0xff]
        %v4751 = vld [vmem:[#allocation12 + $0x368] sm:$0xff]
        %v4752 = vld [vmem:[#allocation12 + $0x370] sm:$0xff]
        %v4753 = vld [vmem:[#allocation12 + $0x378] sm:$0xff]
        %v4754 = vld [vmem:[#allocation12 + $0x380] sm:$0xff]
        %v4755 = vld [vmem:[#allocation12 + $0x388] sm:$0xff]
        %v4756 = vld [vmem:[#allocation12 + $0x390] sm:$0xff]
        %v4757 = vld [vmem:[#allocation12 + $0x398] sm:$0xff]
        %v4758 = vld [vmem:[#allocation12 + $0x3a0] sm:$0xff]
        %v4759 = vld [vmem:[#allocation12 + $0x3a8] sm:$0xff]
        %v4760 = vld [vmem:[#allocation12 + $0x3b0] sm:$0xff]
        %v4761 = vld [vmem:[#allocation12 + $0x3b8] sm:$0xff]
        %v4762 = vld [vmem:[#allocation12 + $0x3c0] sm:$0xff]
        %v4763 = vld [vmem:[#allocation12 + $0x3c8] sm:$0xff]
        %v4764 = vld [vmem:[#allocation12 + $0x3d0] sm:$0xff]
        %v4765 = vld [vmem:[#allocation12 + $0x3d8] sm:$0xff]
        %v4766 = vld [vmem:[#allocation12 + $0x3e0] sm:$0xff]
        %v4767 = vld [vmem:[#allocation12 + $0x3e8] sm:$0xff]
        %v4768 = vld [vmem:[#allocation12 + $0x3f0] sm:$0xff]
        %v4769 = vld [vmem:[#allocation12 + $0x3f8] sm:$0xff]
        %v4770 = vld [vmem:[#allocation14] sm:$0xf]
        %v4772 = vlaneseq
        %v4773 = vshrl.u32 %v4772, 7
        %v4774 = vsub.s32 0, %v4773
        %v4775 = vrot.slane %v4770, %v4774
        %v4776 = vlaneseq
        %v4777 = vshrl.u32 %v4776, 7
        %v4778 = vsub.s32 1, %v4777
        %v4779 = vrot.slane %v4770, %v4778
        %v4780 = vlaneseq
        %v4781 = vshrl.u32 %v4780, 7
        %v4782 = vsub.s32 2, %v4781
        %v4783 = vrot.slane %v4770, %v4782
        %v4784 = vlaneseq
        %v4785 = vshrl.u32 %v4784, 7
        %v4786 = vsub.s32 3, %v4785
        %v4787 = vrot.slane %v4770, %v4786
        %v4920 = vunpack.c.l.b16 %v4642
        %v4921 = vunpack.c.h.b16 %v4642
        %v4922 = vunpack.c.l.b16 %v4643
        %v4923 = vunpack.c.h.b16 %v4643
        %v4924 = vunpack.c.l.b16 %v4644
        %v4925 = vunpack.c.h.b16 %v4644
        %v4926 = vunpack.c.l.b16 %v4645
        %v4927 = vunpack.c.h.b16 %v4645
        %v4928 = vunpack.c.l.b16 %v4646
        %v4929 = vunpack.c.h.b16 %v4646
        %v4930 = vunpack.c.l.b16 %v4647
        %v4931 = vunpack.c.h.b16 %v4647
        %v4932 = vunpack.c.l.b16 %v4648
        %v4933 = vunpack.c.h.b16 %v4648
        %v4934 = vunpack.c.l.b16 %v4649
        %v4935 = vunpack.c.h.b16 %v4649
        %v4936 = vunpack.c.l.b16 %v4650
        %v4937 = vunpack.c.h.b16 %v4650
        %v4938 = vunpack.c.l.b16 %v4651
        %v4939 = vunpack.c.h.b16 %v4651
        %v4940 = vunpack.c.l.b16 %v4652
        %v4941 = vunpack.c.h.b16 %v4652
        %v4942 = vunpack.c.l.b16 %v4653
        %v4943 = vunpack.c.h.b16 %v4653
        %v4944 = vunpack.c.l.b16 %v4654
        %v4945 = vunpack.c.h.b16 %v4654
        %v4946 = vunpack.c.l.b16 %v4655
        %v4947 = vunpack.c.h.b16 %v4655
        %v4948 = vunpack.c.l.b16 %v4656
        %v4949 = vunpack.c.h.b16 %v4656
        %v4950 = vunpack.c.l.b16 %v4657
        %v4951 = vunpack.c.h.b16 %v4657
        %v4952 = vunpack.c.l.b16 %v4658
        %v4953 = vunpack.c.h.b16 %v4658
        %v4954 = vunpack.c.l.b16 %v4659
        %v4955 = vunpack.c.h.b16 %v4659
        %v4956 = vunpack.c.l.b16 %v4660
        %v4957 = vunpack.c.h.b16 %v4660
        %v4958 = vunpack.c.l.b16 %v4661
        %v4959 = vunpack.c.h.b16 %v4661
        %v4960 = vunpack.c.l.b16 %v4662
        %v4961 = vunpack.c.h.b16 %v4662
        %v4962 = vunpack.c.l.b16 %v4663
        %v4963 = vunpack.c.h.b16 %v4663
        %v4964 = vunpack.c.l.b16 %v4664
        %v4965 = vunpack.c.h.b16 %v4664
        %v4966 = vunpack.c.l.b16 %v4665
        %v4967 = vunpack.c.h.b16 %v4665
        %v4968 = vunpack.c.l.b16 %v4666
        %v4969 = vunpack.c.h.b16 %v4666
        %v4970 = vunpack.c.l.b16 %v4667
        %v4971 = vunpack.c.h.b16 %v4667
        %v4972 = vunpack.c.l.b16 %v4668
        %v4973 = vunpack.c.h.b16 %v4668
        %v4974 = vunpack.c.l.b16 %v4669
        %v4975 = vunpack.c.h.b16 %v4669
        %v4976 = vunpack.c.l.b16 %v4670
        %v4977 = vunpack.c.h.b16 %v4670
        %v4978 = vunpack.c.l.b16 %v4671
        %v4979 = vunpack.c.h.b16 %v4671
        %v4980 = vunpack.c.l.b16 %v4672
        %v4981 = vunpack.c.h.b16 %v4672
        %v4982 = vunpack.c.l.b16 %v4673
        %v4983 = vunpack.c.h.b16 %v4673
        %v4984 = vunpack.c.l.b16 %v4674
        %v4985 = vunpack.c.h.b16 %v4674
        %v4986 = vunpack.c.l.b16 %v4675
        %v4987 = vunpack.c.h.b16 %v4675
        %v4988 = vunpack.c.l.b16 %v4676
        %v4989 = vunpack.c.h.b16 %v4676
        %v4990 = vunpack.c.l.b16 %v4677
        %v4991 = vunpack.c.h.b16 %v4677
        %v4992 = vunpack.c.l.b16 %v4678
        %v4993 = vunpack.c.h.b16 %v4678
        %v4994 = vunpack.c.l.b16 %v4679
        %v4995 = vunpack.c.h.b16 %v4679
        %v4996 = vunpack.c.l.b16 %v4680
        %v4997 = vunpack.c.h.b16 %v4680
        %v4998 = vunpack.c.l.b16 %v4681
        %v4999 = vunpack.c.h.b16 %v4681
        %v5000 = vunpack.c.l.b16 %v4682
        %v5001 = vunpack.c.h.b16 %v4682
        %v5002 = vunpack.c.l.b16 %v4683
        %v5003 = vunpack.c.h.b16 %v4683
        %v5004 = vunpack.c.l.b16 %v4684
        %v5005 = vunpack.c.h.b16 %v4684
        %v5006 = vunpack.c.l.b16 %v4685
        %v5007 = vunpack.c.h.b16 %v4685
        %v5008 = vunpack.c.l.b16 %v4686
        %v5009 = vunpack.c.h.b16 %v4686
        %v5010 = vunpack.c.l.b16 %v4687
        %v5011 = vunpack.c.h.b16 %v4687
        %v5012 = vunpack.c.l.b16 %v4688
        %v5013 = vunpack.c.h.b16 %v4688
        %v5014 = vunpack.c.l.b16 %v4689
        %v5015 = vunpack.c.h.b16 %v4689
        %v5016 = vunpack.c.l.b16 %v4690
        %v5017 = vunpack.c.h.b16 %v4690
        %v5018 = vunpack.c.l.b16 %v4691
        %v5019 = vunpack.c.h.b16 %v4691
        %v5020 = vunpack.c.l.b16 %v4692
        %v5021 = vunpack.c.h.b16 %v4692
        %v5022 = vunpack.c.l.b16 %v4693
        %v5023 = vunpack.c.h.b16 %v4693
        %v5024 = vunpack.c.l.b16 %v4694
        %v5025 = vunpack.c.h.b16 %v4694
        %v5026 = vunpack.c.l.b16 %v4695
        %v5027 = vunpack.c.h.b16 %v4695
        %v5028 = vunpack.c.l.b16 %v4696
        %v5029 = vunpack.c.h.b16 %v4696
        %v5030 = vunpack.c.l.b16 %v4697
        %v5031 = vunpack.c.h.b16 %v4697
        %v5032 = vunpack.c.l.b16 %v4698
        %v5033 = vunpack.c.h.b16 %v4698
        %v5034 = vunpack.c.l.b16 %v4699
        %v5035 = vunpack.c.h.b16 %v4699
        %v5036 = vunpack.c.l.b16 %v4700
        %v5037 = vunpack.c.h.b16 %v4700
        %v5038 = vunpack.c.l.b16 %v4701
        %v5039 = vunpack.c.h.b16 %v4701
        %v5040 = vunpack.c.l.b16 %v4702
        %v5041 = vunpack.c.h.b16 %v4702
        %v5042 = vunpack.c.l.b16 %v4703
        %v5043 = vunpack.c.h.b16 %v4703
        %v5044 = vunpack.c.l.b16 %v4704
        %v5045 = vunpack.c.h.b16 %v4704
        %v5046 = vunpack.c.l.b16 %v4705
        %v5047 = vunpack.c.h.b16 %v4705
        %v5048 = vunpack.c.l.b16 %v4706
        %v5049 = vunpack.c.h.b16 %v4706
        %v5050 = vunpack.c.l.b16 %v4707
        %v5051 = vunpack.c.h.b16 %v4707
        %v5052 = vunpack.c.l.b16 %v4708
        %v5053 = vunpack.c.h.b16 %v4708
        %v5054 = vunpack.c.l.b16 %v4709
        %v5055 = vunpack.c.h.b16 %v4709
        %v5056 = vunpack.c.l.b16 %v4710
        %v5057 = vunpack.c.h.b16 %v4710
        %v5058 = vunpack.c.l.b16 %v4711
        %v5059 = vunpack.c.h.b16 %v4711
        %v5060 = vunpack.c.l.b16 %v4712
        %v5061 = vunpack.c.h.b16 %v4712
        %v5062 = vunpack.c.l.b16 %v4713
        %v5063 = vunpack.c.h.b16 %v4713
        %v5064 = vunpack.c.l.b16 %v4714
        %v5065 = vunpack.c.h.b16 %v4714
        %v5066 = vunpack.c.l.b16 %v4715
        %v5067 = vunpack.c.h.b16 %v4715
        %v5068 = vunpack.c.l.b16 %v4716
        %v5069 = vunpack.c.h.b16 %v4716
        %v5070 = vunpack.c.l.b16 %v4717
        %v5071 = vunpack.c.h.b16 %v4717
        %v5072 = vunpack.c.l.b16 %v4718
        %v5073 = vunpack.c.h.b16 %v4718
        %v5074 = vunpack.c.l.b16 %v4719
        %v5075 = vunpack.c.h.b16 %v4719
        %v5076 = vunpack.c.l.b16 %v4720
        %v5077 = vunpack.c.h.b16 %v4720
        %v5078 = vunpack.c.l.b16 %v4721
        %v5079 = vunpack.c.h.b16 %v4721
        %v5080 = vunpack.c.l.b16 %v4722
        %v5081 = vunpack.c.h.b16 %v4722
        %v5082 = vunpack.c.l.b16 %v4723
        %v5083 = vunpack.c.h.b16 %v4723
        %v5084 = vunpack.c.l.b16 %v4724
        %v5085 = vunpack.c.h.b16 %v4724
        %v5086 = vunpack.c.l.b16 %v4725
        %v5087 = vunpack.c.h.b16 %v4725
        %v5088 = vunpack.c.l.b16 %v4726
        %v5089 = vunpack.c.h.b16 %v4726
        %v5090 = vunpack.c.l.b16 %v4727
        %v5091 = vunpack.c.h.b16 %v4727
        %v5092 = vunpack.c.l.b16 %v4728
        %v5093 = vunpack.c.h.b16 %v4728
        %v5094 = vunpack.c.l.b16 %v4729
        %v5095 = vunpack.c.h.b16 %v4729
        %v5096 = vunpack.c.l.b16 %v4730
        %v5097 = vunpack.c.h.b16 %v4730
        %v5098 = vunpack.c.l.b16 %v4731
        %v5099 = vunpack.c.h.b16 %v4731
        %v5100 = vunpack.c.l.b16 %v4732
        %v5101 = vunpack.c.h.b16 %v4732
        %v5102 = vunpack.c.l.b16 %v4733
        %v5103 = vunpack.c.h.b16 %v4733
        %v5104 = vunpack.c.l.b16 %v4734
        %v5105 = vunpack.c.h.b16 %v4734
        %v5106 = vunpack.c.l.b16 %v4735
        %v5107 = vunpack.c.h.b16 %v4735
        %v5108 = vunpack.c.l.b16 %v4736
        %v5109 = vunpack.c.h.b16 %v4736
        %v5110 = vunpack.c.l.b16 %v4737
        %v5111 = vunpack.c.h.b16 %v4737
        %v5112 = vunpack.c.l.b16 %v4738
        %v5113 = vunpack.c.h.b16 %v4738
        %v5114 = vunpack.c.l.b16 %v4739
        %v5115 = vunpack.c.h.b16 %v4739
        %v5116 = vunpack.c.l.b16 %v4740
        %v5117 = vunpack.c.h.b16 %v4740
        %v5118 = vunpack.c.l.b16 %v4741
        %v5119 = vunpack.c.h.b16 %v4741
        %v5120 = vunpack.c.l.b16 %v4742
        %v5121 = vunpack.c.h.b16 %v4742
        %v5122 = vunpack.c.l.b16 %v4743
        %v5123 = vunpack.c.h.b16 %v4743
        %v5124 = vunpack.c.l.b16 %v4744
        %v5125 = vunpack.c.h.b16 %v4744
        %v5126 = vunpack.c.l.b16 %v4745
        %v5127 = vunpack.c.h.b16 %v4745
        %v5128 = vunpack.c.l.b16 %v4746
        %v5129 = vunpack.c.h.b16 %v4746
        %v5130 = vunpack.c.l.b16 %v4747
        %v5131 = vunpack.c.h.b16 %v4747
        %v5132 = vunpack.c.l.b16 %v4748
        %v5133 = vunpack.c.h.b16 %v4748
        %v5134 = vunpack.c.l.b16 %v4749
        %v5135 = vunpack.c.h.b16 %v4749
        %v5136 = vunpack.c.l.b16 %v4750
        %v5137 = vunpack.c.h.b16 %v4750
        %v5138 = vunpack.c.l.b16 %v4751
        %v5139 = vunpack.c.h.b16 %v4751
        %v5140 = vunpack.c.l.b16 %v4752
        %v5141 = vunpack.c.h.b16 %v4752
        %v5142 = vunpack.c.l.b16 %v4753
        %v5143 = vunpack.c.h.b16 %v4753
        %v5144 = vunpack.c.l.b16 %v4754
        %v5145 = vunpack.c.h.b16 %v4754
        %v5146 = vunpack.c.l.b16 %v4755
        %v5147 = vunpack.c.h.b16 %v4755
        %v5148 = vunpack.c.l.b16 %v4756
        %v5149 = vunpack.c.h.b16 %v4756
        %v5150 = vunpack.c.l.b16 %v4757
        %v5151 = vunpack.c.h.b16 %v4757
        %v5152 = vunpack.c.l.b16 %v4758
        %v5153 = vunpack.c.h.b16 %v4758
        %v5154 = vunpack.c.l.b16 %v4759
        %v5155 = vunpack.c.h.b16 %v4759
        %v5156 = vunpack.c.l.b16 %v4760
        %v5157 = vunpack.c.h.b16 %v4760
        %v5158 = vunpack.c.l.b16 %v4761
        %v5159 = vunpack.c.h.b16 %v4761
        %v5160 = vunpack.c.l.b16 %v4762
        %v5161 = vunpack.c.h.b16 %v4762
        %v5162 = vunpack.c.l.b16 %v4763
        %v5163 = vunpack.c.h.b16 %v4763
        %v5164 = vunpack.c.l.b16 %v4764
        %v5165 = vunpack.c.h.b16 %v4764
        %v5166 = vunpack.c.l.b16 %v4765
        %v5167 = vunpack.c.h.b16 %v4765
        %v5168 = vunpack.c.l.b16 %v4766
        %v5169 = vunpack.c.h.b16 %v4766
        %v5170 = vunpack.c.l.b16 %v4767
        %v5171 = vunpack.c.h.b16 %v4767
        %v5172 = vunpack.c.l.b16 %v4768
        %v5173 = vunpack.c.h.b16 %v4768
        %v5174 = vunpack.c.l.b16 %v4769
        %v5175 = vunpack.c.h.b16 %v4769
        %v5176 = vpack.c.b16 %v4924, %v4920
        %v5177 = vpack.c.b16 %v4925, %v4921
        %v5178 = vpack.c.b16 %v4926, %v4922
        %v5179 = vpack.c.b16 %v4927, %v4923
        %v5180 = vpack.c.b16 %v4932, %v4928
        %v5181 = vpack.c.b16 %v4933, %v4929
        %v5182 = vpack.c.b16 %v4934, %v4930
        %v5183 = vpack.c.b16 %v4935, %v4931
        %v5184 = vpack.c.b16 %v4940, %v4936
        %v5185 = vpack.c.b16 %v4941, %v4937
        %v5186 = vpack.c.b16 %v4942, %v4938
        %v5187 = vpack.c.b16 %v4943, %v4939
        %v5188 = vpack.c.b16 %v4948, %v4944
        %v5189 = vpack.c.b16 %v4949, %v4945
        %v5190 = vpack.c.b16 %v4950, %v4946
        %v5191 = vpack.c.b16 %v4951, %v4947
        %v5192 = vpack.c.b16 %v4956, %v4952
        %v5193 = vpack.c.b16 %v4957, %v4953
        %v5194 = vpack.c.b16 %v4958, %v4954
        %v5195 = vpack.c.b16 %v4959, %v4955
        %v5196 = vpack.c.b16 %v4964, %v4960
        %v5197 = vpack.c.b16 %v4965, %v4961
        %v5198 = vpack.c.b16 %v4966, %v4962
        %v5199 = vpack.c.b16 %v4967, %v4963
        %v5200 = vpack.c.b16 %v4972, %v4968
        %v5201 = vpack.c.b16 %v4973, %v4969
        %v5202 = vpack.c.b16 %v4974, %v4970
        %v5203 = vpack.c.b16 %v4975, %v4971
        %v5204 = vpack.c.b16 %v4980, %v4976
        %v5205 = vpack.c.b16 %v4981, %v4977
        %v5206 = vpack.c.b16 %v4982, %v4978
        %v5207 = vpack.c.b16 %v4983, %v4979
        %v5208 = vpack.c.b16 %v4988, %v4984
        %v5209 = vpack.c.b16 %v4989, %v4985
        %v5210 = vpack.c.b16 %v4990, %v4986
        %v5211 = vpack.c.b16 %v4991, %v4987
        %v5212 = vpack.c.b16 %v4996, %v4992
        %v5213 = vpack.c.b16 %v4997, %v4993
        %v5214 = vpack.c.b16 %v4998, %v4994
        %v5215 = vpack.c.b16 %v4999, %v4995
        %v5216 = vpack.c.b16 %v5004, %v5000
        %v5217 = vpack.c.b16 %v5005, %v5001
        %v5218 = vpack.c.b16 %v5006, %v5002
        %v5219 = vpack.c.b16 %v5007, %v5003
        %v5220 = vpack.c.b16 %v5012, %v5008
        %v5221 = vpack.c.b16 %v5013, %v5009
        %v5222 = vpack.c.b16 %v5014, %v5010
        %v5223 = vpack.c.b16 %v5015, %v5011
        %v5224 = vpack.c.b16 %v5020, %v5016
        %v5225 = vpack.c.b16 %v5021, %v5017
        %v5226 = vpack.c.b16 %v5022, %v5018
        %v5227 = vpack.c.b16 %v5023, %v5019
        %v5228 = vpack.c.b16 %v5028, %v5024
        %v5229 = vpack.c.b16 %v5029, %v5025
        %v5230 = vpack.c.b16 %v5030, %v5026
        %v5231 = vpack.c.b16 %v5031, %v5027
        %v5232 = vpack.c.b16 %v5036, %v5032
        %v5233 = vpack.c.b16 %v5037, %v5033
        %v5234 = vpack.c.b16 %v5038, %v5034
        %v5235 = vpack.c.b16 %v5039, %v5035
        %v5236 = vpack.c.b16 %v5044, %v5040
        %v5237 = vpack.c.b16 %v5045, %v5041
        %v5238 = vpack.c.b16 %v5046, %v5042
        %v5239 = vpack.c.b16 %v5047, %v5043
        %v5240 = vpack.c.b16 %v5052, %v5048
        %v5241 = vpack.c.b16 %v5053, %v5049
        %v5242 = vpack.c.b16 %v5054, %v5050
        %v5243 = vpack.c.b16 %v5055, %v5051
        %v5244 = vpack.c.b16 %v5060, %v5056
        %v5245 = vpack.c.b16 %v5061, %v5057
        %v5246 = vpack.c.b16 %v5062, %v5058
        %v5247 = vpack.c.b16 %v5063, %v5059
        %v5248 = vpack.c.b16 %v5068, %v5064
        %v5249 = vpack.c.b16 %v5069, %v5065
        %v5250 = vpack.c.b16 %v5070, %v5066
        %v5251 = vpack.c.b16 %v5071, %v5067
        %v5252 = vpack.c.b16 %v5076, %v5072
        %v5253 = vpack.c.b16 %v5077, %v5073
        %v5254 = vpack.c.b16 %v5078, %v5074
        %v5255 = vpack.c.b16 %v5079, %v5075
        %v5256 = vpack.c.b16 %v5084, %v5080
        %v5257 = vpack.c.b16 %v5085, %v5081
        %v5258 = vpack.c.b16 %v5086, %v5082
        %v5259 = vpack.c.b16 %v5087, %v5083
        %v5260 = vpack.c.b16 %v5092, %v5088
        %v5261 = vpack.c.b16 %v5093, %v5089
        %v5262 = vpack.c.b16 %v5094, %v5090
        %v5263 = vpack.c.b16 %v5095, %v5091
        %v5264 = vpack.c.b16 %v5100, %v5096
        %v5265 = vpack.c.b16 %v5101, %v5097
        %v5266 = vpack.c.b16 %v5102, %v5098
        %v5267 = vpack.c.b16 %v5103, %v5099
        %v5268 = vpack.c.b16 %v5108, %v5104
        %v5269 = vpack.c.b16 %v5109, %v5105
        %v5270 = vpack.c.b16 %v5110, %v5106
        %v5271 = vpack.c.b16 %v5111, %v5107
        %v5272 = vpack.c.b16 %v5116, %v5112
        %v5273 = vpack.c.b16 %v5117, %v5113
        %v5274 = vpack.c.b16 %v5118, %v5114
        %v5275 = vpack.c.b16 %v5119, %v5115
        %v5276 = vpack.c.b16 %v5124, %v5120
        %v5277 = vpack.c.b16 %v5125, %v5121
        %v5278 = vpack.c.b16 %v5126, %v5122
        %v5279 = vpack.c.b16 %v5127, %v5123
        %v5280 = vpack.c.b16 %v5132, %v5128
        %v5281 = vpack.c.b16 %v5133, %v5129
        %v5282 = vpack.c.b16 %v5134, %v5130
        %v5283 = vpack.c.b16 %v5135, %v5131
        %v5284 = vpack.c.b16 %v5140, %v5136
        %v5285 = vpack.c.b16 %v5141, %v5137
        %v5286 = vpack.c.b16 %v5142, %v5138
        %v5287 = vpack.c.b16 %v5143, %v5139
        %v5288 = vpack.c.b16 %v5148, %v5144
        %v5289 = vpack.c.b16 %v5149, %v5145
        %v5290 = vpack.c.b16 %v5150, %v5146
        %v5291 = vpack.c.b16 %v5151, %v5147
        %v5292 = vpack.c.b16 %v5156, %v5152
        %v5293 = vpack.c.b16 %v5157, %v5153
        %v5294 = vpack.c.b16 %v5158, %v5154
        %v5295 = vpack.c.b16 %v5159, %v5155
        %v5296 = vpack.c.b16 %v5164, %v5160
        %v5297 = vpack.c.b16 %v5165, %v5161
        %v5298 = vpack.c.b16 %v5166, %v5162
        %v5299 = vpack.c.b16 %v5167, %v5163
        %v5300 = vpack.c.b16 %v5172, %v5168
        %v5301 = vpack.c.b16 %v5173, %v5169
        %v5302 = vpack.c.b16 %v5174, %v5170
        %v5303 = vpack.c.b16 %v5175, %v5171
        %5432 = vmatprep.subr.bf16.mxu0 %v5177
        %5433 = vmatpush1.bf16.msra.mxu0 %v5176
        %5434 = vmatprep.subr.bf16.mxu0 %v5181
        %5435 = vmatpush1.bf16.msra.mxu0 %v5180
        %5436 = vmatprep.subr.bf16.mxu0 %v5185
        %5437 = vmatpush1.bf16.msra.mxu0 %v5184
        %5438 = vmatprep.subr.bf16.mxu0 %v5189
        %5439 = vmatpush1.bf16.msra.mxu0 %v5188
        %5440 = vmatprep.subr.bf16.mxu0 %v5193
        %5441 = vmatpush1.bf16.msra.mxu0 %v5192
        %5442 = vmatprep.subr.bf16.mxu0 %v5197
        %5443 = vmatpush1.bf16.msra.mxu0 %v5196
        %5444 = vmatprep.subr.bf16.mxu0 %v5201
        %5445 = vmatpush1.bf16.msra.mxu0 %v5200
        %5446 = vmatprep.subr.bf16.mxu0 %v5205
        %5447 = vmatpush1.bf16.msra.mxu0 %v5204
        %5448 = vmatprep.subr.bf16.mxu0 %v5209
        %5449 = vmatpush1.bf16.msra.mxu0 %v5208
        %5450 = vmatprep.subr.bf16.mxu0 %v5213
        %5451 = vmatpush1.bf16.msra.mxu0 %v5212
        %5452 = vmatprep.subr.bf16.mxu0 %v5217
        %5453 = vmatpush1.bf16.msra.mxu0 %v5216
        %5454 = vmatprep.subr.bf16.mxu0 %v5221
        %5455 = vmatpush1.bf16.msra.mxu0 %v5220
        %5456 = vmatprep.subr.bf16.mxu0 %v5225
        %5457 = vmatpush1.bf16.msra.mxu0 %v5224
        %5458 = vmatprep.subr.bf16.mxu0 %v5229
        %5459 = vmatpush1.bf16.msra.mxu0 %v5228
        %5460 = vmatprep.subr.bf16.mxu0 %v5233
        %5461 = vmatpush1.bf16.msra.mxu0 %v5232
        %5462 = vmatprep.subr.bf16.mxu0 %v5237
        %5463 = vmatpush1.bf16.msra.mxu0 %v5236
        %5464 = vmatprep.mubr.bf16.mxu0 %v4579
        %5465 = vmatmul.mubr.bf16.gmra.mrb[0].mxu0 %v4578
        %v5466 = vpop.f32.mrb[0].mxu0
        %v5467 = vadd.f32 %v4775, %v5466
        %v5468 = vpop.f32.mrb[0].mxu0
        %v5469 = vadd.f32 %v4779, %v5468
        %v5470 = vpop.f32.mrb[0].mxu0
        %v5471 = vadd.f32 %v4775, %v5470
        %v5472 = vpop.f32.mrb[0].mxu0
        %v5473 = vadd.f32 %v4779, %v5472
        %5474 = vmatprep.mubr.bf16.mxu0 %v4583
        %5475 = vmatmul.mubr.bf16.gmra.mrb[0].mxu0 %v4582
        %v5476 = vpop.f32.mrb[0].mxu0
        %v5477 = vadd.f32 %v4775, %v5476
        %v5478 = vpop.f32.mrb[0].mxu0
        %v5479 = vadd.f32 %v4779, %v5478
        %v5480 = vpop.f32.mrb[0].mxu0
        %v5481 = vadd.f32 %v4775, %v5480
        %v5482 = vpop.f32.mrb[0].mxu0
        %v5483 = vadd.f32 %v4779, %v5482
        %5484 = vmatprep.mubr.bf16.mxu0 %v4587
        %5485 = vmatmul.mubr.bf16.gmra.mrb[0].mxu0 %v4586
        %v5486 = vpop.f32.mrb[0].mxu0
        %v5487 = vadd.f32 %v4775, %v5486
        %v5488 = vpop.f32.mrb[0].mxu0
        %v5489 = vadd.f32 %v4779, %v5488
        %v5490 = vpop.f32.mrb[0].mxu0
        %v5491 = vadd.f32 %v4775, %v5490
        %v5492 = vpop.f32.mrb[0].mxu0
        %v5493 = vadd.f32 %v4779, %v5492
        %5494 = vmatprep.mubr.bf16.mxu0 %v4591
        %5495 = vmatmul.mubr.bf16.gmra.mrb[0].mxu0 %v4590
        %v5496 = vpop.f32.mrb[0].mxu0
        %v5497 = vadd.f32 %v4775, %v5496
        %v5498 = vpop.f32.mrb[0].mxu0
        %v5499 = vadd.f32 %v4779, %v5498
        %v5500 = vpop.f32.mrb[0].mxu0
        %v5501 = vadd.f32 %v4775, %v5500
        %v5502 = vpop.f32.mrb[0].mxu0
        %v5503 = vadd.f32 %v4779, %v5502
        %5504 = vmatprep.mubr.bf16.mxu0 %v4595
        %5505 = vmatmul.mubr.bf16.gmra.mrb[0].mxu0 %v4594
        %v5506 = vpop.f32.mrb[0].mxu0
        %v5507 = vadd.f32 %v4775, %v5506
        %v5508 = vpop.f32.mrb[0].mxu0
        %v5509 = vadd.f32 %v4779, %v5508
        %v5510 = vpop.f32.mrb[0].mxu0
        %v5511 = vadd.f32 %v4775, %v5510
        %v5512 = vpop.f32.mrb[0].mxu0
        %v5513 = vadd.f32 %v4779, %v5512
        %5514 = vmatprep.mubr.bf16.mxu0 %v4599
        %5515 = vmatmul.mubr.bf16.gmra.mrb[0].mxu0 %v4598
        %v5516 = vpop.f32.mrb[0].mxu0
        %v5517 = vadd.f32 %v4775, %v5516
        %v5518 = vpop.f32.mrb[0].mxu0
        %v5519 = vadd.f32 %v4779, %v5518
        %v5520 = vpop.f32.mrb[0].mxu0
        %v5521 = vadd.f32 %v4775, %v5520
        %v5522 = vpop.f32.mrb[0].mxu0
        %v5523 = vadd.f32 %v4779, %v5522
        %5524 = vmatprep.mubr.bf16.mxu0 %v4603
        %5525 = vmatmul.mubr.bf16.gmra.mrb[0].mxu0 %v4602
        %v5526 = vpop.f32.mrb[0].mxu0
        %v5527 = vadd.f32 %v4775, %v5526
        %v5528 = vpop.f32.mrb[0].mxu0
        %v5529 = vadd.f32 %v4779, %v5528
        %v5530 = vpop.f32.mrb[0].mxu0
        %v5531 = vadd.f32 %v4775, %v5530
        %v5532 = vpop.f32.mrb[0].mxu0
        %v5533 = vadd.f32 %v4779, %v5532
        %5534 = vmatprep.mubr.bf16.mxu0 %v4607
        %5535 = vmatmul.mubr.bf16.gmra.mrb[0].mxu0 %v4606
        %v5536 = vpop.f32.mrb[0].mxu0
        %v5537 = vadd.f32 %v4775, %v5536
        %v5538 = vpop.f32.mrb[0].mxu0
        %v5539 = vadd.f32 %v4779, %v5538
        %v5540 = vpop.f32.mrb[0].mxu0
        %v5541 = vadd.f32 %v4775, %v5540
        %v5542 = vpop.f32.mrb[0].mxu0
        %v5543 = vadd.f32 %v4779, %v5542
        %5544 = vmatprep.mubr.bf16.mxu0 %v4611
        %5545 = vmatmul.mubr.bf16.gmra.mrb[0].mxu0 %v4610
        %v5546 = vpop.f32.mrb[0].mxu0
        %v5547 = vadd.f32 %v4775, %v5546
        %v5548 = vpop.f32.mrb[0].mxu0
        %v5549 = vadd.f32 %v4779, %v5548
        %v5550 = vpop.f32.mrb[0].mxu0
        %v5551 = vadd.f32 %v4775, %v5550
        %v5552 = vpop.f32.mrb[0].mxu0
        %v5553 = vadd.f32 %v4779, %v5552
        %5554 = vmatprep.mubr.bf16.mxu0 %v4615
        %5555 = vmatmul.mubr.bf16.gmra.mrb[0].mxu0 %v4614
        %v5556 = vpop.f32.mrb[0].mxu0
        %v5557 = vadd.f32 %v4775, %v5556
        %v5558 = vpop.f32.mrb[0].mxu0
        %v5559 = vadd.f32 %v4779, %v5558
        %v5560 = vpop.f32.mrb[0].mxu0
        %v5561 = vadd.f32 %v4775, %v5560
        %v5562 = vpop.f32.mrb[0].mxu0
        %v5563 = vadd.f32 %v4779, %v5562
        %5564 = vmatprep.mubr.bf16.mxu0 %v4619
        %5565 = vmatmul.mubr.bf16.gmra.mrb[0].mxu0 %v4618
        %v5566 = vpop.f32.mrb[0].mxu0
        %v5567 = vadd.f32 %v4775, %v5566
        %v5568 = vpop.f32.mrb[0].mxu0
        %v5569 = vadd.f32 %v4779, %v5568
        %v5570 = vpop.f32.mrb[0].mxu0
        %v5571 = vadd.f32 %v4775, %v5570
        %v5572 = vpop.f32.mrb[0].mxu0
        %v5573 = vadd.f32 %v4779, %v5572
        %5574 = vmatprep.mubr.bf16.mxu0 %v4623
        %5575 = vmatmul.mubr.bf16.gmra.mrb[0].mxu0 %v4622
        %v5576 = vpop.f32.mrb[0].mxu0
        %v5577 = vadd.f32 %v4775, %v5576
        %v5578 = vpop.f32.mrb[0].mxu0
        %v5579 = vadd.f32 %v4779, %v5578
        %v5580 = vpop.f32.mrb[0].mxu0
        %v5581 = vadd.f32 %v4775, %v5580
        %v5582 = vpop.f32.mrb[0].mxu0
        %v5583 = vadd.f32 %v4779, %v5582
        %5584 = vmatprep.mubr.bf16.mxu0 %v4627
        %5585 = vmatmul.mubr.bf16.gmra.mrb[0].mxu0 %v4626
        %v5586 = vpop.f32.mrb[0].mxu0
        %v5587 = vadd.f32 %v4775, %v5586
        %v5588 = vpop.f32.mrb[0].mxu0
        %v5589 = vadd.f32 %v4779, %v5588
        %v5590 = vpop.f32.mrb[0].mxu0
        %v5591 = vadd.f32 %v4775, %v5590
        %v5592 = vpop.f32.mrb[0].mxu0
        %v5593 = vadd.f32 %v4779, %v5592
        %5594 = vmatprep.mubr.bf16.mxu0 %v4631
        %5595 = vmatmul.mubr.bf16.gmra.mrb[0].mxu0 %v4630
        %v5596 = vpop.f32.mrb[0].mxu0
        %v5597 = vadd.f32 %v4775, %v5596
        %v5598 = vpop.f32.mrb[0].mxu0
        %v5599 = vadd.f32 %v4779, %v5598
        %v5600 = vpop.f32.mrb[0].mxu0
        %v5601 = vadd.f32 %v4775, %v5600
        %v5602 = vpop.f32.mrb[0].mxu0
        %v5603 = vadd.f32 %v4779, %v5602
        %5604 = vmatprep.mubr.bf16.mxu0 %v4635
        %5605 = vmatmul.mubr.bf16.gmra.mrb[0].mxu0 %v4634
        %v5606 = vpop.f32.mrb[0].mxu0
        %v5607 = vadd.f32 %v4775, %v5606
        %v5608 = vpop.f32.mrb[0].mxu0
        %v5609 = vadd.f32 %v4779, %v5608
        %v5610 = vpop.f32.mrb[0].mxu0
        %v5611 = vadd.f32 %v4775, %v5610
        %v5612 = vpop.f32.mrb[0].mxu0
        %v5613 = vadd.f32 %v4779, %v5612
        %5614 = vmatprep.mubr.bf16.mxu0 %v4639
        %5615 = vmatmul.mubr.bf16.gmra.mrb[0].mxu0 %v4638
        %v5616 = vpop.f32.mrb[0].mxu0
        %v5617 = vadd.f32 %v4775, %v5616
        %v5618 = vpop.f32.mrb[0].mxu0
        %v5619 = vadd.f32 %v4779, %v5618
        %v5620 = vpop.f32.mrb[0].mxu0
        %v5621 = vadd.f32 %v4775, %v5620
        %v5622 = vpop.f32.mrb[0].mxu0
        %v5623 = vadd.f32 %v4779, %v5622
        %5624 = vdwg.mxu0
        %5625 = vmatprep.subr.bf16.mxu0 %v5241
        %5626 = vmatpush1.bf16.msra.mxu0 %v5240
        %5627 = vmatprep.subr.bf16.mxu0 %v5245
        %5628 = vmatpush1.bf16.msra.mxu0 %v5244
        %5629 = vmatprep.subr.bf16.mxu0 %v5249
        %5630 = vmatpush1.bf16.msra.mxu0 %v5248
        %5631 = vmatprep.subr.bf16.mxu0 %v5253
        %5632 = vmatpush1.bf16.msra.mxu0 %v5252
        %5633 = vmatprep.subr.bf16.mxu0 %v5257
        %5634 = vmatpush1.bf16.msra.mxu0 %v5256
        %5635 = vmatprep.subr.bf16.mxu0 %v5261
        %5636 = vmatpush1.bf16.msra.mxu0 %v5260
        %5637 = vmatprep.subr.bf16.mxu0 %v5265
        %5638 = vmatpush1.bf16.msra.mxu0 %v5264
        %5639 = vmatprep.subr.bf16.mxu0 %v5269
        %5640 = vmatpush1.bf16.msra.mxu0 %v5268
        %5641 = vmatprep.subr.bf16.mxu0 %v5273
        %5642 = vmatpush1.bf16.msra.mxu0 %v5272
        %5643 = vmatprep.subr.bf16.mxu0 %v5277
        %5644 = vmatpush1.bf16.msra.mxu0 %v5276
        %5645 = vmatprep.subr.bf16.mxu0 %v5281
        %5646 = vmatpush1.bf16.msra.mxu0 %v5280
        %5647 = vmatprep.subr.bf16.mxu0 %v5285
        %5648 = vmatpush1.bf16.msra.mxu0 %v5284
        %5649 = vmatprep.subr.bf16.mxu0 %v5289
        %5650 = vmatpush1.bf16.msra.mxu0 %v5288
        %5651 = vmatprep.subr.bf16.mxu0 %v5293
        %5652 = vmatpush1.bf16.msra.mxu0 %v5292
        %5653 = vmatprep.subr.bf16.mxu0 %v5297
        %5654 = vmatpush1.bf16.msra.mxu0 %v5296
        %5655 = vmatprep.subr.bf16.mxu0 %v5301
        %5656 = vmatpush1.bf16.msra.mxu0 %v5300
        %5657 = vmatprep.mubr.bf16.mxu0 %v4581
        %5658 = vmatmul.mubr.bf16.gmra.mrb[0].mxu0 %v4580
        %v5659 = vpop.f32.mrb[0].mxu0
        %v5660 = vadd.f32 %v5467, %v5659
        %v5661 = vpop.f32.mrb[0].mxu0
        %v5662 = vadd.f32 %v5469, %v5661
        %v5663 = vpop.f32.mrb[0].mxu0
        %v5664 = vadd.f32 %v5471, %v5663
        %v5665 = vpop.f32.mrb[0].mxu0
        %v5666 = vadd.f32 %v5473, %v5665
        %5667 = vmatprep.mubr.bf16.mxu0 %v4585
        %5668 = vmatmul.mubr.bf16.gmra.mrb[0].mxu0 %v4584
        %v5669 = vpop.f32.mrb[0].mxu0
        %v5670 = vadd.f32 %v5477, %v5669
        %v5671 = vpop.f32.mrb[0].mxu0
        %v5672 = vadd.f32 %v5479, %v5671
        %v5673 = vpop.f32.mrb[0].mxu0
        %v5674 = vadd.f32 %v5481, %v5673
        %v5675 = vpop.f32.mrb[0].mxu0
        %v5676 = vadd.f32 %v5483, %v5675
        %5677 = vmatprep.mubr.bf16.mxu0 %v4589
        %5678 = vmatmul.mubr.bf16.gmra.mrb[0].mxu0 %v4588
        %v5679 = vpop.f32.mrb[0].mxu0
        %v5680 = vadd.f32 %v5487, %v5679
        %v5681 = vpop.f32.mrb[0].mxu0
        %v5682 = vadd.f32 %v5489, %v5681
        %v5683 = vpop.f32.mrb[0].mxu0
        %v5684 = vadd.f32 %v5491, %v5683
        %v5685 = vpop.f32.mrb[0].mxu0
        %v5686 = vadd.f32 %v5493, %v5685
        %5687 = vmatprep.mubr.bf16.mxu0 %v4593
        %5688 = vmatmul.mubr.bf16.gmra.mrb[0].mxu0 %v4592
        %v5689 = vpop.f32.mrb[0].mxu0
        %v5690 = vadd.f32 %v5497, %v5689
        %v5691 = vpop.f32.mrb[0].mxu0
        %v5692 = vadd.f32 %v5499, %v5691
        %v5693 = vpop.f32.mrb[0].mxu0
        %v5694 = vadd.f32 %v5501, %v5693
        %v5695 = vpop.f32.mrb[0].mxu0
        %v5696 = vadd.f32 %v5503, %v5695
        %5697 = vmatprep.mubr.bf16.mxu0 %v4597
        %5698 = vmatmul.mubr.bf16.gmra.mrb[0].mxu0 %v4596
        %v5699 = vpop.f32.mrb[0].mxu0
        %v5700 = vadd.f32 %v5507, %v5699
        %v5701 = vpop.f32.mrb[0].mxu0
        %v5702 = vadd.f32 %v5509, %v5701
        %v5703 = vpop.f32.mrb[0].mxu0
        %v5704 = vadd.f32 %v5511, %v5703
        %v5705 = vpop.f32.mrb[0].mxu0
        %v5706 = vadd.f32 %v5513, %v5705
        %5707 = vmatprep.mubr.bf16.mxu0 %v4601
        %5708 = vmatmul.mubr.bf16.gmra.mrb[0].mxu0 %v4600
        %v5709 = vpop.f32.mrb[0].mxu0
        %v5710 = vadd.f32 %v5517, %v5709
        %v5711 = vpop.f32.mrb[0].mxu0
        %v5712 = vadd.f32 %v5519, %v5711
        %v5713 = vpop.f32.mrb[0].mxu0
        %v5714 = vadd.f32 %v5521, %v5713
        %v5715 = vpop.f32.mrb[0].mxu0
        %v5716 = vadd.f32 %v5523, %v5715
        %5717 = vmatprep.mubr.bf16.mxu0 %v4605
        %5718 = vmatmul.mubr.bf16.gmra.mrb[0].mxu0 %v4604
        %v5719 = vpop.f32.mrb[0].mxu0
        %v5720 = vadd.f32 %v5527, %v5719
        %v5721 = vpop.f32.mrb[0].mxu0
        %v5722 = vadd.f32 %v5529, %v5721
        %v5723 = vpop.f32.mrb[0].mxu0
        %v5724 = vadd.f32 %v5531, %v5723
        %v5725 = vpop.f32.mrb[0].mxu0
        %v5726 = vadd.f32 %v5533, %v5725
        %5727 = vmatprep.mubr.bf16.mxu0 %v4609
        %5728 = vmatmul.mubr.bf16.gmra.mrb[0].mxu0 %v4608
        %v5729 = vpop.f32.mrb[0].mxu0
        %v5730 = vadd.f32 %v5537, %v5729
        %v5731 = vpop.f32.mrb[0].mxu0
        %v5732 = vadd.f32 %v5539, %v5731
        %v5733 = vpop.f32.mrb[0].mxu0
        %v5734 = vadd.f32 %v5541, %v5733
        %v5735 = vpop.f32.mrb[0].mxu0
        %v5736 = vadd.f32 %v5543, %v5735
        %5737 = vmatprep.mubr.bf16.mxu0 %v4613
        %5738 = vmatmul.mubr.bf16.gmra.mrb[0].mxu0 %v4612
        %v5739 = vpop.f32.mrb[0].mxu0
        %v5740 = vadd.f32 %v5547, %v5739
        %v5741 = vpop.f32.mrb[0].mxu0
        %v5742 = vadd.f32 %v5549, %v5741
        %v5743 = vpop.f32.mrb[0].mxu0
        %v5744 = vadd.f32 %v5551, %v5743
        %v5745 = vpop.f32.mrb[0].mxu0
        %v5746 = vadd.f32 %v5553, %v5745
        %5747 = vmatprep.mubr.bf16.mxu0 %v4617
        %5748 = vmatmul.mubr.bf16.gmra.mrb[0].mxu0 %v4616
        %v5749 = vpop.f32.mrb[0].mxu0
        %v5750 = vadd.f32 %v5557, %v5749
        %v5751 = vpop.f32.mrb[0].mxu0
        %v5752 = vadd.f32 %v5559, %v5751
        %v5753 = vpop.f32.mrb[0].mxu0
        %v5754 = vadd.f32 %v5561, %v5753
        %v5755 = vpop.f32.mrb[0].mxu0
        %v5756 = vadd.f32 %v5563, %v5755
        %5757 = vmatprep.mubr.bf16.mxu0 %v4621
        %5758 = vmatmul.mubr.bf16.gmra.mrb[0].mxu0 %v4620
        %v5759 = vpop.f32.mrb[0].mxu0
        %v5760 = vadd.f32 %v5567, %v5759
        %v5761 = vpop.f32.mrb[0].mxu0
        %v5762 = vadd.f32 %v5569, %v5761
        %v5763 = vpop.f32.mrb[0].mxu0
        %v5764 = vadd.f32 %v5571, %v5763
        %v5765 = vpop.f32.mrb[0].mxu0
        %v5766 = vadd.f32 %v5573, %v5765
        %5767 = vmatprep.mubr.bf16.mxu0 %v4625
        %5768 = vmatmul.mubr.bf16.gmra.mrb[0].mxu0 %v4624
        %v5769 = vpop.f32.mrb[0].mxu0
        %v5770 = vadd.f32 %v5577, %v5769
        %v5771 = vpop.f32.mrb[0].mxu0
        %v5772 = vadd.f32 %v5579, %v5771
        %v5773 = vpop.f32.mrb[0].mxu0
        %v5774 = vadd.f32 %v5581, %v5773
        %v5775 = vpop.f32.mrb[0].mxu0
        %v5776 = vadd.f32 %v5583, %v5775
        %5777 = vmatprep.mubr.bf16.mxu0 %v4629
        %5778 = vmatmul.mubr.bf16.gmra.mrb[0].mxu0 %v4628
        %v5779 = vpop.f32.mrb[0].mxu0
        %v5780 = vadd.f32 %v5587, %v5779
        %v5781 = vpop.f32.mrb[0].mxu0
        %v5782 = vadd.f32 %v5589, %v5781
        %v5783 = vpop.f32.mrb[0].mxu0
        %v5784 = vadd.f32 %v5591, %v5783
        %v5785 = vpop.f32.mrb[0].mxu0
        %v5786 = vadd.f32 %v5593, %v5785
        %5787 = vmatprep.mubr.bf16.mxu0 %v4633
        %5788 = vmatmul.mubr.bf16.gmra.mrb[0].mxu0 %v4632
        %v5789 = vpop.f32.mrb[0].mxu0
        %v5790 = vadd.f32 %v5597, %v5789
        %v5791 = vpop.f32.mrb[0].mxu0
        %v5792 = vadd.f32 %v5599, %v5791
        %v5793 = vpop.f32.mrb[0].mxu0
        %v5794 = vadd.f32 %v5601, %v5793
        %v5795 = vpop.f32.mrb[0].mxu0
        %v5796 = vadd.f32 %v5603, %v5795
        %5797 = vmatprep.mubr.bf16.mxu0 %v4637
        %5798 = vmatmul.mubr.bf16.gmra.mrb[0].mxu0 %v4636
        %v5799 = vpop.f32.mrb[0].mxu0
        %v5800 = vadd.f32 %v5607, %v5799
        %v5801 = vpop.f32.mrb[0].mxu0
        %v5802 = vadd.f32 %v5609, %v5801
        %v5803 = vpop.f32.mrb[0].mxu0
        %v5804 = vadd.f32 %v5611, %v5803
        %v5805 = vpop.f32.mrb[0].mxu0
        %v5806 = vadd.f32 %v5613, %v5805
        %5807 = vmatprep.mubr.bf16.mxu0 %v4641
        %5808 = vmatmul.mubr.bf16.gmra.mrb[0].mxu0 %v4640
        %v5809 = vpop.f32.mrb[0].mxu0
        %v5810 = vadd.f32 %v5617, %v5809
        %v5811 = vpop.f32.mrb[0].mxu0
        %v5812 = vadd.f32 %v5619, %v5811
        %v5813 = vpop.f32.mrb[0].mxu0
        %v5814 = vadd.f32 %v5621, %v5813
        %v5815 = vpop.f32.mrb[0].mxu0
        %v5816 = vadd.f32 %v5623, %v5815
        %5817 = vdwg.mxu0
        %5818 = vmatprep.subr.bf16.mxu0 %v5179
        %5819 = vmatpush1.bf16.msra.mxu0 %v5178
        %5820 = vmatprep.subr.bf16.mxu0 %v5183
        %5821 = vmatpush1.bf16.msra.mxu0 %v5182
        %5822 = vmatprep.subr.bf16.mxu0 %v5187
        %5823 = vmatpush1.bf16.msra.mxu0 %v5186
        %5824 = vmatprep.subr.bf16.mxu0 %v5191
        %5825 = vmatpush1.bf16.msra.mxu0 %v5190
        %5826 = vmatprep.subr.bf16.mxu0 %v5195
        %5827 = vmatpush1.bf16.msra.mxu0 %v5194
        %5828 = vmatprep.subr.bf16.mxu0 %v5199
        %5829 = vmatpush1.bf16.msra.mxu0 %v5198
        %5830 = vmatprep.subr.bf16.mxu0 %v5203
        %5831 = vmatpush1.bf16.msra.mxu0 %v5202
        %5832 = vmatprep.subr.bf16.mxu0 %v5207
        %5833 = vmatpush1.bf16.msra.mxu0 %v5206
        %5834 = vmatprep.subr.bf16.mxu0 %v5211
        %5835 = vmatpush1.bf16.msra.mxu0 %v5210
        %5836 = vmatprep.subr.bf16.mxu0 %v5215
        %5837 = vmatpush1.bf16.msra.mxu0 %v5214
        %5838 = vmatprep.subr.bf16.mxu0 %v5219
        %5839 = vmatpush1.bf16.msra.mxu0 %v5218
        %5840 = vmatprep.subr.bf16.mxu0 %v5223
        %5841 = vmatpush1.bf16.msra.mxu0 %v5222
        %5842 = vmatprep.subr.bf16.mxu0 %v5227
        %5843 = vmatpush1.bf16.msra.mxu0 %v5226
        %5844 = vmatprep.subr.bf16.mxu0 %v5231
        %5845 = vmatpush1.bf16.msra.mxu0 %v5230
        %5846 = vmatprep.subr.bf16.mxu0 %v5235
        %5847 = vmatpush1.bf16.msra.mxu0 %v5234
        %5848 = vmatprep.subr.bf16.mxu0 %v5239
        %5849 = vmatpush1.bf16.msra.mxu0 %v5238
        %5850 = vmatprep.mubr.bf16.mxu0 %v4579
        %5851 = vmatmul.mubr.bf16.gmra.mrb[0].mxu0 %v4578
        %v5852 = vpop.f32.mrb[0].mxu0
        %v5853 = vadd.f32 %v4783, %v5852
        %v5854 = vpop.f32.mrb[0].mxu0
        %v5855 = vadd.f32 %v4787, %v5854
        %v5856 = vpop.f32.mrb[0].mxu0
        %v5857 = vadd.f32 %v4783, %v5856
        %v5858 = vpop.f32.mrb[0].mxu0
        %v5859 = vadd.f32 %v4787, %v5858
        %5860 = vmatprep.mubr.bf16.mxu0 %v4583
        %5861 = vmatmul.mubr.bf16.gmra.mrb[0].mxu0 %v4582
        %v5862 = vpop.f32.mrb[0].mxu0
        %v5863 = vadd.f32 %v4783, %v5862
        %v5864 = vpop.f32.mrb[0].mxu0
        %v5865 = vadd.f32 %v4787, %v5864
        %v5866 = vpop.f32.mrb[0].mxu0
        %v5867 = vadd.f32 %v4783, %v5866
        %v5868 = vpop.f32.mrb[0].mxu0
        %v5869 = vadd.f32 %v4787, %v5868
        %5870 = vmatprep.mubr.bf16.mxu0 %v4587
        %5871 = vmatmul.mubr.bf16.gmra.mrb[0].mxu0 %v4586
        %v5872 = vpop.f32.mrb[0].mxu0
        %v5873 = vadd.f32 %v4783, %v5872
        %v5874 = vpop.f32.mrb[0].mxu0
        %v5875 = vadd.f32 %v4787, %v5874
        %v5876 = vpop.f32.mrb[0].mxu0
        %v5877 = vadd.f32 %v4783, %v5876
        %v5878 = vpop.f32.mrb[0].mxu0
        %v5879 = vadd.f32 %v4787, %v5878
        %5880 = vmatprep.mubr.bf16.mxu0 %v4591
        %5881 = vmatmul.mubr.bf16.gmra.mrb[0].mxu0 %v4590
        %v5882 = vpop.f32.mrb[0].mxu0
        %v5883 = vadd.f32 %v4783, %v5882
        %v5884 = vpop.f32.mrb[0].mxu0
        %v5885 = vadd.f32 %v4787, %v5884
        %v5886 = vpop.f32.mrb[0].mxu0
        %v5887 = vadd.f32 %v4783, %v5886
        %v5888 = vpop.f32.mrb[0].mxu0
        %v5889 = vadd.f32 %v4787, %v5888
        %5890 = vmatprep.mubr.bf16.mxu0 %v4595
        %5891 = vmatmul.mubr.bf16.gmra.mrb[0].mxu0 %v4594
        %v5892 = vpop.f32.mrb[0].mxu0
        %v5893 = vadd.f32 %v4783, %v5892
        %v5894 = vpop.f32.mrb[0].mxu0
        %v5895 = vadd.f32 %v4787, %v5894
        %v5896 = vpop.f32.mrb[0].mxu0
        %v5897 = vadd.f32 %v4783, %v5896
        %v5898 = vpop.f32.mrb[0].mxu0
        %v5899 = vadd.f32 %v4787, %v5898
        %5900 = vmatprep.mubr.bf16.mxu0 %v4599
        %5901 = vmatmul.mubr.bf16.gmra.mrb[0].mxu0 %v4598
        %v5902 = vpop.f32.mrb[0].mxu0
        %v5903 = vadd.f32 %v4783, %v5902
        %v5904 = vpop.f32.mrb[0].mxu0
        %v5905 = vadd.f32 %v4787, %v5904
        %v5906 = vpop.f32.mrb[0].mxu0
        %v5907 = vadd.f32 %v4783, %v5906
        %v5908 = vpop.f32.mrb[0].mxu0
        %v5909 = vadd.f32 %v4787, %v5908
        %5910 = vmatprep.mubr.bf16.mxu0 %v4603
        %5911 = vmatmul.mubr.bf16.gmra.mrb[0].mxu0 %v4602
        %v5912 = vpop.f32.mrb[0].mxu0
        %v5913 = vadd.f32 %v4783, %v5912
        %v5914 = vpop.f32.mrb[0].mxu0
        %v5915 = vadd.f32 %v4787, %v5914
        %v5916 = vpop.f32.mrb[0].mxu0
        %v5917 = vadd.f32 %v4783, %v5916
        %v5918 = vpop.f32.mrb[0].mxu0
        %v5919 = vadd.f32 %v4787, %v5918
        %5920 = vmatprep.mubr.bf16.mxu0 %v4607
        %5921 = vmatmul.mubr.bf16.gmra.mrb[0].mxu0 %v4606
        %v5922 = vpop.f32.mrb[0].mxu0
        %v5923 = vadd.f32 %v4783, %v5922
        %v5924 = vpop.f32.mrb[0].mxu0
        %v5925 = vadd.f32 %v4787, %v5924
        %v5926 = vpop.f32.mrb[0].mxu0
        %v5927 = vadd.f32 %v4783, %v5926
        %v5928 = vpop.f32.mrb[0].mxu0
        %v5929 = vadd.f32 %v4787, %v5928
        %5930 = vmatprep.mubr.bf16.mxu0 %v4611
        %5931 = vmatmul.mubr.bf16.gmra.mrb[0].mxu0 %v4610
        %v5932 = vpop.f32.mrb[0].mxu0
        %v5933 = vadd.f32 %v4783, %v5932
        %v5934 = vpop.f32.mrb[0].mxu0
        %v5935 = vadd.f32 %v4787, %v5934
        %v5936 = vpop.f32.mrb[0].mxu0
        %v5937 = vadd.f32 %v4783, %v5936
        %v5938 = vpop.f32.mrb[0].mxu0
        %v5939 = vadd.f32 %v4787, %v5938
        %5940 = vmatprep.mubr.bf16.mxu0 %v4615
        %5941 = vmatmul.mubr.bf16.gmra.mrb[0].mxu0 %v4614
        %v5942 = vpop.f32.mrb[0].mxu0
        %v5943 = vadd.f32 %v4783, %v5942
        %v5944 = vpop.f32.mrb[0].mxu0
        %v5945 = vadd.f32 %v4787, %v5944
        %v5946 = vpop.f32.mrb[0].mxu0
        %v5947 = vadd.f32 %v4783, %v5946
        %v5948 = vpop.f32.mrb[0].mxu0
        %v5949 = vadd.f32 %v4787, %v5948
        %5950 = vmatprep.mubr.bf16.mxu0 %v4619
        %5951 = vmatmul.mubr.bf16.gmra.mrb[0].mxu0 %v4618
        %v5952 = vpop.f32.mrb[0].mxu0
        %v5953 = vadd.f32 %v4783, %v5952
        %v5954 = vpop.f32.mrb[0].mxu0
        %v5955 = vadd.f32 %v4787, %v5954
        %v5956 = vpop.f32.mrb[0].mxu0
        %v5957 = vadd.f32 %v4783, %v5956
        %v5958 = vpop.f32.mrb[0].mxu0
        %v5959 = vadd.f32 %v4787, %v5958
        %5960 = vmatprep.mubr.bf16.mxu0 %v4623
        %5961 = vmatmul.mubr.bf16.gmra.mrb[0].mxu0 %v4622
        %v5962 = vpop.f32.mrb[0].mxu0
        %v5963 = vadd.f32 %v4783, %v5962
        %v5964 = vpop.f32.mrb[0].mxu0
        %v5965 = vadd.f32 %v4787, %v5964
        %v5966 = vpop.f32.mrb[0].mxu0
        %v5967 = vadd.f32 %v4783, %v5966
        %v5968 = vpop.f32.mrb[0].mxu0
        %v5969 = vadd.f32 %v4787, %v5968
        %5970 = vmatprep.mubr.bf16.mxu0 %v4627
        %5971 = vmatmul.mubr.bf16.gmra.mrb[0].mxu0 %v4626
        %v5972 = vpop.f32.mrb[0].mxu0
        %v5973 = vadd.f32 %v4783, %v5972
        %v5974 = vpop.f32.mrb[0].mxu0
        %v5975 = vadd.f32 %v4787, %v5974
        %v5976 = vpop.f32.mrb[0].mxu0
        %v5977 = vadd.f32 %v4783, %v5976
        %v5978 = vpop.f32.mrb[0].mxu0
        %v5979 = vadd.f32 %v4787, %v5978
        %5980 = vmatprep.mubr.bf16.mxu0 %v4631
        %5981 = vmatmul.mubr.bf16.gmra.mrb[0].mxu0 %v4630
        %v5982 = vpop.f32.mrb[0].mxu0
        %v5983 = vadd.f32 %v4783, %v5982
        %v5984 = vpop.f32.mrb[0].mxu0
        %v5985 = vadd.f32 %v4787, %v5984
        %v5986 = vpop.f32.mrb[0].mxu0
        %v5987 = vadd.f32 %v4783, %v5986
        %v5988 = vpop.f32.mrb[0].mxu0
        %v5989 = vadd.f32 %v4787, %v5988
        %5990 = vmatprep.mubr.bf16.mxu0 %v4635
        %5991 = vmatmul.mubr.bf16.gmra.mrb[0].mxu0 %v4634
        %v5992 = vpop.f32.mrb[0].mxu0
        %v5993 = vadd.f32 %v4783, %v5992
        %v5994 = vpop.f32.mrb[0].mxu0
        %v5995 = vadd.f32 %v4787, %v5994
        %v5996 = vpop.f32.mrb[0].mxu0
        %v5997 = vadd.f32 %v4783, %v5996
        %v5998 = vpop.f32.mrb[0].mxu0
        %v5999 = vadd.f32 %v4787, %v5998
        %6000 = vmatprep.mubr.bf16.mxu0 %v4639
        %6001 = vmatmul.mubr.bf16.gmra.mrb[0].mxu0 %v4638
        %v6002 = vpop.f32.mrb[0].mxu0
        %v6003 = vadd.f32 %v4783, %v6002
        %v6004 = vpop.f32.mrb[0].mxu0
        %v6005 = vadd.f32 %v4787, %v6004
        %v6006 = vpop.f32.mrb[0].mxu0
        %v6007 = vadd.f32 %v4783, %v6006
        %v6008 = vpop.f32.mrb[0].mxu0
        %v6009 = vadd.f32 %v4787, %v6008
        %6010 = vdwg.mxu0
        %6011 = vmatprep.subr.bf16.mxu0 %v5243
        %6012 = vmatpush1.bf16.msra.mxu0 %v5242
        %6013 = vmatprep.subr.bf16.mxu0 %v5247
        %6014 = vmatpush1.bf16.msra.mxu0 %v5246
        %6015 = vmatprep.subr.bf16.mxu0 %v5251
        %6016 = vmatpush1.bf16.msra.mxu0 %v5250
        %6017 = vmatprep.subr.bf16.mxu0 %v5255
        %6018 = vmatpush1.bf16.msra.mxu0 %v5254
        %6019 = vmatprep.subr.bf16.mxu0 %v5259
        %6020 = vmatpush1.bf16.msra.mxu0 %v5258
        %6021 = vmatprep.subr.bf16.mxu0 %v5263
        %6022 = vmatpush1.bf16.msra.mxu0 %v5262
        %6023 = vmatprep.subr.bf16.mxu0 %v5267
        %6024 = vmatpush1.bf16.msra.mxu0 %v5266
        %6025 = vmatprep.subr.bf16.mxu0 %v5271
        %6026 = vmatpush1.bf16.msra.mxu0 %v5270
        %6027 = vmatprep.subr.bf16.mxu0 %v5275
        %6028 = vmatpush1.bf16.msra.mxu0 %v5274
        %6029 = vmatprep.subr.bf16.mxu0 %v5279
        %6030 = vmatpush1.bf16.msra.mxu0 %v5278
        %6031 = vmatprep.subr.bf16.mxu0 %v5283
        %6032 = vmatpush1.bf16.msra.mxu0 %v5282
        %6033 = vmatprep.subr.bf16.mxu0 %v5287
        %6034 = vmatpush1.bf16.msra.mxu0 %v5286
        %6035 = vmatprep.subr.bf16.mxu0 %v5291
        %6036 = vmatpush1.bf16.msra.mxu0 %v5290
        %6037 = vmatprep.subr.bf16.mxu0 %v5295
        %6038 = vmatpush1.bf16.msra.mxu0 %v5294
        %6039 = vmatprep.subr.bf16.mxu0 %v5299
        %6040 = vmatpush1.bf16.msra.mxu0 %v5298
        %6041 = vmatprep.subr.bf16.mxu0 %v5303
        %6042 = vmatpush1.bf16.msra.mxu0 %v5302
        %6043 = vmatprep.mubr.bf16.mxu0 %v4581
        %6044 = vmatmul.mubr.bf16.gmra.mrb[0].mxu0 %v4580
        %v6045 = vpop.f32.mrb[0].mxu0
        %v6046 = vadd.f32 %v5853, %v6045
        %v6047 = vpop.f32.mrb[0].mxu0
        %v6048 = vadd.f32 %v5855, %v6047
        %v6049 = vpop.f32.mrb[0].mxu0
        %v6050 = vadd.f32 %v5857, %v6049
        %v6051 = vpop.f32.mrb[0].mxu0
        %v6052 = vadd.f32 %v5859, %v6051
        %6053 = vmatprep.mubr.bf16.mxu0 %v4585
        %6054 = vmatmul.mubr.bf16.gmra.mrb[0].mxu0 %v4584
        %v6055 = vpop.f32.mrb[0].mxu0
        %v6056 = vadd.f32 %v5863, %v6055
        %v6057 = vpop.f32.mrb[0].mxu0
        %v6058 = vadd.f32 %v5865, %v6057
        %v6059 = vpop.f32.mrb[0].mxu0
        %v6060 = vadd.f32 %v5867, %v6059
        %v6061 = vpop.f32.mrb[0].mxu0
        %v6062 = vadd.f32 %v5869, %v6061
        %6063 = vmatprep.mubr.bf16.mxu0 %v4589
        %6064 = vmatmul.mubr.bf16.gmra.mrb[0].mxu0 %v4588
        %v6065 = vpop.f32.mrb[0].mxu0
        %v6066 = vadd.f32 %v5873, %v6065
        %v6067 = vpop.f32.mrb[0].mxu0
        %v6068 = vadd.f32 %v5875, %v6067
        %v6069 = vpop.f32.mrb[0].mxu0
        %v6070 = vadd.f32 %v5877, %v6069
        %v6071 = vpop.f32.mrb[0].mxu0
        %v6072 = vadd.f32 %v5879, %v6071
        %6073 = vmatprep.mubr.bf16.mxu0 %v4593
        %6074 = vmatmul.mubr.bf16.gmra.mrb[0].mxu0 %v4592
        %v6075 = vpop.f32.mrb[0].mxu0
        %v6076 = vadd.f32 %v5883, %v6075
        %v6077 = vpop.f32.mrb[0].mxu0
        %v6078 = vadd.f32 %v5885, %v6077
        %v6079 = vpop.f32.mrb[0].mxu0
        %v6080 = vadd.f32 %v5887, %v6079
        %v6081 = vpop.f32.mrb[0].mxu0
        %v6082 = vadd.f32 %v5889, %v6081
        %6083 = vmatprep.mubr.bf16.mxu0 %v4597
        %6084 = vmatmul.mubr.bf16.gmra.mrb[0].mxu0 %v4596
        %v6085 = vpop.f32.mrb[0].mxu0
        %v6086 = vadd.f32 %v5893, %v6085
        %v6087 = vpop.f32.mrb[0].mxu0
        %v6088 = vadd.f32 %v5895, %v6087
        %v6089 = vpop.f32.mrb[0].mxu0
        %v6090 = vadd.f32 %v5897, %v6089
        %v6091 = vpop.f32.mrb[0].mxu0
        %v6092 = vadd.f32 %v5899, %v6091
        %6093 = vmatprep.mubr.bf16.mxu0 %v4601
        %6094 = vmatmul.mubr.bf16.gmra.mrb[0].mxu0 %v4600
        %v6095 = vpop.f32.mrb[0].mxu0
        %v6096 = vadd.f32 %v5903, %v6095
        %v6097 = vpop.f32.mrb[0].mxu0
        %v6098 = vadd.f32 %v5905, %v6097
        %v6099 = vpop.f32.mrb[0].mxu0
        %v6100 = vadd.f32 %v5907, %v6099
        %v6101 = vpop.f32.mrb[0].mxu0
        %v6102 = vadd.f32 %v5909, %v6101
        %6103 = vmatprep.mubr.bf16.mxu0 %v4605
        %6104 = vmatmul.mubr.bf16.gmra.mrb[0].mxu0 %v4604
        %v6105 = vpop.f32.mrb[0].mxu0
        %v6106 = vadd.f32 %v5913, %v6105
        %v6107 = vpop.f32.mrb[0].mxu0
        %v6108 = vadd.f32 %v5915, %v6107
        %v6109 = vpop.f32.mrb[0].mxu0
        %v6110 = vadd.f32 %v5917, %v6109
        %v6111 = vpop.f32.mrb[0].mxu0
        %v6112 = vadd.f32 %v5919, %v6111
        %6113 = vmatprep.mubr.bf16.mxu0 %v4609
        %6114 = vmatmul.mubr.bf16.gmra.mrb[0].mxu0 %v4608
        %v6115 = vpop.f32.mrb[0].mxu0
        %v6116 = vadd.f32 %v5923, %v6115
        %v6117 = vpop.f32.mrb[0].mxu0
        %v6118 = vadd.f32 %v5925, %v6117
        %v6119 = vpop.f32.mrb[0].mxu0
        %v6120 = vadd.f32 %v5927, %v6119
        %v6121 = vpop.f32.mrb[0].mxu0
        %v6122 = vadd.f32 %v5929, %v6121
        %6123 = vmatprep.mubr.bf16.mxu0 %v4613
        %6124 = vmatmul.mubr.bf16.gmra.mrb[0].mxu0 %v4612
        %v6125 = vpop.f32.mrb[0].mxu0
        %v6126 = vadd.f32 %v5933, %v6125
        %v6127 = vpop.f32.mrb[0].mxu0
        %v6128 = vadd.f32 %v5935, %v6127
        %v6129 = vpop.f32.mrb[0].mxu0
        %v6130 = vadd.f32 %v5937, %v6129
        %v6131 = vpop.f32.mrb[0].mxu0
        %v6132 = vadd.f32 %v5939, %v6131
        %6133 = vmatprep.mubr.bf16.mxu0 %v4617
        %6134 = vmatmul.mubr.bf16.gmra.mrb[0].mxu0 %v4616
        %v6135 = vpop.f32.mrb[0].mxu0
        %v6136 = vadd.f32 %v5943, %v6135
        %v6137 = vpop.f32.mrb[0].mxu0
        %v6138 = vadd.f32 %v5945, %v6137
        %v6139 = vpop.f32.mrb[0].mxu0
        %v6140 = vadd.f32 %v5947, %v6139
        %v6141 = vpop.f32.mrb[0].mxu0
        %v6142 = vadd.f32 %v5949, %v6141
        %6143 = vmatprep.mubr.bf16.mxu0 %v4621
        %6144 = vmatmul.mubr.bf16.gmra.mrb[0].mxu0 %v4620
        %v6145 = vpop.f32.mrb[0].mxu0
        %v6146 = vadd.f32 %v5953, %v6145
        %v6147 = vpop.f32.mrb[0].mxu0
        %v6148 = vadd.f32 %v5955, %v6147
        %v6149 = vpop.f32.mrb[0].mxu0
        %v6150 = vadd.f32 %v5957, %v6149
        %v6151 = vpop.f32.mrb[0].mxu0
        %v6152 = vadd.f32 %v5959, %v6151
        %6153 = vmatprep.mubr.bf16.mxu0 %v4625
        %6154 = vmatmul.mubr.bf16.gmra.mrb[0].mxu0 %v4624
        %v6155 = vpop.f32.mrb[0].mxu0
        %v6156 = vadd.f32 %v5963, %v6155
        %v6157 = vpop.f32.mrb[0].mxu0
        %v6158 = vadd.f32 %v5965, %v6157
        %v6159 = vpop.f32.mrb[0].mxu0
        %v6160 = vadd.f32 %v5967, %v6159
        %v6161 = vpop.f32.mrb[0].mxu0
        %v6162 = vadd.f32 %v5969, %v6161
        %6163 = vmatprep.mubr.bf16.mxu0 %v4629
        %6164 = vmatmul.mubr.bf16.gmra.mrb[0].mxu0 %v4628
        %v6165 = vpop.f32.mrb[0].mxu0
        %v6166 = vadd.f32 %v5973, %v6165
        %v6167 = vpop.f32.mrb[0].mxu0
        %v6168 = vadd.f32 %v5975, %v6167
        %v6169 = vpop.f32.mrb[0].mxu0
        %v6170 = vadd.f32 %v5977, %v6169
        %v6171 = vpop.f32.mrb[0].mxu0
        %v6172 = vadd.f32 %v5979, %v6171
        %6173 = vmatprep.mubr.bf16.mxu0 %v4633
        %6174 = vmatmul.mubr.bf16.gmra.mrb[0].mxu0 %v4632
        %v6175 = vpop.f32.mrb[0].mxu0
        %v6176 = vadd.f32 %v5983, %v6175
        %v6177 = vpop.f32.mrb[0].mxu0
        %v6178 = vadd.f32 %v5985, %v6177
        %v6179 = vpop.f32.mrb[0].mxu0
        %v6180 = vadd.f32 %v5987, %v6179
        %v6181 = vpop.f32.mrb[0].mxu0
        %v6182 = vadd.f32 %v5989, %v6181
        %6183 = vmatprep.mubr.bf16.mxu0 %v4637
        %6184 = vmatmul.mubr.bf16.gmra.mrb[0].mxu0 %v4636
        %v6185 = vpop.f32.mrb[0].mxu0
        %v6186 = vadd.f32 %v5993, %v6185
        %v6187 = vpop.f32.mrb[0].mxu0
        %v6188 = vadd.f32 %v5995, %v6187
        %v6189 = vpop.f32.mrb[0].mxu0
        %v6190 = vadd.f32 %v5997, %v6189
        %v6191 = vpop.f32.mrb[0].mxu0
        %v6192 = vadd.f32 %v5999, %v6191
        %6193 = vmatprep.mubr.bf16.mxu0 %v4641
        %6194 = vmatmul.mubr.bf16.gmra.mrb[0].mxu0 %v4640
        %v6195 = vpop.f32.mrb[0].mxu0
        %v6196 = vadd.f32 %v6003, %v6195
        %v6197 = vpop.f32.mrb[0].mxu0
        %v6198 = vadd.f32 %v6005, %v6197
        %v6199 = vpop.f32.mrb[0].mxu0
        %v6200 = vadd.f32 %v6007, %v6199
        %v6201 = vpop.f32.mrb[0].mxu0
        %v6202 = vadd.f32 %v6009, %v6201
        %6203 = vdwg.mxu0
        %v6204 = vmax.f32 %v5660, 0.0
        %v6205 = vmax.f32 %v5662, 0.0
        %v6206 = vmax.f32 %v6046, 0.0
        %v6207 = vmax.f32 %v6048, 0.0
        %v6208 = vmax.f32 %v5664, 0.0
        %v6209 = vmax.f32 %v5666, 0.0
        %v6210 = vmax.f32 %v6050, 0.0
        %v6211 = vmax.f32 %v6052, 0.0
        %v6212 = vmax.f32 %v5670, 0.0
        %v6213 = vmax.f32 %v5672, 0.0
        %v6214 = vmax.f32 %v6056, 0.0
        %v6215 = vmax.f32 %v6058, 0.0
        %v6216 = vmax.f32 %v5674, 0.0
        %v6217 = vmax.f32 %v5676, 0.0
        %v6218 = vmax.f32 %v6060, 0.0
        %v6219 = vmax.f32 %v6062, 0.0
        %v6220 = vmax.f32 %v5680, 0.0
        %v6221 = vmax.f32 %v5682, 0.0
        %v6222 = vmax.f32 %v6066, 0.0
        %v6223 = vmax.f32 %v6068, 0.0
        %v6224 = vmax.f32 %v5684, 0.0
        %v6225 = vmax.f32 %v5686, 0.0
        %v6226 = vmax.f32 %v6070, 0.0
        %v6227 = vmax.f32 %v6072, 0.0
        %v6228 = vmax.f32 %v5690, 0.0
        %v6229 = vmax.f32 %v5692, 0.0
        %v6230 = vmax.f32 %v6076, 0.0
        %v6231 = vmax.f32 %v6078, 0.0
        %v6232 = vmax.f32 %v5694, 0.0
        %v6233 = vmax.f32 %v5696, 0.0
        %v6234 = vmax.f32 %v6080, 0.0
        %v6235 = vmax.f32 %v6082, 0.0
        %v6236 = vmax.f32 %v5700, 0.0
        %v6237 = vmax.f32 %v5702, 0.0
        %v6238 = vmax.f32 %v6086, 0.0
        %v6239 = vmax.f32 %v6088, 0.0
        %v6240 = vmax.f32 %v5704, 0.0
        %v6241 = vmax.f32 %v5706, 0.0
        %v6242 = vmax.f32 %v6090, 0.0
        %v6243 = vmax.f32 %v6092, 0.0
        %v6244 = vmax.f32 %v5710, 0.0
        %v6245 = vmax.f32 %v5712, 0.0
        %v6246 = vmax.f32 %v6096, 0.0
        %v6247 = vmax.f32 %v6098, 0.0
        %v6248 = vmax.f32 %v5714, 0.0
        %v6249 = vmax.f32 %v5716, 0.0
        %v6250 = vmax.f32 %v6100, 0.0
        %v6251 = vmax.f32 %v6102, 0.0
        %v6252 = vmax.f32 %v5720, 0.0
        %v6253 = vmax.f32 %v5722, 0.0
        %v6254 = vmax.f32 %v6106, 0.0
        %v6255 = vmax.f32 %v6108, 0.0
        %v6256 = vmax.f32 %v5724, 0.0
        %v6257 = vmax.f32 %v5726, 0.0
        %v6258 = vmax.f32 %v6110, 0.0
        %v6259 = vmax.f32 %v6112, 0.0
        %v6260 = vmax.f32 %v5730, 0.0
        %v6261 = vmax.f32 %v5732, 0.0
        %v6262 = vmax.f32 %v6116, 0.0
        %v6263 = vmax.f32 %v6118, 0.0
        %v6264 = vmax.f32 %v5734, 0.0
        %v6265 = vmax.f32 %v5736, 0.0
        %v6266 = vmax.f32 %v6120, 0.0
        %v6267 = vmax.f32 %v6122, 0.0
        %v6268 = vmax.f32 %v5740, 0.0
        %v6269 = vmax.f32 %v5742, 0.0
        %v6270 = vmax.f32 %v6126, 0.0
        %v6271 = vmax.f32 %v6128, 0.0
        %v6272 = vmax.f32 %v5744, 0.0
        %v6273 = vmax.f32 %v5746, 0.0
        %v6274 = vmax.f32 %v6130, 0.0
        %v6275 = vmax.f32 %v6132, 0.0
        %v6276 = vmax.f32 %v5750, 0.0
        %v6277 = vmax.f32 %v5752, 0.0
        %v6278 = vmax.f32 %v6136, 0.0
        %v6279 = vmax.f32 %v6138, 0.0
        %v6280 = vmax.f32 %v5754, 0.0
        %v6281 = vmax.f32 %v5756, 0.0
        %v6282 = vmax.f32 %v6140, 0.0
        %v6283 = vmax.f32 %v6142, 0.0
        %v6284 = vmax.f32 %v5760, 0.0
        %v6285 = vmax.f32 %v5762, 0.0
        %v6286 = vmax.f32 %v6146, 0.0
        %v6287 = vmax.f32 %v6148, 0.0
        %v6288 = vmax.f32 %v5764, 0.0
        %v6289 = vmax.f32 %v5766, 0.0
        %v6290 = vmax.f32 %v6150, 0.0
        %v6291 = vmax.f32 %v6152, 0.0
        %v6292 = vmax.f32 %v5770, 0.0
        %v6293 = vmax.f32 %v5772, 0.0
        %v6294 = vmax.f32 %v6156, 0.0
        %v6295 = vmax.f32 %v6158, 0.0
        %v6296 = vmax.f32 %v5774, 0.0
        %v6297 = vmax.f32 %v5776, 0.0
        %v6298 = vmax.f32 %v6160, 0.0
        %v6299 = vmax.f32 %v6162, 0.0
        %v6300 = vmax.f32 %v5780, 0.0
        %v6301 = vmax.f32 %v5782, 0.0
        %v6302 = vmax.f32 %v6166, 0.0
        %v6303 = vmax.f32 %v6168, 0.0
        %v6304 = vmax.f32 %v5784, 0.0
        %v6305 = vmax.f32 %v5786, 0.0
        %v6306 = vmax.f32 %v6170, 0.0
        %v6307 = vmax.f32 %v6172, 0.0
        %v6308 = vmax.f32 %v5790, 0.0
        %v6309 = vmax.f32 %v5792, 0.0
        %v6310 = vmax.f32 %v6176, 0.0
        %v6311 = vmax.f32 %v6178, 0.0
        %v6312 = vmax.f32 %v5794, 0.0
        %v6313 = vmax.f32 %v5796, 0.0
        %v6314 = vmax.f32 %v6180, 0.0
        %v6315 = vmax.f32 %v6182, 0.0
        %v6316 = vmax.f32 %v5800, 0.0
        %v6317 = vmax.f32 %v5802, 0.0
        %v6318 = vmax.f32 %v6186, 0.0
        %v6319 = vmax.f32 %v6188, 0.0
        %v6320 = vmax.f32 %v5804, 0.0
        %v6321 = vmax.f32 %v5806, 0.0
        %v6322 = vmax.f32 %v6190, 0.0
        %v6323 = vmax.f32 %v6192, 0.0
        %v6324 = vmax.f32 %v5810, 0.0
        %v6325 = vmax.f32 %v5812, 0.0
        %v6326 = vmax.f32 %v6196, 0.0
        %v6327 = vmax.f32 %v6198, 0.0
        %v6328 = vmax.f32 %v5814, 0.0
        %v6329 = vmax.f32 %v5816, 0.0
        %v6330 = vmax.f32 %v6200, 0.0
        %v6331 = vmax.f32 %v6202, 0.0
        %v6332 = vpack.c.bf16 %v6208, %v6204
        %v6333 = vpack.c.bf16 %v6209, %v6205
        %v6334 = vpack.c.bf16 %v6210, %v6206
        %v6335 = vpack.c.bf16 %v6211, %v6207
        %v6336 = vpack.c.bf16 %v6216, %v6212
        %v6337 = vpack.c.bf16 %v6217, %v6213
        %v6338 = vpack.c.bf16 %v6218, %v6214
        %v6339 = vpack.c.bf16 %v6219, %v6215
        %v6340 = vpack.c.bf16 %v6224, %v6220
        %v6341 = vpack.c.bf16 %v6225, %v6221
        %v6342 = vpack.c.bf16 %v6226, %v6222
        %v6343 = vpack.c.bf16 %v6227, %v6223
        %v6344 = vpack.c.bf16 %v6232, %v6228
        %v6345 = vpack.c.bf16 %v6233, %v6229
        %v6346 = vpack.c.bf16 %v6234, %v6230
        %v6347 = vpack.c.bf16 %v6235, %v6231
        %v6348 = vpack.c.bf16 %v6240, %v6236
        %v6349 = vpack.c.bf16 %v6241, %v6237
        %v6350 = vpack.c.bf16 %v6242, %v6238
        %v6351 = vpack.c.bf16 %v6243, %v6239
        %v6352 = vpack.c.bf16 %v6248, %v6244
        %v6353 = vpack.c.bf16 %v6249, %v6245
        %v6354 = vpack.c.bf16 %v6250, %v6246
        %v6355 = vpack.c.bf16 %v6251, %v6247
        %v6356 = vpack.c.bf16 %v6256, %v6252
        %v6357 = vpack.c.bf16 %v6257, %v6253
        %v6358 = vpack.c.bf16 %v6258, %v6254
        %v6359 = vpack.c.bf16 %v6259, %v6255
        %v6360 = vpack.c.bf16 %v6264, %v6260
        %v6361 = vpack.c.bf16 %v6265, %v6261
        %v6362 = vpack.c.bf16 %v6266, %v6262
        %v6363 = vpack.c.bf16 %v6267, %v6263
        %v6364 = vpack.c.bf16 %v6272, %v6268
        %v6365 = vpack.c.bf16 %v6273, %v6269
        %v6366 = vpack.c.bf16 %v6274, %v6270
        %v6367 = vpack.c.bf16 %v6275, %v6271
        %v6368 = vpack.c.bf16 %v6280, %v6276
        %v6369 = vpack.c.bf16 %v6281, %v6277
        %v6370 = vpack.c.bf16 %v6282, %v6278
        %v6371 = vpack.c.bf16 %v6283, %v6279
        %v6372 = vpack.c.bf16 %v6288, %v6284
        %v6373 = vpack.c.bf16 %v6289, %v6285
        %v6374 = vpack.c.bf16 %v6290, %v6286
        %v6375 = vpack.c.bf16 %v6291, %v6287
        %v6376 = vpack.c.bf16 %v6296, %v6292
        %v6377 = vpack.c.bf16 %v6297, %v6293
        %v6378 = vpack.c.bf16 %v6298, %v6294
        %v6379 = vpack.c.bf16 %v6299, %v6295
        %v6380 = vpack.c.bf16 %v6304, %v6300
        %v6381 = vpack.c.bf16 %v6305, %v6301
        %v6382 = vpack.c.bf16 %v6306, %v6302
        %v6383 = vpack.c.bf16 %v6307, %v6303
        %v6384 = vpack.c.bf16 %v6312, %v6308
        %v6385 = vpack.c.bf16 %v6313, %v6309
        %v6386 = vpack.c.bf16 %v6314, %v6310
        %v6387 = vpack.c.bf16 %v6315, %v6311
        %v6388 = vpack.c.bf16 %v6320, %v6316
        %v6389 = vpack.c.bf16 %v6321, %v6317
        %v6390 = vpack.c.bf16 %v6322, %v6318
        %v6391 = vpack.c.bf16 %v6323, %v6319
        %v6392 = vpack.c.bf16 %v6328, %v6324
        %v6393 = vpack.c.bf16 %v6329, %v6325
        %v6394 = vpack.c.bf16 %v6330, %v6326
        %v6395 = vpack.c.bf16 %v6331, %v6327
        %v6396 = vld [vmem:[#allocation15] sm:$0xff]
        %v6397 = vld [vmem:[#allocation15 + $0x8] sm:$0xff]
        %v6398 = vld [vmem:[#allocation15 + $0x10] sm:$0xff]
        %v6399 = vld [vmem:[#allocation15 + $0x18] sm:$0xff]
        %v6400 = vld [vmem:[#allocation15 + $0x20] sm:$0xff]
        %v6401 = vld [vmem:[#allocation15 + $0x28] sm:$0xff]
        %v6402 = vld [vmem:[#allocation15 + $0x30] sm:$0xff]
        %v6403 = vld [vmem:[#allocation15 + $0x38] sm:$0xff]
        %v6404 = vld [vmem:[#allocation15 + $0x40] sm:$0xff]
        %v6405 = vld [vmem:[#allocation15 + $0x48] sm:$0xff]
        %v6406 = vld [vmem:[#allocation15 + $0x50] sm:$0xff]
        %v6407 = vld [vmem:[#allocation15 + $0x58] sm:$0xff]
        %v6408 = vld [vmem:[#allocation15 + $0x60] sm:$0xff]
        %v6409 = vld [vmem:[#allocation15 + $0x68] sm:$0xff]
        %v6410 = vld [vmem:[#allocation15 + $0x70] sm:$0xff]
        %v6411 = vld [vmem:[#allocation15 + $0x78] sm:$0xff]
        %v6412 = vld [vmem:[#allocation15 + $0x80] sm:$0xff]
        %v6413 = vld [vmem:[#allocation15 + $0x88] sm:$0xff]
        %v6414 = vld [vmem:[#allocation15 + $0x90] sm:$0xff]
        %v6415 = vld [vmem:[#allocation15 + $0x98] sm:$0xff]
        %v6416 = vld [vmem:[#allocation15 + $0xa0] sm:$0xff]
        %v6417 = vld [vmem:[#allocation15 + $0xa8] sm:$0xff]
        %v6418 = vld [vmem:[#allocation15 + $0xb0] sm:$0xff]
        %v6419 = vld [vmem:[#allocation15 + $0xb8] sm:$0xff]
        %v6420 = vld [vmem:[#allocation15 + $0xc0] sm:$0xff]
        %v6421 = vld [vmem:[#allocation15 + $0xc8] sm:$0xff]
        %v6422 = vld [vmem:[#allocation15 + $0xd0] sm:$0xff]
        %v6423 = vld [vmem:[#allocation15 + $0xd8] sm:$0xff]
        %v6424 = vld [vmem:[#allocation15 + $0xe0] sm:$0xff]
        %v6425 = vld [vmem:[#allocation15 + $0xe8] sm:$0xff]
        %v6426 = vld [vmem:[#allocation15 + $0xf0] sm:$0xff]
        %v6427 = vld [vmem:[#allocation15 + $0xf8] sm:$0xff]
        %v6428 = vld [vmem:[#allocation15 + $0x100] sm:$0xff]
        %v6429 = vld [vmem:[#allocation15 + $0x108] sm:$0xff]
        %v6430 = vld [vmem:[#allocation15 + $0x110] sm:$0xff]
        %v6431 = vld [vmem:[#allocation15 + $0x118] sm:$0xff]
        %v6432 = vld [vmem:[#allocation15 + $0x120] sm:$0xff]
        %v6433 = vld [vmem:[#allocation15 + $0x128] sm:$0xff]
        %v6434 = vld [vmem:[#allocation15 + $0x130] sm:$0xff]
        %v6435 = vld [vmem:[#allocation15 + $0x138] sm:$0xff]
        %v6436 = vld [vmem:[#allocation15 + $0x140] sm:$0xff]
        %v6437 = vld [vmem:[#allocation15 + $0x148] sm:$0xff]
        %v6438 = vld [vmem:[#allocation15 + $0x150] sm:$0xff]
        %v6439 = vld [vmem:[#allocation15 + $0x158] sm:$0xff]
        %v6440 = vld [vmem:[#allocation15 + $0x160] sm:$0xff]
        %v6441 = vld [vmem:[#allocation15 + $0x168] sm:$0xff]
        %v6442 = vld [vmem:[#allocation15 + $0x170] sm:$0xff]
        %v6443 = vld [vmem:[#allocation15 + $0x178] sm:$0xff]
        %v6444 = vld [vmem:[#allocation15 + $0x180] sm:$0xff]
        %v6445 = vld [vmem:[#allocation15 + $0x188] sm:$0xff]
        %v6446 = vld [vmem:[#allocation15 + $0x190] sm:$0xff]
        %v6447 = vld [vmem:[#allocation15 + $0x198] sm:$0xff]
        %v6448 = vld [vmem:[#allocation15 + $0x1a0] sm:$0xff]
        %v6449 = vld [vmem:[#allocation15 + $0x1a8] sm:$0xff]
        %v6450 = vld [vmem:[#allocation15 + $0x1b0] sm:$0xff]
        %v6451 = vld [vmem:[#allocation15 + $0x1b8] sm:$0xff]
        %v6452 = vld [vmem:[#allocation15 + $0x1c0] sm:$0xff]
        %v6453 = vld [vmem:[#allocation15 + $0x1c8] sm:$0xff]
        %v6454 = vld [vmem:[#allocation15 + $0x1d0] sm:$0xff]
        %v6455 = vld [vmem:[#allocation15 + $0x1d8] sm:$0xff]
        %v6456 = vld [vmem:[#allocation15 + $0x1e0] sm:$0xff]
        %v6457 = vld [vmem:[#allocation15 + $0x1e8] sm:$0xff]
        %v6458 = vld [vmem:[#allocation15 + $0x1f0] sm:$0xff]
        %v6459 = vld [vmem:[#allocation15 + $0x1f8] sm:$0xff]
        %v6460 = vld [vmem:[#allocation15 + $0x200] sm:$0xff]
        %v6461 = vld [vmem:[#allocation15 + $0x208] sm:$0xff]
        %v6462 = vld [vmem:[#allocation15 + $0x210] sm:$0xff]
        %v6463 = vld [vmem:[#allocation15 + $0x218] sm:$0xff]
        %v6464 = vld [vmem:[#allocation15 + $0x220] sm:$0xff]
        %v6465 = vld [vmem:[#allocation15 + $0x228] sm:$0xff]
        %v6466 = vld [vmem:[#allocation15 + $0x230] sm:$0xff]
        %v6467 = vld [vmem:[#allocation15 + $0x238] sm:$0xff]
        %v6468 = vld [vmem:[#allocation15 + $0x240] sm:$0xff]
        %v6469 = vld [vmem:[#allocation15 + $0x248] sm:$0xff]
        %v6470 = vld [vmem:[#allocation15 + $0x250] sm:$0xff]
        %v6471 = vld [vmem:[#allocation15 + $0x258] sm:$0xff]
        %v6472 = vld [vmem:[#allocation15 + $0x260] sm:$0xff]
        %v6473 = vld [vmem:[#allocation15 + $0x268] sm:$0xff]
        %v6474 = vld [vmem:[#allocation15 + $0x270] sm:$0xff]
        %v6475 = vld [vmem:[#allocation15 + $0x278] sm:$0xff]
        %v6476 = vld [vmem:[#allocation15 + $0x280] sm:$0xff]
        %v6477 = vld [vmem:[#allocation15 + $0x288] sm:$0xff]
        %v6478 = vld [vmem:[#allocation15 + $0x290] sm:$0xff]
        %v6479 = vld [vmem:[#allocation15 + $0x298] sm:$0xff]
        %v6480 = vld [vmem:[#allocation15 + $0x2a0] sm:$0xff]
        %v6481 = vld [vmem:[#allocation15 + $0x2a8] sm:$0xff]
        %v6482 = vld [vmem:[#allocation15 + $0x2b0] sm:$0xff]
        %v6483 = vld [vmem:[#allocation15 + $0x2b8] sm:$0xff]
        %v6484 = vld [vmem:[#allocation15 + $0x2c0] sm:$0xff]
        %v6485 = vld [vmem:[#allocation15 + $0x2c8] sm:$0xff]
        %v6486 = vld [vmem:[#allocation15 + $0x2d0] sm:$0xff]
        %v6487 = vld [vmem:[#allocation15 + $0x2d8] sm:$0xff]
        %v6488 = vld [vmem:[#allocation15 + $0x2e0] sm:$0xff]
        %v6489 = vld [vmem:[#allocation15 + $0x2e8] sm:$0xff]
        %v6490 = vld [vmem:[#allocation15 + $0x2f0] sm:$0xff]
        %v6491 = vld [vmem:[#allocation15 + $0x2f8] sm:$0xff]
        %v6492 = vld [vmem:[#allocation15 + $0x300] sm:$0xff]
        %v6493 = vld [vmem:[#allocation15 + $0x308] sm:$0xff]
        %v6494 = vld [vmem:[#allocation15 + $0x310] sm:$0xff]
        %v6495 = vld [vmem:[#allocation15 + $0x318] sm:$0xff]
        %v6496 = vld [vmem:[#allocation15 + $0x320] sm:$0xff]
        %v6497 = vld [vmem:[#allocation15 + $0x328] sm:$0xff]
        %v6498 = vld [vmem:[#allocation15 + $0x330] sm:$0xff]
        %v6499 = vld [vmem:[#allocation15 + $0x338] sm:$0xff]
        %v6500 = vld [vmem:[#allocation15 + $0x340] sm:$0xff]
        %v6501 = vld [vmem:[#allocation15 + $0x348] sm:$0xff]
        %v6502 = vld [vmem:[#allocation15 + $0x350] sm:$0xff]
        %v6503 = vld [vmem:[#allocation15 + $0x358] sm:$0xff]
        %v6504 = vld [vmem:[#allocation15 + $0x360] sm:$0xff]
        %v6505 = vld [vmem:[#allocation15 + $0x368] sm:$0xff]
        %v6506 = vld [vmem:[#allocation15 + $0x370] sm:$0xff]
        %v6507 = vld [vmem:[#allocation15 + $0x378] sm:$0xff]
        %v6508 = vld [vmem:[#allocation15 + $0x380] sm:$0xff]
        %v6509 = vld [vmem:[#allocation15 + $0x388] sm:$0xff]
        %v6510 = vld [vmem:[#allocation15 + $0x390] sm:$0xff]
        %v6511 = vld [vmem:[#allocation15 + $0x398] sm:$0xff]
        %v6512 = vld [vmem:[#allocation15 + $0x3a0] sm:$0xff]
        %v6513 = vld [vmem:[#allocation15 + $0x3a8] sm:$0xff]
        %v6514 = vld [vmem:[#allocation15 + $0x3b0] sm:$0xff]
        %v6515 = vld [vmem:[#allocation15 + $0x3b8] sm:$0xff]
        %v6516 = vld [vmem:[#allocation15 + $0x3c0] sm:$0xff]
        %v6517 = vld [vmem:[#allocation15 + $0x3c8] sm:$0xff]
        %v6518 = vld [vmem:[#allocation15 + $0x3d0] sm:$0xff]
        %v6519 = vld [vmem:[#allocation15 + $0x3d8] sm:$0xff]
        %v6520 = vld [vmem:[#allocation15 + $0x3e0] sm:$0xff]
        %v6521 = vld [vmem:[#allocation15 + $0x3e8] sm:$0xff]
        %v6522 = vld [vmem:[#allocation15 + $0x3f0] sm:$0xff]
        %v6523 = vld [vmem:[#allocation15 + $0x3f8] sm:$0xff]
        %v6524 = vld [vmem:[#allocation15 + $0x400] sm:$0xff]
        %v6525 = vld [vmem:[#allocation15 + $0x408] sm:$0xff]
        %v6526 = vld [vmem:[#allocation15 + $0x410] sm:$0xff]
        %v6527 = vld [vmem:[#allocation15 + $0x418] sm:$0xff]
        %v6528 = vld [vmem:[#allocation15 + $0x420] sm:$0xff]
        %v6529 = vld [vmem:[#allocation15 + $0x428] sm:$0xff]
        %v6530 = vld [vmem:[#allocation15 + $0x430] sm:$0xff]
        %v6531 = vld [vmem:[#allocation15 + $0x438] sm:$0xff]
        %v6532 = vld [vmem:[#allocation15 + $0x440] sm:$0xff]
        %v6533 = vld [vmem:[#allocation15 + $0x448] sm:$0xff]
        %v6534 = vld [vmem:[#allocation15 + $0x450] sm:$0xff]
        %v6535 = vld [vmem:[#allocation15 + $0x458] sm:$0xff]
        %v6536 = vld [vmem:[#allocation15 + $0x460] sm:$0xff]
        %v6537 = vld [vmem:[#allocation15 + $0x468] sm:$0xff]
        %v6538 = vld [vmem:[#allocation15 + $0x470] sm:$0xff]
        %v6539 = vld [vmem:[#allocation15 + $0x478] sm:$0xff]
        %v6540 = vld [vmem:[#allocation15 + $0x480] sm:$0xff]
        %v6541 = vld [vmem:[#allocation15 + $0x488] sm:$0xff]
        %v6542 = vld [vmem:[#allocation15 + $0x490] sm:$0xff]
        %v6543 = vld [vmem:[#allocation15 + $0x498] sm:$0xff]
        %v6544 = vld [vmem:[#allocation15 + $0x4a0] sm:$0xff]
        %v6545 = vld [vmem:[#allocation15 + $0x4a8] sm:$0xff]
        %v6546 = vld [vmem:[#allocation15 + $0x4b0] sm:$0xff]
        %v6547 = vld [vmem:[#allocation15 + $0x4b8] sm:$0xff]
        %v6548 = vld [vmem:[#allocation15 + $0x4c0] sm:$0xff]
        %v6549 = vld [vmem:[#allocation15 + $0x4c8] sm:$0xff]
        %v6550 = vld [vmem:[#allocation15 + $0x4d0] sm:$0xff]
        %v6551 = vld [vmem:[#allocation15 + $0x4d8] sm:$0xff]
        %v6552 = vld [vmem:[#allocation15 + $0x4e0] sm:$0xff]
        %v6553 = vld [vmem:[#allocation15 + $0x4e8] sm:$0xff]
        %v6554 = vld [vmem:[#allocation15 + $0x4f0] sm:$0xff]
        %v6555 = vld [vmem:[#allocation15 + $0x4f8] sm:$0xff]
        %v6556 = vld [vmem:[#allocation15 + $0x500] sm:$0xff]
        %v6557 = vld [vmem:[#allocation15 + $0x508] sm:$0xff]
        %v6558 = vld [vmem:[#allocation15 + $0x510] sm:$0xff]
        %v6559 = vld [vmem:[#allocation15 + $0x518] sm:$0xff]
        %v6560 = vld [vmem:[#allocation15 + $0x520] sm:$0xff]
        %v6561 = vld [vmem:[#allocation15 + $0x528] sm:$0xff]
        %v6562 = vld [vmem:[#allocation15 + $0x530] sm:$0xff]
        %v6563 = vld [vmem:[#allocation15 + $0x538] sm:$0xff]
        %v6564 = vld [vmem:[#allocation15 + $0x540] sm:$0xff]
        %v6565 = vld [vmem:[#allocation15 + $0x548] sm:$0xff]
        %v6566 = vld [vmem:[#allocation15 + $0x550] sm:$0xff]
        %v6567 = vld [vmem:[#allocation15 + $0x558] sm:$0xff]
        %v6568 = vld [vmem:[#allocation15 + $0x560] sm:$0xff]
        %v6569 = vld [vmem:[#allocation15 + $0x568] sm:$0xff]
        %v6570 = vld [vmem:[#allocation15 + $0x570] sm:$0xff]
        %v6571 = vld [vmem:[#allocation15 + $0x578] sm:$0xff]
        %v6572 = vld [vmem:[#allocation15 + $0x580] sm:$0xff]
        %v6573 = vld [vmem:[#allocation15 + $0x588] sm:$0xff]
        %v6574 = vld [vmem:[#allocation15 + $0x590] sm:$0xff]
        %v6575 = vld [vmem:[#allocation15 + $0x598] sm:$0xff]
        %v6576 = vld [vmem:[#allocation15 + $0x5a0] sm:$0xff]
        %v6577 = vld [vmem:[#allocation15 + $0x5a8] sm:$0xff]
        %v6578 = vld [vmem:[#allocation15 + $0x5b0] sm:$0xff]
        %v6579 = vld [vmem:[#allocation15 + $0x5b8] sm:$0xff]
        %v6580 = vld [vmem:[#allocation15 + $0x5c0] sm:$0xff]
        %v6581 = vld [vmem:[#allocation15 + $0x5c8] sm:$0xff]
        %v6582 = vld [vmem:[#allocation15 + $0x5d0] sm:$0xff]
        %v6583 = vld [vmem:[#allocation15 + $0x5d8] sm:$0xff]
        %v6584 = vld [vmem:[#allocation15 + $0x5e0] sm:$0xff]
        %v6585 = vld [vmem:[#allocation15 + $0x5e8] sm:$0xff]
        %v6586 = vld [vmem:[#allocation15 + $0x5f0] sm:$0xff]
        %v6587 = vld [vmem:[#allocation15 + $0x5f8] sm:$0xff]
        %v6588 = vld [vmem:[#allocation17] sm:$0x3f]
        %v6590 = vlaneseq
        %v6591 = vshrl.u32 %v6590, 7
        %v6592 = vsub.s32 0, %v6591
        %v6593 = vrot.slane %v6588, %v6592
        %v6594 = vlaneseq
        %v6595 = vshrl.u32 %v6594, 7
        %v6596 = vsub.s32 1, %v6595
        %v6597 = vrot.slane %v6588, %v6596
        %v6598 = vlaneseq
        %v6599 = vshrl.u32 %v6598, 7
        %v6600 = vsub.s32 2, %v6599
        %v6601 = vrot.slane %v6588, %v6600
        %v6602 = vlaneseq
        %v6603 = vshrl.u32 %v6602, 7
        %v6604 = vsub.s32 3, %v6603
        %v6605 = vrot.slane %v6588, %v6604
        %v6606 = vlaneseq
        %v6607 = vshrl.u32 %v6606, 7
        %v6608 = vsub.s32 4, %v6607
        %v6609 = vrot.slane %v6588, %v6608
        %v6610 = vlaneseq
        %v6611 = vshrl.u32 %v6610, 7
        %v6612 = vsub.s32 5, %v6611
        %v6613 = vrot.slane %v6588, %v6612
        %v6812 = vunpack.c.l.b16 %v6396
        %v6813 = vunpack.c.h.b16 %v6396
        %v6814 = vunpack.c.l.b16 %v6397
        %v6815 = vunpack.c.h.b16 %v6397
        %v6816 = vunpack.c.l.b16 %v6398
        %v6817 = vunpack.c.h.b16 %v6398
        %v6818 = vunpack.c.l.b16 %v6399
        %v6819 = vunpack.c.h.b16 %v6399
        %v6820 = vunpack.c.l.b16 %v6400
        %v6821 = vunpack.c.h.b16 %v6400
        %v6822 = vunpack.c.l.b16 %v6401
        %v6823 = vunpack.c.h.b16 %v6401
        %v6824 = vunpack.c.l.b16 %v6402
        %v6825 = vunpack.c.h.b16 %v6402
        %v6826 = vunpack.c.l.b16 %v6403
        %v6827 = vunpack.c.h.b16 %v6403
        %v6828 = vunpack.c.l.b16 %v6404
        %v6829 = vunpack.c.h.b16 %v6404
        %v6830 = vunpack.c.l.b16 %v6405
        %v6831 = vunpack.c.h.b16 %v6405
        %v6832 = vunpack.c.l.b16 %v6406
        %v6833 = vunpack.c.h.b16 %v6406
        %v6834 = vunpack.c.l.b16 %v6407
        %v6835 = vunpack.c.h.b16 %v6407
        %v6836 = vunpack.c.l.b16 %v6408
        %v6837 = vunpack.c.h.b16 %v6408
        %v6838 = vunpack.c.l.b16 %v6409
        %v6839 = vunpack.c.h.b16 %v6409
        %v6840 = vunpack.c.l.b16 %v6410
        %v6841 = vunpack.c.h.b16 %v6410
        %v6842 = vunpack.c.l.b16 %v6411
        %v6843 = vunpack.c.h.b16 %v6411
        %v6844 = vunpack.c.l.b16 %v6412
        %v6845 = vunpack.c.h.b16 %v6412
        %v6846 = vunpack.c.l.b16 %v6413
        %v6847 = vunpack.c.h.b16 %v6413
        %v6848 = vunpack.c.l.b16 %v6414
        %v6849 = vunpack.c.h.b16 %v6414
        %v6850 = vunpack.c.l.b16 %v6415
        %v6851 = vunpack.c.h.b16 %v6415
        %v6852 = vunpack.c.l.b16 %v6416
        %v6853 = vunpack.c.h.b16 %v6416
        %v6854 = vunpack.c.l.b16 %v6417
        %v6855 = vunpack.c.h.b16 %v6417
        %v6856 = vunpack.c.l.b16 %v6418
        %v6857 = vunpack.c.h.b16 %v6418
        %v6858 = vunpack.c.l.b16 %v6419
        %v6859 = vunpack.c.h.b16 %v6419
        %v6860 = vunpack.c.l.b16 %v6420
        %v6861 = vunpack.c.h.b16 %v6420
        %v6862 = vunpack.c.l.b16 %v6421
        %v6863 = vunpack.c.h.b16 %v6421
        %v6864 = vunpack.c.l.b16 %v6422
        %v6865 = vunpack.c.h.b16 %v6422
        %v6866 = vunpack.c.l.b16 %v6423
        %v6867 = vunpack.c.h.b16 %v6423
        %v6868 = vunpack.c.l.b16 %v6424
        %v6869 = vunpack.c.h.b16 %v6424
        %v6870 = vunpack.c.l.b16 %v6425
        %v6871 = vunpack.c.h.b16 %v6425
        %v6872 = vunpack.c.l.b16 %v6426
        %v6873 = vunpack.c.h.b16 %v6426
        %v6874 = vunpack.c.l.b16 %v6427
        %v6875 = vunpack.c.h.b16 %v6427
        %v6876 = vunpack.c.l.b16 %v6428
        %v6877 = vunpack.c.h.b16 %v6428
        %v6878 = vunpack.c.l.b16 %v6429
        %v6879 = vunpack.c.h.b16 %v6429
        %v6880 = vunpack.c.l.b16 %v6430
        %v6881 = vunpack.c.h.b16 %v6430
        %v6882 = vunpack.c.l.b16 %v6431
        %v6883 = vunpack.c.h.b16 %v6431
        %v6884 = vunpack.c.l.b16 %v6432
        %v6885 = vunpack.c.h.b16 %v6432
        %v6886 = vunpack.c.l.b16 %v6433
        %v6887 = vunpack.c.h.b16 %v6433
        %v6888 = vunpack.c.l.b16 %v6434
        %v6889 = vunpack.c.h.b16 %v6434
        %v6890 = vunpack.c.l.b16 %v6435
        %v6891 = vunpack.c.h.b16 %v6435
        %v6892 = vunpack.c.l.b16 %v6436
        %v6893 = vunpack.c.h.b16 %v6436
        %v6894 = vunpack.c.l.b16 %v6437
        %v6895 = vunpack.c.h.b16 %v6437
        %v6896 = vunpack.c.l.b16 %v6438
        %v6897 = vunpack.c.h.b16 %v6438
        %v6898 = vunpack.c.l.b16 %v6439
        %v6899 = vunpack.c.h.b16 %v6439
        %v6900 = vunpack.c.l.b16 %v6440
        %v6901 = vunpack.c.h.b16 %v6440
        %v6902 = vunpack.c.l.b16 %v6441
        %v6903 = vunpack.c.h.b16 %v6441
        %v6904 = vunpack.c.l.b16 %v6442
        %v6905 = vunpack.c.h.b16 %v6442
        %v6906 = vunpack.c.l.b16 %v6443
        %v6907 = vunpack.c.h.b16 %v6443
        %v6908 = vunpack.c.l.b16 %v6444
        %v6909 = vunpack.c.h.b16 %v6444
        %v6910 = vunpack.c.l.b16 %v6445
        %v6911 = vunpack.c.h.b16 %v6445
        %v6912 = vunpack.c.l.b16 %v6446
        %v6913 = vunpack.c.h.b16 %v6446
        %v6914 = vunpack.c.l.b16 %v6447
        %v6915 = vunpack.c.h.b16 %v6447
        %v6916 = vunpack.c.l.b16 %v6448
        %v6917 = vunpack.c.h.b16 %v6448
        %v6918 = vunpack.c.l.b16 %v6449
        %v6919 = vunpack.c.h.b16 %v6449
        %v6920 = vunpack.c.l.b16 %v6450
        %v6921 = vunpack.c.h.b16 %v6450
        %v6922 = vunpack.c.l.b16 %v6451
        %v6923 = vunpack.c.h.b16 %v6451
        %v6924 = vunpack.c.l.b16 %v6452
        %v6925 = vunpack.c.h.b16 %v6452
        %v6926 = vunpack.c.l.b16 %v6453
        %v6927 = vunpack.c.h.b16 %v6453
        %v6928 = vunpack.c.l.b16 %v6454
        %v6929 = vunpack.c.h.b16 %v6454
        %v6930 = vunpack.c.l.b16 %v6455
        %v6931 = vunpack.c.h.b16 %v6455
        %v6932 = vunpack.c.l.b16 %v6456
        %v6933 = vunpack.c.h.b16 %v6456
        %v6934 = vunpack.c.l.b16 %v6457
        %v6935 = vunpack.c.h.b16 %v6457
        %v6936 = vunpack.c.l.b16 %v6458
        %v6937 = vunpack.c.h.b16 %v6458
        %v6938 = vunpack.c.l.b16 %v6459
        %v6939 = vunpack.c.h.b16 %v6459
        %v6940 = vunpack.c.l.b16 %v6460
        %v6941 = vunpack.c.h.b16 %v6460
        %v6942 = vunpack.c.l.b16 %v6461
        %v6943 = vunpack.c.h.b16 %v6461
        %v6944 = vunpack.c.l.b16 %v6462
        %v6945 = vunpack.c.h.b16 %v6462
        %v6946 = vunpack.c.l.b16 %v6463
        %v6947 = vunpack.c.h.b16 %v6463
        %v6948 = vunpack.c.l.b16 %v6464
        %v6949 = vunpack.c.h.b16 %v6464
        %v6950 = vunpack.c.l.b16 %v6465
        %v6951 = vunpack.c.h.b16 %v6465
        %v6952 = vunpack.c.l.b16 %v6466
        %v6953 = vunpack.c.h.b16 %v6466
        %v6954 = vunpack.c.l.b16 %v6467
        %v6955 = vunpack.c.h.b16 %v6467
        %v6956 = vunpack.c.l.b16 %v6468
        %v6957 = vunpack.c.h.b16 %v6468
        %v6958 = vunpack.c.l.b16 %v6469
        %v6959 = vunpack.c.h.b16 %v6469
        %v6960 = vunpack.c.l.b16 %v6470
        %v6961 = vunpack.c.h.b16 %v6470
        %v6962 = vunpack.c.l.b16 %v6471
        %v6963 = vunpack.c.h.b16 %v6471
        %v6964 = vunpack.c.l.b16 %v6472
        %v6965 = vunpack.c.h.b16 %v6472
        %v6966 = vunpack.c.l.b16 %v6473
        %v6967 = vunpack.c.h.b16 %v6473
        %v6968 = vunpack.c.l.b16 %v6474
        %v6969 = vunpack.c.h.b16 %v6474
        %v6970 = vunpack.c.l.b16 %v6475
        %v6971 = vunpack.c.h.b16 %v6475
        %v6972 = vunpack.c.l.b16 %v6476
        %v6973 = vunpack.c.h.b16 %v6476
        %v6974 = vunpack.c.l.b16 %v6477
        %v6975 = vunpack.c.h.b16 %v6477
        %v6976 = vunpack.c.l.b16 %v6478
        %v6977 = vunpack.c.h.b16 %v6478
        %v6978 = vunpack.c.l.b16 %v6479
        %v6979 = vunpack.c.h.b16 %v6479
        %v6980 = vunpack.c.l.b16 %v6480
        %v6981 = vunpack.c.h.b16 %v6480
        %v6982 = vunpack.c.l.b16 %v6481
        %v6983 = vunpack.c.h.b16 %v6481
        %v6984 = vunpack.c.l.b16 %v6482
        %v6985 = vunpack.c.h.b16 %v6482
        %v6986 = vunpack.c.l.b16 %v6483
        %v6987 = vunpack.c.h.b16 %v6483
        %v6988 = vunpack.c.l.b16 %v6484
        %v6989 = vunpack.c.h.b16 %v6484
        %v6990 = vunpack.c.l.b16 %v6485
        %v6991 = vunpack.c.h.b16 %v6485
        %v6992 = vunpack.c.l.b16 %v6486
        %v6993 = vunpack.c.h.b16 %v6486
        %v6994 = vunpack.c.l.b16 %v6487
        %v6995 = vunpack.c.h.b16 %v6487
        %v6996 = vunpack.c.l.b16 %v6488
        %v6997 = vunpack.c.h.b16 %v6488
        %v6998 = vunpack.c.l.b16 %v6489
        %v6999 = vunpack.c.h.b16 %v6489
        %v7000 = vunpack.c.l.b16 %v6490
        %v7001 = vunpack.c.h.b16 %v6490
        %v7002 = vunpack.c.l.b16 %v6491
        %v7003 = vunpack.c.h.b16 %v6491
        %v7004 = vunpack.c.l.b16 %v6492
        %v7005 = vunpack.c.h.b16 %v6492
        %v7006 = vunpack.c.l.b16 %v6493
        %v7007 = vunpack.c.h.b16 %v6493
        %v7008 = vunpack.c.l.b16 %v6494
        %v7009 = vunpack.c.h.b16 %v6494
        %v7010 = vunpack.c.l.b16 %v6495
        %v7011 = vunpack.c.h.b16 %v6495
        %v7012 = vunpack.c.l.b16 %v6496
        %v7013 = vunpack.c.h.b16 %v6496
        %v7014 = vunpack.c.l.b16 %v6497
        %v7015 = vunpack.c.h.b16 %v6497
        %v7016 = vunpack.c.l.b16 %v6498
        %v7017 = vunpack.c.h.b16 %v6498
        %v7018 = vunpack.c.l.b16 %v6499
        %v7019 = vunpack.c.h.b16 %v6499
        %v7020 = vunpack.c.l.b16 %v6500
        %v7021 = vunpack.c.h.b16 %v6500
        %v7022 = vunpack.c.l.b16 %v6501
        %v7023 = vunpack.c.h.b16 %v6501
        %v7024 = vunpack.c.l.b16 %v6502
        %v7025 = vunpack.c.h.b16 %v6502
        %v7026 = vunpack.c.l.b16 %v6503
        %v7027 = vunpack.c.h.b16 %v6503
        %v7028 = vunpack.c.l.b16 %v6504
        %v7029 = vunpack.c.h.b16 %v6504
        %v7030 = vunpack.c.l.b16 %v6505
        %v7031 = vunpack.c.h.b16 %v6505
        %v7032 = vunpack.c.l.b16 %v6506
        %v7033 = vunpack.c.h.b16 %v6506
        %v7034 = vunpack.c.l.b16 %v6507
        %v7035 = vunpack.c.h.b16 %v6507
        %v7036 = vunpack.c.l.b16 %v6508
        %v7037 = vunpack.c.h.b16 %v6508
        %v7038 = vunpack.c.l.b16 %v6509
        %v7039 = vunpack.c.h.b16 %v6509
        %v7040 = vunpack.c.l.b16 %v6510
        %v7041 = vunpack.c.h.b16 %v6510
        %v7042 = vunpack.c.l.b16 %v6511
        %v7043 = vunpack.c.h.b16 %v6511
        %v7044 = vunpack.c.l.b16 %v6512
        %v7045 = vunpack.c.h.b16 %v6512
        %v7046 = vunpack.c.l.b16 %v6513
        %v7047 = vunpack.c.h.b16 %v6513
        %v7048 = vunpack.c.l.b16 %v6514
        %v7049 = vunpack.c.h.b16 %v6514
        %v7050 = vunpack.c.l.b16 %v6515
        %v7051 = vunpack.c.h.b16 %v6515
        %v7052 = vunpack.c.l.b16 %v6516
        %v7053 = vunpack.c.h.b16 %v6516
        %v7054 = vunpack.c.l.b16 %v6517
        %v7055 = vunpack.c.h.b16 %v6517
        %v7056 = vunpack.c.l.b16 %v6518
        %v7057 = vunpack.c.h.b16 %v6518
        %v7058 = vunpack.c.l.b16 %v6519
        %v7059 = vunpack.c.h.b16 %v6519
        %v7060 = vunpack.c.l.b16 %v6520
        %v7061 = vunpack.c.h.b16 %v6520
        %v7062 = vunpack.c.l.b16 %v6521
        %v7063 = vunpack.c.h.b16 %v6521
        %v7064 = vunpack.c.l.b16 %v6522
        %v7065 = vunpack.c.h.b16 %v6522
        %v7066 = vunpack.c.l.b16 %v6523
        %v7067 = vunpack.c.h.b16 %v6523
        %v7068 = vunpack.c.l.b16 %v6524
        %v7069 = vunpack.c.h.b16 %v6524
        %v7070 = vunpack.c.l.b16 %v6525
        %v7071 = vunpack.c.h.b16 %v6525
        %v7072 = vunpack.c.l.b16 %v6526
        %v7073 = vunpack.c.h.b16 %v6526
        %v7074 = vunpack.c.l.b16 %v6527
        %v7075 = vunpack.c.h.b16 %v6527
        %v7076 = vunpack.c.l.b16 %v6528
        %v7077 = vunpack.c.h.b16 %v6528
        %v7078 = vunpack.c.l.b16 %v6529
        %v7079 = vunpack.c.h.b16 %v6529
        %v7080 = vunpack.c.l.b16 %v6530
        %v7081 = vunpack.c.h.b16 %v6530
        %v7082 = vunpack.c.l.b16 %v6531
        %v7083 = vunpack.c.h.b16 %v6531
        %v7084 = vunpack.c.l.b16 %v6532
        %v7085 = vunpack.c.h.b16 %v6532
        %v7086 = vunpack.c.l.b16 %v6533
        %v7087 = vunpack.c.h.b16 %v6533
        %v7088 = vunpack.c.l.b16 %v6534
        %v7089 = vunpack.c.h.b16 %v6534
        %v7090 = vunpack.c.l.b16 %v6535
        %v7091 = vunpack.c.h.b16 %v6535
        %v7092 = vunpack.c.l.b16 %v6536
        %v7093 = vunpack.c.h.b16 %v6536
        %v7094 = vunpack.c.l.b16 %v6537
        %v7095 = vunpack.c.h.b16 %v6537
        %v7096 = vunpack.c.l.b16 %v6538
        %v7097 = vunpack.c.h.b16 %v6538
        %v7098 = vunpack.c.l.b16 %v6539
        %v7099 = vunpack.c.h.b16 %v6539
        %v7100 = vunpack.c.l.b16 %v6540
        %v7101 = vunpack.c.h.b16 %v6540
        %v7102 = vunpack.c.l.b16 %v6541
        %v7103 = vunpack.c.h.b16 %v6541
        %v7104 = vunpack.c.l.b16 %v6542
        %v7105 = vunpack.c.h.b16 %v6542
        %v7106 = vunpack.c.l.b16 %v6543
        %v7107 = vunpack.c.h.b16 %v6543
        %v7108 = vunpack.c.l.b16 %v6544
        %v7109 = vunpack.c.h.b16 %v6544
        %v7110 = vunpack.c.l.b16 %v6545
        %v7111 = vunpack.c.h.b16 %v6545
        %v7112 = vunpack.c.l.b16 %v6546
        %v7113 = vunpack.c.h.b16 %v6546
        %v7114 = vunpack.c.l.b16 %v6547
        %v7115 = vunpack.c.h.b16 %v6547
        %v7116 = vunpack.c.l.b16 %v6548
        %v7117 = vunpack.c.h.b16 %v6548
        %v7118 = vunpack.c.l.b16 %v6549
        %v7119 = vunpack.c.h.b16 %v6549
        %v7120 = vunpack.c.l.b16 %v6550
        %v7121 = vunpack.c.h.b16 %v6550
        %v7122 = vunpack.c.l.b16 %v6551
        %v7123 = vunpack.c.h.b16 %v6551
        %v7124 = vunpack.c.l.b16 %v6552
        %v7125 = vunpack.c.h.b16 %v6552
        %v7126 = vunpack.c.l.b16 %v6553
        %v7127 = vunpack.c.h.b16 %v6553
        %v7128 = vunpack.c.l.b16 %v6554
        %v7129 = vunpack.c.h.b16 %v6554
        %v7130 = vunpack.c.l.b16 %v6555
        %v7131 = vunpack.c.h.b16 %v6555
        %v7132 = vunpack.c.l.b16 %v6556
        %v7133 = vunpack.c.h.b16 %v6556
        %v7134 = vunpack.c.l.b16 %v6557
        %v7135 = vunpack.c.h.b16 %v6557
        %v7136 = vunpack.c.l.b16 %v6558
        %v7137 = vunpack.c.h.b16 %v6558
        %v7138 = vunpack.c.l.b16 %v6559
        %v7139 = vunpack.c.h.b16 %v6559
        %v7140 = vunpack.c.l.b16 %v6560
        %v7141 = vunpack.c.h.b16 %v6560
        %v7142 = vunpack.c.l.b16 %v6561
        %v7143 = vunpack.c.h.b16 %v6561
        %v7144 = vunpack.c.l.b16 %v6562
        %v7145 = vunpack.c.h.b16 %v6562
        %v7146 = vunpack.c.l.b16 %v6563
        %v7147 = vunpack.c.h.b16 %v6563
        %v7148 = vunpack.c.l.b16 %v6564
        %v7149 = vunpack.c.h.b16 %v6564
        %v7150 = vunpack.c.l.b16 %v6565
        %v7151 = vunpack.c.h.b16 %v6565
        %v7152 = vunpack.c.l.b16 %v6566
        %v7153 = vunpack.c.h.b16 %v6566
        %v7154 = vunpack.c.l.b16 %v6567
        %v7155 = vunpack.c.h.b16 %v6567
        %v7156 = vunpack.c.l.b16 %v6568
        %v7157 = vunpack.c.h.b16 %v6568
        %v7158 = vunpack.c.l.b16 %v6569
        %v7159 = vunpack.c.h.b16 %v6569
        %v7160 = vunpack.c.l.b16 %v6570
        %v7161 = vunpack.c.h.b16 %v6570
        %v7162 = vunpack.c.l.b16 %v6571
        %v7163 = vunpack.c.h.b16 %v6571
        %v7164 = vunpack.c.l.b16 %v6572
        %v7165 = vunpack.c.h.b16 %v6572
        %v7166 = vunpack.c.l.b16 %v6573
        %v7167 = vunpack.c.h.b16 %v6573
        %v7168 = vunpack.c.l.b16 %v6574
        %v7169 = vunpack.c.h.b16 %v6574
        %v7170 = vunpack.c.l.b16 %v6575
        %v7171 = vunpack.c.h.b16 %v6575
        %v7172 = vunpack.c.l.b16 %v6576
        %v7173 = vunpack.c.h.b16 %v6576
        %v7174 = vunpack.c.l.b16 %v6577
        %v7175 = vunpack.c.h.b16 %v6577
        %v7176 = vunpack.c.l.b16 %v6578
        %v7177 = vunpack.c.h.b16 %v6578
        %v7178 = vunpack.c.l.b16 %v6579
        %v7179 = vunpack.c.h.b16 %v6579
        %v7180 = vunpack.c.l.b16 %v6580
        %v7181 = vunpack.c.h.b16 %v6580
        %v7182 = vunpack.c.l.b16 %v6581
        %v7183 = vunpack.c.h.b16 %v6581
        %v7184 = vunpack.c.l.b16 %v6582
        %v7185 = vunpack.c.h.b16 %v6582
        %v7186 = vunpack.c.l.b16 %v6583
        %v7187 = vunpack.c.h.b16 %v6583
        %v7188 = vunpack.c.l.b16 %v6584
        %v7189 = vunpack.c.h.b16 %v6584
        %v7190 = vunpack.c.l.b16 %v6585
        %v7191 = vunpack.c.h.b16 %v6585
        %v7192 = vunpack.c.l.b16 %v6586
        %v7193 = vunpack.c.h.b16 %v6586
        %v7194 = vunpack.c.l.b16 %v6587
        %v7195 = vunpack.c.h.b16 %v6587
        %v7196 = vpack.c.b16 %v6818, %v6812
        %v7197 = vpack.c.b16 %v6819, %v6813
        %v7198 = vpack.c.b16 %v6820, %v6814
        %v7199 = vpack.c.b16 %v6821, %v6815
        %v7200 = vpack.c.b16 %v6822, %v6816
        %v7201 = vpack.c.b16 %v6823, %v6817
        %v7202 = vpack.c.b16 %v6830, %v6824
        %v7203 = vpack.c.b16 %v6831, %v6825
        %v7204 = vpack.c.b16 %v6832, %v6826
        %v7205 = vpack.c.b16 %v6833, %v6827
        %v7206 = vpack.c.b16 %v6834, %v6828
        %v7207 = vpack.c.b16 %v6835, %v6829
        %v7208 = vpack.c.b16 %v6842, %v6836
        %v7209 = vpack.c.b16 %v6843, %v6837
        %v7210 = vpack.c.b16 %v6844, %v6838
        %v7211 = vpack.c.b16 %v6845, %v6839
        %v7212 = vpack.c.b16 %v6846, %v6840
        %v7213 = vpack.c.b16 %v6847, %v6841
        %v7214 = vpack.c.b16 %v6854, %v6848
        %v7215 = vpack.c.b16 %v6855, %v6849
        %v7216 = vpack.c.b16 %v6856, %v6850
        %v7217 = vpack.c.b16 %v6857, %v6851
        %v7218 = vpack.c.b16 %v6858, %v6852
        %v7219 = vpack.c.b16 %v6859, %v6853
        %v7220 = vpack.c.b16 %v6866, %v6860
        %v7221 = vpack.c.b16 %v6867, %v6861
        %v7222 = vpack.c.b16 %v6868, %v6862
        %v7223 = vpack.c.b16 %v6869, %v6863
        %v7224 = vpack.c.b16 %v6870, %v6864
        %v7225 = vpack.c.b16 %v6871, %v6865
        %v7226 = vpack.c.b16 %v6878, %v6872
        %v7227 = vpack.c.b16 %v6879, %v6873
        %v7228 = vpack.c.b16 %v6880, %v6874
        %v7229 = vpack.c.b16 %v6881, %v6875
        %v7230 = vpack.c.b16 %v6882, %v6876
        %v7231 = vpack.c.b16 %v6883, %v6877
        %v7232 = vpack.c.b16 %v6890, %v6884
        %v7233 = vpack.c.b16 %v6891, %v6885
        %v7234 = vpack.c.b16 %v6892, %v6886
        %v7235 = vpack.c.b16 %v6893, %v6887
        %v7236 = vpack.c.b16 %v6894, %v6888
        %v7237 = vpack.c.b16 %v6895, %v6889
        %v7238 = vpack.c.b16 %v6902, %v6896
        %v7239 = vpack.c.b16 %v6903, %v6897
        %v7240 = vpack.c.b16 %v6904, %v6898
        %v7241 = vpack.c.b16 %v6905, %v6899
        %v7242 = vpack.c.b16 %v6906, %v6900
        %v7243 = vpack.c.b16 %v6907, %v6901
        %v7244 = vpack.c.b16 %v6914, %v6908
        %v7245 = vpack.c.b16 %v6915, %v6909
        %v7246 = vpack.c.b16 %v6916, %v6910
        %v7247 = vpack.c.b16 %v6917, %v6911
        %v7248 = vpack.c.b16 %v6918, %v6912
        %v7249 = vpack.c.b16 %v6919, %v6913
        %v7250 = vpack.c.b16 %v6926, %v6920
        %v7251 = vpack.c.b16 %v6927, %v6921
        %v7252 = vpack.c.b16 %v6928, %v6922
        %v7253 = vpack.c.b16 %v6929, %v6923
        %v7254 = vpack.c.b16 %v6930, %v6924
        %v7255 = vpack.c.b16 %v6931, %v6925
        %v7256 = vpack.c.b16 %v6938, %v6932
        %v7257 = vpack.c.b16 %v6939, %v6933
        %v7258 = vpack.c.b16 %v6940, %v6934
        %v7259 = vpack.c.b16 %v6941, %v6935
        %v7260 = vpack.c.b16 %v6942, %v6936
        %v7261 = vpack.c.b16 %v6943, %v6937
        %v7262 = vpack.c.b16 %v6950, %v6944
        %v7263 = vpack.c.b16 %v6951, %v6945
        %v7264 = vpack.c.b16 %v6952, %v6946
        %v7265 = vpack.c.b16 %v6953, %v6947
        %v7266 = vpack.c.b16 %v6954, %v6948
        %v7267 = vpack.c.b16 %v6955, %v6949
        %v7268 = vpack.c.b16 %v6962, %v6956
        %v7269 = vpack.c.b16 %v6963, %v6957
        %v7270 = vpack.c.b16 %v6964, %v6958
        %v7271 = vpack.c.b16 %v6965, %v6959
        %v7272 = vpack.c.b16 %v6966, %v6960
        %v7273 = vpack.c.b16 %v6967, %v6961
        %v7274 = vpack.c.b16 %v6974, %v6968
        %v7275 = vpack.c.b16 %v6975, %v6969
        %v7276 = vpack.c.b16 %v6976, %v6970
        %v7277 = vpack.c.b16 %v6977, %v6971
        %v7278 = vpack.c.b16 %v6978, %v6972
        %v7279 = vpack.c.b16 %v6979, %v6973
        %v7280 = vpack.c.b16 %v6986, %v6980
        %v7281 = vpack.c.b16 %v6987, %v6981
        %v7282 = vpack.c.b16 %v6988, %v6982
        %v7283 = vpack.c.b16 %v6989, %v6983
        %v7284 = vpack.c.b16 %v6990, %v6984
        %v7285 = vpack.c.b16 %v6991, %v6985
        %v7286 = vpack.c.b16 %v6998, %v6992
        %v7287 = vpack.c.b16 %v6999, %v6993
        %v7288 = vpack.c.b16 %v7000, %v6994
        %v7289 = vpack.c.b16 %v7001, %v6995
        %v7290 = vpack.c.b16 %v7002, %v6996
        %v7291 = vpack.c.b16 %v7003, %v6997
        %v7292 = vpack.c.b16 %v7010, %v7004
        %v7293 = vpack.c.b16 %v7011, %v7005
        %v7294 = vpack.c.b16 %v7012, %v7006
        %v7295 = vpack.c.b16 %v7013, %v7007
        %v7296 = vpack.c.b16 %v7014, %v7008
        %v7297 = vpack.c.b16 %v7015, %v7009
        %v7298 = vpack.c.b16 %v7022, %v7016
        %v7299 = vpack.c.b16 %v7023, %v7017
        %v7300 = vpack.c.b16 %v7024, %v7018
        %v7301 = vpack.c.b16 %v7025, %v7019
        %v7302 = vpack.c.b16 %v7026, %v7020
        %v7303 = vpack.c.b16 %v7027, %v7021
        %v7304 = vpack.c.b16 %v7034, %v7028
        %v7305 = vpack.c.b16 %v7035, %v7029
        %v7306 = vpack.c.b16 %v7036, %v7030
        %v7307 = vpack.c.b16 %v7037, %v7031
        %v7308 = vpack.c.b16 %v7038, %v7032
        %v7309 = vpack.c.b16 %v7039, %v7033
        %v7310 = vpack.c.b16 %v7046, %v7040
        %v7311 = vpack.c.b16 %v7047, %v7041
        %v7312 = vpack.c.b16 %v7048, %v7042
        %v7313 = vpack.c.b16 %v7049, %v7043
        %v7314 = vpack.c.b16 %v7050, %v7044
        %v7315 = vpack.c.b16 %v7051, %v7045
        %v7316 = vpack.c.b16 %v7058, %v7052
        %v7317 = vpack.c.b16 %v7059, %v7053
        %v7318 = vpack.c.b16 %v7060, %v7054
        %v7319 = vpack.c.b16 %v7061, %v7055
        %v7320 = vpack.c.b16 %v7062, %v7056
        %v7321 = vpack.c.b16 %v7063, %v7057
        %v7322 = vpack.c.b16 %v7070, %v7064
        %v7323 = vpack.c.b16 %v7071, %v7065
        %v7324 = vpack.c.b16 %v7072, %v7066
        %v7325 = vpack.c.b16 %v7073, %v7067
        %v7326 = vpack.c.b16 %v7074, %v7068
        %v7327 = vpack.c.b16 %v7075, %v7069
        %v7328 = vpack.c.b16 %v7082, %v7076
        %v7329 = vpack.c.b16 %v7083, %v7077
        %v7330 = vpack.c.b16 %v7084, %v7078
        %v7331 = vpack.c.b16 %v7085, %v7079
        %v7332 = vpack.c.b16 %v7086, %v7080
        %v7333 = vpack.c.b16 %v7087, %v7081
        %v7334 = vpack.c.b16 %v7094, %v7088
        %v7335 = vpack.c.b16 %v7095, %v7089
        %v7336 = vpack.c.b16 %v7096, %v7090
        %v7337 = vpack.c.b16 %v7097, %v7091
        %v7338 = vpack.c.b16 %v7098, %v7092
        %v7339 = vpack.c.b16 %v7099, %v7093
        %v7340 = vpack.c.b16 %v7106, %v7100
        %v7341 = vpack.c.b16 %v7107, %v7101
        %v7342 = vpack.c.b16 %v7108, %v7102
        %v7343 = vpack.c.b16 %v7109, %v7103
        %v7344 = vpack.c.b16 %v7110, %v7104
        %v7345 = vpack.c.b16 %v7111, %v7105
        %v7346 = vpack.c.b16 %v7118, %v7112
        %v7347 = vpack.c.b16 %v7119, %v7113
        %v7348 = vpack.c.b16 %v7120, %v7114
        %v7349 = vpack.c.b16 %v7121, %v7115
        %v7350 = vpack.c.b16 %v7122, %v7116
        %v7351 = vpack.c.b16 %v7123, %v7117
        %v7352 = vpack.c.b16 %v7130, %v7124
        %v7353 = vpack.c.b16 %v7131, %v7125
        %v7354 = vpack.c.b16 %v7132, %v7126
        %v7355 = vpack.c.b16 %v7133, %v7127
        %v7356 = vpack.c.b16 %v7134, %v7128
        %v7357 = vpack.c.b16 %v7135, %v7129
        %v7358 = vpack.c.b16 %v7142, %v7136
        %v7359 = vpack.c.b16 %v7143, %v7137
        %v7360 = vpack.c.b16 %v7144, %v7138
        %v7361 = vpack.c.b16 %v7145, %v7139
        %v7362 = vpack.c.b16 %v7146, %v7140
        %v7363 = vpack.c.b16 %v7147, %v7141
        %v7364 = vpack.c.b16 %v7154, %v7148
        %v7365 = vpack.c.b16 %v7155, %v7149
        %v7366 = vpack.c.b16 %v7156, %v7150
        %v7367 = vpack.c.b16 %v7157, %v7151
        %v7368 = vpack.c.b16 %v7158, %v7152
        %v7369 = vpack.c.b16 %v7159, %v7153
        %v7370 = vpack.c.b16 %v7166, %v7160
        %v7371 = vpack.c.b16 %v7167, %v7161
        %v7372 = vpack.c.b16 %v7168, %v7162
        %v7373 = vpack.c.b16 %v7169, %v7163
        %v7374 = vpack.c.b16 %v7170, %v7164
        %v7375 = vpack.c.b16 %v7171, %v7165
        %v7376 = vpack.c.b16 %v7178, %v7172
        %v7377 = vpack.c.b16 %v7179, %v7173
        %v7378 = vpack.c.b16 %v7180, %v7174
        %v7379 = vpack.c.b16 %v7181, %v7175
        %v7380 = vpack.c.b16 %v7182, %v7176
        %v7381 = vpack.c.b16 %v7183, %v7177
        %v7382 = vpack.c.b16 %v7190, %v7184
        %v7383 = vpack.c.b16 %v7191, %v7185
        %v7384 = vpack.c.b16 %v7192, %v7186
        %v7385 = vpack.c.b16 %v7193, %v7187
        %v7386 = vpack.c.b16 %v7194, %v7188
        %v7387 = vpack.c.b16 %v7195, %v7189
        %7580 = vmatprep.subr.bf16.mxu0 %v7197
        %7581 = vmatpush1.bf16.msra.mxu0 %v7196
        %7582 = vmatprep.subr.bf16.mxu0 %v7203
        %7583 = vmatpush1.bf16.msra.mxu0 %v7202
        %7584 = vmatprep.subr.bf16.mxu0 %v7209
        %7585 = vmatpush1.bf16.msra.mxu0 %v7208
        %7586 = vmatprep.subr.bf16.mxu0 %v7215
        %7587 = vmatpush1.bf16.msra.mxu0 %v7214
        %7588 = vmatprep.subr.bf16.mxu0 %v7221
        %7589 = vmatpush1.bf16.msra.mxu0 %v7220
        %7590 = vmatprep.subr.bf16.mxu0 %v7227
        %7591 = vmatpush1.bf16.msra.mxu0 %v7226
        %7592 = vmatprep.subr.bf16.mxu0 %v7233
        %7593 = vmatpush1.bf16.msra.mxu0 %v7232
        %7594 = vmatprep.subr.bf16.mxu0 %v7239
        %7595 = vmatpush1.bf16.msra.mxu0 %v7238
        %7596 = vmatprep.subr.bf16.mxu0 %v7245
        %7597 = vmatpush1.bf16.msra.mxu0 %v7244
        %7598 = vmatprep.subr.bf16.mxu0 %v7251
        %7599 = vmatpush1.bf16.msra.mxu0 %v7250
        %7600 = vmatprep.subr.bf16.mxu0 %v7257
        %7601 = vmatpush1.bf16.msra.mxu0 %v7256
        %7602 = vmatprep.subr.bf16.mxu0 %v7263
        %7603 = vmatpush1.bf16.msra.mxu0 %v7262
        %7604 = vmatprep.subr.bf16.mxu0 %v7269
        %7605 = vmatpush1.bf16.msra.mxu0 %v7268
        %7606 = vmatprep.subr.bf16.mxu0 %v7275
        %7607 = vmatpush1.bf16.msra.mxu0 %v7274
        %7608 = vmatprep.subr.bf16.mxu0 %v7281
        %7609 = vmatpush1.bf16.msra.mxu0 %v7280
        %7610 = vmatprep.subr.bf16.mxu0 %v7287
        %7611 = vmatpush1.bf16.msra.mxu0 %v7286
        %7612 = vmatprep.mubr.bf16.mxu0 %v6333
        %7613 = vmatmul.mubr.bf16.gmra.mrb[0].mxu0 %v6332
        %v7614 = vpop.f32.mrb[0].mxu0
        %v7615 = vadd.f32 %v6593, %v7614
        %v7616 = vpop.f32.mrb[0].mxu0
        %v7617 = vadd.f32 %v6597, %v7616
        %v7618 = vpop.f32.mrb[0].mxu0
        %v7619 = vadd.f32 %v6593, %v7618
        %v7620 = vpop.f32.mrb[0].mxu0
        %v7621 = vadd.f32 %v6597, %v7620
        %7622 = vmatprep.mubr.bf16.mxu0 %v6337
        %7623 = vmatmul.mubr.bf16.gmra.mrb[0].mxu0 %v6336
        %v7624 = vpop.f32.mrb[0].mxu0
        %v7625 = vadd.f32 %v6593, %v7624
        %v7626 = vpop.f32.mrb[0].mxu0
        %v7627 = vadd.f32 %v6597, %v7626
        %v7628 = vpop.f32.mrb[0].mxu0
        %v7629 = vadd.f32 %v6593, %v7628
        %v7630 = vpop.f32.mrb[0].mxu0
        %v7631 = vadd.f32 %v6597, %v7630
        %7632 = vmatprep.mubr.bf16.mxu0 %v6341
        %7633 = vmatmul.mubr.bf16.gmra.mrb[0].mxu0 %v6340
        %v7634 = vpop.f32.mrb[0].mxu0
        %v7635 = vadd.f32 %v6593, %v7634
        %v7636 = vpop.f32.mrb[0].mxu0
        %v7637 = vadd.f32 %v6597, %v7636
        %v7638 = vpop.f32.mrb[0].mxu0
        %v7639 = vadd.f32 %v6593, %v7638
        %v7640 = vpop.f32.mrb[0].mxu0
        %v7641 = vadd.f32 %v6597, %v7640
        %7642 = vmatprep.mubr.bf16.mxu0 %v6345
        %7643 = vmatmul.mubr.bf16.gmra.mrb[0].mxu0 %v6344
        %v7644 = vpop.f32.mrb[0].mxu0
        %v7645 = vadd.f32 %v6593, %v7644
        %v7646 = vpop.f32.mrb[0].mxu0
        %v7647 = vadd.f32 %v6597, %v7646
        %v7648 = vpop.f32.mrb[0].mxu0
        %v7649 = vadd.f32 %v6593, %v7648
        %v7650 = vpop.f32.mrb[0].mxu0
        %v7651 = vadd.f32 %v6597, %v7650
        %7652 = vmatprep.mubr.bf16.mxu0 %v6349
        %7653 = vmatmul.mubr.bf16.gmra.mrb[0].mxu0 %v6348
        %v7654 = vpop.f32.mrb[0].mxu0
        %v7655 = vadd.f32 %v6593, %v7654
        %v7656 = vpop.f32.mrb[0].mxu0
        %v7657 = vadd.f32 %v6597, %v7656
        %v7658 = vpop.f32.mrb[0].mxu0
        %v7659 = vadd.f32 %v6593, %v7658
        %v7660 = vpop.f32.mrb[0].mxu0
        %v7661 = vadd.f32 %v6597, %v7660
        %7662 = vmatprep.mubr.bf16.mxu0 %v6353
        %7663 = vmatmul.mubr.bf16.gmra.mrb[0].mxu0 %v6352
        %v7664 = vpop.f32.mrb[0].mxu0
        %v7665 = vadd.f32 %v6593, %v7664
        %v7666 = vpop.f32.mrb[0].mxu0
        %v7667 = vadd.f32 %v6597, %v7666
        %v7668 = vpop.f32.mrb[0].mxu0
        %v7669 = vadd.f32 %v6593, %v7668
        %v7670 = vpop.f32.mrb[0].mxu0
        %v7671 = vadd.f32 %v6597, %v7670
        %7672 = vmatprep.mubr.bf16.mxu0 %v6357
        %7673 = vmatmul.mubr.bf16.gmra.mrb[0].mxu0 %v6356
        %v7674 = vpop.f32.mrb[0].mxu0
        %v7675 = vadd.f32 %v6593, %v7674
        %v7676 = vpop.f32.mrb[0].mxu0
        %v7677 = vadd.f32 %v6597, %v7676
        %v7678 = vpop.f32.mrb[0].mxu0
        %v7679 = vadd.f32 %v6593, %v7678
        %v7680 = vpop.f32.mrb[0].mxu0
        %v7681 = vadd.f32 %v6597, %v7680
        %7682 = vmatprep.mubr.bf16.mxu0 %v6361
        %7683 = vmatmul.mubr.bf16.gmra.mrb[0].mxu0 %v6360
        %v7684 = vpop.f32.mrb[0].mxu0
        %v7685 = vadd.f32 %v6593, %v7684
        %v7686 = vpop.f32.mrb[0].mxu0
        %v7687 = vadd.f32 %v6597, %v7686
        %v7688 = vpop.f32.mrb[0].mxu0
        %v7689 = vadd.f32 %v6593, %v7688
        %v7690 = vpop.f32.mrb[0].mxu0
        %v7691 = vadd.f32 %v6597, %v7690
        %7692 = vmatprep.mubr.bf16.mxu0 %v6365
        %7693 = vmatmul.mubr.bf16.gmra.mrb[0].mxu0 %v6364
        %v7694 = vpop.f32.mrb[0].mxu0
        %v7695 = vadd.f32 %v6593, %v7694
        %v7696 = vpop.f32.mrb[0].mxu0
        %v7697 = vadd.f32 %v6597, %v7696
        %v7698 = vpop.f32.mrb[0].mxu0
        %v7699 = vadd.f32 %v6593, %v7698
        %v7700 = vpop.f32.mrb[0].mxu0
        %v7701 = vadd.f32 %v6597, %v7700
        %7702 = vmatprep.mubr.bf16.mxu0 %v6369
        %7703 = vmatmul.mubr.bf16.gmra.mrb[0].mxu0 %v6368
        %v7704 = vpop.f32.mrb[0].mxu0
        %v7705 = vadd.f32 %v6593, %v7704
        %v7706 = vpop.f32.mrb[0].mxu0
        %v7707 = vadd.f32 %v6597, %v7706
        %v7708 = vpop.f32.mrb[0].mxu0
        %v7709 = vadd.f32 %v6593, %v7708
        %v7710 = vpop.f32.mrb[0].mxu0
        %v7711 = vadd.f32 %v6597, %v7710
        %7712 = vmatprep.mubr.bf16.mxu0 %v6373
        %7713 = vmatmul.mubr.bf16.gmra.mrb[0].mxu0 %v6372
        %v7714 = vpop.f32.mrb[0].mxu0
        %v7715 = vadd.f32 %v6593, %v7714
        %v7716 = vpop.f32.mrb[0].mxu0
        %v7717 = vadd.f32 %v6597, %v7716
        %v7718 = vpop.f32.mrb[0].mxu0
        %v7719 = vadd.f32 %v6593, %v7718
        %v7720 = vpop.f32.mrb[0].mxu0
        %v7721 = vadd.f32 %v6597, %v7720
        %7722 = vmatprep.mubr.bf16.mxu0 %v6377
        %7723 = vmatmul.mubr.bf16.gmra.mrb[0].mxu0 %v6376
        %v7724 = vpop.f32.mrb[0].mxu0
        %v7725 = vadd.f32 %v6593, %v7724
        %v7726 = vpop.f32.mrb[0].mxu0
        %v7727 = vadd.f32 %v6597, %v7726
        %v7728 = vpop.f32.mrb[0].mxu0
        %v7729 = vadd.f32 %v6593, %v7728
        %v7730 = vpop.f32.mrb[0].mxu0
        %v7731 = vadd.f32 %v6597, %v7730
        %7732 = vmatprep.mubr.bf16.mxu0 %v6381
        %7733 = vmatmul.mubr.bf16.gmra.mrb[0].mxu0 %v6380
        %v7734 = vpop.f32.mrb[0].mxu0
        %v7735 = vadd.f32 %v6593, %v7734
        %v7736 = vpop.f32.mrb[0].mxu0
        %v7737 = vadd.f32 %v6597, %v7736
        %v7738 = vpop.f32.mrb[0].mxu0
        %v7739 = vadd.f32 %v6593, %v7738
        %v7740 = vpop.f32.mrb[0].mxu0
        %v7741 = vadd.f32 %v6597, %v7740
        %7742 = vmatprep.mubr.bf16.mxu0 %v6385
        %7743 = vmatmul.mubr.bf16.gmra.mrb[0].mxu0 %v6384
        %v7744 = vpop.f32.mrb[0].mxu0
        %v7745 = vadd.f32 %v6593, %v7744
        %v7746 = vpop.f32.mrb[0].mxu0
        %v7747 = vadd.f32 %v6597, %v7746
        %v7748 = vpop.f32.mrb[0].mxu0
        %v7749 = vadd.f32 %v6593, %v7748
        %v7750 = vpop.f32.mrb[0].mxu0
        %v7751 = vadd.f32 %v6597, %v7750
        %7752 = vmatprep.mubr.bf16.mxu0 %v6389
        %7753 = vmatmul.mubr.bf16.gmra.mrb[0].mxu0 %v6388
        %v7754 = vpop.f32.mrb[0].mxu0
        %v7755 = vadd.f32 %v6593, %v7754
        %v7756 = vpop.f32.mrb[0].mxu0
        %v7757 = vadd.f32 %v6597, %v7756
        %v7758 = vpop.f32.mrb[0].mxu0
        %v7759 = vadd.f32 %v6593, %v7758
        %v7760 = vpop.f32.mrb[0].mxu0
        %v7761 = vadd.f32 %v6597, %v7760
        %7762 = vmatprep.mubr.bf16.mxu0 %v6393
        %7763 = vmatmul.mubr.bf16.gmra.mrb[0].mxu0 %v6392
        %v7764 = vpop.f32.mrb[0].mxu0
        %v7765 = vadd.f32 %v6593, %v7764
        %v7766 = vpop.f32.mrb[0].mxu0
        %v7767 = vadd.f32 %v6597, %v7766
        %v7768 = vpop.f32.mrb[0].mxu0
        %v7769 = vadd.f32 %v6593, %v7768
        %v7770 = vpop.f32.mrb[0].mxu0
        %v7771 = vadd.f32 %v6597, %v7770
        %7772 = vdwg.mxu0
        %7773 = vmatprep.subr.bf16.mxu0 %v7293
        %7774 = vmatpush1.bf16.msra.mxu0 %v7292
        %7775 = vmatprep.subr.bf16.mxu0 %v7299
        %7776 = vmatpush1.bf16.msra.mxu0 %v7298
        %7777 = vmatprep.subr.bf16.mxu0 %v7305
        %7778 = vmatpush1.bf16.msra.mxu0 %v7304
        %7779 = vmatprep.subr.bf16.mxu0 %v7311
        %7780 = vmatpush1.bf16.msra.mxu0 %v7310
        %7781 = vmatprep.subr.bf16.mxu0 %v7317
        %7782 = vmatpush1.bf16.msra.mxu0 %v7316
        %7783 = vmatprep.subr.bf16.mxu0 %v7323
        %7784 = vmatpush1.bf16.msra.mxu0 %v7322
        %7785 = vmatprep.subr.bf16.mxu0 %v7329
        %7786 = vmatpush1.bf16.msra.mxu0 %v7328
        %7787 = vmatprep.subr.bf16.mxu0 %v7335
        %7788 = vmatpush1.bf16.msra.mxu0 %v7334
        %7789 = vmatprep.subr.bf16.mxu0 %v7341
        %7790 = vmatpush1.bf16.msra.mxu0 %v7340
        %7791 = vmatprep.subr.bf16.mxu0 %v7347
        %7792 = vmatpush1.bf16.msra.mxu0 %v7346
        %7793 = vmatprep.subr.bf16.mxu0 %v7353
        %7794 = vmatpush1.bf16.msra.mxu0 %v7352
        %7795 = vmatprep.subr.bf16.mxu0 %v7359
        %7796 = vmatpush1.bf16.msra.mxu0 %v7358
        %7797 = vmatprep.subr.bf16.mxu0 %v7365
        %7798 = vmatpush1.bf16.msra.mxu0 %v7364
        %7799 = vmatprep.subr.bf16.mxu0 %v7371
        %7800 = vmatpush1.bf16.msra.mxu0 %v7370
        %7801 = vmatprep.subr.bf16.mxu0 %v7377
        %7802 = vmatpush1.bf16.msra.mxu0 %v7376
        %7803 = vmatprep.subr.bf16.mxu0 %v7383
        %7804 = vmatpush1.bf16.msra.mxu0 %v7382
        %7805 = vmatprep.mubr.bf16.mxu0 %v6335
        %7806 = vmatmul.mubr.bf16.gmra.mrb[0].mxu0 %v6334
        %v7807 = vpop.f32.mrb[0].mxu0
        %v7808 = vadd.f32 %v7615, %v7807
        %v7809 = vpop.f32.mrb[0].mxu0
        %v7810 = vadd.f32 %v7617, %v7809
        %v7811 = vpop.f32.mrb[0].mxu0
        %v7812 = vadd.f32 %v7619, %v7811
        %v7813 = vpop.f32.mrb[0].mxu0
        %v7814 = vadd.f32 %v7621, %v7813
        %7815 = vmatprep.mubr.bf16.mxu0 %v6339
        %7816 = vmatmul.mubr.bf16.gmra.mrb[0].mxu0 %v6338
        %v7817 = vpop.f32.mrb[0].mxu0
        %v7818 = vadd.f32 %v7625, %v7817
        %v7819 = vpop.f32.mrb[0].mxu0
        %v7820 = vadd.f32 %v7627, %v7819
        %v7821 = vpop.f32.mrb[0].mxu0
        %v7822 = vadd.f32 %v7629, %v7821
        %v7823 = vpop.f32.mrb[0].mxu0
        %v7824 = vadd.f32 %v7631, %v7823
        %7825 = vmatprep.mubr.bf16.mxu0 %v6343
        %7826 = vmatmul.mubr.bf16.gmra.mrb[0].mxu0 %v6342
        %v7827 = vpop.f32.mrb[0].mxu0
        %v7828 = vadd.f32 %v7635, %v7827
        %v7829 = vpop.f32.mrb[0].mxu0
        %v7830 = vadd.f32 %v7637, %v7829
        %v7831 = vpop.f32.mrb[0].mxu0
        %v7832 = vadd.f32 %v7639, %v7831
        %v7833 = vpop.f32.mrb[0].mxu0
        %v7834 = vadd.f32 %v7641, %v7833
        %7835 = vmatprep.mubr.bf16.mxu0 %v6347
        %7836 = vmatmul.mubr.bf16.gmra.mrb[0].mxu0 %v6346
        %v7837 = vpop.f32.mrb[0].mxu0
        %v7838 = vadd.f32 %v7645, %v7837
        %v7839 = vpop.f32.mrb[0].mxu0
        %v7840 = vadd.f32 %v7647, %v7839
        %v7841 = vpop.f32.mrb[0].mxu0
        %v7842 = vadd.f32 %v7649, %v7841
        %v7843 = vpop.f32.mrb[0].mxu0
        %v7844 = vadd.f32 %v7651, %v7843
        %7845 = vmatprep.mubr.bf16.mxu0 %v6351
        %7846 = vmatmul.mubr.bf16.gmra.mrb[0].mxu0 %v6350
        %v7847 = vpop.f32.mrb[0].mxu0
        %v7848 = vadd.f32 %v7655, %v7847
        %v7849 = vpop.f32.mrb[0].mxu0
        %v7850 = vadd.f32 %v7657, %v7849
        %v7851 = vpop.f32.mrb[0].mxu0
        %v7852 = vadd.f32 %v7659, %v7851
        %v7853 = vpop.f32.mrb[0].mxu0
        %v7854 = vadd.f32 %v7661, %v7853
        %7855 = vmatprep.mubr.bf16.mxu0 %v6355
        %7856 = vmatmul.mubr.bf16.gmra.mrb[0].mxu0 %v6354
        %v7857 = vpop.f32.mrb[0].mxu0
        %v7858 = vadd.f32 %v7665, %v7857
        %v7859 = vpop.f32.mrb[0].mxu0
        %v7860 = vadd.f32 %v7667, %v7859
        %v7861 = vpop.f32.mrb[0].mxu0
        %v7862 = vadd.f32 %v7669, %v7861
        %v7863 = vpop.f32.mrb[0].mxu0
        %v7864 = vadd.f32 %v7671, %v7863
        %7865 = vmatprep.mubr.bf16.mxu0 %v6359
        %7866 = vmatmul.mubr.bf16.gmra.mrb[0].mxu0 %v6358
        %v7867 = vpop.f32.mrb[0].mxu0
        %v7868 = vadd.f32 %v7675, %v7867
        %v7869 = vpop.f32.mrb[0].mxu0
        %v7870 = vadd.f32 %v7677, %v7869
        %v7871 = vpop.f32.mrb[0].mxu0
        %v7872 = vadd.f32 %v7679, %v7871
        %v7873 = vpop.f32.mrb[0].mxu0
        %v7874 = vadd.f32 %v7681, %v7873
        %7875 = vmatprep.mubr.bf16.mxu0 %v6363
        %7876 = vmatmul.mubr.bf16.gmra.mrb[0].mxu0 %v6362
        %v7877 = vpop.f32.mrb[0].mxu0
        %v7878 = vadd.f32 %v7685, %v7877
        %v7879 = vpop.f32.mrb[0].mxu0
        %v7880 = vadd.f32 %v7687, %v7879
        %v7881 = vpop.f32.mrb[0].mxu0
        %v7882 = vadd.f32 %v7689, %v7881
        %v7883 = vpop.f32.mrb[0].mxu0
        %v7884 = vadd.f32 %v7691, %v7883
        %7885 = vmatprep.mubr.bf16.mxu0 %v6367
        %7886 = vmatmul.mubr.bf16.gmra.mrb[0].mxu0 %v6366
        %v7887 = vpop.f32.mrb[0].mxu0
        %v7888 = vadd.f32 %v7695, %v7887
        %v7889 = vpop.f32.mrb[0].mxu0
        %v7890 = vadd.f32 %v7697, %v7889
        %v7891 = vpop.f32.mrb[0].mxu0
        %v7892 = vadd.f32 %v7699, %v7891
        %v7893 = vpop.f32.mrb[0].mxu0
        %v7894 = vadd.f32 %v7701, %v7893
        %7895 = vmatprep.mubr.bf16.mxu0 %v6371
        %7896 = vmatmul.mubr.bf16.gmra.mrb[0].mxu0 %v6370
        %v7897 = vpop.f32.mrb[0].mxu0
        %v7898 = vadd.f32 %v7705, %v7897
        %v7899 = vpop.f32.mrb[0].mxu0
        %v7900 = vadd.f32 %v7707, %v7899
        %v7901 = vpop.f32.mrb[0].mxu0
        %v7902 = vadd.f32 %v7709, %v7901
        %v7903 = vpop.f32.mrb[0].mxu0
        %v7904 = vadd.f32 %v7711, %v7903
        %7905 = vmatprep.mubr.bf16.mxu0 %v6375
        %7906 = vmatmul.mubr.bf16.gmra.mrb[0].mxu0 %v6374
        %v7907 = vpop.f32.mrb[0].mxu0
        %v7908 = vadd.f32 %v7715, %v7907
        %v7909 = vpop.f32.mrb[0].mxu0
        %v7910 = vadd.f32 %v7717, %v7909
        %v7911 = vpop.f32.mrb[0].mxu0
        %v7912 = vadd.f32 %v7719, %v7911
        %v7913 = vpop.f32.mrb[0].mxu0
        %v7914 = vadd.f32 %v7721, %v7913
        %7915 = vmatprep.mubr.bf16.mxu0 %v6379
        %7916 = vmatmul.mubr.bf16.gmra.mrb[0].mxu0 %v6378
        %v7917 = vpop.f32.mrb[0].mxu0
        %v7918 = vadd.f32 %v7725, %v7917
        %v7919 = vpop.f32.mrb[0].mxu0
        %v7920 = vadd.f32 %v7727, %v7919
        %v7921 = vpop.f32.mrb[0].mxu0
        %v7922 = vadd.f32 %v7729, %v7921
        %v7923 = vpop.f32.mrb[0].mxu0
        %v7924 = vadd.f32 %v7731, %v7923
        %7925 = vmatprep.mubr.bf16.mxu0 %v6383
        %7926 = vmatmul.mubr.bf16.gmra.mrb[0].mxu0 %v6382
        %v7927 = vpop.f32.mrb[0].mxu0
        %v7928 = vadd.f32 %v7735, %v7927
        %v7929 = vpop.f32.mrb[0].mxu0
        %v7930 = vadd.f32 %v7737, %v7929
        %v7931 = vpop.f32.mrb[0].mxu0
        %v7932 = vadd.f32 %v7739, %v7931
        %v7933 = vpop.f32.mrb[0].mxu0
        %v7934 = vadd.f32 %v7741, %v7933
        %7935 = vmatprep.mubr.bf16.mxu0 %v6387
        %7936 = vmatmul.mubr.bf16.gmra.mrb[0].mxu0 %v6386
        %v7937 = vpop.f32.mrb[0].mxu0
        %v7938 = vadd.f32 %v7745, %v7937
        %v7939 = vpop.f32.mrb[0].mxu0
        %v7940 = vadd.f32 %v7747, %v7939
        %v7941 = vpop.f32.mrb[0].mxu0
        %v7942 = vadd.f32 %v7749, %v7941
        %v7943 = vpop.f32.mrb[0].mxu0
        %v7944 = vadd.f32 %v7751, %v7943
        %7945 = vmatprep.mubr.bf16.mxu0 %v6391
        %7946 = vmatmul.mubr.bf16.gmra.mrb[0].mxu0 %v6390
        %v7947 = vpop.f32.mrb[0].mxu0
        %v7948 = vadd.f32 %v7755, %v7947
        %v7949 = vpop.f32.mrb[0].mxu0
        %v7950 = vadd.f32 %v7757, %v7949
        %v7951 = vpop.f32.mrb[0].mxu0
        %v7952 = vadd.f32 %v7759, %v7951
        %v7953 = vpop.f32.mrb[0].mxu0
        %v7954 = vadd.f32 %v7761, %v7953
        %7955 = vmatprep.mubr.bf16.mxu0 %v6395
        %7956 = vmatmul.mubr.bf16.gmra.mrb[0].mxu0 %v6394
        %v7957 = vpop.f32.mrb[0].mxu0
        %v7958 = vadd.f32 %v7765, %v7957
        %v7959 = vpop.f32.mrb[0].mxu0
        %v7960 = vadd.f32 %v7767, %v7959
        %v7961 = vpop.f32.mrb[0].mxu0
        %v7962 = vadd.f32 %v7769, %v7961
        %v7963 = vpop.f32.mrb[0].mxu0
        %v7964 = vadd.f32 %v7771, %v7963
        %7965 = vdwg.mxu0
        %7966 = vmatprep.subr.bf16.mxu0 %v7199
        %7967 = vmatpush1.bf16.msra.mxu0 %v7198
        %7968 = vmatprep.subr.bf16.mxu0 %v7205
        %7969 = vmatpush1.bf16.msra.mxu0 %v7204
        %7970 = vmatprep.subr.bf16.mxu0 %v7211
        %7971 = vmatpush1.bf16.msra.mxu0 %v7210
        %7972 = vmatprep.subr.bf16.mxu0 %v7217
        %7973 = vmatpush1.bf16.msra.mxu0 %v7216
        %7974 = vmatprep.subr.bf16.mxu0 %v7223
        %7975 = vmatpush1.bf16.msra.mxu0 %v7222
        %7976 = vmatprep.subr.bf16.mxu0 %v7229
        %7977 = vmatpush1.bf16.msra.mxu0 %v7228
        %7978 = vmatprep.subr.bf16.mxu0 %v7235
        %7979 = vmatpush1.bf16.msra.mxu0 %v7234
        %7980 = vmatprep.subr.bf16.mxu0 %v7241
        %7981 = vmatpush1.bf16.msra.mxu0 %v7240
        %7982 = vmatprep.subr.bf16.mxu0 %v7247
        %7983 = vmatpush1.bf16.msra.mxu0 %v7246
        %7984 = vmatprep.subr.bf16.mxu0 %v7253
        %7985 = vmatpush1.bf16.msra.mxu0 %v7252
        %7986 = vmatprep.subr.bf16.mxu0 %v7259
        %7987 = vmatpush1.bf16.msra.mxu0 %v7258
        %7988 = vmatprep.subr.bf16.mxu0 %v7265
        %7989 = vmatpush1.bf16.msra.mxu0 %v7264
        %7990 = vmatprep.subr.bf16.mxu0 %v7271
        %7991 = vmatpush1.bf16.msra.mxu0 %v7270
        %7992 = vmatprep.subr.bf16.mxu0 %v7277
        %7993 = vmatpush1.bf16.msra.mxu0 %v7276
        %7994 = vmatprep.subr.bf16.mxu0 %v7283
        %7995 = vmatpush1.bf16.msra.mxu0 %v7282
        %7996 = vmatprep.subr.bf16.mxu0 %v7289
        %7997 = vmatpush1.bf16.msra.mxu0 %v7288
        %7998 = vmatprep.mubr.bf16.mxu0 %v6333
        %7999 = vmatmul.mubr.bf16.gmra.mrb[0].mxu0 %v6332
        %v8000 = vpop.f32.mrb[0].mxu0
        %v8001 = vadd.f32 %v6601, %v8000
        %v8002 = vpop.f32.mrb[0].mxu0
        %v8003 = vadd.f32 %v6605, %v8002
        %v8004 = vpop.f32.mrb[0].mxu0
        %v8005 = vadd.f32 %v6601, %v8004
        %v8006 = vpop.f32.mrb[0].mxu0
        %v8007 = vadd.f32 %v6605, %v8006
        %8008 = vmatprep.mubr.bf16.mxu0 %v6337
        %8009 = vmatmul.mubr.bf16.gmra.mrb[0].mxu0 %v6336
        %v8010 = vpop.f32.mrb[0].mxu0
        %v8011 = vadd.f32 %v6601, %v8010
        %v8012 = vpop.f32.mrb[0].mxu0
        %v8013 = vadd.f32 %v6605, %v8012
        %v8014 = vpop.f32.mrb[0].mxu0
        %v8015 = vadd.f32 %v6601, %v8014
        %v8016 = vpop.f32.mrb[0].mxu0
        %v8017 = vadd.f32 %v6605, %v8016
        %8018 = vmatprep.mubr.bf16.mxu0 %v6341
        %8019 = vmatmul.mubr.bf16.gmra.mrb[0].mxu0 %v6340
        %v8020 = vpop.f32.mrb[0].mxu0
        %v8021 = vadd.f32 %v6601, %v8020
        %v8022 = vpop.f32.mrb[0].mxu0
        %v8023 = vadd.f32 %v6605, %v8022
        %v8024 = vpop.f32.mrb[0].mxu0
        %v8025 = vadd.f32 %v6601, %v8024
        %v8026 = vpop.f32.mrb[0].mxu0
        %v8027 = vadd.f32 %v6605, %v8026
        %8028 = vmatprep.mubr.bf16.mxu0 %v6345
        %8029 = vmatmul.mubr.bf16.gmra.mrb[0].mxu0 %v6344
        %v8030 = vpop.f32.mrb[0].mxu0
        %v8031 = vadd.f32 %v6601, %v8030
        %v8032 = vpop.f32.mrb[0].mxu0
        %v8033 = vadd.f32 %v6605, %v8032
        %v8034 = vpop.f32.mrb[0].mxu0
        %v8035 = vadd.f32 %v6601, %v8034
        %v8036 = vpop.f32.mrb[0].mxu0
        %v8037 = vadd.f32 %v6605, %v8036
        %8038 = vmatprep.mubr.bf16.mxu0 %v6349
        %8039 = vmatmul.mubr.bf16.gmra.mrb[0].mxu0 %v6348
        %v8040 = vpop.f32.mrb[0].mxu0
        %v8041 = vadd.f32 %v6601, %v8040
        %v8042 = vpop.f32.mrb[0].mxu0
        %v8043 = vadd.f32 %v6605, %v8042
        %v8044 = vpop.f32.mrb[0].mxu0
        %v8045 = vadd.f32 %v6601, %v8044
        %v8046 = vpop.f32.mrb[0].mxu0
        %v8047 = vadd.f32 %v6605, %v8046
        %8048 = vmatprep.mubr.bf16.mxu0 %v6353
        %8049 = vmatmul.mubr.bf16.gmra.mrb[0].mxu0 %v6352
        %v8050 = vpop.f32.mrb[0].mxu0
        %v8051 = vadd.f32 %v6601, %v8050
        %v8052 = vpop.f32.mrb[0].mxu0
        %v8053 = vadd.f32 %v6605, %v8052
        %v8054 = vpop.f32.mrb[0].mxu0
        %v8055 = vadd.f32 %v6601, %v8054
        %v8056 = vpop.f32.mrb[0].mxu0
        %v8057 = vadd.f32 %v6605, %v8056
        %8058 = vmatprep.mubr.bf16.mxu0 %v6357
        %8059 = vmatmul.mubr.bf16.gmra.mrb[0].mxu0 %v6356
        %v8060 = vpop.f32.mrb[0].mxu0
        %v8061 = vadd.f32 %v6601, %v8060
        %v8062 = vpop.f32.mrb[0].mxu0
        %v8063 = vadd.f32 %v6605, %v8062
        %v8064 = vpop.f32.mrb[0].mxu0
        %v8065 = vadd.f32 %v6601, %v8064
        %v8066 = vpop.f32.mrb[0].mxu0
        %v8067 = vadd.f32 %v6605, %v8066
        %8068 = vmatprep.mubr.bf16.mxu0 %v6361
        %8069 = vmatmul.mubr.bf16.gmra.mrb[0].mxu0 %v6360
        %v8070 = vpop.f32.mrb[0].mxu0
        %v8071 = vadd.f32 %v6601, %v8070
        %v8072 = vpop.f32.mrb[0].mxu0
        %v8073 = vadd.f32 %v6605, %v8072
        %v8074 = vpop.f32.mrb[0].mxu0
        %v8075 = vadd.f32 %v6601, %v8074
        %v8076 = vpop.f32.mrb[0].mxu0
        %v8077 = vadd.f32 %v6605, %v8076
        %8078 = vmatprep.mubr.bf16.mxu0 %v6365
        %8079 = vmatmul.mubr.bf16.gmra.mrb[0].mxu0 %v6364
        %v8080 = vpop.f32.mrb[0].mxu0
        %v8081 = vadd.f32 %v6601, %v8080
        %v8082 = vpop.f32.mrb[0].mxu0
        %v8083 = vadd.f32 %v6605, %v8082
        %v8084 = vpop.f32.mrb[0].mxu0
        %v8085 = vadd.f32 %v6601, %v8084
        %v8086 = vpop.f32.mrb[0].mxu0
        %v8087 = vadd.f32 %v6605, %v8086
        %8088 = vmatprep.mubr.bf16.mxu0 %v6369
        %8089 = vmatmul.mubr.bf16.gmra.mrb[0].mxu0 %v6368
        %v8090 = vpop.f32.mrb[0].mxu0
        %v8091 = vadd.f32 %v6601, %v8090
        %v8092 = vpop.f32.mrb[0].mxu0
        %v8093 = vadd.f32 %v6605, %v8092
        %v8094 = vpop.f32.mrb[0].mxu0
        %v8095 = vadd.f32 %v6601, %v8094
        %v8096 = vpop.f32.mrb[0].mxu0
        %v8097 = vadd.f32 %v6605, %v8096
        %8098 = vmatprep.mubr.bf16.mxu0 %v6373
        %8099 = vmatmul.mubr.bf16.gmra.mrb[0].mxu0 %v6372
        %v8100 = vpop.f32.mrb[0].mxu0
        %v8101 = vadd.f32 %v6601, %v8100
        %v8102 = vpop.f32.mrb[0].mxu0
        %v8103 = vadd.f32 %v6605, %v8102
        %v8104 = vpop.f32.mrb[0].mxu0
        %v8105 = vadd.f32 %v6601, %v8104
        %v8106 = vpop.f32.mrb[0].mxu0
        %v8107 = vadd.f32 %v6605, %v8106
        %8108 = vmatprep.mubr.bf16.mxu0 %v6377
        %8109 = vmatmul.mubr.bf16.gmra.mrb[0].mxu0 %v6376
        %v8110 = vpop.f32.mrb[0].mxu0
        %v8111 = vadd.f32 %v6601, %v8110
        %v8112 = vpop.f32.mrb[0].mxu0
        %v8113 = vadd.f32 %v6605, %v8112
        %v8114 = vpop.f32.mrb[0].mxu0
        %v8115 = vadd.f32 %v6601, %v8114
        %v8116 = vpop.f32.mrb[0].mxu0
        %v8117 = vadd.f32 %v6605, %v8116
        %8118 = vmatprep.mubr.bf16.mxu0 %v6381
        %8119 = vmatmul.mubr.bf16.gmra.mrb[0].mxu0 %v6380
        %v8120 = vpop.f32.mrb[0].mxu0
        %v8121 = vadd.f32 %v6601, %v8120
        %v8122 = vpop.f32.mrb[0].mxu0
        %v8123 = vadd.f32 %v6605, %v8122
        %v8124 = vpop.f32.mrb[0].mxu0
        %v8125 = vadd.f32 %v6601, %v8124
        %v8126 = vpop.f32.mrb[0].mxu0
        %v8127 = vadd.f32 %v6605, %v8126
        %8128 = vmatprep.mubr.bf16.mxu0 %v6385
        %8129 = vmatmul.mubr.bf16.gmra.mrb[0].mxu0 %v6384
        %v8130 = vpop.f32.mrb[0].mxu0
        %v8131 = vadd.f32 %v6601, %v8130
        %v8132 = vpop.f32.mrb[0].mxu0
        %v8133 = vadd.f32 %v6605, %v8132
        %v8134 = vpop.f32.mrb[0].mxu0
        %v8135 = vadd.f32 %v6601, %v8134
        %v8136 = vpop.f32.mrb[0].mxu0
        %v8137 = vadd.f32 %v6605, %v8136
        %8138 = vmatprep.mubr.bf16.mxu0 %v6389
        %8139 = vmatmul.mubr.bf16.gmra.mrb[0].mxu0 %v6388
        %v8140 = vpop.f32.mrb[0].mxu0
        %v8141 = vadd.f32 %v6601, %v8140
        %v8142 = vpop.f32.mrb[0].mxu0
        %v8143 = vadd.f32 %v6605, %v8142
        %v8144 = vpop.f32.mrb[0].mxu0
        %v8145 = vadd.f32 %v6601, %v8144
        %v8146 = vpop.f32.mrb[0].mxu0
        %v8147 = vadd.f32 %v6605, %v8146
        %8148 = vmatprep.mubr.bf16.mxu0 %v6393
        %8149 = vmatmul.mubr.bf16.gmra.mrb[0].mxu0 %v6392
        %v8150 = vpop.f32.mrb[0].mxu0
        %v8151 = vadd.f32 %v6601, %v8150
        %v8152 = vpop.f32.mrb[0].mxu0
        %v8153 = vadd.f32 %v6605, %v8152
        %v8154 = vpop.f32.mrb[0].mxu0
        %v8155 = vadd.f32 %v6601, %v8154
        %v8156 = vpop.f32.mrb[0].mxu0
        %v8157 = vadd.f32 %v6605, %v8156
        %8158 = vdwg.mxu0
        %8159 = vmatprep.subr.bf16.mxu0 %v7295
        %8160 = vmatpush1.bf16.msra.mxu0 %v7294
        %8161 = vmatprep.subr.bf16.mxu0 %v7301
        %8162 = vmatpush1.bf16.msra.mxu0 %v7300
        %8163 = vmatprep.subr.bf16.mxu0 %v7307
        %8164 = vmatpush1.bf16.msra.mxu0 %v7306
        %8165 = vmatprep.subr.bf16.mxu0 %v7313
        %8166 = vmatpush1.bf16.msra.mxu0 %v7312
        %8167 = vmatprep.subr.bf16.mxu0 %v7319
        %8168 = vmatpush1.bf16.msra.mxu0 %v7318
        %8169 = vmatprep.subr.bf16.mxu0 %v7325
        %8170 = vmatpush1.bf16.msra.mxu0 %v7324
        %8171 = vmatprep.subr.bf16.mxu0 %v7331
        %8172 = vmatpush1.bf16.msra.mxu0 %v7330
        %8173 = vmatprep.subr.bf16.mxu0 %v7337
        %8174 = vmatpush1.bf16.msra.mxu0 %v7336
        %8175 = vmatprep.subr.bf16.mxu0 %v7343
        %8176 = vmatpush1.bf16.msra.mxu0 %v7342
        %8177 = vmatprep.subr.bf16.mxu0 %v7349
        %8178 = vmatpush1.bf16.msra.mxu0 %v7348
        %8179 = vmatprep.subr.bf16.mxu0 %v7355
        %8180 = vmatpush1.bf16.msra.mxu0 %v7354
        %8181 = vmatprep.subr.bf16.mxu0 %v7361
        %8182 = vmatpush1.bf16.msra.mxu0 %v7360
        %8183 = vmatprep.subr.bf16.mxu0 %v7367
        %8184 = vmatpush1.bf16.msra.mxu0 %v7366
        %8185 = vmatprep.subr.bf16.mxu0 %v7373
        %8186 = vmatpush1.bf16.msra.mxu0 %v7372
        %8187 = vmatprep.subr.bf16.mxu0 %v7379
        %8188 = vmatpush1.bf16.msra.mxu0 %v7378
        %8189 = vmatprep.subr.bf16.mxu0 %v7385
        %8190 = vmatpush1.bf16.msra.mxu0 %v7384
        %8191 = vmatprep.mubr.bf16.mxu0 %v6335
        %8192 = vmatmul.mubr.bf16.gmra.mrb[0].mxu0 %v6334
        %v8193 = vpop.f32.mrb[0].mxu0
        %v8194 = vadd.f32 %v8001, %v8193
        %v8195 = vpop.f32.mrb[0].mxu0
        %v8196 = vadd.f32 %v8003, %v8195
        %v8197 = vpop.f32.mrb[0].mxu0
        %v8198 = vadd.f32 %v8005, %v8197
        %v8199 = vpop.f32.mrb[0].mxu0
        %v8200 = vadd.f32 %v8007, %v8199
        %8201 = vmatprep.mubr.bf16.mxu0 %v6339
        %8202 = vmatmul.mubr.bf16.gmra.mrb[0].mxu0 %v6338
        %v8203 = vpop.f32.mrb[0].mxu0
        %v8204 = vadd.f32 %v8011, %v8203
        %v8205 = vpop.f32.mrb[0].mxu0
        %v8206 = vadd.f32 %v8013, %v8205
        %v8207 = vpop.f32.mrb[0].mxu0
        %v8208 = vadd.f32 %v8015, %v8207
        %v8209 = vpop.f32.mrb[0].mxu0
        %v8210 = vadd.f32 %v8017, %v8209
        %8211 = vmatprep.mubr.bf16.mxu0 %v6343
        %8212 = vmatmul.mubr.bf16.gmra.mrb[0].mxu0 %v6342
        %v8213 = vpop.f32.mrb[0].mxu0
        %v8214 = vadd.f32 %v8021, %v8213
        %v8215 = vpop.f32.mrb[0].mxu0
        %v8216 = vadd.f32 %v8023, %v8215
        %v8217 = vpop.f32.mrb[0].mxu0
        %v8218 = vadd.f32 %v8025, %v8217
        %v8219 = vpop.f32.mrb[0].mxu0
        %v8220 = vadd.f32 %v8027, %v8219
        %8221 = vmatprep.mubr.bf16.mxu0 %v6347
        %8222 = vmatmul.mubr.bf16.gmra.mrb[0].mxu0 %v6346
        %v8223 = vpop.f32.mrb[0].mxu0
        %v8224 = vadd.f32 %v8031, %v8223
        %v8225 = vpop.f32.mrb[0].mxu0
        %v8226 = vadd.f32 %v8033, %v8225
        %v8227 = vpop.f32.mrb[0].mxu0
        %v8228 = vadd.f32 %v8035, %v8227
        %v8229 = vpop.f32.mrb[0].mxu0
        %v8230 = vadd.f32 %v8037, %v8229
        %8231 = vmatprep.mubr.bf16.mxu0 %v6351
        %8232 = vmatmul.mubr.bf16.gmra.mrb[0].mxu0 %v6350
        %v8233 = vpop.f32.mrb[0].mxu0
        %v8234 = vadd.f32 %v8041, %v8233
        %v8235 = vpop.f32.mrb[0].mxu0
        %v8236 = vadd.f32 %v8043, %v8235
        %v8237 = vpop.f32.mrb[0].mxu0
        %v8238 = vadd.f32 %v8045, %v8237
        %v8239 = vpop.f32.mrb[0].mxu0
        %v8240 = vadd.f32 %v8047, %v8239
        %8241 = vmatprep.mubr.bf16.mxu0 %v6355
        %8242 = vmatmul.mubr.bf16.gmra.mrb[0].mxu0 %v6354
        %v8243 = vpop.f32.mrb[0].mxu0
        %v8244 = vadd.f32 %v8051, %v8243
        %v8245 = vpop.f32.mrb[0].mxu0
        %v8246 = vadd.f32 %v8053, %v8245
        %v8247 = vpop.f32.mrb[0].mxu0
        %v8248 = vadd.f32 %v8055, %v8247
        %v8249 = vpop.f32.mrb[0].mxu0
        %v8250 = vadd.f32 %v8057, %v8249
        %8251 = vmatprep.mubr.bf16.mxu0 %v6359
        %8252 = vmatmul.mubr.bf16.gmra.mrb[0].mxu0 %v6358
        %v8253 = vpop.f32.mrb[0].mxu0
        %v8254 = vadd.f32 %v8061, %v8253
        %v8255 = vpop.f32.mrb[0].mxu0
        %v8256 = vadd.f32 %v8063, %v8255
        %v8257 = vpop.f32.mrb[0].mxu0
        %v8258 = vadd.f32 %v8065, %v8257
        %v8259 = vpop.f32.mrb[0].mxu0
        %v8260 = vadd.f32 %v8067, %v8259
        %8261 = vmatprep.mubr.bf16.mxu0 %v6363
        %8262 = vmatmul.mubr.bf16.gmra.mrb[0].mxu0 %v6362
        %v8263 = vpop.f32.mrb[0].mxu0
        %v8264 = vadd.f32 %v8071, %v8263
        %v8265 = vpop.f32.mrb[0].mxu0
        %v8266 = vadd.f32 %v8073, %v8265
        %v8267 = vpop.f32.mrb[0].mxu0
        %v8268 = vadd.f32 %v8075, %v8267
        %v8269 = vpop.f32.mrb[0].mxu0
        %v8270 = vadd.f32 %v8077, %v8269
        %8271 = vmatprep.mubr.bf16.mxu0 %v6367
        %8272 = vmatmul.mubr.bf16.gmra.mrb[0].mxu0 %v6366
        %v8273 = vpop.f32.mrb[0].mxu0
        %v8274 = vadd.f32 %v8081, %v8273
        %v8275 = vpop.f32.mrb[0].mxu0
        %v8276 = vadd.f32 %v8083, %v8275
        %v8277 = vpop.f32.mrb[0].mxu0
        %v8278 = vadd.f32 %v8085, %v8277
        %v8279 = vpop.f32.mrb[0].mxu0
        %v8280 = vadd.f32 %v8087, %v8279
        %8281 = vmatprep.mubr.bf16.mxu0 %v6371
        %8282 = vmatmul.mubr.bf16.gmra.mrb[0].mxu0 %v6370
        %v8283 = vpop.f32.mrb[0].mxu0
        %v8284 = vadd.f32 %v8091, %v8283
        %v8285 = vpop.f32.mrb[0].mxu0
        %v8286 = vadd.f32 %v8093, %v8285
        %v8287 = vpop.f32.mrb[0].mxu0
        %v8288 = vadd.f32 %v8095, %v8287
        %v8289 = vpop.f32.mrb[0].mxu0
        %v8290 = vadd.f32 %v8097, %v8289
        %8291 = vmatprep.mubr.bf16.mxu0 %v6375
        %8292 = vmatmul.mubr.bf16.gmra.mrb[0].mxu0 %v6374
        %v8293 = vpop.f32.mrb[0].mxu0
        %v8294 = vadd.f32 %v8101, %v8293
        %v8295 = vpop.f32.mrb[0].mxu0
        %v8296 = vadd.f32 %v8103, %v8295
        %v8297 = vpop.f32.mrb[0].mxu0
        %v8298 = vadd.f32 %v8105, %v8297
        %v8299 = vpop.f32.mrb[0].mxu0
        %v8300 = vadd.f32 %v8107, %v8299
        %8301 = vmatprep.mubr.bf16.mxu0 %v6379
        %8302 = vmatmul.mubr.bf16.gmra.mrb[0].mxu0 %v6378
        %v8303 = vpop.f32.mrb[0].mxu0
        %v8304 = vadd.f32 %v8111, %v8303
        %v8305 = vpop.f32.mrb[0].mxu0
        %v8306 = vadd.f32 %v8113, %v8305
        %v8307 = vpop.f32.mrb[0].mxu0
        %v8308 = vadd.f32 %v8115, %v8307
        %v8309 = vpop.f32.mrb[0].mxu0
        %v8310 = vadd.f32 %v8117, %v8309
        %8311 = vmatprep.mubr.bf16.mxu0 %v6383
        %8312 = vmatmul.mubr.bf16.gmra.mrb[0].mxu0 %v6382
        %v8313 = vpop.f32.mrb[0].mxu0
        %v8314 = vadd.f32 %v8121, %v8313
        %v8315 = vpop.f32.mrb[0].mxu0
        %v8316 = vadd.f32 %v8123, %v8315
        %v8317 = vpop.f32.mrb[0].mxu0
        %v8318 = vadd.f32 %v8125, %v8317
        %v8319 = vpop.f32.mrb[0].mxu0
        %v8320 = vadd.f32 %v8127, %v8319
        %8321 = vmatprep.mubr.bf16.mxu0 %v6387
        %8322 = vmatmul.mubr.bf16.gmra.mrb[0].mxu0 %v6386
        %v8323 = vpop.f32.mrb[0].mxu0
        %v8324 = vadd.f32 %v8131, %v8323
        %v8325 = vpop.f32.mrb[0].mxu0
        %v8326 = vadd.f32 %v8133, %v8325
        %v8327 = vpop.f32.mrb[0].mxu0
        %v8328 = vadd.f32 %v8135, %v8327
        %v8329 = vpop.f32.mrb[0].mxu0
        %v8330 = vadd.f32 %v8137, %v8329
        %8331 = vmatprep.mubr.bf16.mxu0 %v6391
        %8332 = vmatmul.mubr.bf16.gmra.mrb[0].mxu0 %v6390
        %v8333 = vpop.f32.mrb[0].mxu0
        %v8334 = vadd.f32 %v8141, %v8333
        %v8335 = vpop.f32.mrb[0].mxu0
        %v8336 = vadd.f32 %v8143, %v8335
        %v8337 = vpop.f32.mrb[0].mxu0
        %v8338 = vadd.f32 %v8145, %v8337
        %v8339 = vpop.f32.mrb[0].mxu0
        %v8340 = vadd.f32 %v8147, %v8339
        %8341 = vmatprep.mubr.bf16.mxu0 %v6395
        %8342 = vmatmul.mubr.bf16.gmra.mrb[0].mxu0 %v6394
        %v8343 = vpop.f32.mrb[0].mxu0
        %v8344 = vadd.f32 %v8151, %v8343
        %v8345 = vpop.f32.mrb[0].mxu0
        %v8346 = vadd.f32 %v8153, %v8345
        %v8347 = vpop.f32.mrb[0].mxu0
        %v8348 = vadd.f32 %v8155, %v8347
        %v8349 = vpop.f32.mrb[0].mxu0
        %v8350 = vadd.f32 %v8157, %v8349
        %8351 = vdwg.mxu0
        %8352 = vmatprep.subr.bf16.mxu0 %v7201
        %8353 = vmatpush1.bf16.msra.mxu0 %v7200
        %8354 = vmatprep.subr.bf16.mxu0 %v7207
        %8355 = vmatpush1.bf16.msra.mxu0 %v7206
        %8356 = vmatprep.subr.bf16.mxu0 %v7213
        %8357 = vmatpush1.bf16.msra.mxu0 %v7212
        %8358 = vmatprep.subr.bf16.mxu0 %v7219
        %8359 = vmatpush1.bf16.msra.mxu0 %v7218
        %8360 = vmatprep.subr.bf16.mxu0 %v7225
        %8361 = vmatpush1.bf16.msra.mxu0 %v7224
        %8362 = vmatprep.subr.bf16.mxu0 %v7231
        %8363 = vmatpush1.bf16.msra.mxu0 %v7230
        %8364 = vmatprep.subr.bf16.mxu0 %v7237
        %8365 = vmatpush1.bf16.msra.mxu0 %v7236
        %8366 = vmatprep.subr.bf16.mxu0 %v7243
        %8367 = vmatpush1.bf16.msra.mxu0 %v7242
        %8368 = vmatprep.subr.bf16.mxu0 %v7249
        %8369 = vmatpush1.bf16.msra.mxu0 %v7248
        %8370 = vmatprep.subr.bf16.mxu0 %v7255
        %8371 = vmatpush1.bf16.msra.mxu0 %v7254
        %8372 = vmatprep.subr.bf16.mxu0 %v7261
        %8373 = vmatpush1.bf16.msra.mxu0 %v7260
        %8374 = vmatprep.subr.bf16.mxu0 %v7267
        %8375 = vmatpush1.bf16.msra.mxu0 %v7266
        %8376 = vmatprep.subr.bf16.mxu0 %v7273
        %8377 = vmatpush1.bf16.msra.mxu0 %v7272
        %8378 = vmatprep.subr.bf16.mxu0 %v7279
        %8379 = vmatpush1.bf16.msra.mxu0 %v7278
        %8380 = vmatprep.subr.bf16.mxu0 %v7285
        %8381 = vmatpush1.bf16.msra.mxu0 %v7284
        %8382 = vmatprep.subr.bf16.mxu0 %v7291
        %8383 = vmatpush1.bf16.msra.mxu0 %v7290
        %8384 = vmatprep.mubr.bf16.mxu0 %v6333
        %8385 = vmatmul.mubr.bf16.gmra.mrb[0].mxu0 %v6332
        %v8386 = vpop.f32.mrb[0].mxu0
        %v8387 = vadd.f32 %v6609, %v8386
        %v8388 = vpop.f32.mrb[0].mxu0
        %v8389 = vadd.f32 %v6613, %v8388
        %v8390 = vpop.f32.mrb[0].mxu0
        %v8391 = vadd.f32 %v6609, %v8390
        %v8392 = vpop.f32.mrb[0].mxu0
        %v8393 = vadd.f32 %v6613, %v8392
        %8394 = vmatprep.mubr.bf16.mxu0 %v6337
        %8395 = vmatmul.mubr.bf16.gmra.mrb[0].mxu0 %v6336
        %v8396 = vpop.f32.mrb[0].mxu0
        %v8397 = vadd.f32 %v6609, %v8396
        %v8398 = vpop.f32.mrb[0].mxu0
        %v8399 = vadd.f32 %v6613, %v8398
        %v8400 = vpop.f32.mrb[0].mxu0
        %v8401 = vadd.f32 %v6609, %v8400
        %v8402 = vpop.f32.mrb[0].mxu0
        %v8403 = vadd.f32 %v6613, %v8402
        %8404 = vmatprep.mubr.bf16.mxu0 %v6341
        %8405 = vmatmul.mubr.bf16.gmra.mrb[0].mxu0 %v6340
        %v8406 = vpop.f32.mrb[0].mxu0
        %v8407 = vadd.f32 %v6609, %v8406
        %v8408 = vpop.f32.mrb[0].mxu0
        %v8409 = vadd.f32 %v6613, %v8408
        %v8410 = vpop.f32.mrb[0].mxu0
        %v8411 = vadd.f32 %v6609, %v8410
        %v8412 = vpop.f32.mrb[0].mxu0
        %v8413 = vadd.f32 %v6613, %v8412
        %8414 = vmatprep.mubr.bf16.mxu0 %v6345
        %8415 = vmatmul.mubr.bf16.gmra.mrb[0].mxu0 %v6344
        %v8416 = vpop.f32.mrb[0].mxu0
        %v8417 = vadd.f32 %v6609, %v8416
        %v8418 = vpop.f32.mrb[0].mxu0
        %v8419 = vadd.f32 %v6613, %v8418
        %v8420 = vpop.f32.mrb[0].mxu0
        %v8421 = vadd.f32 %v6609, %v8420
        %v8422 = vpop.f32.mrb[0].mxu0
        %v8423 = vadd.f32 %v6613, %v8422
        %8424 = vmatprep.mubr.bf16.mxu0 %v6349
        %8425 = vmatmul.mubr.bf16.gmra.mrb[0].mxu0 %v6348
        %v8426 = vpop.f32.mrb[0].mxu0
        %v8427 = vadd.f32 %v6609, %v8426
        %v8428 = vpop.f32.mrb[0].mxu0
        %v8429 = vadd.f32 %v6613, %v8428
        %v8430 = vpop.f32.mrb[0].mxu0
        %v8431 = vadd.f32 %v6609, %v8430
        %v8432 = vpop.f32.mrb[0].mxu0
        %v8433 = vadd.f32 %v6613, %v8432
        %8434 = vmatprep.mubr.bf16.mxu0 %v6353
        %8435 = vmatmul.mubr.bf16.gmra.mrb[0].mxu0 %v6352
        %v8436 = vpop.f32.mrb[0].mxu0
        %v8437 = vadd.f32 %v6609, %v8436
        %v8438 = vpop.f32.mrb[0].mxu0
        %v8439 = vadd.f32 %v6613, %v8438
        %v8440 = vpop.f32.mrb[0].mxu0
        %v8441 = vadd.f32 %v6609, %v8440
        %v8442 = vpop.f32.mrb[0].mxu0
        %v8443 = vadd.f32 %v6613, %v8442
        %8444 = vmatprep.mubr.bf16.mxu0 %v6357
        %8445 = vmatmul.mubr.bf16.gmra.mrb[0].mxu0 %v6356
        %v8446 = vpop.f32.mrb[0].mxu0
        %v8447 = vadd.f32 %v6609, %v8446
        %v8448 = vpop.f32.mrb[0].mxu0
        %v8449 = vadd.f32 %v6613, %v8448
        %v8450 = vpop.f32.mrb[0].mxu0
        %v8451 = vadd.f32 %v6609, %v8450
        %v8452 = vpop.f32.mrb[0].mxu0
        %v8453 = vadd.f32 %v6613, %v8452
        %8454 = vmatprep.mubr.bf16.mxu0 %v6361
        %8455 = vmatmul.mubr.bf16.gmra.mrb[0].mxu0 %v6360
        %v8456 = vpop.f32.mrb[0].mxu0
        %v8457 = vadd.f32 %v6609, %v8456
        %v8458 = vpop.f32.mrb[0].mxu0
        %v8459 = vadd.f32 %v6613, %v8458
        %v8460 = vpop.f32.mrb[0].mxu0
        %v8461 = vadd.f32 %v6609, %v8460
        %v8462 = vpop.f32.mrb[0].mxu0
        %v8463 = vadd.f32 %v6613, %v8462
        %8464 = vmatprep.mubr.bf16.mxu0 %v6365
        %8465 = vmatmul.mubr.bf16.gmra.mrb[0].mxu0 %v6364
        %v8466 = vpop.f32.mrb[0].mxu0
        %v8467 = vadd.f32 %v6609, %v8466
        %v8468 = vpop.f32.mrb[0].mxu0
        %v8469 = vadd.f32 %v6613, %v8468
        %v8470 = vpop.f32.mrb[0].mxu0
        %v8471 = vadd.f32 %v6609, %v8470
        %v8472 = vpop.f32.mrb[0].mxu0
        %v8473 = vadd.f32 %v6613, %v8472
        %8474 = vmatprep.mubr.bf16.mxu0 %v6369
        %8475 = vmatmul.mubr.bf16.gmra.mrb[0].mxu0 %v6368
        %v8476 = vpop.f32.mrb[0].mxu0
        %v8477 = vadd.f32 %v6609, %v8476
        %v8478 = vpop.f32.mrb[0].mxu0
        %v8479 = vadd.f32 %v6613, %v8478
        %v8480 = vpop.f32.mrb[0].mxu0
        %v8481 = vadd.f32 %v6609, %v8480
        %v8482 = vpop.f32.mrb[0].mxu0
        %v8483 = vadd.f32 %v6613, %v8482
        %8484 = vmatprep.mubr.bf16.mxu0 %v6373
        %8485 = vmatmul.mubr.bf16.gmra.mrb[0].mxu0 %v6372
        %v8486 = vpop.f32.mrb[0].mxu0
        %v8487 = vadd.f32 %v6609, %v8486
        %v8488 = vpop.f32.mrb[0].mxu0
        %v8489 = vadd.f32 %v6613, %v8488
        %v8490 = vpop.f32.mrb[0].mxu0
        %v8491 = vadd.f32 %v6609, %v8490
        %v8492 = vpop.f32.mrb[0].mxu0
        %v8493 = vadd.f32 %v6613, %v8492
        %8494 = vmatprep.mubr.bf16.mxu0 %v6377
        %8495 = vmatmul.mubr.bf16.gmra.mrb[0].mxu0 %v6376
        %v8496 = vpop.f32.mrb[0].mxu0
        %v8497 = vadd.f32 %v6609, %v8496
        %v8498 = vpop.f32.mrb[0].mxu0
        %v8499 = vadd.f32 %v6613, %v8498
        %v8500 = vpop.f32.mrb[0].mxu0
        %v8501 = vadd.f32 %v6609, %v8500
        %v8502 = vpop.f32.mrb[0].mxu0
        %v8503 = vadd.f32 %v6613, %v8502
        %8504 = vmatprep.mubr.bf16.mxu0 %v6381
        %8505 = vmatmul.mubr.bf16.gmra.mrb[0].mxu0 %v6380
        %v8506 = vpop.f32.mrb[0].mxu0
        %v8507 = vadd.f32 %v6609, %v8506
        %v8508 = vpop.f32.mrb[0].mxu0
        %v8509 = vadd.f32 %v6613, %v8508
        %v8510 = vpop.f32.mrb[0].mxu0
        %v8511 = vadd.f32 %v6609, %v8510
        %v8512 = vpop.f32.mrb[0].mxu0
        %v8513 = vadd.f32 %v6613, %v8512
        %8514 = vmatprep.mubr.bf16.mxu0 %v6385
        %8515 = vmatmul.mubr.bf16.gmra.mrb[0].mxu0 %v6384
        %v8516 = vpop.f32.mrb[0].mxu0
        %v8517 = vadd.f32 %v6609, %v8516
        %v8518 = vpop.f32.mrb[0].mxu0
        %v8519 = vadd.f32 %v6613, %v8518
        %v8520 = vpop.f32.mrb[0].mxu0
        %v8521 = vadd.f32 %v6609, %v8520
        %v8522 = vpop.f32.mrb[0].mxu0
        %v8523 = vadd.f32 %v6613, %v8522
        %8524 = vmatprep.mubr.bf16.mxu0 %v6389
        %8525 = vmatmul.mubr.bf16.gmra.mrb[0].mxu0 %v6388
        %v8526 = vpop.f32.mrb[0].mxu0
        %v8527 = vadd.f32 %v6609, %v8526
        %v8528 = vpop.f32.mrb[0].mxu0
        %v8529 = vadd.f32 %v6613, %v8528
        %v8530 = vpop.f32.mrb[0].mxu0
        %v8531 = vadd.f32 %v6609, %v8530
        %v8532 = vpop.f32.mrb[0].mxu0
        %v8533 = vadd.f32 %v6613, %v8532
        %8534 = vmatprep.mubr.bf16.mxu0 %v6393
        %8535 = vmatmul.mubr.bf16.gmra.mrb[0].mxu0 %v6392
        %v8536 = vpop.f32.mrb[0].mxu0
        %v8537 = vadd.f32 %v6609, %v8536
        %v8538 = vpop.f32.mrb[0].mxu0
        %v8539 = vadd.f32 %v6613, %v8538
        %v8540 = vpop.f32.mrb[0].mxu0
        %v8541 = vadd.f32 %v6609, %v8540
        %v8542 = vpop.f32.mrb[0].mxu0
        %v8543 = vadd.f32 %v6613, %v8542
        %8544 = vdwg.mxu0
        %8545 = vmatprep.subr.bf16.mxu0 %v7297
        %8546 = vmatpush1.bf16.msra.mxu0 %v7296
        %8547 = vmatprep.subr.bf16.mxu0 %v7303
        %8548 = vmatpush1.bf16.msra.mxu0 %v7302
        %8549 = vmatprep.subr.bf16.mxu0 %v7309
        %8550 = vmatpush1.bf16.msra.mxu0 %v7308
        %8551 = vmatprep.subr.bf16.mxu0 %v7315
        %8552 = vmatpush1.bf16.msra.mxu0 %v7314
        %8553 = vmatprep.subr.bf16.mxu0 %v7321
        %8554 = vmatpush1.bf16.msra.mxu0 %v7320
        %8555 = vmatprep.subr.bf16.mxu0 %v7327
        %8556 = vmatpush1.bf16.msra.mxu0 %v7326
        %8557 = vmatprep.subr.bf16.mxu0 %v7333
        %8558 = vmatpush1.bf16.msra.mxu0 %v7332
        %8559 = vmatprep.subr.bf16.mxu0 %v7339
        %8560 = vmatpush1.bf16.msra.mxu0 %v7338
        %8561 = vmatprep.subr.bf16.mxu0 %v7345
        %8562 = vmatpush1.bf16.msra.mxu0 %v7344
        %8563 = vmatprep.subr.bf16.mxu0 %v7351
        %8564 = vmatpush1.bf16.msra.mxu0 %v7350
        %8565 = vmatprep.subr.bf16.mxu0 %v7357
        %8566 = vmatpush1.bf16.msra.mxu0 %v7356
        %8567 = vmatprep.subr.bf16.mxu0 %v7363
        %8568 = vmatpush1.bf16.msra.mxu0 %v7362
        %8569 = vmatprep.subr.bf16.mxu0 %v7369
        %8570 = vmatpush1.bf16.msra.mxu0 %v7368
        %8571 = vmatprep.subr.bf16.mxu0 %v7375
        %8572 = vmatpush1.bf16.msra.mxu0 %v7374
        %8573 = vmatprep.subr.bf16.mxu0 %v7381
        %8574 = vmatpush1.bf16.msra.mxu0 %v7380
        %8575 = vmatprep.subr.bf16.mxu0 %v7387
        %8576 = vmatpush1.bf16.msra.mxu0 %v7386
        %8577 = vmatprep.mubr.bf16.mxu0 %v6335
        %8578 = vmatmul.mubr.bf16.gmra.mrb[0].mxu0 %v6334
        %v8579 = vpop.f32.mrb[0].mxu0
        %v8580 = vadd.f32 %v8387, %v8579
        %v8581 = vpop.f32.mrb[0].mxu0
        %v8582 = vadd.f32 %v8389, %v8581
        %v8583 = vpop.f32.mrb[0].mxu0
        %v8584 = vadd.f32 %v8391, %v8583
        %v8585 = vpop.f32.mrb[0].mxu0
        %v8586 = vadd.f32 %v8393, %v8585
        %8587 = vmatprep.mubr.bf16.mxu0 %v6339
        %8588 = vmatmul.mubr.bf16.gmra.mrb[0].mxu0 %v6338
        %v8589 = vpop.f32.mrb[0].mxu0
        %v8590 = vadd.f32 %v8397, %v8589
        %v8591 = vpop.f32.mrb[0].mxu0
        %v8592 = vadd.f32 %v8399, %v8591
        %v8593 = vpop.f32.mrb[0].mxu0
        %v8594 = vadd.f32 %v8401, %v8593
        %v8595 = vpop.f32.mrb[0].mxu0
        %v8596 = vadd.f32 %v8403, %v8595
        %8597 = vmatprep.mubr.bf16.mxu0 %v6343
        %8598 = vmatmul.mubr.bf16.gmra.mrb[0].mxu0 %v6342
        %v8599 = vpop.f32.mrb[0].mxu0
        %v8600 = vadd.f32 %v8407, %v8599
        %v8601 = vpop.f32.mrb[0].mxu0
        %v8602 = vadd.f32 %v8409, %v8601
        %v8603 = vpop.f32.mrb[0].mxu0
        %v8604 = vadd.f32 %v8411, %v8603
        %v8605 = vpop.f32.mrb[0].mxu0
        %v8606 = vadd.f32 %v8413, %v8605
        %8607 = vmatprep.mubr.bf16.mxu0 %v6347
        %8608 = vmatmul.mubr.bf16.gmra.mrb[0].mxu0 %v6346
        %v8609 = vpop.f32.mrb[0].mxu0
        %v8610 = vadd.f32 %v8417, %v8609
        %v8611 = vpop.f32.mrb[0].mxu0
        %v8612 = vadd.f32 %v8419, %v8611
        %v8613 = vpop.f32.mrb[0].mxu0
        %v8614 = vadd.f32 %v8421, %v8613
        %v8615 = vpop.f32.mrb[0].mxu0
        %v8616 = vadd.f32 %v8423, %v8615
        %8617 = vmatprep.mubr.bf16.mxu0 %v6351
        %8618 = vmatmul.mubr.bf16.gmra.mrb[0].mxu0 %v6350
        %v8619 = vpop.f32.mrb[0].mxu0
        %v8620 = vadd.f32 %v8427, %v8619
        %v8621 = vpop.f32.mrb[0].mxu0
        %v8622 = vadd.f32 %v8429, %v8621
        %v8623 = vpop.f32.mrb[0].mxu0
        %v8624 = vadd.f32 %v8431, %v8623
        %v8625 = vpop.f32.mrb[0].mxu0
        %v8626 = vadd.f32 %v8433, %v8625
        %8627 = vmatprep.mubr.bf16.mxu0 %v6355
        %8628 = vmatmul.mubr.bf16.gmra.mrb[0].mxu0 %v6354
        %v8629 = vpop.f32.mrb[0].mxu0
        %v8630 = vadd.f32 %v8437, %v8629
        %v8631 = vpop.f32.mrb[0].mxu0
        %v8632 = vadd.f32 %v8439, %v8631
        %v8633 = vpop.f32.mrb[0].mxu0
        %v8634 = vadd.f32 %v8441, %v8633
        %v8635 = vpop.f32.mrb[0].mxu0
        %v8636 = vadd.f32 %v8443, %v8635
        %8637 = vmatprep.mubr.bf16.mxu0 %v6359
        %8638 = vmatmul.mubr.bf16.gmra.mrb[0].mxu0 %v6358
        %v8639 = vpop.f32.mrb[0].mxu0
        %v8640 = vadd.f32 %v8447, %v8639
        %v8641 = vpop.f32.mrb[0].mxu0
        %v8642 = vadd.f32 %v8449, %v8641
        %v8643 = vpop.f32.mrb[0].mxu0
        %v8644 = vadd.f32 %v8451, %v8643
        %v8645 = vpop.f32.mrb[0].mxu0
        %v8646 = vadd.f32 %v8453, %v8645
        %8647 = vmatprep.mubr.bf16.mxu0 %v6363
        %8648 = vmatmul.mubr.bf16.gmra.mrb[0].mxu0 %v6362
        %v8649 = vpop.f32.mrb[0].mxu0
        %v8650 = vadd.f32 %v8457, %v8649
        %v8651 = vpop.f32.mrb[0].mxu0
        %v8652 = vadd.f32 %v8459, %v8651
        %v8653 = vpop.f32.mrb[0].mxu0
        %v8654 = vadd.f32 %v8461, %v8653
        %v8655 = vpop.f32.mrb[0].mxu0
        %v8656 = vadd.f32 %v8463, %v8655
        %8657 = vmatprep.mubr.bf16.mxu0 %v6367
        %8658 = vmatmul.mubr.bf16.gmra.mrb[0].mxu0 %v6366
        %v8659 = vpop.f32.mrb[0].mxu0
        %v8660 = vadd.f32 %v8467, %v8659
        %v8661 = vpop.f32.mrb[0].mxu0
        %v8662 = vadd.f32 %v8469, %v8661
        %v8663 = vpop.f32.mrb[0].mxu0
        %v8664 = vadd.f32 %v8471, %v8663
        %v8665 = vpop.f32.mrb[0].mxu0
        %v8666 = vadd.f32 %v8473, %v8665
        %8667 = vmatprep.mubr.bf16.mxu0 %v6371
        %8668 = vmatmul.mubr.bf16.gmra.mrb[0].mxu0 %v6370
        %v8669 = vpop.f32.mrb[0].mxu0
        %v8670 = vadd.f32 %v8477, %v8669
        %v8671 = vpop.f32.mrb[0].mxu0
        %v8672 = vadd.f32 %v8479, %v8671
        %v8673 = vpop.f32.mrb[0].mxu0
        %v8674 = vadd.f32 %v8481, %v8673
        %v8675 = vpop.f32.mrb[0].mxu0
        %v8676 = vadd.f32 %v8483, %v8675
        %8677 = vmatprep.mubr.bf16.mxu0 %v6375
        %8678 = vmatmul.mubr.bf16.gmra.mrb[0].mxu0 %v6374
        %v8679 = vpop.f32.mrb[0].mxu0
        %v8680 = vadd.f32 %v8487, %v8679
        %v8681 = vpop.f32.mrb[0].mxu0
        %v8682 = vadd.f32 %v8489, %v8681
        %v8683 = vpop.f32.mrb[0].mxu0
        %v8684 = vadd.f32 %v8491, %v8683
        %v8685 = vpop.f32.mrb[0].mxu0
        %v8686 = vadd.f32 %v8493, %v8685
        %8687 = vmatprep.mubr.bf16.mxu0 %v6379
        %8688 = vmatmul.mubr.bf16.gmra.mrb[0].mxu0 %v6378
        %v8689 = vpop.f32.mrb[0].mxu0
        %v8690 = vadd.f32 %v8497, %v8689
        %v8691 = vpop.f32.mrb[0].mxu0
        %v8692 = vadd.f32 %v8499, %v8691
        %v8693 = vpop.f32.mrb[0].mxu0
        %v8694 = vadd.f32 %v8501, %v8693
        %v8695 = vpop.f32.mrb[0].mxu0
        %v8696 = vadd.f32 %v8503, %v8695
        %8697 = vmatprep.mubr.bf16.mxu0 %v6383
        %8698 = vmatmul.mubr.bf16.gmra.mrb[0].mxu0 %v6382
        %v8699 = vpop.f32.mrb[0].mxu0
        %v8700 = vadd.f32 %v8507, %v8699
        %v8701 = vpop.f32.mrb[0].mxu0
        %v8702 = vadd.f32 %v8509, %v8701
        %v8703 = vpop.f32.mrb[0].mxu0
        %v8704 = vadd.f32 %v8511, %v8703
        %v8705 = vpop.f32.mrb[0].mxu0
        %v8706 = vadd.f32 %v8513, %v8705
        %8707 = vmatprep.mubr.bf16.mxu0 %v6387
        %8708 = vmatmul.mubr.bf16.gmra.mrb[0].mxu0 %v6386
        %v8709 = vpop.f32.mrb[0].mxu0
        %v8710 = vadd.f32 %v8517, %v8709
        %v8711 = vpop.f32.mrb[0].mxu0
        %v8712 = vadd.f32 %v8519, %v8711
        %v8713 = vpop.f32.mrb[0].mxu0
        %v8714 = vadd.f32 %v8521, %v8713
        %v8715 = vpop.f32.mrb[0].mxu0
        %v8716 = vadd.f32 %v8523, %v8715
        %8717 = vmatprep.mubr.bf16.mxu0 %v6391
        %8718 = vmatmul.mubr.bf16.gmra.mrb[0].mxu0 %v6390
        %v8719 = vpop.f32.mrb[0].mxu0
        %v8720 = vadd.f32 %v8527, %v8719
        %v8721 = vpop.f32.mrb[0].mxu0
        %v8722 = vadd.f32 %v8529, %v8721
        %v8723 = vpop.f32.mrb[0].mxu0
        %v8724 = vadd.f32 %v8531, %v8723
        %v8725 = vpop.f32.mrb[0].mxu0
        %v8726 = vadd.f32 %v8533, %v8725
        %8727 = vmatprep.mubr.bf16.mxu0 %v6395
        %8728 = vmatmul.mubr.bf16.gmra.mrb[0].mxu0 %v6394
        %v8729 = vpop.f32.mrb[0].mxu0
        %v8730 = vadd.f32 %v8537, %v8729
        %v8731 = vpop.f32.mrb[0].mxu0
        %v8732 = vadd.f32 %v8539, %v8731
        %v8733 = vpop.f32.mrb[0].mxu0
        %v8734 = vadd.f32 %v8541, %v8733
        %v8735 = vpop.f32.mrb[0].mxu0
        %v8736 = vadd.f32 %v8543, %v8735
        %8737 = vdwg.mxu0
        %v8738 = vtanh.pop %v7808
        %v8739 = vtanh.pop %v7810
        %v8740 = vtanh.pop %v8194
        %v8741 = vtanh.pop %v7812
        %v8742 = vtanh.pop %v7814
        %v8743 = vtanh.pop %v8198
        %v8744 = vtanh.pop %v7818
        %v8745 = vtanh.pop %v7820
        %v8746 = vtanh.pop %v8204
        %v8747 = vtanh.pop %v7822
        %v8748 = vtanh.pop %v7824
        %v8749 = vtanh.pop %v8208
        %v8750 = vtanh.pop %v7828
        %v8751 = vtanh.pop %v7830
        %v8752 = vtanh.pop %v8214
        %v8753 = vtanh.pop %v7832
        %v8754 = vtanh.pop %v7834
        %v8755 = vtanh.pop %v8218
        %v8756 = vtanh.pop %v7838
        %v8757 = vtanh.pop %v7840
        %v8758 = vtanh.pop %v8224
        %v8759 = vtanh.pop %v7842
        %v8760 = vtanh.pop %v7844
        %v8761 = vtanh.pop %v8228
        %v8762 = vtanh.pop %v7848
        %v8763 = vtanh.pop %v7850
        %v8764 = vtanh.pop %v8234
        %v8765 = vtanh.pop %v7852
        %v8766 = vtanh.pop %v7854
        %v8767 = vtanh.pop %v8238
        %v8768 = vtanh.pop %v7858
        %v8769 = vtanh.pop %v7860
        %v8770 = vtanh.pop %v8244
        %v8771 = vtanh.pop %v7862
        %v8772 = vtanh.pop %v7864
        %v8773 = vtanh.pop %v8248
        %v8774 = vtanh.pop %v7868
        %v8775 = vtanh.pop %v7870
        %v8776 = vtanh.pop %v8254
        %v8777 = vtanh.pop %v7872
        %v8778 = vtanh.pop %v7874
        %v8779 = vtanh.pop %v8258
        %v8780 = vtanh.pop %v7878
        %v8781 = vtanh.pop %v7880
        %v8782 = vtanh.pop %v8264
        %v8783 = vtanh.pop %v7882
        %v8784 = vtanh.pop %v7884
        %v8785 = vtanh.pop %v8268
        %v8786 = vtanh.pop %v7888
        %v8787 = vtanh.pop %v7890
        %v8788 = vtanh.pop %v8274
        %v8789 = vtanh.pop %v7892
        %v8790 = vtanh.pop %v7894
        %v8791 = vtanh.pop %v8278
        %v8792 = vtanh.pop %v7898
        %v8793 = vtanh.pop %v7900
        %v8794 = vtanh.pop %v8284
        %v8795 = vtanh.pop %v7902
        %v8796 = vtanh.pop %v7904
        %v8797 = vtanh.pop %v8288
        %v8798 = vtanh.pop %v7908
        %v8799 = vtanh.pop %v7910
        %v8800 = vtanh.pop %v8294
        %v8801 = vtanh.pop %v7912
        %v8802 = vtanh.pop %v7914
        %v8803 = vtanh.pop %v8298
        %v8804 = vtanh.pop %v7918
        %v8805 = vtanh.pop %v7920
        %v8806 = vtanh.pop %v8304
        %v8807 = vtanh.pop %v7922
        %v8808 = vtanh.pop %v7924
        %v8809 = vtanh.pop %v8308
        %v8810 = vtanh.pop %v7928
        %v8811 = vtanh.pop %v7930
        %v8812 = vtanh.pop %v8314
        %v8813 = vtanh.pop %v7932
        %v8814 = vtanh.pop %v7934
        %v8815 = vtanh.pop %v8318
        %v8816 = vtanh.pop %v7938
        %v8817 = vtanh.pop %v7940
        %v8818 = vtanh.pop %v8324
        %v8819 = vtanh.pop %v7942
        %v8820 = vtanh.pop %v7944
        %v8821 = vtanh.pop %v8328
        %v8822 = vtanh.pop %v7948
        %v8823 = vtanh.pop %v7950
        %v8824 = vtanh.pop %v8334
        %v8825 = vtanh.pop %v7952
        %v8826 = vtanh.pop %v7954
        %v8827 = vtanh.pop %v8338
        %v8828 = vtanh.pop %v7958
        %v8829 = vtanh.pop %v7960
        %v8830 = vtanh.pop %v8344
        %v8831 = vtanh.pop %v7962
        %v8832 = vtanh.pop %v7964
        %v8833 = vtanh.pop %v8348
        %v8834 = vxor.u32 %v8196, 2147483648
        %v8835 = vxor.u32 %v8580, 2147483648
        %v8836 = vxor.u32 %v8582, 2147483648
        %v8837 = vxor.u32 %v8200, 2147483648
        %v8838 = vxor.u32 %v8584, 2147483648
        %v8839 = vxor.u32 %v8586, 2147483648
        %v8840 = vxor.u32 %v8206, 2147483648
        %v8841 = vxor.u32 %v8590, 2147483648
        %v8842 = vxor.u32 %v8592, 2147483648
        %v8843 = vxor.u32 %v8210, 2147483648
        %v8844 = vxor.u32 %v8594, 2147483648
        %v8845 = vxor.u32 %v8596, 2147483648
        %v8846 = vxor.u32 %v8216, 2147483648
        %v8847 = vxor.u32 %v8600, 2147483648
        %v8848 = vxor.u32 %v8602, 2147483648
        %v8849 = vxor.u32 %v8220, 2147483648
        %v8850 = vxor.u32 %v8604, 2147483648
        %v8851 = vxor.u32 %v8606, 2147483648
        %v8852 = vxor.u32 %v8226, 2147483648
        %v8853 = vxor.u32 %v8610, 2147483648
        %v8854 = vxor.u32 %v8612, 2147483648
        %v8855 = vxor.u32 %v8230, 2147483648
        %v8856 = vxor.u32 %v8614, 2147483648
        %v8857 = vxor.u32 %v8616, 2147483648
        %v8858 = vxor.u32 %v8236, 2147483648
        %v8859 = vxor.u32 %v8620, 2147483648
        %v8860 = vxor.u32 %v8622, 2147483648
        %v8861 = vxor.u32 %v8240, 2147483648
        %v8862 = vxor.u32 %v8624, 2147483648
        %v8863 = vxor.u32 %v8626, 2147483648
        %v8864 = vxor.u32 %v8246, 2147483648
        %v8865 = vxor.u32 %v8630, 2147483648
        %v8866 = vxor.u32 %v8632, 2147483648
        %v8867 = vxor.u32 %v8250, 2147483648
        %v8868 = vxor.u32 %v8634, 2147483648
        %v8869 = vxor.u32 %v8636, 2147483648
        %v8870 = vxor.u32 %v8256, 2147483648
        %v8871 = vxor.u32 %v8640, 2147483648
        %v8872 = vxor.u32 %v8642, 2147483648
        %v8873 = vxor.u32 %v8260, 2147483648
        %v8874 = vxor.u32 %v8644, 2147483648
        %v8875 = vxor.u32 %v8646, 2147483648
        %v8876 = vxor.u32 %v8266, 2147483648
        %v8877 = vxor.u32 %v8650, 2147483648
        %v8878 = vxor.u32 %v8652, 2147483648
        %v8879 = vxor.u32 %v8270, 2147483648
        %v8880 = vxor.u32 %v8654, 2147483648
        %v8881 = vxor.u32 %v8656, 2147483648
        %v8882 = vxor.u32 %v8276, 2147483648
        %v8883 = vxor.u32 %v8660, 2147483648
        %v8884 = vxor.u32 %v8662, 2147483648
        %v8885 = vxor.u32 %v8280, 2147483648
        %v8886 = vxor.u32 %v8664, 2147483648
        %v8887 = vxor.u32 %v8666, 2147483648
        %v8888 = vxor.u32 %v8286, 2147483648
        %v8889 = vxor.u32 %v8670, 2147483648
        %v8890 = vxor.u32 %v8672, 2147483648
        %v8891 = vxor.u32 %v8290, 2147483648
        %v8892 = vxor.u32 %v8674, 2147483648
        %v8893 = vxor.u32 %v8676, 2147483648
        %v8894 = vxor.u32 %v8296, 2147483648
        %v8895 = vxor.u32 %v8680, 2147483648
        %v8896 = vxor.u32 %v8682, 2147483648
        %v8897 = vxor.u32 %v8300, 2147483648
        %v8898 = vxor.u32 %v8684, 2147483648
        %v8899 = vxor.u32 %v8686, 2147483648
        %v8900 = vxor.u32 %v8306, 2147483648
        %v8901 = vxor.u32 %v8690, 2147483648
        %v8902 = vxor.u32 %v8692, 2147483648
        %v8903 = vxor.u32 %v8310, 2147483648
        %v8904 = vxor.u32 %v8694, 2147483648
        %v8905 = vxor.u32 %v8696, 2147483648
        %v8906 = vxor.u32 %v8316, 2147483648
        %v8907 = vxor.u32 %v8700, 2147483648
        %v8908 = vxor.u32 %v8702, 2147483648
        %v8909 = vxor.u32 %v8320, 2147483648
        %v8910 = vxor.u32 %v8704, 2147483648
        %v8911 = vxor.u32 %v8706, 2147483648
        %v8912 = vxor.u32 %v8326, 2147483648
        %v8913 = vxor.u32 %v8710, 2147483648
        %v8914 = vxor.u32 %v8712, 2147483648
        %v8915 = vxor.u32 %v8330, 2147483648
        %v8916 = vxor.u32 %v8714, 2147483648
        %v8917 = vxor.u32 %v8716, 2147483648
        %v8918 = vxor.u32 %v8336, 2147483648
        %v8919 = vxor.u32 %v8720, 2147483648
        %v8920 = vxor.u32 %v8722, 2147483648
        %v8921 = vxor.u32 %v8340, 2147483648
        %v8922 = vxor.u32 %v8724, 2147483648
        %v8923 = vxor.u32 %v8726, 2147483648
        %v8924 = vxor.u32 %v8346, 2147483648
        %v8925 = vxor.u32 %v8730, 2147483648
        %v8926 = vxor.u32 %v8732, 2147483648
        %v8927 = vxor.u32 %v8350, 2147483648
        %v8928 = vxor.u32 %v8734, 2147483648
        %v8929 = vxor.u32 %v8736, 2147483648
        %v8930 = vmul.f32 %v8834, 1.442695
        %v8931 = vpow.pop %v8930
        %v8932 = vmul.f32 %v8835, 1.442695
        %v8933 = vpow.pop %v8932
        %v8934 = vmul.f32 %v8836, 1.442695
        %v8935 = vpow.pop %v8934
        %v8936 = vmul.f32 %v8837, 1.442695
        %v8937 = vpow.pop %v8936
        %v8938 = vmul.f32 %v8838, 1.442695
        %v8939 = vpow.pop %v8938
        %v8940 = vmul.f32 %v8839, 1.442695
        %v8941 = vpow.pop %v8940
        %v8942 = vmul.f32 %v8840, 1.442695
        %v8943 = vpow.pop %v8942
        %v8944 = vmul.f32 %v8841, 1.442695
        %v8945 = vpow.pop %v8944
        %v8946 = vmul.f32 %v8842, 1.442695
        %v8947 = vpow.pop %v8946
        %v8948 = vmul.f32 %v8843, 1.442695
        %v8949 = vpow.pop %v8948
        %v8950 = vmul.f32 %v8844, 1.442695
        %v8951 = vpow.pop %v8950
        %v8952 = vmul.f32 %v8845, 1.442695
        %v8953 = vpow.pop %v8952
        %v8954 = vmul.f32 %v8846, 1.442695
        %v8955 = vpow.pop %v8954
        %v8956 = vmul.f32 %v8847, 1.442695
        %v8957 = vpow.pop %v8956
        %v8958 = vmul.f32 %v8848, 1.442695
        %v8959 = vpow.pop %v8958
        %v8960 = vmul.f32 %v8849, 1.442695
        %v8961 = vpow.pop %v8960
        %v8962 = vmul.f32 %v8850, 1.442695
        %v8963 = vpow.pop %v8962
        %v8964 = vmul.f32 %v8851, 1.442695
        %v8965 = vpow.pop %v8964
        %v8966 = vmul.f32 %v8852, 1.442695
        %v8967 = vpow.pop %v8966
        %v8968 = vmul.f32 %v8853, 1.442695
        %v8969 = vpow.pop %v8968
        %v8970 = vmul.f32 %v8854, 1.442695
        %v8971 = vpow.pop %v8970
        %v8972 = vmul.f32 %v8855, 1.442695
        %v8973 = vpow.pop %v8972
        %v8974 = vmul.f32 %v8856, 1.442695
        %v8975 = vpow.pop %v8974
        %v8976 = vmul.f32 %v8857, 1.442695
        %v8977 = vpow.pop %v8976
        %v8978 = vmul.f32 %v8858, 1.442695
        %v8979 = vpow.pop %v8978
        %v8980 = vmul.f32 %v8859, 1.442695
        %v8981 = vpow.pop %v8980
        %v8982 = vmul.f32 %v8860, 1.442695
        %v8983 = vpow.pop %v8982
        %v8984 = vmul.f32 %v8861, 1.442695
        %v8985 = vpow.pop %v8984
        %v8986 = vmul.f32 %v8862, 1.442695
        %v8987 = vpow.pop %v8986
        %v8988 = vmul.f32 %v8863, 1.442695
        %v8989 = vpow.pop %v8988
        %v8990 = vmul.f32 %v8864, 1.442695
        %v8991 = vpow.pop %v8990
        %v8992 = vmul.f32 %v8865, 1.442695
        %v8993 = vpow.pop %v8992
        %v8994 = vmul.f32 %v8866, 1.442695
        %v8995 = vpow.pop %v8994
        %v8996 = vmul.f32 %v8867, 1.442695
        %v8997 = vpow.pop %v8996
        %v8998 = vmul.f32 %v8868, 1.442695
        %v8999 = vpow.pop %v8998
        %v9000 = vmul.f32 %v8869, 1.442695
        %v9001 = vpow.pop %v9000
        %v9002 = vmul.f32 %v8870, 1.442695
        %v9003 = vpow.pop %v9002
        %v9004 = vmul.f32 %v8871, 1.442695
        %v9005 = vpow.pop %v9004
        %v9006 = vmul.f32 %v8872, 1.442695
        %v9007 = vpow.pop %v9006
        %v9008 = vmul.f32 %v8873, 1.442695
        %v9009 = vpow.pop %v9008
        %v9010 = vmul.f32 %v8874, 1.442695
        %v9011 = vpow.pop %v9010
        %v9012 = vmul.f32 %v8875, 1.442695
        %v9013 = vpow.pop %v9012
        %v9014 = vmul.f32 %v8876, 1.442695
        %v9015 = vpow.pop %v9014
        %v9016 = vmul.f32 %v8877, 1.442695
        %v9017 = vpow.pop %v9016
        %v9018 = vmul.f32 %v8878, 1.442695
        %v9019 = vpow.pop %v9018
        %v9020 = vmul.f32 %v8879, 1.442695
        %v9021 = vpow.pop %v9020
        %v9022 = vmul.f32 %v8880, 1.442695
        %v9023 = vpow.pop %v9022
        %v9024 = vmul.f32 %v8881, 1.442695
        %v9025 = vpow.pop %v9024
        %v9026 = vmul.f32 %v8882, 1.442695
        %v9027 = vpow.pop %v9026
        %v9028 = vmul.f32 %v8883, 1.442695
        %v9029 = vpow.pop %v9028
        %v9030 = vmul.f32 %v8884, 1.442695
        %v9031 = vpow.pop %v9030
        %v9032 = vmul.f32 %v8885, 1.442695
        %v9033 = vpow.pop %v9032
        %v9034 = vmul.f32 %v8886, 1.442695
        %v9035 = vpow.pop %v9034
        %v9036 = vmul.f32 %v8887, 1.442695
        %v9037 = vpow.pop %v9036
        %v9038 = vmul.f32 %v8888, 1.442695
        %v9039 = vpow.pop %v9038
        %v9040 = vmul.f32 %v8889, 1.442695
        %v9041 = vpow.pop %v9040
        %v9042 = vmul.f32 %v8890, 1.442695
        %v9043 = vpow.pop %v9042
        %v9044 = vmul.f32 %v8891, 1.442695
        %v9045 = vpow.pop %v9044
        %v9046 = vmul.f32 %v8892, 1.442695
        %v9047 = vpow.pop %v9046
        %v9048 = vmul.f32 %v8893, 1.442695
        %v9049 = vpow.pop %v9048
        %v9050 = vmul.f32 %v8894, 1.442695
        %v9051 = vpow.pop %v9050
        %v9052 = vmul.f32 %v8895, 1.442695
        %v9053 = vpow.pop %v9052
        %v9054 = vmul.f32 %v8896, 1.442695
        %v9055 = vpow.pop %v9054
        %v9056 = vmul.f32 %v8897, 1.442695
        %v9057 = vpow.pop %v9056
        %v9058 = vmul.f32 %v8898, 1.442695
        %v9059 = vpow.pop %v9058
        %v9060 = vmul.f32 %v8899, 1.442695
        %v9061 = vpow.pop %v9060
        %v9062 = vmul.f32 %v8900, 1.442695
        %v9063 = vpow.pop %v9062
        %v9064 = vmul.f32 %v8901, 1.442695
        %v9065 = vpow.pop %v9064
        %v9066 = vmul.f32 %v8902, 1.442695
        %v9067 = vpow.pop %v9066
        %v9068 = vmul.f32 %v8903, 1.442695
        %v9069 = vpow.pop %v9068
        %v9070 = vmul.f32 %v8904, 1.442695
        %v9071 = vpow.pop %v9070
        %v9072 = vmul.f32 %v8905, 1.442695
        %v9073 = vpow.pop %v9072
        %v9074 = vmul.f32 %v8906, 1.442695
        %v9075 = vpow.pop %v9074
        %v9076 = vmul.f32 %v8907, 1.442695
        %v9077 = vpow.pop %v9076
        %v9078 = vmul.f32 %v8908, 1.442695
        %v9079 = vpow.pop %v9078
        %v9080 = vmul.f32 %v8909, 1.442695
        %v9081 = vpow.pop %v9080
        %v9082 = vmul.f32 %v8910, 1.442695
        %v9083 = vpow.pop %v9082
        %v9084 = vmul.f32 %v8911, 1.442695
        %v9085 = vpow.pop %v9084
        %v9086 = vmul.f32 %v8912, 1.442695
        %v9087 = vpow.pop %v9086
        %v9088 = vmul.f32 %v8913, 1.442695
        %v9089 = vpow.pop %v9088
        %v9090 = vmul.f32 %v8914, 1.442695
        %v9091 = vpow.pop %v9090
        %v9092 = vmul.f32 %v8915, 1.442695
        %v9093 = vpow.pop %v9092
        %v9094 = vmul.f32 %v8916, 1.442695
        %v9095 = vpow.pop %v9094
        %v9096 = vmul.f32 %v8917, 1.442695
        %v9097 = vpow.pop %v9096
        %v9098 = vmul.f32 %v8918, 1.442695
        %v9099 = vpow.pop %v9098
        %v9100 = vmul.f32 %v8919, 1.442695
        %v9101 = vpow.pop %v9100
        %v9102 = vmul.f32 %v8920, 1.442695
        %v9103 = vpow.pop %v9102
        %v9104 = vmul.f32 %v8921, 1.442695
        %v9105 = vpow.pop %v9104
        %v9106 = vmul.f32 %v8922, 1.442695
        %v9107 = vpow.pop %v9106
        %v9108 = vmul.f32 %v8923, 1.442695
        %v9109 = vpow.pop %v9108
        %v9110 = vmul.f32 %v8924, 1.442695
        %v9111 = vpow.pop %v9110
        %v9112 = vmul.f32 %v8925, 1.442695
        %v9113 = vpow.pop %v9112
        %v9114 = vmul.f32 %v8926, 1.442695
        %v9115 = vpow.pop %v9114
        %v9116 = vmul.f32 %v8927, 1.442695
        %v9117 = vpow.pop %v9116
        %v9118 = vmul.f32 %v8928, 1.442695
        %v9119 = vpow.pop %v9118
        %v9120 = vmul.f32 %v8929, 1.442695
        %v9121 = vpow.pop %v9120
        %v9122 = vadd.f32 %v8931, 1.0
        %v9123 = vadd.f32 %v8933, 1.0
        %v9124 = vadd.f32 %v8935, 1.0
        %v9125 = vadd.f32 %v8937, 1.0
        %v9126 = vadd.f32 %v8939, 1.0
        %v9127 = vadd.f32 %v8941, 1.0
        %v9128 = vadd.f32 %v8943, 1.0
        %v9129 = vadd.f32 %v8945, 1.0
        %v9130 = vadd.f32 %v8947, 1.0
        %v9131 = vadd.f32 %v8949, 1.0
        %v9132 = vadd.f32 %v8951, 1.0
        %v9133 = vadd.f32 %v8953, 1.0
        %v9134 = vadd.f32 %v8955, 1.0
        %v9135 = vadd.f32 %v8957, 1.0
        %v9136 = vadd.f32 %v8959, 1.0
        %v9137 = vadd.f32 %v8961, 1.0
        %v9138 = vadd.f32 %v8963, 1.0
        %v9139 = vadd.f32 %v8965, 1.0
        %v9140 = vadd.f32 %v8967, 1.0
        %v9141 = vadd.f32 %v8969, 1.0
        %v9142 = vadd.f32 %v8971, 1.0
        %v9143 = vadd.f32 %v8973, 1.0
        %v9144 = vadd.f32 %v8975, 1.0
        %v9145 = vadd.f32 %v8977, 1.0
        %v9146 = vadd.f32 %v8979, 1.0
        %v9147 = vadd.f32 %v8981, 1.0
        %v9148 = vadd.f32 %v8983, 1.0
        %v9149 = vadd.f32 %v8985, 1.0
        %v9150 = vadd.f32 %v8987, 1.0
        %v9151 = vadd.f32 %v8989, 1.0
        %v9152 = vadd.f32 %v8991, 1.0
        %v9153 = vadd.f32 %v8993, 1.0
        %v9154 = vadd.f32 %v8995, 1.0
        %v9155 = vadd.f32 %v8997, 1.0
        %v9156 = vadd.f32 %v8999, 1.0
        %v9157 = vadd.f32 %v9001, 1.0
        %v9158 = vadd.f32 %v9003, 1.0
        %v9159 = vadd.f32 %v9005, 1.0
        %v9160 = vadd.f32 %v9007, 1.0
        %v9161 = vadd.f32 %v9009, 1.0
        %v9162 = vadd.f32 %v9011, 1.0
        %v9163 = vadd.f32 %v9013, 1.0
        %v9164 = vadd.f32 %v9015, 1.0
        %v9165 = vadd.f32 %v9017, 1.0
        %v9166 = vadd.f32 %v9019, 1.0
        %v9167 = vadd.f32 %v9021, 1.0
        %v9168 = vadd.f32 %v9023, 1.0
        %v9169 = vadd.f32 %v9025, 1.0
        %v9170 = vadd.f32 %v9027, 1.0
        %v9171 = vadd.f32 %v9029, 1.0
        %v9172 = vadd.f32 %v9031, 1.0
        %v9173 = vadd.f32 %v9033, 1.0
        %v9174 = vadd.f32 %v9035, 1.0
        %v9175 = vadd.f32 %v9037, 1.0
        %v9176 = vadd.f32 %v9039, 1.0
        %v9177 = vadd.f32 %v9041, 1.0
        %v9178 = vadd.f32 %v9043, 1.0
        %v9179 = vadd.f32 %v9045, 1.0
        %v9180 = vadd.f32 %v9047, 1.0
        %v9181 = vadd.f32 %v9049, 1.0
        %v9182 = vadd.f32 %v9051, 1.0
        %v9183 = vadd.f32 %v9053, 1.0
        %v9184 = vadd.f32 %v9055, 1.0
        %v9185 = vadd.f32 %v9057, 1.0
        %v9186 = vadd.f32 %v9059, 1.0
        %v9187 = vadd.f32 %v9061, 1.0
        %v9188 = vadd.f32 %v9063, 1.0
        %v9189 = vadd.f32 %v9065, 1.0
        %v9190 = vadd.f32 %v9067, 1.0
        %v9191 = vadd.f32 %v9069, 1.0
        %v9192 = vadd.f32 %v9071, 1.0
        %v9193 = vadd.f32 %v9073, 1.0
        %v9194 = vadd.f32 %v9075, 1.0
        %v9195 = vadd.f32 %v9077, 1.0
        %v9196 = vadd.f32 %v9079, 1.0
        %v9197 = vadd.f32 %v9081, 1.0
        %v9198 = vadd.f32 %v9083, 1.0
        %v9199 = vadd.f32 %v9085, 1.0
        %v9200 = vadd.f32 %v9087, 1.0
        %v9201 = vadd.f32 %v9089, 1.0
        %v9202 = vadd.f32 %v9091, 1.0
        %v9203 = vadd.f32 %v9093, 1.0
        %v9204 = vadd.f32 %v9095, 1.0
        %v9205 = vadd.f32 %v9097, 1.0
        %v9206 = vadd.f32 %v9099, 1.0
        %v9207 = vadd.f32 %v9101, 1.0
        %v9208 = vadd.f32 %v9103, 1.0
        %v9209 = vadd.f32 %v9105, 1.0
        %v9210 = vadd.f32 %v9107, 1.0
        %v9211 = vadd.f32 %v9109, 1.0
        %v9212 = vadd.f32 %v9111, 1.0
        %v9213 = vadd.f32 %v9113, 1.0
        %v9214 = vadd.f32 %v9115, 1.0
        %v9215 = vadd.f32 %v9117, 1.0
        %v9216 = vadd.f32 %v9119, 1.0
        %v9217 = vadd.f32 %v9121, 1.0
        %v9218 = vrcp.pop %v9122
        %v9219 = vmul.f32 1.0, %v9218
        %v9220 = vrcp.pop %v9123
        %v9221 = vmul.f32 1.0, %v9220
        %v9222 = vrcp.pop %v9124
        %v9223 = vmul.f32 1.0, %v9222
        %v9224 = vrcp.pop %v9125
        %v9225 = vmul.f32 1.0, %v9224
        %v9226 = vrcp.pop %v9126
        %v9227 = vmul.f32 1.0, %v9226
        %v9228 = vrcp.pop %v9127
        %v9229 = vmul.f32 1.0, %v9228
        %v9230 = vrcp.pop %v9128
        %v9231 = vmul.f32 1.0, %v9230
        %v9232 = vrcp.pop %v9129
        %v9233 = vmul.f32 1.0, %v9232
        %v9234 = vrcp.pop %v9130
        %v9235 = vmul.f32 1.0, %v9234
        %v9236 = vrcp.pop %v9131
        %v9237 = vmul.f32 1.0, %v9236
        %v9238 = vrcp.pop %v9132
        %v9239 = vmul.f32 1.0, %v9238
        %v9240 = vrcp.pop %v9133
        %v9241 = vmul.f32 1.0, %v9240
        %v9242 = vrcp.pop %v9134
        %v9243 = vmul.f32 1.0, %v9242
        %v9244 = vrcp.pop %v9135
        %v9245 = vmul.f32 1.0, %v9244
        %v9246 = vrcp.pop %v9136
        %v9247 = vmul.f32 1.0, %v9246
        %v9248 = vrcp.pop %v9137
        %v9249 = vmul.f32 1.0, %v9248
        %v9250 = vrcp.pop %v9138
        %v9251 = vmul.f32 1.0, %v9250
        %v9252 = vrcp.pop %v9139
        %v9253 = vmul.f32 1.0, %v9252
        %v9254 = vrcp.pop %v9140
        %v9255 = vmul.f32 1.0, %v9254
        %v9256 = vrcp.pop %v9141
        %v9257 = vmul.f32 1.0, %v9256
        %v9258 = vrcp.pop %v9142
        %v9259 = vmul.f32 1.0, %v9258
        %v9260 = vrcp.pop %v9143
        %v9261 = vmul.f32 1.0, %v9260
        %v9262 = vrcp.pop %v9144
        %v9263 = vmul.f32 1.0, %v9262
        %v9264 = vrcp.pop %v9145
        %v9265 = vmul.f32 1.0, %v9264
        %v9266 = vrcp.pop %v9146
        %v9267 = vmul.f32 1.0, %v9266
        %v9268 = vrcp.pop %v9147
        %v9269 = vmul.f32 1.0, %v9268
        %v9270 = vrcp.pop %v9148
        %v9271 = vmul.f32 1.0, %v9270
        %v9272 = vrcp.pop %v9149
        %v9273 = vmul.f32 1.0, %v9272
        %v9274 = vrcp.pop %v9150
        %v9275 = vmul.f32 1.0, %v9274
        %v9276 = vrcp.pop %v9151
        %v9277 = vmul.f32 1.0, %v9276
        %v9278 = vrcp.pop %v9152
        %v9279 = vmul.f32 1.0, %v9278
        %v9280 = vrcp.pop %v9153
        %v9281 = vmul.f32 1.0, %v9280
        %v9282 = vrcp.pop %v9154
        %v9283 = vmul.f32 1.0, %v9282
        %v9284 = vrcp.pop %v9155
        %v9285 = vmul.f32 1.0, %v9284
        %v9286 = vrcp.pop %v9156
        %v9287 = vmul.f32 1.0, %v9286
        %v9288 = vrcp.pop %v9157
        %v9289 = vmul.f32 1.0, %v9288
        %v9290 = vrcp.pop %v9158
        %v9291 = vmul.f32 1.0, %v9290
        %v9292 = vrcp.pop %v9159
        %v9293 = vmul.f32 1.0, %v9292
        %v9294 = vrcp.pop %v9160
        %v9295 = vmul.f32 1.0, %v9294
        %v9296 = vrcp.pop %v9161
        %v9297 = vmul.f32 1.0, %v9296
        %v9298 = vrcp.pop %v9162
        %v9299 = vmul.f32 1.0, %v9298
        %v9300 = vrcp.pop %v9163
        %v9301 = vmul.f32 1.0, %v9300
        %v9302 = vrcp.pop %v9164
        %v9303 = vmul.f32 1.0, %v9302
        %v9304 = vrcp.pop %v9165
        %v9305 = vmul.f32 1.0, %v9304
        %v9306 = vrcp.pop %v9166
        %v9307 = vmul.f32 1.0, %v9306
        %v9308 = vrcp.pop %v9167
        %v9309 = vmul.f32 1.0, %v9308
        %v9310 = vrcp.pop %v9168
        %v9311 = vmul.f32 1.0, %v9310
        %v9312 = vrcp.pop %v9169
        %v9313 = vmul.f32 1.0, %v9312
        %v9314 = vrcp.pop %v9170
        %v9315 = vmul.f32 1.0, %v9314
        %v9316 = vrcp.pop %v9171
        %v9317 = vmul.f32 1.0, %v9316
        %v9318 = vrcp.pop %v9172
        %v9319 = vmul.f32 1.0, %v9318
        %v9320 = vrcp.pop %v9173
        %v9321 = vmul.f32 1.0, %v9320
        %v9322 = vrcp.pop %v9174
        %v9323 = vmul.f32 1.0, %v9322
        %v9324 = vrcp.pop %v9175
        %v9325 = vmul.f32 1.0, %v9324
        %v9326 = vrcp.pop %v9176
        %v9327 = vmul.f32 1.0, %v9326
        %v9328 = vrcp.pop %v9177
        %v9329 = vmul.f32 1.0, %v9328
        %v9330 = vrcp.pop %v9178
        %v9331 = vmul.f32 1.0, %v9330
        %v9332 = vrcp.pop %v9179
        %v9333 = vmul.f32 1.0, %v9332
        %v9334 = vrcp.pop %v9180
        %v9335 = vmul.f32 1.0, %v9334
        %v9336 = vrcp.pop %v9181
        %v9337 = vmul.f32 1.0, %v9336
        %v9338 = vrcp.pop %v9182
        %v9339 = vmul.f32 1.0, %v9338
        %v9340 = vrcp.pop %v9183
        %v9341 = vmul.f32 1.0, %v9340
        %v9342 = vrcp.pop %v9184
        %v9343 = vmul.f32 1.0, %v9342
        %v9344 = vrcp.pop %v9185
        %v9345 = vmul.f32 1.0, %v9344
        %v9346 = vrcp.pop %v9186
        %v9347 = vmul.f32 1.0, %v9346
        %v9348 = vrcp.pop %v9187
        %v9349 = vmul.f32 1.0, %v9348
        %v9350 = vrcp.pop %v9188
        %v9351 = vmul.f32 1.0, %v9350
        %v9352 = vrcp.pop %v9189
        %v9353 = vmul.f32 1.0, %v9352
        %v9354 = vrcp.pop %v9190
        %v9355 = vmul.f32 1.0, %v9354
        %v9356 = vrcp.pop %v9191
        %v9357 = vmul.f32 1.0, %v9356
        %v9358 = vrcp.pop %v9192
        %v9359 = vmul.f32 1.0, %v9358
        %v9360 = vrcp.pop %v9193
        %v9361 = vmul.f32 1.0, %v9360
        %v9362 = vrcp.pop %v9194
        %v9363 = vmul.f32 1.0, %v9362
        %v9364 = vrcp.pop %v9195
        %v9365 = vmul.f32 1.0, %v9364
        %v9366 = vrcp.pop %v9196
        %v9367 = vmul.f32 1.0, %v9366
        %v9368 = vrcp.pop %v9197
        %v9369 = vmul.f32 1.0, %v9368
        %v9370 = vrcp.pop %v9198
        %v9371 = vmul.f32 1.0, %v9370
        %v9372 = vrcp.pop %v9199
        %v9373 = vmul.f32 1.0, %v9372
        %v9374 = vrcp.pop %v9200
        %v9375 = vmul.f32 1.0, %v9374
        %v9376 = vrcp.pop %v9201
        %v9377 = vmul.f32 1.0, %v9376
        %v9378 = vrcp.pop %v9202
        %v9379 = vmul.f32 1.0, %v9378
        %v9380 = vrcp.pop %v9203
        %v9381 = vmul.f32 1.0, %v9380
        %v9382 = vrcp.pop %v9204
        %v9383 = vmul.f32 1.0, %v9382
        %v9384 = vrcp.pop %v9205
        %v9385 = vmul.f32 1.0, %v9384
        %v9386 = vrcp.pop %v9206
        %v9387 = vmul.f32 1.0, %v9386
        %v9388 = vrcp.pop %v9207
        %v9389 = vmul.f32 1.0, %v9388
        %v9390 = vrcp.pop %v9208
        %v9391 = vmul.f32 1.0, %v9390
        %v9392 = vrcp.pop %v9209
        %v9393 = vmul.f32 1.0, %v9392
        %v9394 = vrcp.pop %v9210
        %v9395 = vmul.f32 1.0, %v9394
        %v9396 = vrcp.pop %v9211
        %v9397 = vmul.f32 1.0, %v9396
        %v9398 = vrcp.pop %v9212
        %v9399 = vmul.f32 1.0, %v9398
        %v9400 = vrcp.pop %v9213
        %v9401 = vmul.f32 1.0, %v9400
        %v9402 = vrcp.pop %v9214
        %v9403 = vmul.f32 1.0, %v9402
        %v9404 = vrcp.pop %v9215
        %v9405 = vmul.f32 1.0, %v9404
        %v9406 = vrcp.pop %v9216
        %v9407 = vmul.f32 1.0, %v9406
        %v9408 = vrcp.pop %v9217
        %v9409 = vmul.f32 1.0, %v9408
        %v9410 = vmul.f32 %v8738, %v9219
        %v9411 = vmul.f32 %v8739, %v9221
        %v9412 = vmul.f32 %v8740, %v9223
        %v9413 = vmul.f32 %v8741, %v9225
        %v9414 = vmul.f32 %v8742, %v9227
        %v9415 = vmul.f32 %v8743, %v9229
        %v9416 = vmul.f32 %v8744, %v9231
        %v9417 = vmul.f32 %v8745, %v9233
        %v9418 = vmul.f32 %v8746, %v9235
        %v9419 = vmul.f32 %v8747, %v9237
        %v9420 = vmul.f32 %v8748, %v9239
        %v9421 = vmul.f32 %v8749, %v9241
        %v9422 = vmul.f32 %v8750, %v9243
        %v9423 = vmul.f32 %v8751, %v9245
        %v9424 = vmul.f32 %v8752, %v9247
        %v9425 = vmul.f32 %v8753, %v9249
        %v9426 = vmul.f32 %v8754, %v9251
        %v9427 = vmul.f32 %v8755, %v9253
        %v9428 = vmul.f32 %v8756, %v9255
        %v9429 = vmul.f32 %v8757, %v9257
        %v9430 = vmul.f32 %v8758, %v9259
        %v9431 = vmul.f32 %v8759, %v9261
        %v9432 = vmul.f32 %v8760, %v9263
        %v9433 = vmul.f32 %v8761, %v9265
        %v9434 = vmul.f32 %v8762, %v9267
        %v9435 = vmul.f32 %v8763, %v9269
        %v9436 = vmul.f32 %v8764, %v9271
        %v9437 = vmul.f32 %v8765, %v9273
        %v9438 = vmul.f32 %v8766, %v9275
        %v9439 = vmul.f32 %v8767, %v9277
        %v9440 = vmul.f32 %v8768, %v9279
        %v9441 = vmul.f32 %v8769, %v9281
        %v9442 = vmul.f32 %v8770, %v9283
        %v9443 = vmul.f32 %v8771, %v9285
        %v9444 = vmul.f32 %v8772, %v9287
        %v9445 = vmul.f32 %v8773, %v9289
        %v9446 = vmul.f32 %v8774, %v9291
        %v9447 = vmul.f32 %v8775, %v9293
        %v9448 = vmul.f32 %v8776, %v9295
        %v9449 = vmul.f32 %v8777, %v9297
        %v9450 = vmul.f32 %v8778, %v9299
        %v9451 = vmul.f32 %v8779, %v9301
        %v9452 = vmul.f32 %v8780, %v9303
        %v9453 = vmul.f32 %v8781, %v9305
        %v9454 = vmul.f32 %v8782, %v9307
        %v9455 = vmul.f32 %v8783, %v9309
        %v9456 = vmul.f32 %v8784, %v9311
        %v9457 = vmul.f32 %v8785, %v9313
        %v9458 = vmul.f32 %v8786, %v9315
        %v9459 = vmul.f32 %v8787, %v9317
        %v9460 = vmul.f32 %v8788, %v9319
        %v9461 = vmul.f32 %v8789, %v9321
        %v9462 = vmul.f32 %v8790, %v9323
        %v9463 = vmul.f32 %v8791, %v9325
        %v9464 = vmul.f32 %v8792, %v9327
        %v9465 = vmul.f32 %v8793, %v9329
        %v9466 = vmul.f32 %v8794, %v9331
        %v9467 = vmul.f32 %v8795, %v9333
        %v9468 = vmul.f32 %v8796, %v9335
        %v9469 = vmul.f32 %v8797, %v9337
        %v9470 = vmul.f32 %v8798, %v9339
        %v9471 = vmul.f32 %v8799, %v9341
        %v9472 = vmul.f32 %v8800, %v9343
        %v9473 = vmul.f32 %v8801, %v9345
        %v9474 = vmul.f32 %v8802, %v9347
        %v9475 = vmul.f32 %v8803, %v9349
        %v9476 = vmul.f32 %v8804, %v9351
        %v9477 = vmul.f32 %v8805, %v9353
        %v9478 = vmul.f32 %v8806, %v9355
        %v9479 = vmul.f32 %v8807, %v9357
        %v9480 = vmul.f32 %v8808, %v9359
        %v9481 = vmul.f32 %v8809, %v9361
        %v9482 = vmul.f32 %v8810, %v9363
        %v9483 = vmul.f32 %v8811, %v9365
        %v9484 = vmul.f32 %v8812, %v9367
        %v9485 = vmul.f32 %v8813, %v9369
        %v9486 = vmul.f32 %v8814, %v9371
        %v9487 = vmul.f32 %v8815, %v9373
        %v9488 = vmul.f32 %v8816, %v9375
        %v9489 = vmul.f32 %v8817, %v9377
        %v9490 = vmul.f32 %v8818, %v9379
        %v9491 = vmul.f32 %v8819, %v9381
        %v9492 = vmul.f32 %v8820, %v9383
        %v9493 = vmul.f32 %v8821, %v9385
        %v9494 = vmul.f32 %v8822, %v9387
        %v9495 = vmul.f32 %v8823, %v9389
        %v9496 = vmul.f32 %v8824, %v9391
        %v9497 = vmul.f32 %v8825, %v9393
        %v9498 = vmul.f32 %v8826, %v9395
        %v9499 = vmul.f32 %v8827, %v9397
        %v9500 = vmul.f32 %v8828, %v9399
        %v9501 = vmul.f32 %v8829, %v9401
        %v9502 = vmul.f32 %v8830, %v9403
        %v9503 = vmul.f32 %v8831, %v9405
        %v9504 = vmul.f32 %v8832, %v9407
        %v9505 = vmul.f32 %v8833, %v9409
        %v9506 = vld [vmem:[#allocation18] sm:$0x7]
        %v9508 = vlaneseq
        %v9509 = vshrl.u32 %v9508, 7
        %v9510 = vsub.s32 0, %v9509
        %v9511 = vrot.slane %v9506, %v9510
        %v9512 = vlaneseq
        %v9513 = vshrl.u32 %v9512, 7
        %v9514 = vsub.s32 1, %v9513
        %v9515 = vrot.slane %v9506, %v9514
        %v9516 = vlaneseq
        %v9517 = vshrl.u32 %v9516, 7
        %v9518 = vsub.s32 2, %v9517
        %v9519 = vrot.slane %v9506, %v9518
        %v9523 = vmul.f32 %v9410, %v9511
        %v9524 = vmul.f32 %v9411, %v9515
        %v9525 = vmul.f32 %v9412, %v9519
        %v9526 = vmul.f32 %v9413, %v9511
        %v9527 = vmul.f32 %v9414, %v9515
        %v9528 = vmul.f32 %v9415, %v9519
        %v9529 = vmul.f32 %v9416, %v9511
        %v9530 = vmul.f32 %v9417, %v9515
        %v9531 = vmul.f32 %v9418, %v9519
        %v9532 = vmul.f32 %v9419, %v9511
        %v9533 = vmul.f32 %v9420, %v9515
        %v9534 = vmul.f32 %v9421, %v9519
        %v9535 = vmul.f32 %v9422, %v9511
        %v9536 = vmul.f32 %v9423, %v9515
        %v9537 = vmul.f32 %v9424, %v9519
        %v9538 = vmul.f32 %v9425, %v9511
        %v9539 = vmul.f32 %v9426, %v9515
        %v9540 = vmul.f32 %v9427, %v9519
        %v9541 = vmul.f32 %v9428, %v9511
        %v9542 = vmul.f32 %v9429, %v9515
        %v9543 = vmul.f32 %v9430, %v9519
        %v9544 = vmul.f32 %v9431, %v9511
        %v9545 = vmul.f32 %v9432, %v9515
        %v9546 = vmul.f32 %v9433, %v9519
        %v9547 = vmul.f32 %v9434, %v9511
        %v9548 = vmul.f32 %v9435, %v9515
        %v9549 = vmul.f32 %v9436, %v9519
        %v9550 = vmul.f32 %v9437, %v9511
        %v9551 = vmul.f32 %v9438, %v9515
        %v9552 = vmul.f32 %v9439, %v9519
        %v9553 = vmul.f32 %v9440, %v9511
        %v9554 = vmul.f32 %v9441, %v9515
        %v9555 = vmul.f32 %v9442, %v9519
        %v9556 = vmul.f32 %v9443, %v9511
        %v9557 = vmul.f32 %v9444, %v9515
        %v9558 = vmul.f32 %v9445, %v9519
        %v9559 = vmul.f32 %v9446, %v9511
        %v9560 = vmul.f32 %v9447, %v9515
        %v9561 = vmul.f32 %v9448, %v9519
        %v9562 = vmul.f32 %v9449, %v9511
        %v9563 = vmul.f32 %v9450, %v9515
        %v9564 = vmul.f32 %v9451, %v9519
        %v9565 = vmul.f32 %v9452, %v9511
        %v9566 = vmul.f32 %v9453, %v9515
        %v9567 = vmul.f32 %v9454, %v9519
        %v9568 = vmul.f32 %v9455, %v9511
        %v9569 = vmul.f32 %v9456, %v9515
        %v9570 = vmul.f32 %v9457, %v9519
        %v9571 = vmul.f32 %v9458, %v9511
        %v9572 = vmul.f32 %v9459, %v9515
        %v9573 = vmul.f32 %v9460, %v9519
        %v9574 = vmul.f32 %v9461, %v9511
        %v9575 = vmul.f32 %v9462, %v9515
        %v9576 = vmul.f32 %v9463, %v9519
        %v9577 = vmul.f32 %v9464, %v9511
        %v9578 = vmul.f32 %v9465, %v9515
        %v9579 = vmul.f32 %v9466, %v9519
        %v9580 = vmul.f32 %v9467, %v9511
        %v9581 = vmul.f32 %v9468, %v9515
        %v9582 = vmul.f32 %v9469, %v9519
        %v9583 = vmul.f32 %v9470, %v9511
        %v9584 = vmul.f32 %v9471, %v9515
        %v9585 = vmul.f32 %v9472, %v9519
        %v9586 = vmul.f32 %v9473, %v9511
        %v9587 = vmul.f32 %v9474, %v9515
        %v9588 = vmul.f32 %v9475, %v9519
        %v9589 = vmul.f32 %v9476, %v9511
        %v9590 = vmul.f32 %v9477, %v9515
        %v9591 = vmul.f32 %v9478, %v9519
        %v9592 = vmul.f32 %v9479, %v9511
        %v9593 = vmul.f32 %v9480, %v9515
        %v9594 = vmul.f32 %v9481, %v9519
        %v9595 = vmul.f32 %v9482, %v9511
        %v9596 = vmul.f32 %v9483, %v9515
        %v9597 = vmul.f32 %v9484, %v9519
        %v9598 = vmul.f32 %v9485, %v9511
        %v9599 = vmul.f32 %v9486, %v9515
        %v9600 = vmul.f32 %v9487, %v9519
        %v9601 = vmul.f32 %v9488, %v9511
        %v9602 = vmul.f32 %v9489, %v9515
        %v9603 = vmul.f32 %v9490, %v9519
        %v9604 = vmul.f32 %v9491, %v9511
        %v9605 = vmul.f32 %v9492, %v9515
        %v9606 = vmul.f32 %v9493, %v9519
        %v9607 = vmul.f32 %v9494, %v9511
        %v9608 = vmul.f32 %v9495, %v9515
        %v9609 = vmul.f32 %v9496, %v9519
        %v9610 = vmul.f32 %v9497, %v9511
        %v9611 = vmul.f32 %v9498, %v9515
        %v9612 = vmul.f32 %v9499, %v9519
        %v9613 = vmul.f32 %v9500, %v9511
        %v9614 = vmul.f32 %v9501, %v9515
        %v9615 = vmul.f32 %v9502, %v9519
        %v9616 = vmul.f32 %v9503, %v9511
        %v9617 = vmul.f32 %v9504, %v9515
        %v9618 = vmul.f32 %v9505, %v9519
        %v9619 = vadd.f32 %v9523, %v9524
        %v9620 = vadd.f32 %v9619, %v9525
        %9621 = vadd.xlane.f32.xlu0 %v9620
        %v9622 = vpop.xlane.xlu0 %9621
        %v9623 = vadd.f32 %v9526, %v9527
        %v9624 = vadd.f32 %v9623, %v9528
        %9625 = vadd.xlane.f32.xlu0 %v9624
        %v9626 = vpop.xlane.xlu0 %9625
        %v9627 = vadd.f32 %v9529, %v9530
        %v9628 = vadd.f32 %v9627, %v9531
        %9629 = vadd.xlane.f32.xlu0 %v9628
        %v9630 = vpop.xlane.xlu0 %9629
        %v9631 = vadd.f32 %v9532, %v9533
        %v9632 = vadd.f32 %v9631, %v9534
        %9633 = vadd.xlane.f32.xlu0 %v9632
        %v9634 = vpop.xlane.xlu0 %9633
        %v9635 = vadd.f32 %v9535, %v9536
        %v9636 = vadd.f32 %v9635, %v9537
        %9637 = vadd.xlane.f32.xlu0 %v9636
        %v9638 = vpop.xlane.xlu0 %9637
        %v9639 = vadd.f32 %v9538, %v9539
        %v9640 = vadd.f32 %v9639, %v9540
        %9641 = vadd.xlane.f32.xlu0 %v9640
        %v9642 = vpop.xlane.xlu0 %9641
        %v9643 = vadd.f32 %v9541, %v9542
        %v9644 = vadd.f32 %v9643, %v9543
        %9645 = vadd.xlane.f32.xlu0 %v9644
        %v9646 = vpop.xlane.xlu0 %9645
        %v9647 = vadd.f32 %v9544, %v9545
        %v9648 = vadd.f32 %v9647, %v9546
        %9649 = vadd.xlane.f32.xlu0 %v9648
        %v9650 = vpop.xlane.xlu0 %9649
        %v9651 = vadd.f32 %v9547, %v9548
        %v9652 = vadd.f32 %v9651, %v9549
        %9653 = vadd.xlane.f32.xlu0 %v9652
        %v9654 = vpop.xlane.xlu0 %9653
        %v9655 = vadd.f32 %v9550, %v9551
        %v9656 = vadd.f32 %v9655, %v9552
        %9657 = vadd.xlane.f32.xlu0 %v9656
        %v9658 = vpop.xlane.xlu0 %9657
        %v9659 = vadd.f32 %v9553, %v9554
        %v9660 = vadd.f32 %v9659, %v9555
        %9661 = vadd.xlane.f32.xlu0 %v9660
        %v9662 = vpop.xlane.xlu0 %9661
        %v9663 = vadd.f32 %v9556, %v9557
        %v9664 = vadd.f32 %v9663, %v9558
        %9665 = vadd.xlane.f32.xlu0 %v9664
        %v9666 = vpop.xlane.xlu0 %9665
        %v9667 = vadd.f32 %v9559, %v9560
        %v9668 = vadd.f32 %v9667, %v9561
        %9669 = vadd.xlane.f32.xlu0 %v9668
        %v9670 = vpop.xlane.xlu0 %9669
        %v9671 = vadd.f32 %v9562, %v9563
        %v9672 = vadd.f32 %v9671, %v9564
        %9673 = vadd.xlane.f32.xlu0 %v9672
        %v9674 = vpop.xlane.xlu0 %9673
        %v9675 = vadd.f32 %v9565, %v9566
        %v9676 = vadd.f32 %v9675, %v9567
        %9677 = vadd.xlane.f32.xlu0 %v9676
        %v9678 = vpop.xlane.xlu0 %9677
        %v9679 = vadd.f32 %v9568, %v9569
        %v9680 = vadd.f32 %v9679, %v9570
        %9681 = vadd.xlane.f32.xlu0 %v9680
        %v9682 = vpop.xlane.xlu0 %9681
        %v9683 = vadd.f32 %v9571, %v9572
        %v9684 = vadd.f32 %v9683, %v9573
        %9685 = vadd.xlane.f32.xlu0 %v9684
        %v9686 = vpop.xlane.xlu0 %9685
        %v9687 = vadd.f32 %v9574, %v9575
        %v9688 = vadd.f32 %v9687, %v9576
        %9689 = vadd.xlane.f32.xlu0 %v9688
        %v9690 = vpop.xlane.xlu0 %9689
        %v9691 = vadd.f32 %v9577, %v9578
        %v9692 = vadd.f32 %v9691, %v9579
        %9693 = vadd.xlane.f32.xlu0 %v9692
        %v9694 = vpop.xlane.xlu0 %9693
        %v9695 = vadd.f32 %v9580, %v9581
        %v9696 = vadd.f32 %v9695, %v9582
        %9697 = vadd.xlane.f32.xlu0 %v9696
        %v9698 = vpop.xlane.xlu0 %9697
        %v9699 = vadd.f32 %v9583, %v9584
        %v9700 = vadd.f32 %v9699, %v9585
        %9701 = vadd.xlane.f32.xlu0 %v9700
        %v9702 = vpop.xlane.xlu0 %9701
        %v9703 = vadd.f32 %v9586, %v9587
        %v9704 = vadd.f32 %v9703, %v9588
        %9705 = vadd.xlane.f32.xlu0 %v9704
        %v9706 = vpop.xlane.xlu0 %9705
        %v9707 = vadd.f32 %v9589, %v9590
        %v9708 = vadd.f32 %v9707, %v9591
        %9709 = vadd.xlane.f32.xlu0 %v9708
        %v9710 = vpop.xlane.xlu0 %9709
        %v9711 = vadd.f32 %v9592, %v9593
        %v9712 = vadd.f32 %v9711, %v9594
        %9713 = vadd.xlane.f32.xlu0 %v9712
        %v9714 = vpop.xlane.xlu0 %9713
        %v9715 = vadd.f32 %v9595, %v9596
        %v9716 = vadd.f32 %v9715, %v9597
        %9717 = vadd.xlane.f32.xlu0 %v9716
        %v9718 = vpop.xlane.xlu0 %9717
        %v9719 = vadd.f32 %v9598, %v9599
        %v9720 = vadd.f32 %v9719, %v9600
        %9721 = vadd.xlane.f32.xlu0 %v9720
        %v9722 = vpop.xlane.xlu0 %9721
        %v9723 = vadd.f32 %v9601, %v9602
        %v9724 = vadd.f32 %v9723, %v9603
        %9725 = vadd.xlane.f32.xlu0 %v9724
        %v9726 = vpop.xlane.xlu0 %9725
        %v9727 = vadd.f32 %v9604, %v9605
        %v9728 = vadd.f32 %v9727, %v9606
        %9729 = vadd.xlane.f32.xlu0 %v9728
        %v9730 = vpop.xlane.xlu0 %9729
        %v9731 = vadd.f32 %v9607, %v9608
        %v9732 = vadd.f32 %v9731, %v9609
        %9733 = vadd.xlane.f32.xlu0 %v9732
        %v9734 = vpop.xlane.xlu0 %9733
        %v9735 = vadd.f32 %v9610, %v9611
        %v9736 = vadd.f32 %v9735, %v9612
        %9737 = vadd.xlane.f32.xlu0 %v9736
        %v9738 = vpop.xlane.xlu0 %9737
        %v9739 = vadd.f32 %v9613, %v9614
        %v9740 = vadd.f32 %v9739, %v9615
        %9741 = vadd.xlane.f32.xlu0 %v9740
        %v9742 = vpop.xlane.xlu0 %9741
        %v9743 = vadd.f32 %v9616, %v9617
        %v9744 = vadd.f32 %v9743, %v9618
        %9745 = vadd.xlane.f32.xlu0 %v9744
        %v9746 = vpop.xlane.xlu0 %9745
        %s9747 = sld [smem:[#allocation5]]
        %v9748 = vstv %s9747
        %v9749 = vadd.f32 %v9622, %v9748
        %v9750 = vadd.f32 %v9626, %v9748
        %v9751 = vadd.f32 %v9630, %v9748
        %v9752 = vadd.f32 %v9634, %v9748
        %v9753 = vadd.f32 %v9638, %v9748
        %v9754 = vadd.f32 %v9642, %v9748
        %v9755 = vadd.f32 %v9646, %v9748
        %v9756 = vadd.f32 %v9650, %v9748
        %v9757 = vadd.f32 %v9654, %v9748
        %v9758 = vadd.f32 %v9658, %v9748
        %v9759 = vadd.f32 %v9662, %v9748
        %v9760 = vadd.f32 %v9666, %v9748
        %v9761 = vadd.f32 %v9670, %v9748
        %v9762 = vadd.f32 %v9674, %v9748
        %v9763 = vadd.f32 %v9678, %v9748
        %v9764 = vadd.f32 %v9682, %v9748
        %v9765 = vadd.f32 %v9686, %v9748
        %v9766 = vadd.f32 %v9690, %v9748
        %v9767 = vadd.f32 %v9694, %v9748
        %v9768 = vadd.f32 %v9698, %v9748
        %v9769 = vadd.f32 %v9702, %v9748
        %v9770 = vadd.f32 %v9706, %v9748
        %v9771 = vadd.f32 %v9710, %v9748
        %v9772 = vadd.f32 %v9714, %v9748
        %v9773 = vadd.f32 %v9718, %v9748
        %v9774 = vadd.f32 %v9722, %v9748
        %v9775 = vadd.f32 %v9726, %v9748
        %v9776 = vadd.f32 %v9730, %v9748
        %v9777 = vadd.f32 %v9734, %v9748
        %v9778 = vadd.f32 %v9738, %v9748
        %v9779 = vadd.f32 %v9742, %v9748
        %v9780 = vadd.f32 %v9746, %v9748
        %s9781 = smul.u32 %s35, 256
        %v9782 = vlaneseq
        %v9783 = vshrl.u32 %v9782, 7
        %v9784 = vadd.s32 %v9783, 8
        %v9785 = vadd.s32 %v9783, 16
        %v9786 = vadd.s32 %v9783, 24
        %v9787 = vadd.s32 %v9783, 32
        %v9788 = vadd.s32 %v9783, 40
        %v9789 = vadd.s32 %v9783, 48
        %v9790 = vadd.s32 %v9783, 56
        %v9791 = vadd.s32 %v9783, 64
        %v9792 = vadd.s32 %v9783, 72
        %v9793 = vadd.s32 %v9783, 80
        %v9794 = vadd.s32 %v9783, 88
        %v9795 = vadd.s32 %v9783, 96
        %v9796 = vadd.s32 %v9783, 104
        %v9797 = vadd.s32 %v9783, 112
        %v9798 = vadd.s32 %v9783, 120
        %v9799 = vadd.s32 %v9783, 128
        %v9800 = vadd.s32 %v9783, 136
        %v9801 = vadd.s32 %v9783, 144
        %v9802 = vadd.s32 %v9783, 152
        %v9803 = vadd.s32 %v9783, 160
        %v9804 = vadd.s32 %v9783, 168
        %v9805 = vadd.s32 %v9783, 176
        %v9806 = vadd.s32 %v9783, 184
        %v9807 = vadd.s32 %v9783, 192
        %v9808 = vadd.s32 %v9783, 200
        %v9809 = vadd.s32 %v9783, 208
        %v9810 = vadd.s32 %v9783, 216
        %v9811 = vadd.s32 %v9783, 224
        %v9812 = vadd.s32 %v9783, 232
        %v9813 = vadd.s32 %v9783, 240
        %v9814 = vadd.s32 %v9783, 248
        %v9815 = vstv %s9781
        %v9816 = vadd.s32 %v9815, %v9783
        %v9817 = vadd.s32 %v9815, %v9784
        %v9818 = vadd.s32 %v9815, %v9785
        %v9819 = vadd.s32 %v9815, %v9786
        %v9820 = vadd.s32 %v9815, %v9787
        %v9821 = vadd.s32 %v9815, %v9788
        %v9822 = vadd.s32 %v9815, %v9789
        %v9823 = vadd.s32 %v9815, %v9790
        %v9824 = vadd.s32 %v9815, %v9791
        %v9825 = vadd.s32 %v9815, %v9792
        %v9826 = vadd.s32 %v9815, %v9793
        %v9827 = vadd.s32 %v9815, %v9794
        %v9828 = vadd.s32 %v9815, %v9795
        %v9829 = vadd.s32 %v9815, %v9796
        %v9830 = vadd.s32 %v9815, %v9797
        %v9831 = vadd.s32 %v9815, %v9798
        %v9832 = vadd.s32 %v9815, %v9799
        %v9833 = vadd.s32 %v9815, %v9800
        %v9834 = vadd.s32 %v9815, %v9801
        %v9835 = vadd.s32 %v9815, %v9802
        %v9836 = vadd.s32 %v9815, %v9803
        %v9837 = vadd.s32 %v9815, %v9804
        %v9838 = vadd.s32 %v9815, %v9805
        %v9839 = vadd.s32 %v9815, %v9806
        %v9840 = vadd.s32 %v9815, %v9807
        %v9841 = vadd.s32 %v9815, %v9808
        %v9842 = vadd.s32 %v9815, %v9809
        %v9843 = vadd.s32 %v9815, %v9810
        %v9844 = vadd.s32 %v9815, %v9811
        %v9845 = vadd.s32 %v9815, %v9812
        %v9846 = vadd.s32 %v9815, %v9813
        %v9847 = vadd.s32 %v9815, %v9814
        %vm9848 = vcmp.lt.s32.totalorder %v9816, 600
        %vm9849 = vcmp.lt.s32.totalorder %v9817, 600
        %vm9850 = vcmp.lt.s32.totalorder %v9818, 600
        %vm9851 = vcmp.lt.s32.totalorder %v9819, 600
        %vm9852 = vcmp.lt.s32.totalorder %v9820, 600
        %vm9853 = vcmp.lt.s32.totalorder %v9821, 600
        %vm9854 = vcmp.lt.s32.totalorder %v9822, 600
        %vm9855 = vcmp.lt.s32.totalorder %v9823, 600
        %vm9856 = vcmp.lt.s32.totalorder %v9824, 600
        %vm9857 = vcmp.lt.s32.totalorder %v9825, 600
        %vm9858 = vcmp.lt.s32.totalorder %v9826, 600
        %vm9859 = vcmp.lt.s32.totalorder %v9827, 600
        %vm9860 = vcmp.lt.s32.totalorder %v9828, 600
        %vm9861 = vcmp.lt.s32.totalorder %v9829, 600
        %vm9862 = vcmp.lt.s32.totalorder %v9830, 600
        %vm9863 = vcmp.lt.s32.totalorder %v9831, 600
        %vm9864 = vcmp.lt.s32.totalorder %v9832, 600
        %vm9865 = vcmp.lt.s32.totalorder %v9833, 600
        %vm9866 = vcmp.lt.s32.totalorder %v9834, 600
        %vm9867 = vcmp.lt.s32.totalorder %v9835, 600
        %vm9868 = vcmp.lt.s32.totalorder %v9836, 600
        %vm9869 = vcmp.lt.s32.totalorder %v9837, 600
        %vm9870 = vcmp.lt.s32.totalorder %v9838, 600
        %vm9871 = vcmp.lt.s32.totalorder %v9839, 600
        %vm9872 = vcmp.lt.s32.totalorder %v9840, 600
        %vm9873 = vcmp.lt.s32.totalorder %v9841, 600
        %vm9874 = vcmp.lt.s32.totalorder %v9842, 600
        %vm9875 = vcmp.lt.s32.totalorder %v9843, 600
        %vm9876 = vcmp.lt.s32.totalorder %v9844, 600
        %vm9877 = vcmp.lt.s32.totalorder %v9845, 600
        %vm9878 = vcmp.lt.s32.totalorder %v9846, 600
        %vm9879 = vcmp.lt.s32.totalorder %v9847, 600
        %v9880 = vsel %vm9848, %v9749, -1e+30
        %v9881 = vsel %vm9849, %v9750, -1e+30
        %v9882 = vsel %vm9850, %v9751, -1e+30
        %v9883 = vsel %vm9851, %v9752, -1e+30
        %v9884 = vsel %vm9852, %v9753, -1e+30
        %v9885 = vsel %vm9853, %v9754, -1e+30
        %v9886 = vsel %vm9854, %v9755, -1e+30
        %v9887 = vsel %vm9855, %v9756, -1e+30
        %v9888 = vsel %vm9856, %v9757, -1e+30
        %v9889 = vsel %vm9857, %v9758, -1e+30
        %v9890 = vsel %vm9858, %v9759, -1e+30
        %v9891 = vsel %vm9859, %v9760, -1e+30
        %v9892 = vsel %vm9860, %v9761, -1e+30
        %v9893 = vsel %vm9861, %v9762, -1e+30
        %v9894 = vsel %vm9862, %v9763, -1e+30
        %v9895 = vsel %vm9863, %v9764, -1e+30
        %v9896 = vsel %vm9864, %v9765, -1e+30
        %v9897 = vsel %vm9865, %v9766, -1e+30
        %v9898 = vsel %vm9866, %v9767, -1e+30
        %v9899 = vsel %vm9867, %v9768, -1e+30
        %v9900 = vsel %vm9868, %v9769, -1e+30
        %v9901 = vsel %vm9869, %v9770, -1e+30
        %v9902 = vsel %vm9870, %v9771, -1e+30
        %v9903 = vsel %vm9871, %v9772, -1e+30
        %v9904 = vsel %vm9872, %v9773, -1e+30
        %v9905 = vsel %vm9873, %v9774, -1e+30
        %v9906 = vsel %vm9874, %v9775, -1e+30
        %v9907 = vsel %vm9875, %v9776, -1e+30
        %v9908 = vsel %vm9876, %v9777, -1e+30
        %v9909 = vsel %vm9877, %v9778, -1e+30
        %v9910 = vsel %vm9878, %v9779, -1e+30
        %v9911 = vsel %vm9879, %v9780, -1e+30
        %vm9912 = vcmask 7168
        %9913 = vst.msk [vmem:[%s566] sm:$0xff] %vm9912, %v9880
        %9914 = vst.msk [vmem:[%s566 + $0x8] sm:$0xff] %vm9912, %v9881
        %9915 = vst.msk [vmem:[%s566 + $0x10] sm:$0xff] %vm9912, %v9882
        %9916 = vst.msk [vmem:[%s566 + $0x18] sm:$0xff] %vm9912, %v9883
        %9917 = vst.msk [vmem:[%s566 + $0x20] sm:$0xff] %vm9912, %v9884
        %9918 = vst.msk [vmem:[%s566 + $0x28] sm:$0xff] %vm9912, %v9885
        %9919 = vst.msk [vmem:[%s566 + $0x30] sm:$0xff] %vm9912, %v9886
        %9920 = vst.msk [vmem:[%s566 + $0x38] sm:$0xff] %vm9912, %v9887
        %9921 = vst.msk [vmem:[%s566 + $0x40] sm:$0xff] %vm9912, %v9888
        %9922 = vst.msk [vmem:[%s566 + $0x48] sm:$0xff] %vm9912, %v9889
        %9923 = vst.msk [vmem:[%s566 + $0x50] sm:$0xff] %vm9912, %v9890
        %9924 = vst.msk [vmem:[%s566 + $0x58] sm:$0xff] %vm9912, %v9891
        %9925 = vst.msk [vmem:[%s566 + $0x60] sm:$0xff] %vm9912, %v9892
        %9926 = vst.msk [vmem:[%s566 + $0x68] sm:$0xff] %vm9912, %v9893
        %9927 = vst.msk [vmem:[%s566 + $0x70] sm:$0xff] %vm9912, %v9894
        %9928 = vst.msk [vmem:[%s566 + $0x78] sm:$0xff] %vm9912, %v9895
        %9929 = vst.msk [vmem:[%s566 + $0x80] sm:$0xff] %vm9912, %v9896
        %9930 = vst.msk [vmem:[%s566 + $0x88] sm:$0xff] %vm9912, %v9897
        %9931 = vst.msk [vmem:[%s566 + $0x90] sm:$0xff] %vm9912, %v9898
        %9932 = vst.msk [vmem:[%s566 + $0x98] sm:$0xff] %vm9912, %v9899
        %9933 = vst.msk [vmem:[%s566 + $0xa0] sm:$0xff] %vm9912, %v9900
        %9934 = vst.msk [vmem:[%s566 + $0xa8] sm:$0xff] %vm9912, %v9901
        %9935 = vst.msk [vmem:[%s566 + $0xb0] sm:$0xff] %vm9912, %v9902
        %9936 = vst.msk [vmem:[%s566 + $0xb8] sm:$0xff] %vm9912, %v9903
        %9937 = vst.msk [vmem:[%s566 + $0xc0] sm:$0xff] %vm9912, %v9904
        %9938 = vst.msk [vmem:[%s566 + $0xc8] sm:$0xff] %vm9912, %v9905
        %9939 = vst.msk [vmem:[%s566 + $0xd0] sm:$0xff] %vm9912, %v9906
        %9940 = vst.msk [vmem:[%s566 + $0xd8] sm:$0xff] %vm9912, %v9907
        %9941 = vst.msk [vmem:[%s566 + $0xe0] sm:$0xff] %vm9912, %v9908
        %9942 = vst.msk [vmem:[%s566 + $0xe8] sm:$0xff] %vm9912, %v9909
        %9943 = vst.msk [vmem:[%s566 + $0xf0] sm:$0xff] %vm9912, %v9910
        %9944 = vst.msk [vmem:[%s566 + $0xf8] sm:$0xff] %vm9912, %v9911
        %v9945 = vmax.f32 %v9880, %v9884
        %v9946 = vmax.f32 %v9881, %v9885
        %v9947 = vmax.f32 %v9882, %v9886
        %v9948 = vmax.f32 %v9883, %v9887
        %v9949 = vmax.f32 %v9945, %v9888
        %v9950 = vmax.f32 %v9946, %v9889
        %v9951 = vmax.f32 %v9947, %v9890
        %v9952 = vmax.f32 %v9948, %v9891
        %v9953 = vmax.f32 %v9949, %v9892
        %v9954 = vmax.f32 %v9950, %v9893
        %v9955 = vmax.f32 %v9951, %v9894
        %v9956 = vmax.f32 %v9952, %v9895
        %v9957 = vmax.f32 %v9953, %v9896
        %v9958 = vmax.f32 %v9954, %v9897
        %v9959 = vmax.f32 %v9955, %v9898
        %v9960 = vmax.f32 %v9956, %v9899
        %v9961 = vmax.f32 %v9957, %v9900
        %v9962 = vmax.f32 %v9958, %v9901
        %v9963 = vmax.f32 %v9959, %v9902
        %v9964 = vmax.f32 %v9960, %v9903
        %v9965 = vmax.f32 %v9961, %v9904
        %v9966 = vmax.f32 %v9962, %v9905
        %v9967 = vmax.f32 %v9963, %v9906
        %v9968 = vmax.f32 %v9964, %v9907
        %v9969 = vmax.f32 %v9965, %v9908
        %v9970 = vmax.f32 %v9966, %v9909
        %v9971 = vmax.f32 %v9967, %v9910
        %v9972 = vmax.f32 %v9968, %v9911
        %v9973 = vmax.f32 %v9969, %v9970
        %v9974 = vmax.f32 %v9971, %v9972
        %v9975 = vmax.f32 %v9973, %v9974
        %v9976 = vrot.slane %v9975, 4
        %v9977 = vmax.f32 %v9975, %v9976
        %v9978 = vrot.slane %v9977, 2
        %v9979 = vmax.f32 %v9977, %v9978
        %v9980 = vrot.slane %v9979, 1
        %v9981 = vmax.f32 %v9979, %v9980
        %v9982 = vld [vmem:[#allocation2] sm:$0x1]
        %v9983 = vmax.f32 %v9982, %v9981
        %v9984 = vsub.f32 %v9982, %v9983
        %v9985 = vmul.f32 %v9984, 1.442695
        %v9986 = vpow.pop %v9985
        %v9988 = vlaneseq
        %v9989 = vshrl.u32 %v9988, 7
        %v9990 = vsub.s32 0, %v9989
        %v9991 = vrot.slane %v9983, %v9990
        %v9993 = vsub.f32 %v9880, %v9991
        %v9994 = vsub.f32 %v9881, %v9991
        %v9995 = vsub.f32 %v9882, %v9991
        %v9996 = vsub.f32 %v9883, %v9991
        %v9997 = vsub.f32 %v9884, %v9991
        %v9998 = vsub.f32 %v9885, %v9991
        %v9999 = vsub.f32 %v9886, %v9991
        %v10000 = vsub.f32 %v9887, %v9991
        %v10001 = vsub.f32 %v9888, %v9991
        %v10002 = vsub.f32 %v9889, %v9991
        %v10003 = vsub.f32 %v9890, %v9991
        %v10004 = vsub.f32 %v9891, %v9991
        %v10005 = vsub.f32 %v9892, %v9991
        %v10006 = vsub.f32 %v9893, %v9991
        %v10007 = vsub.f32 %v9894, %v9991
        %v10008 = vsub.f32 %v9895, %v9991
        %v10009 = vsub.f32 %v9896, %v9991
        %v10010 = vsub.f32 %v9897, %v9991
        %v10011 = vsub.f32 %v9898, %v9991
        %v10012 = vsub.f32 %v9899, %v9991
        %v10013 = vsub.f32 %v9900, %v9991
        %v10014 = vsub.f32 %v9901, %v9991
        %v10015 = vsub.f32 %v9902, %v9991
        %v10016 = vsub.f32 %v9903, %v9991
        %v10017 = vsub.f32 %v9904, %v9991
        %v10018 = vsub.f32 %v9905, %v9991
        %v10019 = vsub.f32 %v9906, %v9991
        %v10020 = vsub.f32 %v9907, %v9991
        %v10021 = vsub.f32 %v9908, %v9991
        %v10022 = vsub.f32 %v9909, %v9991
        %v10023 = vsub.f32 %v9910, %v9991
        %v10024 = vsub.f32 %v9911, %v9991
        %v10025 = vmul.f32 %v9993, 1.442695
        %v10026 = vpow.pop %v10025
        %v10027 = vmul.f32 %v9994, 1.442695
        %v10028 = vpow.pop %v10027
        %v10029 = vmul.f32 %v9995, 1.442695
        %v10030 = vpow.pop %v10029
        %v10031 = vmul.f32 %v9996, 1.442695
        %v10032 = vpow.pop %v10031
        %v10033 = vmul.f32 %v9997, 1.442695
        %v10034 = vpow.pop %v10033
        %v10035 = vmul.f32 %v9998, 1.442695
        %v10036 = vpow.pop %v10035
        %v10037 = vmul.f32 %v9999, 1.442695
        %v10038 = vpow.pop %v10037
        %v10039 = vmul.f32 %v10000, 1.442695
        %v10040 = vpow.pop %v10039
        %v10041 = vmul.f32 %v10001, 1.442695
        %v10042 = vpow.pop %v10041
        %v10043 = vmul.f32 %v10002, 1.442695
        %v10044 = vpow.pop %v10043
        %v10045 = vmul.f32 %v10003, 1.442695
        %v10046 = vpow.pop %v10045
        %v10047 = vmul.f32 %v10004, 1.442695
        %v10048 = vpow.pop %v10047
        %v10049 = vmul.f32 %v10005, 1.442695
        %v10050 = vpow.pop %v10049
        %v10051 = vmul.f32 %v10006, 1.442695
        %v10052 = vpow.pop %v10051
        %v10053 = vmul.f32 %v10007, 1.442695
        %v10054 = vpow.pop %v10053
        %v10055 = vmul.f32 %v10008, 1.442695
        %v10056 = vpow.pop %v10055
        %v10057 = vmul.f32 %v10009, 1.442695
        %v10058 = vpow.pop %v10057
        %v10059 = vmul.f32 %v10010, 1.442695
        %v10060 = vpow.pop %v10059
        %v10061 = vmul.f32 %v10011, 1.442695
        %v10062 = vpow.pop %v10061
        %v10063 = vmul.f32 %v10012, 1.442695
        %v10064 = vpow.pop %v10063
        %v10065 = vmul.f32 %v10013, 1.442695
        %v10066 = vpow.pop %v10065
        %v10067 = vmul.f32 %v10014, 1.442695
        %v10068 = vpow.pop %v10067
        %v10069 = vmul.f32 %v10015, 1.442695
        %v10070 = vpow.pop %v10069
        %v10071 = vmul.f32 %v10016, 1.442695
        %v10072 = vpow.pop %v10071
        %v10073 = vmul.f32 %v10017, 1.442695
        %v10074 = vpow.pop %v10073
        %v10075 = vmul.f32 %v10018, 1.442695
        %v10076 = vpow.pop %v10075
        %v10077 = vmul.f32 %v10019, 1.442695
        %v10078 = vpow.pop %v10077
        %v10079 = vmul.f32 %v10020, 1.442695
        %v10080 = vpow.pop %v10079
        %v10081 = vmul.f32 %v10021, 1.442695
        %v10082 = vpow.pop %v10081
        %v10083 = vmul.f32 %v10022, 1.442695
        %v10084 = vpow.pop %v10083
        %v10085 = vmul.f32 %v10023, 1.442695
        %v10086 = vpow.pop %v10085
        %v10087 = vmul.f32 %v10024, 1.442695
        %v10088 = vpow.pop %v10087
        %v10089 = vld [vmem:[#allocation3] sm:$0x1]
        %v10090 = vmul.f32 %v9986, %v10089
        %v10091 = vsel %vm9912, %v10026, 0.0
        %v10092 = vsel %vm9912, %v10028, 0.0
        %v10093 = vadd.f32 %v10091, %v10092
        %v10094 = vsel %vm9912, %v10030, 0.0
        %v10095 = vadd.f32 %v10093, %v10094
        %v10096 = vsel %vm9912, %v10032, 0.0
        %v10097 = vadd.f32 %v10095, %v10096
        %v10098 = vsel %vm9912, %v10034, 0.0
        %v10099 = vadd.f32 %v10097, %v10098
        %v10100 = vsel %vm9912, %v10036, 0.0
        %v10101 = vadd.f32 %v10099, %v10100
        %v10102 = vsel %vm9912, %v10038, 0.0
        %v10103 = vadd.f32 %v10101, %v10102
        %v10104 = vsel %vm9912, %v10040, 0.0
        %v10105 = vadd.f32 %v10103, %v10104
        %v10106 = vsel %vm9912, %v10042, 0.0
        %v10107 = vadd.f32 %v10105, %v10106
        %v10108 = vsel %vm9912, %v10044, 0.0
        %v10109 = vadd.f32 %v10107, %v10108
        %v10110 = vsel %vm9912, %v10046, 0.0
        %v10111 = vadd.f32 %v10109, %v10110
        %v10112 = vsel %vm9912, %v10048, 0.0
        %v10113 = vadd.f32 %v10111, %v10112
        %v10114 = vsel %vm9912, %v10050, 0.0
        %v10115 = vadd.f32 %v10113, %v10114
        %v10116 = vsel %vm9912, %v10052, 0.0
        %v10117 = vadd.f32 %v10115, %v10116
        %v10118 = vsel %vm9912, %v10054, 0.0
        %v10119 = vadd.f32 %v10117, %v10118
        %v10120 = vsel %vm9912, %v10056, 0.0
        %v10121 = vadd.f32 %v10119, %v10120
        %v10122 = vsel %vm9912, %v10058, 0.0
        %v10123 = vadd.f32 %v10121, %v10122
        %v10124 = vsel %vm9912, %v10060, 0.0
        %v10125 = vadd.f32 %v10123, %v10124
        %v10126 = vsel %vm9912, %v10062, 0.0
        %v10127 = vadd.f32 %v10125, %v10126
        %v10128 = vsel %vm9912, %v10064, 0.0
        %v10129 = vadd.f32 %v10127, %v10128
        %v10130 = vsel %vm9912, %v10066, 0.0
        %v10131 = vadd.f32 %v10129, %v10130
        %v10132 = vsel %vm9912, %v10068, 0.0
        %v10133 = vadd.f32 %v10131, %v10132
        %v10134 = vsel %vm9912, %v10070, 0.0
        %v10135 = vadd.f32 %v10133, %v10134
        %v10136 = vsel %vm9912, %v10072, 0.0
        %v10137 = vadd.f32 %v10135, %v10136
        %v10138 = vsel %vm9912, %v10074, 0.0
        %v10139 = vadd.f32 %v10137, %v10138
        %v10140 = vsel %vm9912, %v10076, 0.0
        %v10141 = vadd.f32 %v10139, %v10140
        %v10142 = vsel %vm9912, %v10078, 0.0
        %v10143 = vadd.f32 %v10141, %v10142
        %v10144 = vsel %vm9912, %v10080, 0.0
        %v10145 = vadd.f32 %v10143, %v10144
        %v10146 = vsel %vm9912, %v10082, 0.0
        %v10147 = vadd.f32 %v10145, %v10146
        %v10148 = vsel %vm9912, %v10084, 0.0
        %v10149 = vadd.f32 %v10147, %v10148
        %v10150 = vsel %vm9912, %v10086, 0.0
        %v10151 = vadd.f32 %v10149, %v10150
        %v10152 = vsel %vm9912, %v10088, 0.0
        %v10153 = vadd.f32 %v10151, %v10152
        %v10154 = vrot.slane %v10153, 4
        %v10155 = vadd.f32 %v10153, %v10154
        %v10156 = vrot.slane %v10155, 2
        %v10157 = vadd.f32 %v10155, %v10156
        %v10158 = vrot.slane %v10157, 1
        %v10159 = vadd.f32 %v10157, %v10158
        %v10160 = vadd.f32 %v10090, %v10159
        %vm10161 = vcmask 0
        %10162 = vst.msk [vmem:[#allocation3] sm:$0x1] %vm10161, %v10160
        %v10163 = vld [vmem:[#allocation4] sm:$0xf]
        %10165 = vset.pattern.permute.xlu0 0
        %10166 = vperm.xlu0 %10165, %v9986
        %v10167 = vpop.permute.xlu0 %10166
        %v10169 = vlaneseq
        %v10170 = vshrl.u32 %v10169, 7
        %v10171 = vsub.s32 0, %v10170
        %v10172 = vrot.slane %v10167, %v10171
        %v10173 = vmul.f32 %v10172, %v10163
        %10175 = vset.pattern.permute.xlu0 0
        %10176 = vperm.xlu0 %10175, %v10026
        %v10177 = vpop.permute.xlu0 %10176
        %10180 = vset.pattern.permute.xlu0 0
        %10181 = vperm.xlu0 %10180, %v10028
        %v10182 = vpop.permute.xlu0 %10181
        %10185 = vset.pattern.permute.xlu0 0
        %10186 = vperm.xlu0 %10185, %v10030
        %v10187 = vpop.permute.xlu0 %10186
        %10190 = vset.pattern.permute.xlu0 0
        %10191 = vperm.xlu0 %10190, %v10032
        %v10192 = vpop.permute.xlu0 %10191
        %10195 = vset.pattern.permute.xlu0 0
        %10196 = vperm.xlu0 %10195, %v10034
        %v10197 = vpop.permute.xlu0 %10196
        %10200 = vset.pattern.permute.xlu0 0
        %10201 = vperm.xlu0 %10200, %v10036
        %v10202 = vpop.permute.xlu0 %10201
        %10205 = vset.pattern.permute.xlu0 0
        %10206 = vperm.xlu0 %10205, %v10038
        %v10207 = vpop.permute.xlu0 %10206
        %10210 = vset.pattern.permute.xlu0 0
        %10211 = vperm.xlu0 %10210, %v10040
        %v10212 = vpop.permute.xlu0 %10211
        %10215 = vset.pattern.permute.xlu0 0
        %10216 = vperm.xlu0 %10215, %v10042
        %v10217 = vpop.permute.xlu0 %10216
        %10220 = vset.pattern.permute.xlu0 0
        %10221 = vperm.xlu0 %10220, %v10044
        %v10222 = vpop.permute.xlu0 %10221
        %10225 = vset.pattern.permute.xlu0 0
        %10226 = vperm.xlu0 %10225, %v10046
        %v10227 = vpop.permute.xlu0 %10226
        %10230 = vset.pattern.permute.xlu0 0
        %10231 = vperm.xlu0 %10230, %v10048
        %v10232 = vpop.permute.xlu0 %10231
        %10235 = vset.pattern.permute.xlu0 0
        %10236 = vperm.xlu0 %10235, %v10050
        %v10237 = vpop.permute.xlu0 %10236
        %10240 = vset.pattern.permute.xlu0 0
        %10241 = vperm.xlu0 %10240, %v10052
        %v10242 = vpop.permute.xlu0 %10241
        %10245 = vset.pattern.permute.xlu0 0
        %10246 = vperm.xlu0 %10245, %v10054
        %v10247 = vpop.permute.xlu0 %10246
        %10250 = vset.pattern.permute.xlu0 0
        %10251 = vperm.xlu0 %10250, %v10056
        %v10252 = vpop.permute.xlu0 %10251
        %10255 = vset.pattern.permute.xlu0 0
        %10256 = vperm.xlu0 %10255, %v10058
        %v10257 = vpop.permute.xlu0 %10256
        %10260 = vset.pattern.permute.xlu0 0
        %10261 = vperm.xlu0 %10260, %v10060
        %v10262 = vpop.permute.xlu0 %10261
        %10265 = vset.pattern.permute.xlu0 0
        %10266 = vperm.xlu0 %10265, %v10062
        %v10267 = vpop.permute.xlu0 %10266
        %10270 = vset.pattern.permute.xlu0 0
        %10271 = vperm.xlu0 %10270, %v10064
        %v10272 = vpop.permute.xlu0 %10271
        %10275 = vset.pattern.permute.xlu0 0
        %10276 = vperm.xlu0 %10275, %v10066
        %v10277 = vpop.permute.xlu0 %10276
        %10280 = vset.pattern.permute.xlu0 0
        %10281 = vperm.xlu0 %10280, %v10068
        %v10282 = vpop.permute.xlu0 %10281
        %10285 = vset.pattern.permute.xlu0 0
        %10286 = vperm.xlu0 %10285, %v10070
        %v10287 = vpop.permute.xlu0 %10286
        %10290 = vset.pattern.permute.xlu0 0
        %10291 = vperm.xlu0 %10290, %v10072
        %v10292 = vpop.permute.xlu0 %10291
        %10295 = vset.pattern.permute.xlu0 0
        %10296 = vperm.xlu0 %10295, %v10074
        %v10297 = vpop.permute.xlu0 %10296
        %10300 = vset.pattern.permute.xlu0 0
        %10301 = vperm.xlu0 %10300, %v10076
        %v10302 = vpop.permute.xlu0 %10301
        %10305 = vset.pattern.permute.xlu0 0
        %10306 = vperm.xlu0 %10305, %v10078
        %v10307 = vpop.permute.xlu0 %10306
        %10310 = vset.pattern.permute.xlu0 0
        %10311 = vperm.xlu0 %10310, %v10080
        %v10312 = vpop.permute.xlu0 %10311
        %10315 = vset.pattern.permute.xlu0 0
        %10316 = vperm.xlu0 %10315, %v10082
        %v10317 = vpop.permute.xlu0 %10316
        %10320 = vset.pattern.permute.xlu0 0
        %10321 = vperm.xlu0 %10320, %v10084
        %v10322 = vpop.permute.xlu0 %10321
        %10325 = vset.pattern.permute.xlu0 0
        %10326 = vperm.xlu0 %10325, %v10086
        %v10327 = vpop.permute.xlu0 %10326
        %10330 = vset.pattern.permute.xlu0 0
        %10331 = vperm.xlu0 %10330, %v10088
        %v10332 = vpop.permute.xlu0 %10331
        %v10334 = vmul.f32 %v10177, %v6204
        %v10335 = vmul.f32 %v10177, %v6205
        %v10336 = vmul.f32 %v10177, %v6206
        %v10337 = vmul.f32 %v10177, %v6207
        %v10338 = vmul.f32 %v10182, %v6208
        %v10339 = vmul.f32 %v10182, %v6209
        %v10340 = vmul.f32 %v10182, %v6210
        %v10341 = vmul.f32 %v10182, %v6211
        %v10342 = vmul.f32 %v10187, %v6212
        %v10343 = vmul.f32 %v10187, %v6213
        %v10344 = vmul.f32 %v10187, %v6214
        %v10345 = vmul.f32 %v10187, %v6215
        %v10346 = vmul.f32 %v10192, %v6216
        %v10347 = vmul.f32 %v10192, %v6217
        %v10348 = vmul.f32 %v10192, %v6218
        %v10349 = vmul.f32 %v10192, %v6219
        %v10350 = vmul.f32 %v10197, %v6220
        %v10351 = vmul.f32 %v10197, %v6221
        %v10352 = vmul.f32 %v10197, %v6222
        %v10353 = vmul.f32 %v10197, %v6223
        %v10354 = vmul.f32 %v10202, %v6224
        %v10355 = vmul.f32 %v10202, %v6225
        %v10356 = vmul.f32 %v10202, %v6226
        %v10357 = vmul.f32 %v10202, %v6227
        %v10358 = vmul.f32 %v10207, %v6228
        %v10359 = vmul.f32 %v10207, %v6229
        %v10360 = vmul.f32 %v10207, %v6230
        %v10361 = vmul.f32 %v10207, %v6231
        %v10362 = vmul.f32 %v10212, %v6232
        %v10363 = vmul.f32 %v10212, %v6233
        %v10364 = vmul.f32 %v10212, %v6234
        %v10365 = vmul.f32 %v10212, %v6235
        %v10366 = vmul.f32 %v10217, %v6236
        %v10367 = vmul.f32 %v10217, %v6237
        %v10368 = vmul.f32 %v10217, %v6238
        %v10369 = vmul.f32 %v10217, %v6239
        %v10370 = vmul.f32 %v10222, %v6240
        %v10371 = vmul.f32 %v10222, %v6241
        %v10372 = vmul.f32 %v10222, %v6242
        %v10373 = vmul.f32 %v10222, %v6243
        %v10374 = vmul.f32 %v10227, %v6244
        %v10375 = vmul.f32 %v10227, %v6245
        %v10376 = vmul.f32 %v10227, %v6246
        %v10377 = vmul.f32 %v10227, %v6247
        %v10378 = vmul.f32 %v10232, %v6248
        %v10379 = vmul.f32 %v10232, %v6249
        %v10380 = vmul.f32 %v10232, %v6250
        %v10381 = vmul.f32 %v10232, %v6251
        %v10382 = vmul.f32 %v10237, %v6252
        %v10383 = vmul.f32 %v10237, %v6253
        %v10384 = vmul.f32 %v10237, %v6254
        %v10385 = vmul.f32 %v10237, %v6255
        %v10386 = vmul.f32 %v10242, %v6256
        %v10387 = vmul.f32 %v10242, %v6257
        %v10388 = vmul.f32 %v10242, %v6258
        %v10389 = vmul.f32 %v10242, %v6259
        %v10390 = vmul.f32 %v10247, %v6260
        %v10391 = vmul.f32 %v10247, %v6261
        %v10392 = vmul.f32 %v10247, %v6262
        %v10393 = vmul.f32 %v10247, %v6263
        %v10394 = vmul.f32 %v10252, %v6264
        %v10395 = vmul.f32 %v10252, %v6265
        %v10396 = vmul.f32 %v10252, %v6266
        %v10397 = vmul.f32 %v10252, %v6267
        %v10398 = vmul.f32 %v10257, %v6268
        %v10399 = vmul.f32 %v10257, %v6269
        %v10400 = vmul.f32 %v10257, %v6270
        %v10401 = vmul.f32 %v10257, %v6271
        %v10402 = vmul.f32 %v10262, %v6272
        %v10403 = vmul.f32 %v10262, %v6273
        %v10404 = vmul.f32 %v10262, %v6274
        %v10405 = vmul.f32 %v10262, %v6275
        %v10406 = vmul.f32 %v10267, %v6276
        %v10407 = vmul.f32 %v10267, %v6277
        %v10408 = vmul.f32 %v10267, %v6278
        %v10409 = vmul.f32 %v10267, %v6279
        %v10410 = vmul.f32 %v10272, %v6280
        %v10411 = vmul.f32 %v10272, %v6281
        %v10412 = vmul.f32 %v10272, %v6282
        %v10413 = vmul.f32 %v10272, %v6283
        %v10414 = vmul.f32 %v10277, %v6284
        %v10415 = vmul.f32 %v10277, %v6285
        %v10416 = vmul.f32 %v10277, %v6286
        %v10417 = vmul.f32 %v10277, %v6287
        %v10418 = vmul.f32 %v10282, %v6288
        %v10419 = vmul.f32 %v10282, %v6289
        %v10420 = vmul.f32 %v10282, %v6290
        %v10421 = vmul.f32 %v10282, %v6291
        %v10422 = vmul.f32 %v10287, %v6292
        %v10423 = vmul.f32 %v10287, %v6293
        %v10424 = vmul.f32 %v10287, %v6294
        %v10425 = vmul.f32 %v10287, %v6295
        %v10426 = vmul.f32 %v10292, %v6296
        %v10427 = vmul.f32 %v10292, %v6297
        %v10428 = vmul.f32 %v10292, %v6298
        %v10429 = vmul.f32 %v10292, %v6299
        %v10430 = vmul.f32 %v10297, %v6300
        %v10431 = vmul.f32 %v10297, %v6301
        %v10432 = vmul.f32 %v10297, %v6302
        %v10433 = vmul.f32 %v10297, %v6303
        %v10434 = vmul.f32 %v10302, %v6304
        %v10435 = vmul.f32 %v10302, %v6305
        %v10436 = vmul.f32 %v10302, %v6306
        %v10437 = vmul.f32 %v10302, %v6307
        %v10438 = vmul.f32 %v10307, %v6308
        %v10439 = vmul.f32 %v10307, %v6309
        %v10440 = vmul.f32 %v10307, %v6310
        %v10441 = vmul.f32 %v10307, %v6311
        %v10442 = vmul.f32 %v10312, %v6312
        %v10443 = vmul.f32 %v10312, %v6313
        %v10444 = vmul.f32 %v10312, %v6314
        %v10445 = vmul.f32 %v10312, %v6315
        %v10446 = vmul.f32 %v10317, %v6316
        %v10447 = vmul.f32 %v10317, %v6317
        %v10448 = vmul.f32 %v10317, %v6318
        %v10449 = vmul.f32 %v10317, %v6319
        %v10450 = vmul.f32 %v10322, %v6320
        %v10451 = vmul.f32 %v10322, %v6321
        %v10452 = vmul.f32 %v10322, %v6322
        %v10453 = vmul.f32 %v10322, %v6323
        %v10454 = vmul.f32 %v10327, %v6324
        %v10455 = vmul.f32 %v10327, %v6325
        %v10456 = vmul.f32 %v10327, %v6326
        %v10457 = vmul.f32 %v10327, %v6327
        %v10458 = vmul.f32 %v10332, %v6328
        %v10459 = vmul.f32 %v10332, %v6329
        %v10460 = vmul.f32 %v10332, %v6330
        %v10461 = vmul.f32 %v10332, %v6331
        %v10462 = vadd.f32 %v10334, %v10338
        %v10463 = vadd.f32 %v10462, %v10342
        %v10464 = vadd.f32 %v10463, %v10346
        %v10465 = vadd.f32 %v10464, %v10350
        %v10466 = vadd.f32 %v10465, %v10354
        %v10467 = vadd.f32 %v10466, %v10358
        %v10468 = vadd.f32 %v10467, %v10362
        %v10469 = vadd.f32 %v10468, %v10366
        %v10470 = vadd.f32 %v10469, %v10370
        %v10471 = vadd.f32 %v10470, %v10374
        %v10472 = vadd.f32 %v10471, %v10378
        %v10473 = vadd.f32 %v10472, %v10382
        %v10474 = vadd.f32 %v10473, %v10386
        %v10475 = vadd.f32 %v10474, %v10390
        %v10476 = vadd.f32 %v10475, %v10394
        %v10477 = vadd.f32 %v10476, %v10398
        %v10478 = vadd.f32 %v10477, %v10402
        %v10479 = vadd.f32 %v10478, %v10406
        %v10480 = vadd.f32 %v10479, %v10410
        %v10481 = vadd.f32 %v10480, %v10414
        %v10482 = vadd.f32 %v10481, %v10418
        %v10483 = vadd.f32 %v10482, %v10422
        %v10484 = vadd.f32 %v10483, %v10426
        %v10485 = vadd.f32 %v10484, %v10430
        %v10486 = vadd.f32 %v10485, %v10434
        %v10487 = vadd.f32 %v10486, %v10438
        %v10488 = vadd.f32 %v10487, %v10442
        %v10489 = vadd.f32 %v10488, %v10446
        %v10490 = vadd.f32 %v10489, %v10450
        %v10491 = vadd.f32 %v10490, %v10454
        %v10492 = vadd.f32 %v10491, %v10458
        %v10493 = vrot.slane %v10492, 4
        %v10494 = vadd.f32 %v10492, %v10493
        %v10495 = vrot.slane %v10494, 2
        %v10496 = vadd.f32 %v10494, %v10495
        %v10497 = vrot.slane %v10496, 1
        %v10498 = vadd.f32 %v10496, %v10497
        %v10499 = vadd.f32 %v10335, %v10339
        %v10500 = vadd.f32 %v10499, %v10343
        %v10501 = vadd.f32 %v10500, %v10347
        %v10502 = vadd.f32 %v10501, %v10351
        %v10503 = vadd.f32 %v10502, %v10355
        %v10504 = vadd.f32 %v10503, %v10359
        %v10505 = vadd.f32 %v10504, %v10363
        %v10506 = vadd.f32 %v10505, %v10367
        %v10507 = vadd.f32 %v10506, %v10371
        %v10508 = vadd.f32 %v10507, %v10375
        %v10509 = vadd.f32 %v10508, %v10379
        %v10510 = vadd.f32 %v10509, %v10383
        %v10511 = vadd.f32 %v10510, %v10387
        %v10512 = vadd.f32 %v10511, %v10391
        %v10513 = vadd.f32 %v10512, %v10395
        %v10514 = vadd.f32 %v10513, %v10399
        %v10515 = vadd.f32 %v10514, %v10403
        %v10516 = vadd.f32 %v10515, %v10407
        %v10517 = vadd.f32 %v10516, %v10411
        %v10518 = vadd.f32 %v10517, %v10415
        %v10519 = vadd.f32 %v10518, %v10419
        %v10520 = vadd.f32 %v10519, %v10423
        %v10521 = vadd.f32 %v10520, %v10427
        %v10522 = vadd.f32 %v10521, %v10431
        %v10523 = vadd.f32 %v10522, %v10435
        %v10524 = vadd.f32 %v10523, %v10439
        %v10525 = vadd.f32 %v10524, %v10443
        %v10526 = vadd.f32 %v10525, %v10447
        %v10527 = vadd.f32 %v10526, %v10451
        %v10528 = vadd.f32 %v10527, %v10455
        %v10529 = vadd.f32 %v10528, %v10459
        %v10530 = vrot.slane %v10529, 4
        %v10531 = vadd.f32 %v10529, %v10530
        %v10532 = vrot.slane %v10531, 2
        %v10533 = vadd.f32 %v10531, %v10532
        %v10534 = vrot.slane %v10533, 1
        %v10535 = vadd.f32 %v10533, %v10534
        %v10536 = vadd.f32 %v10336, %v10340
        %v10537 = vadd.f32 %v10536, %v10344
        %v10538 = vadd.f32 %v10537, %v10348
        %v10539 = vadd.f32 %v10538, %v10352
        %v10540 = vadd.f32 %v10539, %v10356
        %v10541 = vadd.f32 %v10540, %v10360
        %v10542 = vadd.f32 %v10541, %v10364
        %v10543 = vadd.f32 %v10542, %v10368
        %v10544 = vadd.f32 %v10543, %v10372
        %v10545 = vadd.f32 %v10544, %v10376
        %v10546 = vadd.f32 %v10545, %v10380
        %v10547 = vadd.f32 %v10546, %v10384
        %v10548 = vadd.f32 %v10547, %v10388
        %v10549 = vadd.f32 %v10548, %v10392
        %v10550 = vadd.f32 %v10549, %v10396
        %v10551 = vadd.f32 %v10550, %v10400
        %v10552 = vadd.f32 %v10551, %v10404
        %v10553 = vadd.f32 %v10552, %v10408
        %v10554 = vadd.f32 %v10553, %v10412
        %v10555 = vadd.f32 %v10554, %v10416
        %v10556 = vadd.f32 %v10555, %v10420
        %v10557 = vadd.f32 %v10556, %v10424
        %v10558 = vadd.f32 %v10557, %v10428
        %v10559 = vadd.f32 %v10558, %v10432
        %v10560 = vadd.f32 %v10559, %v10436
        %v10561 = vadd.f32 %v10560, %v10440
        %v10562 = vadd.f32 %v10561, %v10444
        %v10563 = vadd.f32 %v10562, %v10448
        %v10564 = vadd.f32 %v10563, %v10452
        %v10565 = vadd.f32 %v10564, %v10456
        %v10566 = vadd.f32 %v10565, %v10460
        %v10567 = vrot.slane %v10566, 4
        %v10568 = vadd.f32 %v10566, %v10567
        %v10569 = vrot.slane %v10568, 2
        %v10570 = vadd.f32 %v10568, %v10569
        %v10571 = vrot.slane %v10570, 1
        %v10572 = vadd.f32 %v10570, %v10571
        %v10573 = vadd.f32 %v10337, %v10341
        %v10574 = vadd.f32 %v10573, %v10345
        %v10575 = vadd.f32 %v10574, %v10349
        %v10576 = vadd.f32 %v10575, %v10353
        %v10577 = vadd.f32 %v10576, %v10357
        %v10578 = vadd.f32 %v10577, %v10361
        %v10579 = vadd.f32 %v10578, %v10365
        %v10580 = vadd.f32 %v10579, %v10369
        %v10581 = vadd.f32 %v10580, %v10373
        %v10582 = vadd.f32 %v10581, %v10377
        %v10583 = vadd.f32 %v10582, %v10381
        %v10584 = vadd.f32 %v10583, %v10385
        %v10585 = vadd.f32 %v10584, %v10389
        %v10586 = vadd.f32 %v10585, %v10393
        %v10587 = vadd.f32 %v10586, %v10397
        %v10588 = vadd.f32 %v10587, %v10401
        %v10589 = vadd.f32 %v10588, %v10405
        %v10590 = vadd.f32 %v10589, %v10409
        %v10591 = vadd.f32 %v10590, %v10413
        %v10592 = vadd.f32 %v10591, %v10417
        %v10593 = vadd.f32 %v10592, %v10421
        %v10594 = vadd.f32 %v10593, %v10425
        %v10595 = vadd.f32 %v10594, %v10429
        %v10596 = vadd.f32 %v10595, %v10433
        %v10597 = vadd.f32 %v10596, %v10437
        %v10598 = vadd.f32 %v10597, %v10441
        %v10599 = vadd.f32 %v10598, %v10445
        %v10600 = vadd.f32 %v10599, %v10449
        %v10601 = vadd.f32 %v10600, %v10453
        %v10602 = vadd.f32 %v10601, %v10457
        %v10603 = vadd.f32 %v10602, %v10461
        %v10604 = vrot.slane %v10603, 4
        %v10605 = vadd.f32 %v10603, %v10604
        %v10606 = vrot.slane %v10605, 2
        %v10607 = vadd.f32 %v10605, %v10606
        %v10608 = vrot.slane %v10607, 1
        %v10609 = vadd.f32 %v10607, %v10608
        %v10614 = vcombine.low %v10498, %v10535
        %v10615 = vcombine.low %v10572, %v10609
        %v10617 = vunpack.c.l.s4 1966171168
        %v10618 = vunpack.c.0.s8 %v10617
        %v10619 = vlaneseq
        %v10620 = vshrl.u32 %v10619, 7
        %v10621 = vsub.s32 %v10618, %v10620
        %v10622 = vrot.slane %v10614, %v10621
        %v10624 = vunpack.c.l.s4 1966171168
        %v10625 = vunpack.c.0.s8 %v10624
        %v10626 = vlaneseq
        %v10627 = vshrl.u32 %v10626, 7
        %v10628 = vsub.s32 %v10625, %v10627
        %v10629 = vrot.slane %v10615, %v10628
        %v10630 = vcombine.low %v10622, %v10629
        %v10632 = vunpack.c.l.s4 1966171168
        %v10633 = vunpack.c.0.s8 %v10632
        %v10634 = vlaneseq
        %v10635 = vshrl.u32 %v10634, 7
        %v10636 = vsub.s32 %v10633, %v10635
        %v10637 = vrot.slane %v10630, %v10636
        %v10639 = vadd.f32 %v10173, %v10637
        %v10640 = vlaneseq
        %vm10641 = vcmp.ge.s32.totalorder %v10640, 0
        %vm10642 = vcmp.lt.s32.totalorder %v10640, 512
        %vm10643 = vmand %vm10641, %vm10642
        %10644 = vst.msk [vmem:[#allocation4] sm:$0xf] %vm10643, %v10639
        %10645 = vst.msk [vmem:[#allocation2] sm:$0x1] %vm10161, %v9983
        %p10646 = scmp.eq.s32.totalorder %s35, 2
        // Predicated region
        $region105: #{tpu_custom_call.1} parent=63 // pred_check
          %p10647 = pneg %p10646
        $region106: #{tpu_custom_call.1} parent=63 // pred_check_branch
          %10649 = sbr.rel (%p10647) target = $region108
        $region107: #{tpu_custom_call.1} parent=63 // pred_region
          %v10650 = vld [vmem:[#allocation4] sm:$0xf]
          %v10651 = vld [vmem:[#allocation3] sm:$0x1]
          %10653 = vset.pattern.permute.xlu0 0
          %10654 = vperm.xlu0 %10653, %v10651
          %v10655 = vpop.permute.xlu0 %10654
          %v10657 = vlaneseq
          %v10658 = vshrl.u32 %v10657, 7
          %v10659 = vsub.s32 0, %v10658
          %v10660 = vrot.slane %v10655, %v10659
          %v10661 = vrcp.pop %v10660
          %v10662 = vmul.f32 %v10650, %v10661
          %10663 = vst.msk [vmem:[#allocation22] sm:$0xf] %vm10643, %v10662
          %v10664 = vld [vmem:[%s9] sm:$0xff]
          %v10665 = vld [vmem:[%s9 + $0x8] sm:$0xff]
          %v10666 = vld [vmem:[%s9 + $0x10] sm:$0xff]
          %v10667 = vld [vmem:[%s9 + $0x18] sm:$0xff]
          %v10668 = vld [vmem:[%s9 + $0x20] sm:$0xff]
          %v10669 = vld [vmem:[%s9 + $0x28] sm:$0xff]
          %v10670 = vld [vmem:[%s9 + $0x30] sm:$0xff]
          %v10671 = vld [vmem:[%s9 + $0x38] sm:$0xff]
          %v10672 = vld [vmem:[%s9 + $0x40] sm:$0xff]
          %v10673 = vld [vmem:[%s9 + $0x48] sm:$0xff]
          %v10674 = vld [vmem:[%s9 + $0x50] sm:$0xff]
          %v10675 = vld [vmem:[%s9 + $0x58] sm:$0xff]
          %v10676 = vld [vmem:[%s9 + $0x60] sm:$0xff]
          %v10677 = vld [vmem:[%s9 + $0x68] sm:$0xff]
          %v10678 = vld [vmem:[%s9 + $0x70] sm:$0xff]
          %v10679 = vld [vmem:[%s9 + $0x78] sm:$0xff]
          %v10680 = vld [vmem:[%s9 + $0x80] sm:$0xff]
          %v10681 = vld [vmem:[%s9 + $0x88] sm:$0xff]
          %v10682 = vld [vmem:[%s9 + $0x90] sm:$0xff]
          %v10683 = vld [vmem:[%s9 + $0x98] sm:$0xff]
          %v10684 = vld [vmem:[%s9 + $0xa0] sm:$0xff]
          %v10685 = vld [vmem:[%s9 + $0xa8] sm:$0xff]
          %v10686 = vld [vmem:[%s9 + $0xb0] sm:$0xff]
          %v10687 = vld [vmem:[%s9 + $0xb8] sm:$0xff]
          %v10688 = vld [vmem:[%s9 + $0xc0] sm:$0xff]
          %v10689 = vld [vmem:[%s9 + $0xc8] sm:$0xff]
          %v10690 = vld [vmem:[%s9 + $0xd0] sm:$0xff]
          %v10691 = vld [vmem:[%s9 + $0xd8] sm:$0xff]
          %v10692 = vld [vmem:[%s9 + $0xe0] sm:$0xff]
          %v10693 = vld [vmem:[%s9 + $0xe8] sm:$0xff]
          %v10694 = vld [vmem:[%s9 + $0xf0] sm:$0xff]
          %v10695 = vld [vmem:[%s9 + $0xf8] sm:$0xff]
          %v10696 = vld [vmem:[%s9 + $0x100] sm:$0xff]
          %v10697 = vld [vmem:[%s9 + $0x108] sm:$0xff]
          %v10698 = vld [vmem:[%s9 + $0x110] sm:$0xff]
          %v10699 = vld [vmem:[%s9 + $0x118] sm:$0xff]
          %v10700 = vld [vmem:[%s9 + $0x120] sm:$0xff]
          %v10701 = vld [vmem:[%s9 + $0x128] sm:$0xff]
          %v10702 = vld [vmem:[%s9 + $0x130] sm:$0xff]
          %v10703 = vld [vmem:[%s9 + $0x138] sm:$0xff]
          %v10704 = vld [vmem:[%s9 + $0x140] sm:$0xff]
          %v10705 = vld [vmem:[%s9 + $0x148] sm:$0xff]
          %v10706 = vld [vmem:[%s9 + $0x150] sm:$0xff]
          %v10707 = vld [vmem:[%s9 + $0x158] sm:$0xff]
          %v10708 = vld [vmem:[%s9 + $0x160] sm:$0xff]
          %v10709 = vld [vmem:[%s9 + $0x168] sm:$0xff]
          %v10710 = vld [vmem:[%s9 + $0x170] sm:$0xff]
          %v10711 = vld [vmem:[%s9 + $0x178] sm:$0xff]
          %v10712 = vld [vmem:[%s9 + $0x180] sm:$0xff]
          %v10713 = vld [vmem:[%s9 + $0x188] sm:$0xff]
          %v10714 = vld [vmem:[%s9 + $0x190] sm:$0xff]
          %v10715 = vld [vmem:[%s9 + $0x198] sm:$0xff]
          %v10716 = vld [vmem:[%s9 + $0x1a0] sm:$0xff]
          %v10717 = vld [vmem:[%s9 + $0x1a8] sm:$0xff]
          %v10718 = vld [vmem:[%s9 + $0x1b0] sm:$0xff]
          %v10719 = vld [vmem:[%s9 + $0x1b8] sm:$0xff]
          %v10720 = vld [vmem:[%s9 + $0x1c0] sm:$0xff]
          %v10721 = vld [vmem:[%s9 + $0x1c8] sm:$0xff]
          %v10722 = vld [vmem:[%s9 + $0x1d0] sm:$0xff]
          %v10723 = vld [vmem:[%s9 + $0x1d8] sm:$0xff]
          %v10724 = vld [vmem:[%s9 + $0x1e0] sm:$0xff]
          %v10725 = vld [vmem:[%s9 + $0x1e8] sm:$0xff]
          %v10726 = vld [vmem:[%s9 + $0x1f0] sm:$0xff]
          %v10727 = vld [vmem:[%s9 + $0x1f8] sm:$0xff]
          %v10728 = vld [vmem:[#allocation20] sm:$0x1]
          %v10730 = vlaneseq
          %v10731 = vshrl.u32 %v10730, 7
          %v10732 = vsub.s32 0, %v10731
          %v10733 = vrot.slane %v10662, %v10732
          %v10734 = vlaneseq
          %v10735 = vshrl.u32 %v10734, 7
          %v10736 = vsub.s32 1, %v10735
          %v10737 = vrot.slane %v10662, %v10736
          %v10738 = vlaneseq
          %v10739 = vshrl.u32 %v10738, 7
          %v10740 = vsub.s32 2, %v10739
          %v10741 = vrot.slane %v10662, %v10740
          %v10742 = vlaneseq
          %v10743 = vshrl.u32 %v10742, 7
          %v10744 = vsub.s32 3, %v10743
          %v10745 = vrot.slane %v10662, %v10744
          %10750 = vmatprep.subr.mxu0 0.0
          %10751 = vmatpush1.msra.mxu0 %v10664
          %10752 = vmatprep.subr.mxu0 0.0
          %10753 = vmatpush1.msra.mxu0 %v10665
          %10754 = vmatprep.subr.mxu0 0.0
          %10755 = vmatpush1.msra.mxu0 %v10666
          %10756 = vmatprep.subr.mxu0 0.0
          %10757 = vmatpush1.msra.mxu0 %v10667
          %10758 = vmatprep.subr.mxu0 0.0
          %10759 = vmatpush1.msra.mxu0 %v10668
          %10760 = vmatprep.subr.mxu0 0.0
          %10761 = vmatpush1.msra.mxu0 %v10669
          %10762 = vmatprep.subr.mxu0 0.0
          %10763 = vmatpush1.msra.mxu0 %v10670
          %10764 = vmatprep.subr.mxu0 0.0
          %10765 = vmatpush1.msra.mxu0 %v10671
          %10766 = vmatprep.subr.mxu0 0.0
          %10767 = vmatpush1.msra.mxu0 %v10672
          %10768 = vmatprep.subr.mxu0 0.0
          %10769 = vmatpush1.msra.mxu0 %v10673
          %10770 = vmatprep.subr.mxu0 0.0
          %10771 = vmatpush1.msra.mxu0 %v10674
          %10772 = vmatprep.subr.mxu0 0.0
          %10773 = vmatpush1.msra.mxu0 %v10675
          %10774 = vmatprep.subr.mxu0 0.0
          %10775 = vmatpush1.msra.mxu0 %v10676
          %10776 = vmatprep.subr.mxu0 0.0
          %10777 = vmatpush1.msra.mxu0 %v10677
          %10778 = vmatprep.subr.mxu0 0.0
          %10779 = vmatpush1.msra.mxu0 %v10678
          %10780 = vmatprep.subr.mxu0 0.0
          %10781 = vmatpush1.msra.mxu0 %v10679
          %10782 = vmatprep.subr.mxu0 0.0
          %10783 = vmatpush1.msra.mxu0 %v10680
          %10784 = vmatprep.subr.mxu0 0.0
          %10785 = vmatpush1.msra.mxu0 %v10681
          %10786 = vmatprep.subr.mxu0 0.0
          %10787 = vmatpush1.msra.mxu0 %v10682
          %10788 = vmatprep.subr.mxu0 0.0
          %10789 = vmatpush1.msra.mxu0 %v10683
          %10790 = vmatprep.subr.mxu0 0.0
          %10791 = vmatpush1.msra.mxu0 %v10684
          %10792 = vmatprep.subr.mxu0 0.0
          %10793 = vmatpush1.msra.mxu0 %v10685
          %10794 = vmatprep.subr.mxu0 0.0
          %10795 = vmatpush1.msra.mxu0 %v10686
          %10796 = vmatprep.subr.mxu0 0.0
          %10797 = vmatpush1.msra.mxu0 %v10687
          %10798 = vmatprep.subr.mxu0 0.0
          %10799 = vmatpush1.msra.mxu0 %v10688
          %10800 = vmatprep.subr.mxu0 0.0
          %10801 = vmatpush1.msra.mxu0 %v10689
          %10802 = vmatprep.subr.mxu0 0.0
          %10803 = vmatpush1.msra.mxu0 %v10690
          %10804 = vmatprep.subr.mxu0 0.0
          %10805 = vmatpush1.msra.mxu0 %v10691
          %10806 = vmatprep.subr.mxu0 0.0
          %10807 = vmatpush1.msra.mxu0 %v10692
          %10808 = vmatprep.subr.mxu0 0.0
          %10809 = vmatpush1.msra.mxu0 %v10693
          %10810 = vmatprep.subr.mxu0 0.0
          %10811 = vmatpush1.msra.mxu0 %v10694
          %10812 = vmatprep.subr.mxu0 0.0
          %10813 = vmatpush1.msra.mxu0 %v10695
          %10814 = vmatprep.mubr.f32.mxu0 %v10737
          %10815 = vmatmul.mubr.f32.gmra.mrb[0].mxu0 %v10733
          %v10816 = vpop.f32.mrb[0].mxu0
          %v10817 = vadd.f32 %v10728, %v10816
          %v10818 = vpop.f32.mrb[0].mxu0
          %10819 = vdwg.mxu0
          %10820 = vmatprep.subr.mxu0 0.0
          %10821 = vmatpush1.msra.mxu0 %v10696
          %10822 = vmatprep.subr.mxu0 0.0
          %10823 = vmatpush1.msra.mxu0 %v10697
          %10824 = vmatprep.subr.mxu0 0.0
          %10825 = vmatpush1.msra.mxu0 %v10698
          %10826 = vmatprep.subr.mxu0 0.0
          %10827 = vmatpush1.msra.mxu0 %v10699
          %10828 = vmatprep.subr.mxu0 0.0
          %10829 = vmatpush1.msra.mxu0 %v10700
          %10830 = vmatprep.subr.mxu0 0.0
          %10831 = vmatpush1.msra.mxu0 %v10701
          %10832 = vmatprep.subr.mxu0 0.0
          %10833 = vmatpush1.msra.mxu0 %v10702
          %10834 = vmatprep.subr.mxu0 0.0
          %10835 = vmatpush1.msra.mxu0 %v10703
          %10836 = vmatprep.subr.mxu0 0.0
          %10837 = vmatpush1.msra.mxu0 %v10704
          %10838 = vmatprep.subr.mxu0 0.0
          %10839 = vmatpush1.msra.mxu0 %v10705
          %10840 = vmatprep.subr.mxu0 0.0
          %10841 = vmatpush1.msra.mxu0 %v10706
          %10842 = vmatprep.subr.mxu0 0.0
          %10843 = vmatpush1.msra.mxu0 %v10707
          %10844 = vmatprep.subr.mxu0 0.0
          %10845 = vmatpush1.msra.mxu0 %v10708
          %10846 = vmatprep.subr.mxu0 0.0
          %10847 = vmatpush1.msra.mxu0 %v10709
          %10848 = vmatprep.subr.mxu0 0.0
          %10849 = vmatpush1.msra.mxu0 %v10710
          %10850 = vmatprep.subr.mxu0 0.0
          %10851 = vmatpush1.msra.mxu0 %v10711
          %10852 = vmatprep.subr.mxu0 0.0
          %10853 = vmatpush1.msra.mxu0 %v10712
          %10854 = vmatprep.subr.mxu0 0.0
          %10855 = vmatpush1.msra.mxu0 %v10713
          %10856 = vmatprep.subr.mxu0 0.0
          %10857 = vmatpush1.msra.mxu0 %v10714
          %10858 = vmatprep.subr.mxu0 0.0
          %10859 = vmatpush1.msra.mxu0 %v10715
          %10860 = vmatprep.subr.mxu0 0.0
          %10861 = vmatpush1.msra.mxu0 %v10716
          %10862 = vmatprep.subr.mxu0 0.0
          %10863 = vmatpush1.msra.mxu0 %v10717
          %10864 = vmatprep.subr.mxu0 0.0
          %10865 = vmatpush1.msra.mxu0 %v10718
          %10866 = vmatprep.subr.mxu0 0.0
          %10867 = vmatpush1.msra.mxu0 %v10719
          %10868 = vmatprep.subr.mxu0 0.0
          %10869 = vmatpush1.msra.mxu0 %v10720
          %10870 = vmatprep.subr.mxu0 0.0
          %10871 = vmatpush1.msra.mxu0 %v10721
          %10872 = vmatprep.subr.mxu0 0.0
          %10873 = vmatpush1.msra.mxu0 %v10722
          %10874 = vmatprep.subr.mxu0 0.0
          %10875 = vmatpush1.msra.mxu0 %v10723
          %10876 = vmatprep.subr.mxu0 0.0
          %10877 = vmatpush1.msra.mxu0 %v10724
          %10878 = vmatprep.subr.mxu0 0.0
          %10879 = vmatpush1.msra.mxu0 %v10725
          %10880 = vmatprep.subr.mxu0 0.0
          %10881 = vmatpush1.msra.mxu0 %v10726
          %10882 = vmatprep.subr.mxu0 0.0
          %10883 = vmatpush1.msra.mxu0 %v10727
          %10884 = vmatprep.mubr.f32.mxu0 %v10745
          %10885 = vmatmul.mubr.f32.gmra.mrb[0].mxu0 %v10741
          %v10886 = vpop.f32.mrb[0].mxu0
          %v10887 = vadd.f32 %v10817, %v10886
          %v10888 = vpop.f32.mrb[0].mxu0
          %10889 = vdwg.mxu0
          %vm10890 = vcmask 8192
          %10891 = vst.msk [vmem:[#allocation21] sm:$0x1] %vm10890, %v10887
        $region108: #{tpu_custom_call.1} parent=63 // pred_fallthru
          _
        %s10892 = smul.u32 32, %s35
        %p10893 = scmp.lt.s32.totalorder %s10892, 95
        %s10894 = scalar_select %p10893, %s10892, 95
        %s10895 = smul.addr %s10894, 8
        %s10896 = scalar_lea.vmem %s11, %s10895
        // Predicated region
        $region109: #{tpu_custom_call.1} parent=63 // pred_check
          %p10897 = pneg %p289
        $region110: #{tpu_custom_call.1} parent=63 // pred_check_branch
          %10899 = sbr.rel (%p10897) target = $region112
        $region111: #{tpu_custom_call.1} parent=63 // pred_region
          %s10900 = smul.u32 32, %s35
        $region112: #{tpu_custom_call.1} parent=63 // pred_fallthru
          _
        // Predicated region
        $region113: #{tpu_custom_call.1} parent=63 // pred_check
          %p10901 = pneg %p310
        $region114: #{tpu_custom_call.1} parent=63 // pred_check_branch
          %10903 = sbr.rel (%p10901) target = $region116
        $region115: #{tpu_custom_call.1} parent=63 // pred_region
          %s10905 = ssub.s32 16, 16
          %10906 = vsyncadd [#allocation8], %s10905
          %s10908 = sshll.u32 [#allocation21], 4
          %s10909 = int_to_ptr.vmem [resolvable:$true] %s10908
          %10911 = dma.vmem_to_hbm [thread:$0]  %s10909, 16, %s12, [#allocation8]
        $region116: #{tpu_custom_call.1} parent=63 // pred_fallthru
          _
        // Predicated region
        $region117: #{tpu_custom_call.1} parent=63 // pred_check
          %p10912 = pneg %p331
        $region118: #{tpu_custom_call.1} parent=63 // pred_check_branch
          %10914 = sbr.rel (%p10912) target = $region120
        $region119: #{tpu_custom_call.1} parent=63 // pred_region
          %s10916 = ssub.s32 64, 64
          %10917 = vsyncadd [#allocation23], %s10916
          %s10919 = sshll.u32 [#allocation22], 4
          %s10920 = int_to_ptr.vmem [resolvable:$true] %s10919
          %10922 = dma.vmem_to_hbm [thread:$0]  %s10920, 64, %s13, [#allocation23]
        $region120: #{tpu_custom_call.1} parent=63 // pred_fallthru
          _
        // Predicated region
        $region121: #{tpu_custom_call.1} parent=63 // pred_check
          %p10923 = pneg %p310
        $region122: #{tpu_custom_call.1} parent=63 // pred_check_branch
          %10925 = sbr.rel (%p10923) target = $region124
        $region123: #{tpu_custom_call.1} parent=63 // pred_region
          %10926 = dma.done [#allocation8], 16
        $region124: #{tpu_custom_call.1} parent=63 // pred_fallthru
          _
        // Predicated region
        $region125: #{tpu_custom_call.1} parent=63 // pred_check
          %p10927 = pneg %p331
        $region126: #{tpu_custom_call.1} parent=63 // pred_check_branch
          %10929 = sbr.rel (%p10927) target = $region128
        $region127: #{tpu_custom_call.1} parent=63 // pred_region
          %10930 = dma.done [#allocation23], 64
        $region128: #{tpu_custom_call.1} parent=63 // pred_fallthru
          _
      $region64: #{tpu_custom_call.1} parent=5 // pred_fallthru
        _
      %p10931 = scmp.le.s32.totalorder 2, %s30
      // Predicated region
      $region129: #{tpu_custom_call.1} parent=5 // pred_check
        %p10932 = pneg %p10931
      $region130: #{tpu_custom_call.1} parent=5 // pred_check_branch
        %10934 = sbr.rel (%p10932) target = $region132
      $region131: #{tpu_custom_call.1} parent=5 // pred_region
        %s10935 = ssub.s32 %s30, 2
        // Predicated region
        $region133: #{tpu_custom_call.1} parent=131 // pred_check
          %p10936 = pneg %p295
        $region134: #{tpu_custom_call.1} parent=131 // pred_check_branch
          %10938 = sbr.rel (%p10936) target = $region136
        $region135: #{tpu_custom_call.1} parent=131 // pred_region
          %s10939 = smul.u32 32, %s36
          %p10940 = scmp.lt.s32.totalorder %s10939, 95
          %s10941 = scalar_select %p10940, %s10939, 95
          %s10942 = smul.addr %s10941, 8
          %s10943 = scalar_lea.vmem %s11, %s10942
        $region136: #{tpu_custom_call.1} parent=131 // pred_fallthru
          _
      $region132: #{tpu_custom_call.1} parent=5 // pred_fallthru
        _
    $region6: #{tpu_custom_call.1} parent=1 // loop_footer
      %s34 = sadd.s32 1, %s30
    $region7: #{tpu_custom_call.1} parent=1 // loop_footer_branch
      %29 = sbr.rel target = $region3
    $region8: #{tpu_custom_call.1} parent=1 // loop_exit
      _
    %10944 = vsyncpa [#allocation7], 1
    %s10945 = scalar_lea.sflag [#allocation7], 1
    %10946 = vsyncpa %s10945, 1
    %10947 = vsyncpa [#allocation10], 1
    %10948 = vsyncpa [#allocation13], 1
    %10949 = vsyncpa [#allocation16], 1
    %10950 = vsyncpa [#allocation19], 1
    %10951 = vsyncpa [#allocation8], 1
    %s10952 = scalar_lea.sflag [#allocation8], 1
    %10953 = vsyncpa %s10952, 1
    %10954 = vsyncpa [#allocation23], 1

</llo_original>
